<compile_context>
chip_gen: v7x
topology: tpu7x:2x2x1
jax: 0.10.0
libtpu: 0.0.40
codegen_flags: <defaults>
</compile_context>

<pallas_src>
import functools
import math

import jax
import jax.numpy as jnp
from jax import lax
from jax.experimental import pallas as pl
from jax.experimental.pallas import tpu as pltpu

# Make in-kernel dots and the pure-JAX reference use the same (full f32) matmul
# precision so the correctness check is tight.
jax.config.update("jax_default_matmul_precision", "highest")

LN_EPS = 1e-5           # nn.LayerNorm default
GELU_C = math.sqrt(2.0 / math.pi)


# ---------------------------------------------------------------------------
# Shared math helpers (used inside the kernel and in the JAX reference).
# ---------------------------------------------------------------------------
def _layernorm(x, g, b):
    mu = jnp.mean(x, axis=-1, keepdims=True)
    var = jnp.mean((x - mu) ** 2, axis=-1, keepdims=True)
    return (x - mu) * lax.rsqrt(var + LN_EPS) * g + b


def _new_gelu(x):
    # 0.5 * x * (1 + tanh(sqrt(2/pi) * (x + 0.044715 * x^3)))
    return 0.5 * x * (1.0 + jnp.tanh(GELU_C * (x + 0.044715 * x * x * x)))


def sinusoidal_pe(L, D, dtype=jnp.float32):
    pos = jnp.arange(L, dtype=jnp.float32)[:, None]
    idx = jnp.arange(0, D, 2, dtype=jnp.float32)[None, :]
    ang = pos / jnp.power(10000.0, idx / D)
    pe = jnp.zeros((L, D), jnp.float32)
    pe = pe.at[:, 0::2].set(jnp.sin(ang))
    pe = pe.at[:, 1::2].set(jnp.cos(ang))
    return pe.astype(dtype)


# ---------------------------------------------------------------------------
# Fused decoder-stack kernel: one grid step = (batch tile, decoder layer)
# ---------------------------------------------------------------------------
def decoder_stack_kernel(
        x_ref, pe_ref,
        g1_ref, b1_ref, wqkv_ref, bqkv_ref, wo_ref, bo_ref,
        g2_ref, b2_ref, w1_ref, b1f_ref, w2_ref, b2f_ref,
        gout_ref, bout_ref,
        o_ref,
        x_acc, attn_buf,
        *, num_heads, emb_scale):
    j = pl.program_id(1)
    n_layers = pl.num_programs(1)
    tb, L, D = x_ref.shape
    M = tb * L
    dh = D // num_heads

    # -- layer 0 prologue: embedding * sqrt(d_model) + PE, into the VMEM slab -----
    @pl.when(j == 0)
    def _():
        x0 = x_ref[...].astype(jnp.float32) * emb_scale + pe_ref[0].astype(jnp.float32)
        x_acc[...] = x0.reshape(M, D)

    x = x_acc[...]                                   # (M, D) f32, VMEM-resident

    # -- pre-LN causal multi-head self-attention + residual -----------------------
    n = _layernorm(x, g1_ref[0].astype(jnp.float32), b1_ref[0].astype(jnp.float32))
    wqkv = wqkv_ref[0]
    qkv = jnp.dot(n.astype(wqkv.dtype), wqkv,
                  preferred_element_type=jnp.float32) + bqkv_ref[0].astype(jnp.float32)
    q3 = qkv[:, 0 * D:1 * D].reshape(tb, L, D)
    k3 = qkv[:, 1 * D:2 * D].reshape(tb, L, D)
    v3 = qkv[:, 2 * D:3 * D].reshape(tb, L, D)

    row = lax.broadcasted_iota(jnp.int32, (1, L, L), 1)
    col = lax.broadcasted_iota(jnp.int32, (1, L, L), 2)
    causal = col <= row

    # The 1/sqrt(d_model) score scale is folded into the Q columns of wqkv/bqkv in
    # the wrapper, so there is no per-score multiply here.  Each head's matmuls are
    # batched over the batch-tile dim; head outputs land in attn_buf so the output
    # projection below is one full-width matmul.
    for hd in range(num_heads):                      # static unroll
        sl = slice(hd * dh, (hd + 1) * dh)
        s = jnp.einsum("bqd,bkd->bqk", q3[:, :, sl], k3[:, :, sl],
                       preferred_element_type=jnp.float32)
        s = jnp.where(causal, s, -1e30)
        s = s - jnp.max(s, axis=-1, keepdims=True)
        p = jnp.exp(s)
        p = p * pl.reciprocal(jnp.sum(p, axis=-1, keepdims=True), approx=True)
        attn_buf[:, :, sl] = jnp.einsum("bqk,bkd->bqd", p, v3[:, :, sl],
                                        preferred_element_type=jnp.float32)

    ao = attn_buf[...].reshape(M, D)
    wo = wo_ref[0]
    x = x + jnp.dot(ao.astype(wo.dtype), wo,
                    preferred_element_type=jnp.float32) + bo_ref[0].astype(jnp.float32)

    # -- pre-LN FFN (NewGELU) + residual ------------------------------------------
    n = _layernorm(x, g2_ref[0].astype(jnp.float32), b2_ref[0].astype(jnp.float32))
    w1 = w1_ref[0]
    h = jnp.dot(n.astype(w1.dtype), w1,
                preferred_element_type=jnp.float32) + b1f_ref[0].astype(jnp.float32)
    h = _new_gelu(h)
    w2 = w2_ref[0]
    x = x + jnp.dot(h.astype(w2.dtype), w2,
                    preferred_element_type=jnp.float32) + b2f_ref[0].astype(jnp.float32)

    x_acc[...] = x

    # -- final LayerNorm; output written once per batch tile -----------------------
    @pl.when(j == n_layers - 1)
    def _():
        y = _layernorm(x, gout_ref[...].astype(jnp.float32),
                       bout_ref[...].astype(jnp.float32))
        o_ref[...] = y.reshape(tb, L, D).astype(o_ref.dtype)


# ---------------------------------------------------------------------------
# Wrapper
# ---------------------------------------------------------------------------
def _default_vmem_limit_bytes():
    # ~75% of physical VMEM (64 MiB on v7x, 128 MiB on v5e/v6e), capped at 100 MiB;
    # conservative fallback if the query is unavailable.
    try:
        phys = pltpu.get_tpu_info().vmem_capacity_bytes
        return int(min(phys * 3 // 4, 100 * 1024 * 1024))
    except Exception:
        return 48 * 1024 * 1024


def decoder_forward(dec_inp, params, *, d_model, num_heads,
                    batch_block=None, param_dtype=None):
    assert d_model % num_heads == 0
    D = d_model
    bs, L = dec_inp.shape
    nb = params["wqkv"].shape[0]
    d_mid = params["w1"].shape[-1]

    # Pick a batch tile so each grid step carries a big (tb*L, D) matmul slab
    # (target >= 256 rows).  On v7x prefer bs//tb even when >1 tile (2-TC split).
    if batch_block is None:
        tb = min(bs, max(1, 256 // L))
        while bs % tb:
            tb -= 1
    else:
        tb = batch_block
    assert bs % tb == 0
    grid = (bs // tb, nb)

    # Fold the 1/sqrt(d_model) attention-score scale into the Q columns of the
    # fused QKV projection (zero in-kernel cost).  NOTE: the PyTorch module takes
    # d_k = d_model *before* the head split, so the scale is 1/sqrt(d_model).
    qscale = 1.0 / math.sqrt(d_model)
    weights = dict(params)
    weights["wqkv"] = params["wqkv"].at[:, :, :D].multiply(qscale)
    weights["bqkv"] = params["bqkv"].at[:, :, :D].multiply(qscale)
    if param_dtype is not None:
        # bf16 weight storage halves DMA/VMEM; matmuls still accumulate in f32 and
        # LN / softmax statistics / residuals stay f32 inside the kernel.
        for name in ("wqkv", "wo", "w1", "w2"):
            weights[name] = weights[name].astype(param_dtype)

    # Embedding row gather is data-dependent; left to XLA.
    x_emb = jnp.take(params["emb"], dec_inp, axis=0)            # (bs, L, D)
    pe = sinusoidal_pe(L, D, x_emb.dtype)[None]                 # (1, L, D)

    kernel = functools.partial(decoder_stack_kernel, num_heads=num_heads,
                               emb_scale=float(math.sqrt(d_model)))

    in_specs = [
        pl.BlockSpec((tb, L, D), lambda i, j: (i, 0, 0)),        # x_emb (resident per i)
        pl.BlockSpec((1, L, D), lambda i, j: (0, 0, 0)),         # pe    (constant)
        pl.BlockSpec((1, 1, D), lambda i, j: (j, 0, 0)),         # g1
        pl.BlockSpec((1, 1, D), lambda i, j: (j, 0, 0)),         # b1
        pl.BlockSpec((1, D, 3 * D), lambda i, j: (j, 0, 0)),     # wqkv
        pl.BlockSpec((1, 1, 3 * D), lambda i, j: (j, 0, 0)),     # bqkv
        pl.BlockSpec((1, D, D), lambda i, j: (j, 0, 0)),         # wo
        pl.BlockSpec((1, 1, D), lambda i, j: (j, 0, 0)),         # bo
        pl.BlockSpec((1, 1, D), lambda i, j: (j, 0, 0)),         # g2
        pl.BlockSpec((1, 1, D), lambda i, j: (j, 0, 0)),         # b2
        pl.BlockSpec((1, D, d_mid), lambda i, j: (j, 0, 0)),     # w1
        pl.BlockSpec((1, 1, d_mid), lambda i, j: (j, 0, 0)),     # b1f
        pl.BlockSpec((1, d_mid, D), lambda i, j: (j, 0, 0)),     # w2
        pl.BlockSpec((1, 1, D), lambda i, j: (j, 0, 0)),         # b2f
        pl.BlockSpec((1, D), lambda i, j: (0, 0)),               # ln_out_g
        pl.BlockSpec((1, D), lambda i, j: (0, 0)),               # ln_out_b
    ]

    return pl.pallas_call(
        kernel,
        out_shape=jax.ShapeDtypeStruct((bs, L, D), x_emb.dtype),
        grid_spec=pltpu.PrefetchScalarGridSpec(
            num_scalar_prefetch=0,
            grid=grid,
            in_specs=in_specs,
            out_specs=pl.BlockSpec((tb, L, D), lambda i, j: (i, 0, 0)),
            scratch_shapes=[
                pltpu.VMEM((tb * L, D), jnp.float32),   # activation slab across layers
                pltpu.VMEM((tb, L, D), jnp.float32),    # per-head attention outputs
            ],
        ),
        compiler_params=pltpu.CompilerParams(
            dimension_semantics=("parallel", "arbitrary"),
            vmem_limit_bytes=_default_vmem_limit_bytes(),
        ),
    )(x_emb, pe,
      weights["g1"], weights["b1"], weights["wqkv"], weights["bqkv"],
      weights["wo"], weights["bo"], weights["g2"], weights["b2"],
      weights["w1"], weights["b1f"], weights["w2"], weights["b2f"],
      weights["ln_out_g"], weights["ln_out_b"])


# ---------------------------------------------------------------------------
# Pure-JAX reference (mirrors the PyTorch forward, eval mode)
# ---------------------------------------------------------------------------
def decoder_ref(dec_inp, params, *, d_model, num_heads):
    bs, L = dec_inp.shape
    D = d_model
    dh = D // num_heads
    nb = params["wqkv"].shape[0]
    x = params["emb"][dec_inp] * math.sqrt(D) + sinusoidal_pe(L, D)[None]
    mask = jnp.tril(jnp.ones((L, L), bool))
    for j in range(nb):
        n = _layernorm(x, params["g1"][j], params["b1"][j])
        qkv = n @ params["wqkv"][j] + params["bqkv"][j]
        q, k, v = jnp.split(qkv, 3, axis=-1)
        to_h = lambda t: t.reshape(bs, L, num_heads, dh).transpose(0, 2, 1, 3)
        qh, kh, vh = to_h(q), to_h(k), to_h(v)
        s = jnp.einsum("bhqd,bhkd->bhqk", qh, kh) / math.sqrt(D)
        s = jnp.where(mask, s, -jnp.inf)
        p = jax.nn.softmax(s, axis=-1)
        o = jnp.einsum("bhqk,bhkd->bhqd", p, vh).transpose(0, 2, 1, 3).reshape(bs, L, D)
        x = x + o @ params["wo"][j] + params["bo"][j]
        n = _layernorm(x, params["g2"][j], params["b2"][j])
        h = _new_gelu(n @ params["w1"][j] + params["b1f"][j])
        x = x + h @ params["w2"][j] + params["b2f"][j]
    return _layernorm(x, params["ln_out_g"], params["ln_out_b"])


# ---------------------------------------------------------------------------
# Deterministic params + demo
# ---------------------------------------------------------------------------
def init_params(key, *, vocab, d_model, d_middle, num_blocks):
    def nrm(k, shape, std=0.02):
        return std * jax.random.normal(k, shape, dtype=jnp.float32)

    keys = jax.random.split(key, 15)
    nb, D, Dm = num_blocks, d_model, d_middle
    return {
        "emb": nrm(keys[0], (vocab, D)),
        "g1": 1.0 + nrm(keys[1], (nb, 1, D)),
        "b1": nrm(keys[2], (nb, 1, D)),
        "wqkv": nrm(keys[3], (nb, D, 3 * D)),
        "bqkv": nrm(keys[4], (nb, 1, 3 * D)),
        "wo": nrm(keys[5], (nb, D, D)),
        "bo": nrm(keys[6], (nb, 1, D)),
        "g2": 1.0 + nrm(keys[7], (nb, 1, D)),
        "b2": nrm(keys[8], (nb, 1, D)),
        "w1": nrm(keys[9], (nb, D, Dm)),
        "b1f": nrm(keys[10], (nb, 1, Dm)),
        "w2": nrm(keys[11], (nb, Dm, D)),
        "b2f": nrm(keys[12], (nb, 1, D)),
        "ln_out_g": 1.0 + nrm(keys[13], (1, D)),
        "ln_out_b": nrm(keys[14], (1, D)),
    }


if __name__ == "__main__":
    bs, L = 2, 8
    vocab, d_model, d_middle, h, num_blocks = 64, 32, 64, 4, 2

    key = jax.random.PRNGKey(0)
    k_tok, k_par = jax.random.split(key)
    dec_inp = jax.random.randint(k_tok, (bs, L), 0, vocab, dtype=jnp.int32)
    params = init_params(k_par, vocab=vocab, d_model=d_model,
                         d_middle=d_middle, num_blocks=num_blocks)

    fwd = jax.jit(functools.partial(decoder_forward, d_model=d_model, num_heads=h))
    out = jax.block_until_ready(fwd(dec_inp, params))

    ref = decoder_ref(dec_inp, params, d_model=d_model, num_heads=h)
    assert out.shape == (bs, L, d_model)
    max_err = float(jnp.max(jnp.abs(out - ref)))
    assert jnp.allclose(out, ref, atol=2e-3, rtol=2e-3), max_err

    print("KERNEL_OK")
</pallas_src>

<mosaic_0001>
module attributes {stable_mosaic.version = 11 : i64} {
  func.func @decoder_stack_kernel(%arg0: i32, %arg1: i32, %arg2: memref<2x8x32xf32, #tpu.memory_space<vmem>>, %arg3: memref<1x8x32xf32, #tpu.memory_space<vmem>>, %arg4: memref<1x1x32xf32, #tpu.memory_space<vmem>>, %arg5: memref<1x1x32xf32, #tpu.memory_space<vmem>>, %arg6: memref<1x32x96xf32, #tpu.memory_space<vmem>>, %arg7: memref<1x1x96xf32, #tpu.memory_space<vmem>>, %arg8: memref<1x32x32xf32, #tpu.memory_space<vmem>>, %arg9: memref<1x1x32xf32, #tpu.memory_space<vmem>>, %arg10: memref<1x1x32xf32, #tpu.memory_space<vmem>>, %arg11: memref<1x1x32xf32, #tpu.memory_space<vmem>>, %arg12: memref<1x32x64xf32, #tpu.memory_space<vmem>>, %arg13: memref<1x1x64xf32, #tpu.memory_space<vmem>>, %arg14: memref<1x64x32xf32, #tpu.memory_space<vmem>>, %arg15: memref<1x1x32xf32, #tpu.memory_space<vmem>>, %arg16: memref<1x32xf32, #tpu.memory_space<vmem>>, %arg17: memref<1x32xf32, #tpu.memory_space<vmem>>, %arg18: memref<2x8x32xf32, #tpu.memory_space<vmem>>, %arg19: memref<16x32xf32, #tpu.memory_space<vmem>>, %arg20: memref<2x8x32xf32, #tpu.memory_space<vmem>>) attributes {dimension_semantics = [#tpu.dimension_semantics<parallel>, #tpu.dimension_semantics<arbitrary>], iteration_bounds = array<i64: 1, 2>, scalar_prefetch = 0 : i64, scratch_operands = 2 : i64, tpu.core_type = #tpu.core_type<tc>, window_params = [{transform_indices = @transform_0, window_bounds = array<i64: 2, 8, 32>}, {pipeline_mode = #tpu.pipeline_mode<synchronous>, transform_indices = @transform_1, window_bounds = array<i64: 1, 8, 32>}, {transform_indices = @transform_2, window_bounds = array<i64: 1, 1, 32>}, {transform_indices = @transform_3, window_bounds = array<i64: 1, 1, 32>}, {transform_indices = @transform_4, window_bounds = array<i64: 1, 32, 96>}, {transform_indices = @transform_5, window_bounds = array<i64: 1, 1, 96>}, {transform_indices = @transform_6, window_bounds = array<i64: 1, 32, 32>}, {transform_indices = @transform_7, window_bounds = array<i64: 1, 1, 32>}, {transform_indices = @transform_8, window_bounds = array<i64: 1, 1, 32>}, {transform_indices = @transform_9, window_bounds = array<i64: 1, 1, 32>}, {transform_indices = @transform_10, window_bounds = array<i64: 1, 32, 64>}, {transform_indices = @transform_11, window_bounds = array<i64: 1, 1, 64>}, {transform_indices = @transform_12, window_bounds = array<i64: 1, 64, 32>}, {transform_indices = @transform_13, window_bounds = array<i64: 1, 1, 32>}, {pipeline_mode = #tpu.pipeline_mode<synchronous>, transform_indices = @transform_14, window_bounds = array<i64: 1, 32>}, {pipeline_mode = #tpu.pipeline_mode<synchronous>, transform_indices = @transform_15, window_bounds = array<i64: 1, 32>}, {transform_indices = @transform_16, window_bounds = array<i64: 2, 8, 32>}]} {
    %c0_i32 = arith.constant 0 : i32
    %0 = arith.cmpi eq, %arg1, %c0_i32 : i32
    %1 = arith.extui %0 : i1 to i32
    %c0_i32_0 = arith.constant 0 : i32
    %2 = arith.cmpi ne, %1, %c0_i32_0 : i32
    scf.if %2 {
      %c0_90 = arith.constant 0 : index
      %c0_91 = arith.constant 0 : index
      %c0_92 = arith.constant 0 : index
      %194 = vector.load %arg2[%c0_90, %c0_91, %c0_92] : memref<2x8x32xf32, #tpu.memory_space<vmem>>, vector<2x8x32xf32>
      %cst_93 = arith.constant 5.65685415 : f32
      %195 = vector.broadcast %cst_93 : f32 to vector<2x8x32xf32>
      %196 = arith.mulf %194, %195 : vector<2x8x32xf32>
      %c0_94 = arith.constant 0 : index
      %c0_95 = arith.constant 0 : index
      %c0_96 = arith.constant 0 : index
      %197 = vector.load %arg3[%c0_94, %c0_95, %c0_96] : memref<1x8x32xf32, #tpu.memory_space<vmem>>, vector<1x8x32xf32>
      %198 = vector.shape_cast %197 : vector<1x8x32xf32> to vector<8x32xf32>
      %199 = vector.shape_cast %198 : vector<8x32xf32> to vector<1x8x32xf32>
      %200 = vector.broadcast %199 : vector<1x8x32xf32> to vector<2x8x32xf32>
      %201 = arith.addf %196, %200 : vector<2x8x32xf32>
      %202 = vector.shape_cast %201 : vector<2x8x32xf32> to vector<16x32xf32>
      %c0_97 = arith.constant 0 : index
      %c0_98 = arith.constant 0 : index
      %203 = vector.load %arg19[%c0_97, %c0_98] : memref<16x32xf32, #tpu.memory_space<vmem>>, vector<16x32xf32>
      tpu.vector_store %arg19[%c0_97, %c0_98], %202 {strides = array<i32>} : memref<16x32xf32, #tpu.memory_space<vmem>>, vector<16x32xf32>,
    } else {
    }
    %c0 = arith.constant 0 : index
    %c0_1 = arith.constant 0 : index
    %3 = vector.load %arg19[%c0, %c0_1] : memref<16x32xf32, #tpu.memory_space<vmem>>, vector<16x32xf32>
    %c0_2 = arith.constant 0 : index
    %c0_3 = arith.constant 0 : index
    %c0_4 = arith.constant 0 : index
    %4 = vector.load %arg4[%c0_2, %c0_3, %c0_4] : memref<1x1x32xf32, #tpu.memory_space<vmem>>, vector<1x1x32xf32>
    %5 = vector.shape_cast %4 : vector<1x1x32xf32> to vector<1x32xf32>
    %c0_5 = arith.constant 0 : index
    %c0_6 = arith.constant 0 : index
    %c0_7 = arith.constant 0 : index
    %6 = vector.load %arg5[%c0_5, %c0_6, %c0_7] : memref<1x1x32xf32, #tpu.memory_space<vmem>>, vector<1x1x32xf32>
    %7 = vector.shape_cast %6 : vector<1x1x32xf32> to vector<1x32xf32>
    %cst = arith.constant dense<0.000000e+00> : vector<16xf32>
    %8 = vector.multi_reduction <add>, %3, %cst [1] : vector<16x32xf32> to vector<16xf32>
    %9 = vector.shape_cast %8 : vector<16xf32> to vector<16x1xf32>
    %cst_8 = arith.constant 3.200000e+01 : f32
    %10 = vector.broadcast %cst_8 : f32 to vector<16x1xf32>
    %11 = arith.divf %9, %10 : vector<16x1xf32>
    %12 = vector.broadcast %11 : vector<16x1xf32> to vector<16x32xf32>
    %13 = arith.subf %3, %12 : vector<16x32xf32>
    %14 = arith.mulf %13, %13 : vector<16x32xf32>
    %cst_9 = arith.constant dense<0.000000e+00> : vector<16xf32>
    %15 = vector.multi_reduction <add>, %14, %cst_9 [1] : vector<16x32xf32> to vector<16xf32>
    %16 = vector.shape_cast %15 : vector<16xf32> to vector<16x1xf32>
    %cst_10 = arith.constant 3.200000e+01 : f32
    %17 = vector.broadcast %cst_10 : f32 to vector<16x1xf32>
    %18 = arith.divf %16, %17 : vector<16x1xf32>
    %19 = vector.broadcast %11 : vector<16x1xf32> to vector<16x32xf32>
    %20 = arith.subf %3, %19 : vector<16x32xf32>
    %cst_11 = arith.constant 9.99999974E-6 : f32
    %21 = vector.broadcast %cst_11 : f32 to vector<16x1xf32>
    %22 = arith.addf %18, %21 : vector<16x1xf32>
    %23 = math.rsqrt %22 : vector<16x1xf32>
    %24 = vector.broadcast %23 : vector<16x1xf32> to vector<16x32xf32>
    %25 = arith.mulf %20, %24 : vector<16x32xf32>
    %26 = vector.broadcast %5 : vector<1x32xf32> to vector<16x32xf32>
    %27 = arith.mulf %25, %26 : vector<16x32xf32>
    %28 = vector.broadcast %7 : vector<1x32xf32> to vector<16x32xf32>
    %29 = arith.addf %27, %28 : vector<16x32xf32>
    %c0_12 = arith.constant 0 : index
    %c0_13 = arith.constant 0 : index
    %c0_14 = arith.constant 0 : index
    %30 = vector.load %arg6[%c0_12, %c0_13, %c0_14] : memref<1x32x96xf32, #tpu.memory_space<vmem>>, vector<1x32x96xf32>
    %31 = vector.shape_cast %30 : vector<1x32x96xf32> to vector<32x96xf32>
    %cst_15 = arith.constant dense<0.000000e+00> : vector<16x96xf32>
    %32 = tpu.matmul %29, %31, %cst_15 {dimension_numbers = #tpu.dot_dimension_numbers<[1], [0], [0], [1], [0, 0, 1, 1], [], []>, precision = #tpu.contract_precision<fp32>} : vector<16x32xf32>, vector<32x96xf32>, vector<16x96xf32> -> vector<16x96xf32>
    %c0_16 = arith.constant 0 : index
    %c0_17 = arith.constant 0 : index
    %c0_18 = arith.constant 0 : index
    %33 = vector.load %arg7[%c0_16, %c0_17, %c0_18] : memref<1x1x96xf32, #tpu.memory_space<vmem>>, vector<1x1x96xf32>
    %34 = vector.shape_cast %33 : vector<1x1x96xf32> to vector<1x96xf32>
    %35 = vector.broadcast %34 : vector<1x96xf32> to vector<16x96xf32>
    %36 = arith.addf %32, %35 : vector<16x96xf32>
    %37 = vector.extract_strided_slice %36 {offsets = [0, 0], sizes = [16, 32], strides = [1, 1]} : vector<16x96xf32> to vector<16x32xf32>
    %38 = vector.shape_cast %37 : vector<16x32xf32> to vector<2x8x32xf32>
    %39 = vector.extract_strided_slice %36 {offsets = [0, 32], sizes = [16, 32], strides = [1, 1]} : vector<16x96xf32> to vector<16x32xf32>
    %40 = vector.shape_cast %39 : vector<16x32xf32> to vector<2x8x32xf32>
    %41 = vector.extract_strided_slice %36 {offsets = [0, 64], sizes = [16, 32], strides = [1, 1]} : vector<16x96xf32> to vector<16x32xf32>
    %42 = vector.shape_cast %41 : vector<16x32xf32> to vector<2x8x32xf32>
    %43 = tpu.iota {dimensions = array<i32: 1>} : vector<1x8x8xi32>
    %44 = tpu.iota {dimensions = array<i32: 2>} : vector<1x8x8xi32>
    %45 = arith.cmpi sle, %44, %43 : vector<1x8x8xi32>
    %46 = vector.extract_strided_slice %38 {offsets = [0, 0, 0], sizes = [2, 8, 8], strides = [1, 1, 1]} : vector<2x8x32xf32> to vector<2x8x8xf32>
    %47 = vector.extract_strided_slice %40 {offsets = [0, 0, 0], sizes = [2, 8, 8], strides = [1, 1, 1]} : vector<2x8x32xf32> to vector<2x8x8xf32>
    "tpu.trace_start"() <{level = 10 : i32, message = "bqd,bkd->bqk"}> : () -> ()
    %cst_19 = arith.constant dense<0.000000e+00> : vector<2x8x8xf32>
    %48 = tpu.matmul %46, %47, %cst_19 {dimension_numbers = #tpu.dot_dimension_numbers<[2], [2], [1], [1], [0, 0, 0, 1, 1, 1], [0], [0]>, precision = #tpu.contract_precision<fp32>} : vector<2x8x8xf32>, vector<2x8x8xf32>, vector<2x8x8xf32> -> vector<2x8x8xf32>
    %cst_20 = arith.constant -1.000000e+30 : f32
    "tpu.trace_stop"() : () -> ()
    %49 = vector.shape_cast %45 : vector<1x8x8xi1> to vector<1x8x8xi1>
    %50 = vector.broadcast %49 : vector<1x8x8xi1> to vector<2x8x8xi1>
    %51 = vector.broadcast %cst_20 : f32 to vector<2x8x8xf32>
    %52 = arith.select %50, %48, %51 : vector<2x8x8xi1>, vector<2x8x8xf32>
    %cst_21 = arith.constant dense<0xFF800000> : vector<2x8xf32>
    %53 = vector.multi_reduction <maximumf>, %52, %cst_21 [2] : vector<2x8x8xf32> to vector<2x8xf32>
    %54 = vector.shape_cast %53 : vector<2x8xf32> to vector<2x8x1xf32>
    %55 = vector.broadcast %54 : vector<2x8x1xf32> to vector<2x8x8xf32>
    %56 = arith.subf %52, %55 : vector<2x8x8xf32>
    %57 = math.exp %56 : vector<2x8x8xf32>
    %cst_22 = arith.constant dense<0.000000e+00> : vector<2x8xf32>
    %58 = vector.multi_reduction <add>, %57, %cst_22 [2] : vector<2x8x8xf32> to vector<2x8xf32>
    %59 = vector.shape_cast %58 : vector<2x8xf32> to vector<2x8x1xf32>
    %60 = tpu.reciprocal %59 {approx = true} : vector<2x8x1xf32> -> vector<2x8x1xf32>
    %61 = vector.broadcast %60 : vector<2x8x1xf32> to vector<2x8x8xf32>
    %62 = arith.mulf %57, %61 : vector<2x8x8xf32>
    %63 = vector.extract_strided_slice %42 {offsets = [0, 0, 0], sizes = [2, 8, 8], strides = [1, 1, 1]} : vector<2x8x32xf32> to vector<2x8x8xf32>
    "tpu.trace_start"() <{level = 10 : i32, message = "bqk,bkd->bqd"}> : () -> ()
    %cst_23 = arith.constant dense<0.000000e+00> : vector<2x8x8xf32>
    %64 = tpu.matmul %62, %63, %cst_23 {dimension_numbers = #tpu.dot_dimension_numbers<[2], [1], [1], [2], [0, 0, 0, 1, 1, 2], [0], [0]>, precision = #tpu.contract_precision<fp32>} : vector<2x8x8xf32>, vector<2x8x8xf32>, vector<2x8x8xf32> -> vector<2x8x8xf32>
    "tpu.trace_stop"() : () -> ()
    %c0_24 = arith.constant 0 : index
    %c0_25 = arith.constant 0 : index
    %c0_26 = arith.constant 0 : index
    %65 = vector.load %arg20[%c0_24, %c0_25, %c0_26] : memref<2x8x32xf32, #tpu.memory_space<vmem>>, vector<2x8x8xf32>
    tpu.vector_store %arg20[%c0_24, %c0_25, %c0_26], %64 {strides = array<i32>} : memref<2x8x32xf32, #tpu.memory_space<vmem>>, vector<2x8x8xf32>,
    %66 = vector.extract_strided_slice %38 {offsets = [0, 0, 8], sizes = [2, 8, 8], strides = [1, 1, 1]} : vector<2x8x32xf32> to vector<2x8x8xf32>
    %67 = vector.extract_strided_slice %40 {offsets = [0, 0, 8], sizes = [2, 8, 8], strides = [1, 1, 1]} : vector<2x8x32xf32> to vector<2x8x8xf32>
    "tpu.trace_start"() <{level = 10 : i32, message = "bqd,bkd->bqk"}> : () -> ()
    %cst_27 = arith.constant dense<0.000000e+00> : vector<2x8x8xf32>
    %68 = tpu.matmul %66, %67, %cst_27 {dimension_numbers = #tpu.dot_dimension_numbers<[2], [2], [1], [1], [0, 0, 0, 1, 1, 1], [0], [0]>, precision = #tpu.contract_precision<fp32>} : vector<2x8x8xf32>, vector<2x8x8xf32>, vector<2x8x8xf32> -> vector<2x8x8xf32>
    %cst_28 = arith.constant -1.000000e+30 : f32
    "tpu.trace_stop"() : () -> ()
    %69 = vector.shape_cast %45 : vector<1x8x8xi1> to vector<1x8x8xi1>
    %70 = vector.broadcast %69 : vector<1x8x8xi1> to vector<2x8x8xi1>
    %71 = vector.broadcast %cst_28 : f32 to vector<2x8x8xf32>
    %72 = arith.select %70, %68, %71 : vector<2x8x8xi1>, vector<2x8x8xf32>
    %cst_29 = arith.constant dense<0xFF800000> : vector<2x8xf32>
    %73 = vector.multi_reduction <maximumf>, %72, %cst_29 [2] : vector<2x8x8xf32> to vector<2x8xf32>
    %74 = vector.shape_cast %73 : vector<2x8xf32> to vector<2x8x1xf32>
    %75 = vector.broadcast %74 : vector<2x8x1xf32> to vector<2x8x8xf32>
    %76 = arith.subf %72, %75 : vector<2x8x8xf32>
    %77 = math.exp %76 : vector<2x8x8xf32>
    %cst_30 = arith.constant dense<0.000000e+00> : vector<2x8xf32>
    %78 = vector.multi_reduction <add>, %77, %cst_30 [2] : vector<2x8x8xf32> to vector<2x8xf32>
    %79 = vector.shape_cast %78 : vector<2x8xf32> to vector<2x8x1xf32>
    %80 = tpu.reciprocal %79 {approx = true} : vector<2x8x1xf32> -> vector<2x8x1xf32>
    %81 = vector.broadcast %80 : vector<2x8x1xf32> to vector<2x8x8xf32>
    %82 = arith.mulf %77, %81 : vector<2x8x8xf32>
    %83 = vector.extract_strided_slice %42 {offsets = [0, 0, 8], sizes = [2, 8, 8], strides = [1, 1, 1]} : vector<2x8x32xf32> to vector<2x8x8xf32>
    "tpu.trace_start"() <{level = 10 : i32, message = "bqk,bkd->bqd"}> : () -> ()
    %cst_31 = arith.constant dense<0.000000e+00> : vector<2x8x8xf32>
    %84 = tpu.matmul %82, %83, %cst_31 {dimension_numbers = #tpu.dot_dimension_numbers<[2], [1], [1], [2], [0, 0, 0, 1, 1, 2], [0], [0]>, precision = #tpu.contract_precision<fp32>} : vector<2x8x8xf32>, vector<2x8x8xf32>, vector<2x8x8xf32> -> vector<2x8x8xf32>
    "tpu.trace_stop"() : () -> ()
    %c0_32 = arith.constant 0 : index
    %c0_33 = arith.constant 0 : index
    %c8 = arith.constant 8 : index
    %85 = vector.load %arg20[%c0_32, %c0_33, %c8] : memref<2x8x32xf32, #tpu.memory_space<vmem>>, vector<2x8x8xf32>
    tpu.vector_store %arg20[%c0_32, %c0_33, %c8], %84 {strides = array<i32>} : memref<2x8x32xf32, #tpu.memory_space<vmem>>, vector<2x8x8xf32>,
    %86 = vector.extract_strided_slice %38 {offsets = [0, 0, 16], sizes = [2, 8, 8], strides = [1, 1, 1]} : vector<2x8x32xf32> to vector<2x8x8xf32>
    %87 = vector.extract_strided_slice %40 {offsets = [0, 0, 16], sizes = [2, 8, 8], strides = [1, 1, 1]} : vector<2x8x32xf32> to vector<2x8x8xf32>
    "tpu.trace_start"() <{level = 10 : i32, message = "bqd,bkd->bqk"}> : () -> ()
    %cst_34 = arith.constant dense<0.000000e+00> : vector<2x8x8xf32>
    %88 = tpu.matmul %86, %87, %cst_34 {dimension_numbers = #tpu.dot_dimension_numbers<[2], [2], [1], [1], [0, 0, 0, 1, 1, 1], [0], [0]>, precision = #tpu.contract_precision<fp32>} : vector<2x8x8xf32>, vector<2x8x8xf32>, vector<2x8x8xf32> -> vector<2x8x8xf32>
    %cst_35 = arith.constant -1.000000e+30 : f32
    "tpu.trace_stop"() : () -> ()
    %89 = vector.shape_cast %45 : vector<1x8x8xi1> to vector<1x8x8xi1>
    %90 = vector.broadcast %89 : vector<1x8x8xi1> to vector<2x8x8xi1>
    %91 = vector.broadcast %cst_35 : f32 to vector<2x8x8xf32>
    %92 = arith.select %90, %88, %91 : vector<2x8x8xi1>, vector<2x8x8xf32>
    %cst_36 = arith.constant dense<0xFF800000> : vector<2x8xf32>
    %93 = vector.multi_reduction <maximumf>, %92, %cst_36 [2] : vector<2x8x8xf32> to vector<2x8xf32>
    %94 = vector.shape_cast %93 : vector<2x8xf32> to vector<2x8x1xf32>
    %95 = vector.broadcast %94 : vector<2x8x1xf32> to vector<2x8x8xf32>
    %96 = arith.subf %92, %95 : vector<2x8x8xf32>
    %97 = math.exp %96 : vector<2x8x8xf32>
    %cst_37 = arith.constant dense<0.000000e+00> : vector<2x8xf32>
    %98 = vector.multi_reduction <add>, %97, %cst_37 [2] : vector<2x8x8xf32> to vector<2x8xf32>
    %99 = vector.shape_cast %98 : vector<2x8xf32> to vector<2x8x1xf32>
    %100 = tpu.reciprocal %99 {approx = true} : vector<2x8x1xf32> -> vector<2x8x1xf32>
    %101 = vector.broadcast %100 : vector<2x8x1xf32> to vector<2x8x8xf32>
    %102 = arith.mulf %97, %101 : vector<2x8x8xf32>
    %103 = vector.extract_strided_slice %42 {offsets = [0, 0, 16], sizes = [2, 8, 8], strides = [1, 1, 1]} : vector<2x8x32xf32> to vector<2x8x8xf32>
    "tpu.trace_start"() <{level = 10 : i32, message = "bqk,bkd->bqd"}> : () -> ()
    %cst_38 = arith.constant dense<0.000000e+00> : vector<2x8x8xf32>
    %104 = tpu.matmul %102, %103, %cst_38 {dimension_numbers = #tpu.dot_dimension_numbers<[2], [1], [1], [2], [0, 0, 0, 1, 1, 2], [0], [0]>, precision = #tpu.contract_precision<fp32>} : vector<2x8x8xf32>, vector<2x8x8xf32>, vector<2x8x8xf32> -> vector<2x8x8xf32>
    "tpu.trace_stop"() : () -> ()
    %c0_39 = arith.constant 0 : index
    %c0_40 = arith.constant 0 : index
    %c16 = arith.constant 16 : index
    %105 = vector.load %arg20[%c0_39, %c0_40, %c16] : memref<2x8x32xf32, #tpu.memory_space<vmem>>, vector<2x8x8xf32>
    tpu.vector_store %arg20[%c0_39, %c0_40, %c16], %104 {strides = array<i32>} : memref<2x8x32xf32, #tpu.memory_space<vmem>>, vector<2x8x8xf32>,
    %106 = vector.extract_strided_slice %38 {offsets = [0, 0, 24], sizes = [2, 8, 8], strides = [1, 1, 1]} : vector<2x8x32xf32> to vector<2x8x8xf32>
    %107 = vector.extract_strided_slice %40 {offsets = [0, 0, 24], sizes = [2, 8, 8], strides = [1, 1, 1]} : vector<2x8x32xf32> to vector<2x8x8xf32>
    "tpu.trace_start"() <{level = 10 : i32, message = "bqd,bkd->bqk"}> : () -> ()
    %cst_41 = arith.constant dense<0.000000e+00> : vector<2x8x8xf32>
    %108 = tpu.matmul %106, %107, %cst_41 {dimension_numbers = #tpu.dot_dimension_numbers<[2], [2], [1], [1], [0, 0, 0, 1, 1, 1], [0], [0]>, precision = #tpu.contract_precision<fp32>} : vector<2x8x8xf32>, vector<2x8x8xf32>, vector<2x8x8xf32> -> vector<2x8x8xf32>
    %cst_42 = arith.constant -1.000000e+30 : f32
    "tpu.trace_stop"() : () -> ()
    %109 = vector.shape_cast %45 : vector<1x8x8xi1> to vector<1x8x8xi1>
    %110 = vector.broadcast %109 : vector<1x8x8xi1> to vector<2x8x8xi1>
    %111 = vector.broadcast %cst_42 : f32 to vector<2x8x8xf32>
    %112 = arith.select %110, %108, %111 : vector<2x8x8xi1>, vector<2x8x8xf32>
    %cst_43 = arith.constant dense<0xFF800000> : vector<2x8xf32>
    %113 = vector.multi_reduction <maximumf>, %112, %cst_43 [2] : vector<2x8x8xf32> to vector<2x8xf32>
    %114 = vector.shape_cast %113 : vector<2x8xf32> to vector<2x8x1xf32>
    %115 = vector.broadcast %114 : vector<2x8x1xf32> to vector<2x8x8xf32>
    %116 = arith.subf %112, %115 : vector<2x8x8xf32>
    %117 = math.exp %116 : vector<2x8x8xf32>
    %cst_44 = arith.constant dense<0.000000e+00> : vector<2x8xf32>
    %118 = vector.multi_reduction <add>, %117, %cst_44 [2] : vector<2x8x8xf32> to vector<2x8xf32>
    %119 = vector.shape_cast %118 : vector<2x8xf32> to vector<2x8x1xf32>
    %120 = tpu.reciprocal %119 {approx = true} : vector<2x8x1xf32> -> vector<2x8x1xf32>
    %121 = vector.broadcast %120 : vector<2x8x1xf32> to vector<2x8x8xf32>
    %122 = arith.mulf %117, %121 : vector<2x8x8xf32>
    %123 = vector.extract_strided_slice %42 {offsets = [0, 0, 24], sizes = [2, 8, 8], strides = [1, 1, 1]} : vector<2x8x32xf32> to vector<2x8x8xf32>
    "tpu.trace_start"() <{level = 10 : i32, message = "bqk,bkd->bqd"}> : () -> ()
    %cst_45 = arith.constant dense<0.000000e+00> : vector<2x8x8xf32>
    %124 = tpu.matmul %122, %123, %cst_45 {dimension_numbers = #tpu.dot_dimension_numbers<[2], [1], [1], [2], [0, 0, 0, 1, 1, 2], [0], [0]>, precision = #tpu.contract_precision<fp32>} : vector<2x8x8xf32>, vector<2x8x8xf32>, vector<2x8x8xf32> -> vector<2x8x8xf32>
    "tpu.trace_stop"() : () -> ()
    %c0_46 = arith.constant 0 : index
    %c0_47 = arith.constant 0 : index
    %c24 = arith.constant 24 : index
    %125 = vector.load %arg20[%c0_46, %c0_47, %c24] : memref<2x8x32xf32, #tpu.memory_space<vmem>>, vector<2x8x8xf32>
    tpu.vector_store %arg20[%c0_46, %c0_47, %c24], %124 {strides = array<i32>} : memref<2x8x32xf32, #tpu.memory_space<vmem>>, vector<2x8x8xf32>,
    %c0_48 = arith.constant 0 : index
    %c0_49 = arith.constant 0 : index
    %c0_50 = arith.constant 0 : index
    %126 = vector.load %arg20[%c0_48, %c0_49, %c0_50] : memref<2x8x32xf32, #tpu.memory_space<vmem>>, vector<2x8x32xf32>
    %127 = vector.shape_cast %126 : vector<2x8x32xf32> to vector<16x32xf32>
    %c0_51 = arith.constant 0 : index
    %c0_52 = arith.constant 0 : index
    %c0_53 = arith.constant 0 : index
    %128 = vector.load %arg8[%c0_51, %c0_52, %c0_53] : memref<1x32x32xf32, #tpu.memory_space<vmem>>, vector<1x32x32xf32>
    %129 = vector.shape_cast %128 : vector<1x32x32xf32> to vector<32x32xf32>
    %cst_54 = arith.constant dense<0.000000e+00> : vector<16x32xf32>
    %130 = tpu.matmul %127, %129, %cst_54 {dimension_numbers = #tpu.dot_dimension_numbers<[1], [0], [0], [1], [0, 0, 1, 1], [], []>, precision = #tpu.contract_precision<fp32>} : vector<16x32xf32>, vector<32x32xf32>, vector<16x32xf32> -> vector<16x32xf32>
    %131 = arith.addf %3, %130 : vector<16x32xf32>
    %c0_55 = arith.constant 0 : index
    %c0_56 = arith.constant 0 : index
    %c0_57 = arith.constant 0 : index
    %132 = vector.load %arg9[%c0_55, %c0_56, %c0_57] : memref<1x1x32xf32, #tpu.memory_space<vmem>>, vector<1x1x32xf32>
    %133 = vector.shape_cast %132 : vector<1x1x32xf32> to vector<1x32xf32>
    %134 = vector.broadcast %133 : vector<1x32xf32> to vector<16x32xf32>
    %135 = arith.addf %131, %134 : vector<16x32xf32>
    %c0_58 = arith.constant 0 : index
    %c0_59 = arith.constant 0 : index
    %c0_60 = arith.constant 0 : index
    %136 = vector.load %arg10[%c0_58, %c0_59, %c0_60] : memref<1x1x32xf32, #tpu.memory_space<vmem>>, vector<1x1x32xf32>
    %137 = vector.shape_cast %136 : vector<1x1x32xf32> to vector<1x32xf32>
    %c0_61 = arith.constant 0 : index
    %c0_62 = arith.constant 0 : index
    %c0_63 = arith.constant 0 : index
    %138 = vector.load %arg11[%c0_61, %c0_62, %c0_63] : memref<1x1x32xf32, #tpu.memory_space<vmem>>, vector<1x1x32xf32>
    %139 = vector.shape_cast %138 : vector<1x1x32xf32> to vector<1x32xf32>
    %cst_64 = arith.constant dense<0.000000e+00> : vector<16xf32>
    %140 = vector.multi_reduction <add>, %135, %cst_64 [1] : vector<16x32xf32> to vector<16xf32>
    %141 = vector.shape_cast %140 : vector<16xf32> to vector<16x1xf32>
    %cst_65 = arith.constant 3.200000e+01 : f32
    %142 = vector.broadcast %cst_65 : f32 to vector<16x1xf32>
    %143 = arith.divf %141, %142 : vector<16x1xf32>
    %144 = vector.broadcast %143 : vector<16x1xf32> to vector<16x32xf32>
    %145 = arith.subf %135, %144 : vector<16x32xf32>
    %146 = arith.mulf %145, %145 : vector<16x32xf32>
    %cst_66 = arith.constant dense<0.000000e+00> : vector<16xf32>
    %147 = vector.multi_reduction <add>, %146, %cst_66 [1] : vector<16x32xf32> to vector<16xf32>
    %148 = vector.shape_cast %147 : vector<16xf32> to vector<16x1xf32>
    %cst_67 = arith.constant 3.200000e+01 : f32
    %149 = vector.broadcast %cst_67 : f32 to vector<16x1xf32>
    %150 = arith.divf %148, %149 : vector<16x1xf32>
    %151 = vector.broadcast %143 : vector<16x1xf32> to vector<16x32xf32>
    %152 = arith.subf %135, %151 : vector<16x32xf32>
    %cst_68 = arith.constant 9.99999974E-6 : f32
    %153 = vector.broadcast %cst_68 : f32 to vector<16x1xf32>
    %154 = arith.addf %150, %153 : vector<16x1xf32>
    %155 = math.rsqrt %154 : vector<16x1xf32>
    %156 = vector.broadcast %155 : vector<16x1xf32> to vector<16x32xf32>
    %157 = arith.mulf %152, %156 : vector<16x32xf32>
    %158 = vector.broadcast %137 : vector<1x32xf32> to vector<16x32xf32>
    %159 = arith.mulf %157, %158 : vector<16x32xf32>
    %160 = vector.broadcast %139 : vector<1x32xf32> to vector<16x32xf32>
    %161 = arith.addf %159, %160 : vector<16x32xf32>
    %c0_69 = arith.constant 0 : index
    %c0_70 = arith.constant 0 : index
    %c0_71 = arith.constant 0 : index
    %162 = vector.load %arg12[%c0_69, %c0_70, %c0_71] : memref<1x32x64xf32, #tpu.memory_space<vmem>>, vector<1x32x64xf32>
    %163 = vector.shape_cast %162 : vector<1x32x64xf32> to vector<32x64xf32>
    %cst_72 = arith.constant dense<0.000000e+00> : vector<16x64xf32>
    %164 = tpu.matmul %161, %163, %cst_72 {dimension_numbers = #tpu.dot_dimension_numbers<[1], [0], [0], [1], [0, 0, 1, 1], [], []>, precision = #tpu.contract_precision<fp32>} : vector<16x32xf32>, vector<32x64xf32>, vector<16x64xf32> -> vector<16x64xf32>
    %c0_73 = arith.constant 0 : index
    %c0_74 = arith.constant 0 : index
    %c0_75 = arith.constant 0 : index
    %165 = vector.load %arg13[%c0_73, %c0_74, %c0_75] : memref<1x1x64xf32, #tpu.memory_space<vmem>>, vector<1x1x64xf32>
    %166 = vector.shape_cast %165 : vector<1x1x64xf32> to vector<1x64xf32>
    %167 = vector.broadcast %166 : vector<1x64xf32> to vector<16x64xf32>
    %168 = arith.addf %164, %167 : vector<16x64xf32>
    %cst_76 = arith.constant 5.000000e-01 : f32
    %169 = vector.broadcast %cst_76 : f32 to vector<16x64xf32>
    %170 = arith.mulf %169, %168 : vector<16x64xf32>
    %cst_77 = arith.constant 4.471500e-02 : f32
    %171 = vector.broadcast %cst_77 : f32 to vector<16x64xf32>
    %172 = arith.mulf %171, %168 : vector<16x64xf32>
    %173 = arith.mulf %172, %168 : vector<16x64xf32>
    %174 = arith.mulf %173, %168 : vector<16x64xf32>
    %175 = arith.addf %168, %174 : vector<16x64xf32>
    %cst_78 = arith.constant 0.797884583 : f32
    %176 = vector.broadcast %cst_78 : f32 to vector<16x64xf32>
    %177 = arith.mulf %176, %175 : vector<16x64xf32>
    %178 = math.tanh %177 : vector<16x64xf32>
    %cst_79 = arith.constant 1.000000e+00 : f32
    %179 = vector.broadcast %cst_79 : f32 to vector<16x64xf32>
    %180 = arith.addf %179, %178 : vector<16x64xf32>
    %181 = arith.mulf %170, %180 : vector<16x64xf32>
    %c0_80 = arith.constant 0 : index
    %c0_81 = arith.constant 0 : index
    %c0_82 = arith.constant 0 : index
    %182 = vector.load %arg14[%c0_80, %c0_81, %c0_82] : memref<1x64x32xf32, #tpu.memory_space<vmem>>, vector<1x64x32xf32>
    %183 = vector.shape_cast %182 : vector<1x64x32xf32> to vector<64x32xf32>
    %cst_83 = arith.constant dense<0.000000e+00> : vector<16x32xf32>
    %184 = tpu.matmul %181, %183, %cst_83 {dimension_numbers = #tpu.dot_dimension_numbers<[1], [0], [0], [1], [0, 0, 1, 1], [], []>, precision = #tpu.contract_precision<fp32>} : vector<16x64xf32>, vector<64x32xf32>, vector<16x32xf32> -> vector<16x32xf32>
    %185 = arith.addf %135, %184 : vector<16x32xf32>
    %c0_84 = arith.constant 0 : index
    %c0_85 = arith.constant 0 : index
    %c0_86 = arith.constant 0 : index
    %186 = vector.load %arg15[%c0_84, %c0_85, %c0_86] : memref<1x1x32xf32, #tpu.memory_space<vmem>>, vector<1x1x32xf32>
    %187 = vector.shape_cast %186 : vector<1x1x32xf32> to vector<1x32xf32>
    %188 = vector.broadcast %187 : vector<1x32xf32> to vector<16x32xf32>
    %189 = arith.addf %185, %188 : vector<16x32xf32>
    %c0_87 = arith.constant 0 : index
    %c0_88 = arith.constant 0 : index
    %190 = vector.load %arg19[%c0_87, %c0_88] : memref<16x32xf32, #tpu.memory_space<vmem>>, vector<16x32xf32>
    tpu.vector_store %arg19[%c0_87, %c0_88], %189 {strides = array<i32>} : memref<16x32xf32, #tpu.memory_space<vmem>>, vector<16x32xf32>,
    %c1_i32 = arith.constant 1 : i32
    %191 = arith.cmpi eq, %arg1, %c1_i32 : i32
    %192 = arith.extui %191 : i1 to i32
    %c0_i32_89 = arith.constant 0 : i32
    %193 = arith.cmpi ne, %192, %c0_i32_89 : i32
    scf.if %193 {
      %c0_90 = arith.constant 0 : index
      %c0_91 = arith.constant 0 : index
      %194 = vector.load %arg16[%c0_90, %c0_91] : memref<1x32xf32, #tpu.memory_space<vmem>>, vector<1x32xf32>
      %c0_92 = arith.constant 0 : index
      %c0_93 = arith.constant 0 : index
      %195 = vector.load %arg17[%c0_92, %c0_93] : memref<1x32xf32, #tpu.memory_space<vmem>>, vector<1x32xf32>
      %cst_94 = arith.constant dense<0.000000e+00> : vector<16xf32>
      %196 = vector.multi_reduction <add>, %189, %cst_94 [1] : vector<16x32xf32> to vector<16xf32>
      %197 = vector.shape_cast %196 : vector<16xf32> to vector<16x1xf32>
      %cst_95 = arith.constant 3.200000e+01 : f32
      %198 = vector.broadcast %cst_95 : f32 to vector<16x1xf32>
      %199 = arith.divf %197, %198 : vector<16x1xf32>
      %200 = vector.broadcast %199 : vector<16x1xf32> to vector<16x32xf32>
      %201 = arith.subf %189, %200 : vector<16x32xf32>
      %202 = arith.mulf %201, %201 : vector<16x32xf32>
      %cst_96 = arith.constant dense<0.000000e+00> : vector<16xf32>
      %203 = vector.multi_reduction <add>, %202, %cst_96 [1] : vector<16x32xf32> to vector<16xf32>
      %204 = vector.shape_cast %203 : vector<16xf32> to vector<16x1xf32>
      %cst_97 = arith.constant 3.200000e+01 : f32
      %205 = vector.broadcast %cst_97 : f32 to vector<16x1xf32>
      %206 = arith.divf %204, %205 : vector<16x1xf32>
      %207 = vector.broadcast %199 : vector<16x1xf32> to vector<16x32xf32>
      %208 = arith.subf %189, %207 : vector<16x32xf32>
      %cst_98 = arith.constant 9.99999974E-6 : f32
      %209 = vector.broadcast %cst_98 : f32 to vector<16x1xf32>
      %210 = arith.addf %206, %209 : vector<16x1xf32>
      %211 = math.rsqrt %210 : vector<16x1xf32>
      %212 = vector.broadcast %211 : vector<16x1xf32> to vector<16x32xf32>
      %213 = arith.mulf %208, %212 : vector<16x32xf32>
      %214 = vector.broadcast %194 : vector<1x32xf32> to vector<16x32xf32>
      %215 = arith.mulf %213, %214 : vector<16x32xf32>
      %216 = vector.broadcast %195 : vector<1x32xf32> to vector<16x32xf32>
      %217 = arith.addf %215, %216 : vector<16x32xf32>
      %218 = vector.shape_cast %217 : vector<16x32xf32> to vector<2x8x32xf32>
      %c0_99 = arith.constant 0 : index
      %c0_100 = arith.constant 0 : index
      %c0_101 = arith.constant 0 : index
      %219 = vector.load %arg18[%c0_99, %c0_100, %c0_101] : memref<2x8x32xf32, #tpu.memory_space<vmem>>, vector<2x8x32xf32>
      tpu.vector_store %arg18[%c0_99, %c0_100, %c0_101], %218 {strides = array<i32>} : memref<2x8x32xf32, #tpu.memory_space<vmem>>, vector<2x8x32xf32>,
    } else {
    }
    return
  }
  func.func @transform_0(%arg0: i32, %arg1: i32) -> (i32, i32, i32) {
    %c0_i32 = arith.constant 0 : i32
    %c0_i32_0 = arith.constant 0 : i32
    %c0_i32_1 = arith.constant 0 : i32
    return %arg0, %c0_i32, %c0_i32_0 : i32, i32, i32
  }
  func.func @transform_1(%arg0: i32, %arg1: i32) -> (i32, i32, i32) {
    %c0_i32 = arith.constant 0 : i32
    %c0_i32_0 = arith.constant 0 : i32
    %c0_i32_1 = arith.constant 0 : i32
    %c0_i32_2 = arith.constant 0 : i32
    return %c0_i32, %c0_i32_0, %c0_i32_1 : i32, i32, i32
  }
  func.func @transform_2(%arg0: i32, %arg1: i32) -> (i32, i32, i32) {
    %c0_i32 = arith.constant 0 : i32
    %c0_i32_0 = arith.constant 0 : i32
    %c0_i32_1 = arith.constant 0 : i32
    return %arg1, %c0_i32, %c0_i32_0 : i32, i32, i32
  }
  func.func @transform_3(%arg0: i32, %arg1: i32) -> (i32, i32, i32) {
    %c0_i32 = arith.constant 0 : i32
    %c0_i32_0 = arith.constant 0 : i32
    %c0_i32_1 = arith.constant 0 : i32
    return %arg1, %c0_i32, %c0_i32_0 : i32, i32, i32
  }
  func.func @transform_4(%arg0: i32, %arg1: i32) -> (i32, i32, i32) {
    %c0_i32 = arith.constant 0 : i32
    %c0_i32_0 = arith.constant 0 : i32
    %c0_i32_1 = arith.constant 0 : i32
    return %arg1, %c0_i32, %c0_i32_0 : i32, i32, i32
  }
  func.func @transform_5(%arg0: i32, %arg1: i32) -> (i32, i32, i32) {
    %c0_i32 = arith.constant 0 : i32
    %c0_i32_0 = arith.constant 0 : i32
    %c0_i32_1 = arith.constant 0 : i32
    return %arg1, %c0_i32, %c0_i32_0 : i32, i32, i32
  }
  func.func @transform_6(%arg0: i32, %arg1: i32) -> (i32, i32, i32) {
    %c0_i32 = arith.constant 0 : i32
    %c0_i32_0 = arith.constant 0 : i32
    %c0_i32_1 = arith.constant 0 : i32
    return %arg1, %c0_i32, %c0_i32_0 : i32, i32, i32
  }
  func.func @transform_7(%arg0: i32, %arg1: i32) -> (i32, i32, i32) {
    %c0_i32 = arith.constant 0 : i32
    %c0_i32_0 = arith.constant 0 : i32
    %c0_i32_1 = arith.constant 0 : i32
    return %arg1, %c0_i32, %c0_i32_0 : i32, i32, i32
  }
  func.func @transform_8(%arg0: i32, %arg1: i32) -> (i32, i32, i32) {
    %c0_i32 = arith.constant 0 : i32
    %c0_i32_0 = arith.constant 0 : i32
    %c0_i32_1 = arith.constant 0 : i32
    return %arg1, %c0_i32, %c0_i32_0 : i32, i32, i32
  }
  func.func @transform_9(%arg0: i32, %arg1: i32) -> (i32, i32, i32) {
    %c0_i32 = arith.constant 0 : i32
    %c0_i32_0 = arith.constant 0 : i32
    %c0_i32_1 = arith.constant 0 : i32
    return %arg1, %c0_i32, %c0_i32_0 : i32, i32, i32
  }
  func.func @transform_10(%arg0: i32, %arg1: i32) -> (i32, i32, i32) {
    %c0_i32 = arith.constant 0 : i32
    %c0_i32_0 = arith.constant 0 : i32
    %c0_i32_1 = arith.constant 0 : i32
    return %arg1, %c0_i32, %c0_i32_0 : i32, i32, i32
  }
  func.func @transform_11(%arg0: i32, %arg1: i32) -> (i32, i32, i32) {
    %c0_i32 = arith.constant 0 : i32
    %c0_i32_0 = arith.constant 0 : i32
    %c0_i32_1 = arith.constant 0 : i32
    return %arg1, %c0_i32, %c0_i32_0 : i32, i32, i32
  }
  func.func @transform_12(%arg0: i32, %arg1: i32) -> (i32, i32, i32) {
    %c0_i32 = arith.constant 0 : i32
    %c0_i32_0 = arith.constant 0 : i32
    %c0_i32_1 = arith.constant 0 : i32
    return %arg1, %c0_i32, %c0_i32_0 : i32, i32, i32
  }
  func.func @transform_13(%arg0: i32, %arg1: i32) -> (i32, i32, i32) {
    %c0_i32 = arith.constant 0 : i32
    %c0_i32_0 = arith.constant 0 : i32
    %c0_i32_1 = arith.constant 0 : i32
    return %arg1, %c0_i32, %c0_i32_0 : i32, i32, i32
  }
  func.func @transform_14(%arg0: i32, %arg1: i32) -> (i32, i32) {
    %c0_i32 = arith.constant 0 : i32
    %c0_i32_0 = arith.constant 0 : i32
    %c0_i32_1 = arith.constant 0 : i32
    return %c0_i32, %c0_i32_0 : i32, i32
  }
  func.func @transform_15(%arg0: i32, %arg1: i32) -> (i32, i32) {
    %c0_i32 = arith.constant 0 : i32
    %c0_i32_0 = arith.constant 0 : i32
    %c0_i32_1 = arith.constant 0 : i32
    return %c0_i32, %c0_i32_0 : i32, i32
  }
  func.func @transform_16(%arg0: i32, %arg1: i32) -> (i32, i32, i32) {
    %c0_i32 = arith.constant 0 : i32
    %c0_i32_0 = arith.constant 0 : i32
    %c0_i32_1 = arith.constant 0 : i32
    return %arg0, %c0_i32, %c0_i32_0 : i32, i32, i32
  }
}

</mosaic_0001>

<llo_original>
// kernel: decoder_forward.1
$region0: #{decoder_forward.1}
  #allocation0 [shape = 'u32[]', space=smem, size = 0x4, offset = 0x4, fixed_abs, tag = 'smem constant byte address 0x4 - core index']
  #allocation1 [shape = 'u32[144,128]{1,0:T(1,128)}', space=vmem, size = 0x12000, scoped, tag = 'internal scratch']
  #allocation2 [shape = 'f32[16,32]{1,0:T(8,128)}', space=vmem, size = 0x2000, scoped, tag = 'scratch operand']
  #allocation3 [shape = 'f32[2,8,32]{2,1,0:T(8,128)}', space=vmem, size = 0x2000, scoped, tag = 'scratch operand']
  %s0 = inlined_call_operand.vmem [shape: f32[2,8,32], index: 0, kind: input, shape index: {}]
  %s1 = inlined_call_operand.vmem [shape: f32[1,8,32], index: 1, kind: input, shape index: {}]
  %s2 = inlined_call_operand.vmem [shape: f32[2,1,32], index: 2, kind: input, shape index: {}]
  %s3 = inlined_call_operand.vmem [shape: f32[2,1,32], index: 3, kind: input, shape index: {}]
  %s4 = inlined_call_operand.vmem [shape: f32[2,32,96], index: 4, kind: input, shape index: {}]
  %s5 = inlined_call_operand.vmem [shape: f32[2,1,96], index: 5, kind: input, shape index: {}]
  %s6 = inlined_call_operand.vmem [shape: f32[2,32,32], index: 6, kind: input, shape index: {}]
  %s7 = inlined_call_operand.vmem [shape: f32[2,1,32], index: 7, kind: input, shape index: {}]
  %s8 = inlined_call_operand.vmem [shape: f32[2,1,32], index: 8, kind: input, shape index: {}]
  %s9 = inlined_call_operand.vmem [shape: f32[2,1,32], index: 9, kind: input, shape index: {}]
  %s10 = inlined_call_operand.vmem [shape: f32[2,32,64], index: 10, kind: input, shape index: {}]
  %s11 = inlined_call_operand.vmem [shape: f32[2,1,64], index: 11, kind: input, shape index: {}]
  %s12 = inlined_call_operand.vmem [shape: f32[2,64,32], index: 12, kind: input, shape index: {}]
  %s13 = inlined_call_operand.vmem [shape: f32[2,1,32], index: 13, kind: input, shape index: {}]
  %s14 = inlined_call_operand.vmem [shape: f32[1,32], index: 14, kind: input, shape index: {}]
  %s15 = inlined_call_operand.vmem [shape: f32[1,32], index: 15, kind: input, shape index: {}]
  %s16 = inlined_call_operand.hbm [shape: f32[2,8,32], index: 16, kind: output, shape index: {}]
  %s17 = sld [smem:[#allocation0]]
  $region105: #{decoder_forward.1} parent=0
    _
  %s19 = ssub.s32 1, %s17
  %s20 = scalar_select 0, %s19, %s17
  $region1: #{decoder_forward.1} parent=0
    #allocation4 [shape = 'u8[8192]{0}', space=vmem, size = 0x2000, scoped, tag = 'output window, operand 0, single buffered']
    #allocation5 [shape = 's32[2]{0}', space=sflag, size = 0x8, scoped, tag = 'scoped memory for decoder_forward.1']
    %21 = vsyncpa [#allocation5], 0
    loop: start=0, step=1, limit=4
    $region2: #{decoder_forward.1} parent=1 // loop_pre_header
      _
    $region3: #{decoder_forward.1} parent=1 // loop_header
      %s23 = sphi 0, %s27
      %p24 = scmp.ge.s32.totalorder %s23, 4
      %s30 = sphi 0, %s42
      %s31 = sphi 0, %s38
      %s32 = sphi 0, %s30
      %s33 = sphi 0, %s31
      %s34 = sphi 0, %s32
      %s35 = sphi 0, %s33
      %s45 = sphi 0, %s47
      %s48 = sphi 0, %s45
      %s49 = sphi 0, %s48
      %s65 = sphi 0, %s49
      %s69 = sphi 0, %s69
      %s71 = sphi 0, %s69
      %s72 = sphi 0, %s71
      %s86 = sphi 0, %s72
      %s92 = sphi 0, %s94
      %s95 = sphi 0, %s92
      %s96 = sphi 0, %s95
      %s112 = sphi 0, %s96
      %s118 = sphi 0, %s120
      %s121 = sphi 0, %s118
      %s122 = sphi 0, %s121
      %s138 = sphi 0, %s122
      %s144 = sphi 0, %s146
      %s147 = sphi 0, %s144
      %s148 = sphi 0, %s147
      %s164 = sphi 0, %s148
      %s170 = sphi 0, %s172
      %s173 = sphi 0, %s170
      %s174 = sphi 0, %s173
      %s190 = sphi 0, %s174
      %s196 = sphi 0, %s198
      %s199 = sphi 0, %s196
      %s200 = sphi 0, %s199
      %s216 = sphi 0, %s200
      %s222 = sphi 0, %s224
      %s225 = sphi 0, %s222
      %s226 = sphi 0, %s225
      %s242 = sphi 0, %s226
      %s248 = sphi 0, %s250
      %s251 = sphi 0, %s248
      %s252 = sphi 0, %s251
      %s268 = sphi 0, %s252
      %s274 = sphi 0, %s276
      %s277 = sphi 0, %s274
      %s278 = sphi 0, %s277
      %s294 = sphi 0, %s278
      %s300 = sphi 0, %s302
      %s303 = sphi 0, %s300
      %s304 = sphi 0, %s303
      %s320 = sphi 0, %s304
      %s326 = sphi 0, %s328
      %s329 = sphi 0, %s326
      %s330 = sphi 0, %s329
      %s346 = sphi 0, %s330
      %s352 = sphi 0, %s354
      %s355 = sphi 0, %s352
      %s356 = sphi 0, %s355
      %s372 = sphi 0, %s356
      %s378 = sphi 0, %s380
      %s381 = sphi 0, %s378
      %s382 = sphi 0, %s381
      %s398 = sphi 0, %s382
      %s402 = sphi 0, %s402
      %s404 = sphi 0, %s402
      %s405 = sphi 0, %s404
      %s419 = sphi 0, %s405
      %s423 = sphi 0, %s423
      %s425 = sphi 0, %s423
      %s426 = sphi 0, %s425
      %s440 = sphi 0, %s426
      %s446 = sphi 0, %s448
      %s449 = sphi 0, %s446
      %s450 = sphi 0, %s449
      %s466 = sphi 0, %s450
    $region4: #{decoder_forward.1} parent=1 // loop_header_branch
      %26 = sbr.rel (%p24) target = $region8
    $region5: #{decoder_forward.1} parent=1 // loop_body
      %s28 = ssub.s32 %s23, 1
      %s29 = ssub.s32 %s23, 2
      %s36 = sadd.s32 1, %s31
      %p37 = scmp.ge.s32.totalorder %s36, 2
      %s38 = scalar_select %p37, 0, %s36
      %s39 = sadd.s32 1, %s30
      %s40 = scalar_select %p37, %s39, %s30
      %p41 = scmp.ge.s32.totalorder %s40, 1
      %s42 = scalar_select %p41, 0, %s40
      %s43 = ssub.s32 %s30, %s42
      %p44 = scmp.eq.s32.totalorder %s43, 0
      %s46 = sadd.s32 %s45, 1
      %s47 = scalar_select %p44, %s45, %s46
      %p50 = pneg %p44
      %p51 = scmp.eq.s32.totalorder %s23, 1
      %p52 = por %p50, %p51
      %p53 = scmp.ne.s32.totalorder %s45, %s48
      %p54 = scmp.eq.s32.totalorder %s23, 0
      %p55 = por %p53, %p54
      %p56 = scmp.ne.s32.totalorder %s45, %s48
      %p57 = scmp.eq.s32.totalorder %s28, 1
      %p58 = por %p56, %p57
      %p59 = scmp.ne.s32.totalorder %s48, %s49
      %p60 = scmp.eq.s32.totalorder %s28, 0
      %p61 = por %p59, %p60
      %p62 = scmp.ne.s32.totalorder %s48, %s49
      %p63 = scmp.eq.s32.totalorder %s29, 1
      %p64 = por %p62, %p63
      %p66 = scmp.ne.s32.totalorder %s49, %s65
      %p67 = scmp.eq.s32.totalorder %s29, 0
      %p68 = por %p66, %p67
      %s70 = sadd.s32 %s69, 1
      %p73 = scmp.eq.s32.totalorder %s23, 1
      %p74 = scmp.ne.s32.totalorder %s69, %s71
      %p75 = scmp.eq.s32.totalorder %s23, 0
      %p76 = por %p74, %p75
      %p77 = scmp.ne.s32.totalorder %s69, %s71
      %p78 = scmp.eq.s32.totalorder %s28, 1
      %p79 = por %p77, %p78
      %p80 = scmp.ne.s32.totalorder %s71, %s72
      %p81 = scmp.eq.s32.totalorder %s28, 0
      %p82 = por %p80, %p81
      %p83 = scmp.ne.s32.totalorder %s71, %s72
      %p84 = scmp.eq.s32.totalorder %s29, 1
      %p85 = por %p83, %p84
      %p87 = scmp.ne.s32.totalorder %s72, %s86
      %p88 = scmp.eq.s32.totalorder %s29, 0
      %p89 = por %p87, %p88
      %s90 = ssub.s32 %s31, %s38
      %p91 = scmp.eq.s32.totalorder %s90, 0
      %s93 = sadd.s32 %s92, 1
      %s94 = scalar_select %p91, %s92, %s93
      %p97 = pneg %p91
      %p98 = scmp.eq.s32.totalorder %s23, 1
      %p99 = por %p97, %p98
      %p100 = scmp.ne.s32.totalorder %s92, %s95
      %p101 = scmp.eq.s32.totalorder %s23, 0
      %p102 = por %p100, %p101
      %p103 = scmp.ne.s32.totalorder %s92, %s95
      %p104 = scmp.eq.s32.totalorder %s28, 1
      %p105 = por %p103, %p104
      %p106 = scmp.ne.s32.totalorder %s95, %s96
      %p107 = scmp.eq.s32.totalorder %s28, 0
      %p108 = por %p106, %p107
      %p109 = scmp.ne.s32.totalorder %s95, %s96
      %p110 = scmp.eq.s32.totalorder %s29, 1
      %p111 = por %p109, %p110
      %p113 = scmp.ne.s32.totalorder %s96, %s112
      %p114 = scmp.eq.s32.totalorder %s29, 0
      %p115 = por %p113, %p114
      %s116 = ssub.s32 %s31, %s38
      %p117 = scmp.eq.s32.totalorder %s116, 0
      %s119 = sadd.s32 %s118, 1
      %s120 = scalar_select %p117, %s118, %s119
      %p123 = pneg %p117
      %p124 = scmp.eq.s32.totalorder %s23, 1
      %p125 = por %p123, %p124
      %p126 = scmp.ne.s32.totalorder %s118, %s121
      %p127 = scmp.eq.s32.totalorder %s23, 0
      %p128 = por %p126, %p127
      %p129 = scmp.ne.s32.totalorder %s118, %s121
      %p130 = scmp.eq.s32.totalorder %s28, 1
      %p131 = por %p129, %p130
      %p132 = scmp.ne.s32.totalorder %s121, %s122
      %p133 = scmp.eq.s32.totalorder %s28, 0
      %p134 = por %p132, %p133
      %p135 = scmp.ne.s32.totalorder %s121, %s122
      %p136 = scmp.eq.s32.totalorder %s29, 1
      %p137 = por %p135, %p136
      %p139 = scmp.ne.s32.totalorder %s122, %s138
      %p140 = scmp.eq.s32.totalorder %s29, 0
      %p141 = por %p139, %p140
      %s142 = ssub.s32 %s31, %s38
      %p143 = scmp.eq.s32.totalorder %s142, 0
      %s145 = sadd.s32 %s144, 1
      %s146 = scalar_select %p143, %s144, %s145
      %p149 = pneg %p143
      %p150 = scmp.eq.s32.totalorder %s23, 1
      %p151 = por %p149, %p150
      %p152 = scmp.ne.s32.totalorder %s144, %s147
      %p153 = scmp.eq.s32.totalorder %s23, 0
      %p154 = por %p152, %p153
      %p155 = scmp.ne.s32.totalorder %s144, %s147
      %p156 = scmp.eq.s32.totalorder %s28, 1
      %p157 = por %p155, %p156
      %p158 = scmp.ne.s32.totalorder %s147, %s148
      %p159 = scmp.eq.s32.totalorder %s28, 0
      %p160 = por %p158, %p159
      %p161 = scmp.ne.s32.totalorder %s147, %s148
      %p162 = scmp.eq.s32.totalorder %s29, 1
      %p163 = por %p161, %p162
      %p165 = scmp.ne.s32.totalorder %s148, %s164
      %p166 = scmp.eq.s32.totalorder %s29, 0
      %p167 = por %p165, %p166
      %s168 = ssub.s32 %s31, %s38
      %p169 = scmp.eq.s32.totalorder %s168, 0
      %s171 = sadd.s32 %s170, 1
      %s172 = scalar_select %p169, %s170, %s171
      %p175 = pneg %p169
      %p176 = scmp.eq.s32.totalorder %s23, 1
      %p177 = por %p175, %p176
      %p178 = scmp.ne.s32.totalorder %s170, %s173
      %p179 = scmp.eq.s32.totalorder %s23, 0
      %p180 = por %p178, %p179
      %p181 = scmp.ne.s32.totalorder %s170, %s173
      %p182 = scmp.eq.s32.totalorder %s28, 1
      %p183 = por %p181, %p182
      %p184 = scmp.ne.s32.totalorder %s173, %s174
      %p185 = scmp.eq.s32.totalorder %s28, 0
      %p186 = por %p184, %p185
      %p187 = scmp.ne.s32.totalorder %s173, %s174
      %p188 = scmp.eq.s32.totalorder %s29, 1
      %p189 = por %p187, %p188
      %p191 = scmp.ne.s32.totalorder %s174, %s190
      %p192 = scmp.eq.s32.totalorder %s29, 0
      %p193 = por %p191, %p192
      %s194 = ssub.s32 %s31, %s38
      %p195 = scmp.eq.s32.totalorder %s194, 0
      %s197 = sadd.s32 %s196, 1
      %s198 = scalar_select %p195, %s196, %s197
      %p201 = pneg %p195
      %p202 = scmp.eq.s32.totalorder %s23, 1
      %p203 = por %p201, %p202
      %p204 = scmp.ne.s32.totalorder %s196, %s199
      %p205 = scmp.eq.s32.totalorder %s23, 0
      %p206 = por %p204, %p205
      %p207 = scmp.ne.s32.totalorder %s196, %s199
      %p208 = scmp.eq.s32.totalorder %s28, 1
      %p209 = por %p207, %p208
      %p210 = scmp.ne.s32.totalorder %s199, %s200
      %p211 = scmp.eq.s32.totalorder %s28, 0
      %p212 = por %p210, %p211
      %p213 = scmp.ne.s32.totalorder %s199, %s200
      %p214 = scmp.eq.s32.totalorder %s29, 1
      %p215 = por %p213, %p214
      %p217 = scmp.ne.s32.totalorder %s200, %s216
      %p218 = scmp.eq.s32.totalorder %s29, 0
      %p219 = por %p217, %p218
      %s220 = ssub.s32 %s31, %s38
      %p221 = scmp.eq.s32.totalorder %s220, 0
      %s223 = sadd.s32 %s222, 1
      %s224 = scalar_select %p221, %s222, %s223
      %p227 = pneg %p221
      %p228 = scmp.eq.s32.totalorder %s23, 1
      %p229 = por %p227, %p228
      %p230 = scmp.ne.s32.totalorder %s222, %s225
      %p231 = scmp.eq.s32.totalorder %s23, 0
      %p232 = por %p230, %p231
      %p233 = scmp.ne.s32.totalorder %s222, %s225
      %p234 = scmp.eq.s32.totalorder %s28, 1
      %p235 = por %p233, %p234
      %p236 = scmp.ne.s32.totalorder %s225, %s226
      %p237 = scmp.eq.s32.totalorder %s28, 0
      %p238 = por %p236, %p237
      %p239 = scmp.ne.s32.totalorder %s225, %s226
      %p240 = scmp.eq.s32.totalorder %s29, 1
      %p241 = por %p239, %p240
      %p243 = scmp.ne.s32.totalorder %s226, %s242
      %p244 = scmp.eq.s32.totalorder %s29, 0
      %p245 = por %p243, %p244
      %s246 = ssub.s32 %s31, %s38
      %p247 = scmp.eq.s32.totalorder %s246, 0
      %s249 = sadd.s32 %s248, 1
      %s250 = scalar_select %p247, %s248, %s249
      %p253 = pneg %p247
      %p254 = scmp.eq.s32.totalorder %s23, 1
      %p255 = por %p253, %p254
      %p256 = scmp.ne.s32.totalorder %s248, %s251
      %p257 = scmp.eq.s32.totalorder %s23, 0
      %p258 = por %p256, %p257
      %p259 = scmp.ne.s32.totalorder %s248, %s251
      %p260 = scmp.eq.s32.totalorder %s28, 1
      %p261 = por %p259, %p260
      %p262 = scmp.ne.s32.totalorder %s251, %s252
      %p263 = scmp.eq.s32.totalorder %s28, 0
      %p264 = por %p262, %p263
      %p265 = scmp.ne.s32.totalorder %s251, %s252
      %p266 = scmp.eq.s32.totalorder %s29, 1
      %p267 = por %p265, %p266
      %p269 = scmp.ne.s32.totalorder %s252, %s268
      %p270 = scmp.eq.s32.totalorder %s29, 0
      %p271 = por %p269, %p270
      %s272 = ssub.s32 %s31, %s38
      %p273 = scmp.eq.s32.totalorder %s272, 0
      %s275 = sadd.s32 %s274, 1
      %s276 = scalar_select %p273, %s274, %s275
      %p279 = pneg %p273
      %p280 = scmp.eq.s32.totalorder %s23, 1
      %p281 = por %p279, %p280
      %p282 = scmp.ne.s32.totalorder %s274, %s277
      %p283 = scmp.eq.s32.totalorder %s23, 0
      %p284 = por %p282, %p283
      %p285 = scmp.ne.s32.totalorder %s274, %s277
      %p286 = scmp.eq.s32.totalorder %s28, 1
      %p287 = por %p285, %p286
      %p288 = scmp.ne.s32.totalorder %s277, %s278
      %p289 = scmp.eq.s32.totalorder %s28, 0
      %p290 = por %p288, %p289
      %p291 = scmp.ne.s32.totalorder %s277, %s278
      %p292 = scmp.eq.s32.totalorder %s29, 1
      %p293 = por %p291, %p292
      %p295 = scmp.ne.s32.totalorder %s278, %s294
      %p296 = scmp.eq.s32.totalorder %s29, 0
      %p297 = por %p295, %p296
      %s298 = ssub.s32 %s31, %s38
      %p299 = scmp.eq.s32.totalorder %s298, 0
      %s301 = sadd.s32 %s300, 1
      %s302 = scalar_select %p299, %s300, %s301
      %p305 = pneg %p299
      %p306 = scmp.eq.s32.totalorder %s23, 1
      %p307 = por %p305, %p306
      %p308 = scmp.ne.s32.totalorder %s300, %s303
      %p309 = scmp.eq.s32.totalorder %s23, 0
      %p310 = por %p308, %p309
      %p311 = scmp.ne.s32.totalorder %s300, %s303
      %p312 = scmp.eq.s32.totalorder %s28, 1
      %p313 = por %p311, %p312
      %p314 = scmp.ne.s32.totalorder %s303, %s304
      %p315 = scmp.eq.s32.totalorder %s28, 0
      %p316 = por %p314, %p315
      %p317 = scmp.ne.s32.totalorder %s303, %s304
      %p318 = scmp.eq.s32.totalorder %s29, 1
      %p319 = por %p317, %p318
      %p321 = scmp.ne.s32.totalorder %s304, %s320
      %p322 = scmp.eq.s32.totalorder %s29, 0
      %p323 = por %p321, %p322
      %s324 = ssub.s32 %s31, %s38
      %p325 = scmp.eq.s32.totalorder %s324, 0
      %s327 = sadd.s32 %s326, 1
      %s328 = scalar_select %p325, %s326, %s327
      %p331 = pneg %p325
      %p332 = scmp.eq.s32.totalorder %s23, 1
      %p333 = por %p331, %p332
      %p334 = scmp.ne.s32.totalorder %s326, %s329
      %p335 = scmp.eq.s32.totalorder %s23, 0
      %p336 = por %p334, %p335
      %p337 = scmp.ne.s32.totalorder %s326, %s329
      %p338 = scmp.eq.s32.totalorder %s28, 1
      %p339 = por %p337, %p338
      %p340 = scmp.ne.s32.totalorder %s329, %s330
      %p341 = scmp.eq.s32.totalorder %s28, 0
      %p342 = por %p340, %p341
      %p343 = scmp.ne.s32.totalorder %s329, %s330
      %p344 = scmp.eq.s32.totalorder %s29, 1
      %p345 = por %p343, %p344
      %p347 = scmp.ne.s32.totalorder %s330, %s346
      %p348 = scmp.eq.s32.totalorder %s29, 0
      %p349 = por %p347, %p348
      %s350 = ssub.s32 %s31, %s38
      %p351 = scmp.eq.s32.totalorder %s350, 0
      %s353 = sadd.s32 %s352, 1
      %s354 = scalar_select %p351, %s352, %s353
      %p357 = pneg %p351
      %p358 = scmp.eq.s32.totalorder %s23, 1
      %p359 = por %p357, %p358
      %p360 = scmp.ne.s32.totalorder %s352, %s355
      %p361 = scmp.eq.s32.totalorder %s23, 0
      %p362 = por %p360, %p361
      %p363 = scmp.ne.s32.totalorder %s352, %s355
      %p364 = scmp.eq.s32.totalorder %s28, 1
      %p365 = por %p363, %p364
      %p366 = scmp.ne.s32.totalorder %s355, %s356
      %p367 = scmp.eq.s32.totalorder %s28, 0
      %p368 = por %p366, %p367
      %p369 = scmp.ne.s32.totalorder %s355, %s356
      %p370 = scmp.eq.s32.totalorder %s29, 1
      %p371 = por %p369, %p370
      %p373 = scmp.ne.s32.totalorder %s356, %s372
      %p374 = scmp.eq.s32.totalorder %s29, 0
      %p375 = por %p373, %p374
      %s376 = ssub.s32 %s31, %s38
      %p377 = scmp.eq.s32.totalorder %s376, 0
      %s379 = sadd.s32 %s378, 1
      %s380 = scalar_select %p377, %s378, %s379
      %p383 = pneg %p377
      %p384 = scmp.eq.s32.totalorder %s23, 1
      %p385 = por %p383, %p384
      %p386 = scmp.ne.s32.totalorder %s378, %s381
      %p387 = scmp.eq.s32.totalorder %s23, 0
      %p388 = por %p386, %p387
      %p389 = scmp.ne.s32.totalorder %s378, %s381
      %p390 = scmp.eq.s32.totalorder %s28, 1
      %p391 = por %p389, %p390
      %p392 = scmp.ne.s32.totalorder %s381, %s382
      %p393 = scmp.eq.s32.totalorder %s28, 0
      %p394 = por %p392, %p393
      %p395 = scmp.ne.s32.totalorder %s381, %s382
      %p396 = scmp.eq.s32.totalorder %s29, 1
      %p397 = por %p395, %p396
      %p399 = scmp.ne.s32.totalorder %s382, %s398
      %p400 = scmp.eq.s32.totalorder %s29, 0
      %p401 = por %p399, %p400
      %s403 = sadd.s32 %s402, 1
      %p406 = scmp.eq.s32.totalorder %s23, 1
      %p407 = scmp.ne.s32.totalorder %s402, %s404
      %p408 = scmp.eq.s32.totalorder %s23, 0
      %p409 = por %p407, %p408
      %p410 = scmp.ne.s32.totalorder %s402, %s404
      %p411 = scmp.eq.s32.totalorder %s28, 1
      %p412 = por %p410, %p411
      %p413 = scmp.ne.s32.totalorder %s404, %s405
      %p414 = scmp.eq.s32.totalorder %s28, 0
      %p415 = por %p413, %p414
      %p416 = scmp.ne.s32.totalorder %s404, %s405
      %p417 = scmp.eq.s32.totalorder %s29, 1
      %p418 = por %p416, %p417
      %p420 = scmp.ne.s32.totalorder %s405, %s419
      %p421 = scmp.eq.s32.totalorder %s29, 0
      %p422 = por %p420, %p421
      %s424 = sadd.s32 %s423, 1
      %p427 = scmp.eq.s32.totalorder %s23, 1
      %p428 = scmp.ne.s32.totalorder %s423, %s425
      %p429 = scmp.eq.s32.totalorder %s23, 0
      %p430 = por %p428, %p429
      %p431 = scmp.ne.s32.totalorder %s423, %s425
      %p432 = scmp.eq.s32.totalorder %s28, 1
      %p433 = por %p431, %p432
      %p434 = scmp.ne.s32.totalorder %s425, %s426
      %p435 = scmp.eq.s32.totalorder %s28, 0
      %p436 = por %p434, %p435
      %p437 = scmp.ne.s32.totalorder %s425, %s426
      %p438 = scmp.eq.s32.totalorder %s29, 1
      %p439 = por %p437, %p438
      %p441 = scmp.ne.s32.totalorder %s426, %s440
      %p442 = scmp.eq.s32.totalorder %s29, 0
      %p443 = por %p441, %p442
      %s444 = ssub.s32 %s30, %s42
      %p445 = scmp.eq.s32.totalorder %s444, 0
      %s447 = sadd.s32 %s446, 1
      %s448 = scalar_select %p445, %s446, %s447
      %p451 = pneg %p445
      %p452 = scmp.eq.s32.totalorder %s23, 1
      %p453 = por %p451, %p452
      %p454 = scmp.ne.s32.totalorder %s446, %s449
      %p455 = scmp.eq.s32.totalorder %s23, 0
      %p456 = por %p454, %p455
      %p457 = scmp.ne.s32.totalorder %s446, %s449
      %p458 = scmp.eq.s32.totalorder %s28, 1
      %p459 = por %p457, %p458
      %p460 = scmp.ne.s32.totalorder %s449, %s450
      %p461 = scmp.eq.s32.totalorder %s28, 0
      %p462 = por %p460, %p461
      %p463 = scmp.ne.s32.totalorder %s449, %s450
      %p464 = scmp.eq.s32.totalorder %s29, 1
      %p465 = por %p463, %p464
      %p467 = scmp.ne.s32.totalorder %s450, %s466
      %p468 = scmp.eq.s32.totalorder %s29, 0
      %p469 = por %p467, %p468
      %p470 = scmp.le.s32.totalorder 1, %s23
      %p471 = scmp.lt.s32.totalorder %s23, 3
      %p472 = pnand %p470, %p471
      %p473 = pneg %p472
      // Predicated region
      $region9: #{decoder_forward.1} parent=5 // pred_check
        _
      $region10: #{decoder_forward.1} parent=5 // pred_check_branch
        %475 = sbr.rel (%p472) target = $region12
      $region11: #{decoder_forward.1} parent=5 // pred_region
        %s476 = ssub.s32 %s23, 1
        // Predicated region
        $region13: #{decoder_forward.1} parent=11 // pred_check
          %p477 = pneg %p61
        $region14: #{decoder_forward.1} parent=11 // pred_check_branch
          %479 = sbr.rel (%p477) target = $region16
        $region15: #{decoder_forward.1} parent=11 // pred_region
          %s480 = smul.u32 2, %s32
          %p481 = scmp.lt.s32.totalorder %s480, 1
          %s482 = scalar_select %p481, %s480, 1
          %s483 = smul.addr %s482, 8
          %s484 = scalar_lea.vmem %s0, %s483
          %s485 = smul.u32 2, %s32
        $region16: #{decoder_forward.1} parent=11 // pred_fallthru
          _
        // Predicated region
        $region17: #{decoder_forward.1} parent=11 // pred_check
          %p486 = pneg %p82
        $region18: #{decoder_forward.1} parent=11 // pred_check_branch
          %488 = sbr.rel (%p486) target = $region20
        $region19: #{decoder_forward.1} parent=11 // pred_region
          _
        $region20: #{decoder_forward.1} parent=11 // pred_fallthru
          _
        // Predicated region
        $region21: #{decoder_forward.1} parent=11 // pred_check
          %p489 = pneg %p415
        $region22: #{decoder_forward.1} parent=11 // pred_check_branch
          %491 = sbr.rel (%p489) target = $region24
        $region23: #{decoder_forward.1} parent=11 // pred_region
          _
        $region24: #{decoder_forward.1} parent=11 // pred_fallthru
          _
        // Predicated region
        $region25: #{decoder_forward.1} parent=11 // pred_check
          %p492 = pneg %p436
        $region26: #{decoder_forward.1} parent=11 // pred_check_branch
          %494 = sbr.rel (%p492) target = $region28
        $region27: #{decoder_forward.1} parent=11 // pred_region
          _
        $region28: #{decoder_forward.1} parent=11 // pred_fallthru
          _
      $region12: #{decoder_forward.1} parent=5 // pred_fallthru
        _
      %p495 = scmp.lt.s32.totalorder %s23, 2
      // Predicated region
      $region29: #{decoder_forward.1} parent=5 // pred_check
        %p496 = pneg %p495
      $region30: #{decoder_forward.1} parent=5 // pred_check_branch
        %498 = sbr.rel (%p496) target = $region32
      $region31: #{decoder_forward.1} parent=5 // pred_region
        // Predicated region
        $region33: #{decoder_forward.1} parent=31 // pred_check
          %p499 = pneg %p102
        $region34: #{decoder_forward.1} parent=31 // pred_check_branch
          %501 = sbr.rel (%p499) target = $region36
        $region35: #{decoder_forward.1} parent=31 // pred_region
          %p502 = scmp.lt.s32.totalorder %s31, 1
          %s503 = scalar_select %p502, %s31, 1
          %s504 = scalar_lea.vmem %s2, %s503
        $region36: #{decoder_forward.1} parent=31 // pred_fallthru
          _
        // Predicated region
        $region37: #{decoder_forward.1} parent=31 // pred_check
          %p505 = pneg %p128
        $region38: #{decoder_forward.1} parent=31 // pred_check_branch
          %507 = sbr.rel (%p505) target = $region40
        $region39: #{decoder_forward.1} parent=31 // pred_region
          %p508 = scmp.lt.s32.totalorder %s31, 1
          %s509 = scalar_select %p508, %s31, 1
          %s510 = scalar_lea.vmem %s3, %s509
        $region40: #{decoder_forward.1} parent=31 // pred_fallthru
          _
        // Predicated region
        $region41: #{decoder_forward.1} parent=31 // pred_check
          %p511 = pneg %p154
        $region42: #{decoder_forward.1} parent=31 // pred_check_branch
          %513 = sbr.rel (%p511) target = $region44
        $region43: #{decoder_forward.1} parent=31 // pred_region
          %p514 = scmp.lt.s32.totalorder %s31, 1
          %s515 = scalar_select %p514, %s31, 1
          %s516 = smul.addr %s515, 4
          %s517 = smul.addr %s516, 8
          %s518 = scalar_lea.vmem %s4, %s517
        $region44: #{decoder_forward.1} parent=31 // pred_fallthru
          _
        // Predicated region
        $region45: #{decoder_forward.1} parent=31 // pred_check
          %p519 = pneg %p180
        $region46: #{decoder_forward.1} parent=31 // pred_check_branch
          %521 = sbr.rel (%p519) target = $region48
        $region47: #{decoder_forward.1} parent=31 // pred_region
          %p522 = scmp.lt.s32.totalorder %s31, 1
          %s523 = scalar_select %p522, %s31, 1
          %s524 = scalar_lea.vmem %s5, %s523
        $region48: #{decoder_forward.1} parent=31 // pred_fallthru
          _
        // Predicated region
        $region49: #{decoder_forward.1} parent=31 // pred_check
          %p525 = pneg %p206
        $region50: #{decoder_forward.1} parent=31 // pred_check_branch
          %527 = sbr.rel (%p525) target = $region52
        $region51: #{decoder_forward.1} parent=31 // pred_region
          %p528 = scmp.lt.s32.totalorder %s31, 1
          %s529 = scalar_select %p528, %s31, 1
          %s530 = smul.addr %s529, 4
          %s531 = smul.addr %s530, 8
          %s532 = scalar_lea.vmem %s6, %s531
        $region52: #{decoder_forward.1} parent=31 // pred_fallthru
          _
        // Predicated region
        $region53: #{decoder_forward.1} parent=31 // pred_check
          %p533 = pneg %p232
        $region54: #{decoder_forward.1} parent=31 // pred_check_branch
          %535 = sbr.rel (%p533) target = $region56
        $region55: #{decoder_forward.1} parent=31 // pred_region
          %p536 = scmp.lt.s32.totalorder %s31, 1
          %s537 = scalar_select %p536, %s31, 1
          %s538 = scalar_lea.vmem %s7, %s537
        $region56: #{decoder_forward.1} parent=31 // pred_fallthru
          _
        // Predicated region
        $region57: #{decoder_forward.1} parent=31 // pred_check
          %p539 = pneg %p258
        $region58: #{decoder_forward.1} parent=31 // pred_check_branch
          %541 = sbr.rel (%p539) target = $region60
        $region59: #{decoder_forward.1} parent=31 // pred_region
          %p542 = scmp.lt.s32.totalorder %s31, 1
          %s543 = scalar_select %p542, %s31, 1
          %s544 = scalar_lea.vmem %s8, %s543
        $region60: #{decoder_forward.1} parent=31 // pred_fallthru
          _
        // Predicated region
        $region61: #{decoder_forward.1} parent=31 // pred_check
          %p545 = pneg %p284
        $region62: #{decoder_forward.1} parent=31 // pred_check_branch
          %547 = sbr.rel (%p545) target = $region64
        $region63: #{decoder_forward.1} parent=31 // pred_region
          %p548 = scmp.lt.s32.totalorder %s31, 1
          %s549 = scalar_select %p548, %s31, 1
          %s550 = scalar_lea.vmem %s9, %s549
        $region64: #{decoder_forward.1} parent=31 // pred_fallthru
          _
        // Predicated region
        $region65: #{decoder_forward.1} parent=31 // pred_check
          %p551 = pneg %p310
        $region66: #{decoder_forward.1} parent=31 // pred_check_branch
          %553 = sbr.rel (%p551) target = $region68
        $region67: #{decoder_forward.1} parent=31 // pred_region
          %p554 = scmp.lt.s32.totalorder %s31, 1
          %s555 = scalar_select %p554, %s31, 1
          %s556 = smul.addr %s555, 4
          %s557 = smul.addr %s556, 8
          %s558 = scalar_lea.vmem %s10, %s557
        $region68: #{decoder_forward.1} parent=31 // pred_fallthru
          _
        // Predicated region
        $region69: #{decoder_forward.1} parent=31 // pred_check
          %p559 = pneg %p336
        $region70: #{decoder_forward.1} parent=31 // pred_check_branch
          %561 = sbr.rel (%p559) target = $region72
        $region71: #{decoder_forward.1} parent=31 // pred_region
          %p562 = scmp.lt.s32.totalorder %s31, 1
          %s563 = scalar_select %p562, %s31, 1
          %s564 = scalar_lea.vmem %s11, %s563
        $region72: #{decoder_forward.1} parent=31 // pred_fallthru
          _
        // Predicated region
        $region73: #{decoder_forward.1} parent=31 // pred_check
          %p565 = pneg %p362
        $region74: #{decoder_forward.1} parent=31 // pred_check_branch
          %567 = sbr.rel (%p565) target = $region76
        $region75: #{decoder_forward.1} parent=31 // pred_region
          %p568 = scmp.lt.s32.totalorder %s31, 1
          %s569 = scalar_select %p568, %s31, 1
          %s570 = smul.addr %s569, 8
          %s571 = smul.addr %s570, 8
          %s572 = scalar_lea.vmem %s12, %s571
        $region76: #{decoder_forward.1} parent=31 // pred_fallthru
          _
        // Predicated region
        $region77: #{decoder_forward.1} parent=31 // pred_check
          %p573 = pneg %p388
        $region78: #{decoder_forward.1} parent=31 // pred_check_branch
          %575 = sbr.rel (%p573) target = $region80
        $region79: #{decoder_forward.1} parent=31 // pred_region
          %p576 = scmp.lt.s32.totalorder %s31, 1
          %s577 = scalar_select %p576, %s31, 1
          %s578 = scalar_lea.vmem %s13, %s577
        $region80: #{decoder_forward.1} parent=31 // pred_fallthru
          _
      $region32: #{decoder_forward.1} parent=5 // pred_fallthru
        _
      %p579 = scmp.le.s32.totalorder 1, %s23
      %p580 = scmp.lt.s32.totalorder %s23, 3
      %p581 = pnand %p579, %p580
      %p582 = pneg %p581
      // Predicated region
      $region81: #{decoder_forward.1} parent=5 // pred_check
        _
      $region82: #{decoder_forward.1} parent=5 // pred_check_branch
        %584 = sbr.rel (%p581) target = $region84
      $region83: #{decoder_forward.1} parent=5 // pred_region
        %s585 = ssub.s32 %s23, 1
        %s586 = smul.u32 2, %s32
        %p587 = scmp.lt.s32.totalorder %s586, 1
        %s588 = scalar_select %p587, %s586, 1
        %s589 = smul.addr %s588, 8
        %s590 = scalar_lea.vmem %s0, %s589
        %p591 = pneg %p61
        %p592 = pneg %p58
        %p593 = pneg %p82
        %p594 = pneg %p79
        %p595 = scmp.lt.s32.totalorder %s33, 1
        %s596 = scalar_select %p595, %s33, 1
        %s597 = scalar_lea.vmem %s2, %s596
        %p598 = pneg %p108
        %p599 = pneg %p105
        %p600 = scmp.lt.s32.totalorder %s33, 1
        %s601 = scalar_select %p600, %s33, 1
        %s602 = scalar_lea.vmem %s3, %s601
        %p603 = pneg %p134
        %p604 = pneg %p131
        %p605 = scmp.lt.s32.totalorder %s33, 1
        %s606 = scalar_select %p605, %s33, 1
        %s607 = smul.addr %s606, 4
        %s608 = smul.addr %s607, 8
        %s609 = scalar_lea.vmem %s4, %s608
        %p610 = pneg %p160
        %p611 = pneg %p157
        %p612 = scmp.lt.s32.totalorder %s33, 1
        %s613 = scalar_select %p612, %s33, 1
        %s614 = scalar_lea.vmem %s5, %s613
        %p615 = pneg %p186
        %p616 = pneg %p183
        %p617 = scmp.lt.s32.totalorder %s33, 1
        %s618 = scalar_select %p617, %s33, 1
        %s619 = smul.addr %s618, 4
        %s620 = smul.addr %s619, 8
        %s621 = scalar_lea.vmem %s6, %s620
        %p622 = pneg %p212
        %p623 = pneg %p209
        %p624 = scmp.lt.s32.totalorder %s33, 1
        %s625 = scalar_select %p624, %s33, 1
        %s626 = scalar_lea.vmem %s7, %s625
        %p627 = pneg %p238
        %p628 = pneg %p235
        %p629 = scmp.lt.s32.totalorder %s33, 1
        %s630 = scalar_select %p629, %s33, 1
        %s631 = scalar_lea.vmem %s8, %s630
        %p632 = pneg %p264
        %p633 = pneg %p261
        %p634 = scmp.lt.s32.totalorder %s33, 1
        %s635 = scalar_select %p634, %s33, 1
        %s636 = scalar_lea.vmem %s9, %s635
        %p637 = pneg %p290
        %p638 = pneg %p287
        %p639 = scmp.lt.s32.totalorder %s33, 1
        %s640 = scalar_select %p639, %s33, 1
        %s641 = smul.addr %s640, 4
        %s642 = smul.addr %s641, 8
        %s643 = scalar_lea.vmem %s10, %s642
        %p644 = pneg %p316
        %p645 = pneg %p313
        %p646 = scmp.lt.s32.totalorder %s33, 1
        %s647 = scalar_select %p646, %s33, 1
        %s648 = scalar_lea.vmem %s11, %s647
        %p649 = pneg %p342
        %p650 = pneg %p339
        %p651 = scmp.lt.s32.totalorder %s33, 1
        %s652 = scalar_select %p651, %s33, 1
        %s653 = smul.addr %s652, 8
        %s654 = smul.addr %s653, 8
        %s655 = scalar_lea.vmem %s12, %s654
        %p656 = pneg %p368
        %p657 = pneg %p365
        %p658 = scmp.lt.s32.totalorder %s33, 1
        %s659 = scalar_select %p658, %s33, 1
        %s660 = scalar_lea.vmem %s13, %s659
        %p661 = pneg %p394
        %p662 = pneg %p391
        %p663 = pneg %p415
        %p664 = pneg %p412
        %p665 = pneg %p436
        %p666 = pneg %p433
        %p667 = pneg %p462
        %p668 = pneg %p459
        %s669 = smul.u32 2, %s32
        %p670 = scmp.lt.s32.totalorder %s669, 1
        %s671 = scalar_select %p670, %s669, 1
        %s672 = smul.addr %s671, 8
        %s673 = scalar_lea.vmem %s0, %s672
        %s674 = smul.u32 2, %s32
        %p675 = scmp.lt.s32.totalorder %s33, 1
        %s676 = scalar_select %p675, %s33, 1
        %s677 = scalar_lea.vmem %s2, %s676
        %p678 = scmp.lt.s32.totalorder %s33, 1
        %s679 = scalar_select %p678, %s33, 1
        %s680 = scalar_lea.vmem %s3, %s679
        %p681 = scmp.lt.s32.totalorder %s33, 1
        %s682 = scalar_select %p681, %s33, 1
        %s683 = smul.addr %s682, 4
        %s684 = smul.addr %s683, 8
        %s685 = scalar_lea.vmem %s4, %s684
        %p686 = scmp.lt.s32.totalorder %s33, 1
        %s687 = scalar_select %p686, %s33, 1
        %s688 = scalar_lea.vmem %s5, %s687
        %p689 = scmp.lt.s32.totalorder %s33, 1
        %s690 = scalar_select %p689, %s33, 1
        %s691 = smul.addr %s690, 4
        %s692 = smul.addr %s691, 8
        %s693 = scalar_lea.vmem %s6, %s692
        %p694 = scmp.lt.s32.totalorder %s33, 1
        %s695 = scalar_select %p694, %s33, 1
        %s696 = scalar_lea.vmem %s7, %s695
        %p697 = scmp.lt.s32.totalorder %s33, 1
        %s698 = scalar_select %p697, %s33, 1
        %s699 = scalar_lea.vmem %s8, %s698
        %p700 = scmp.lt.s32.totalorder %s33, 1
        %s701 = scalar_select %p700, %s33, 1
        %s702 = scalar_lea.vmem %s9, %s701
        %p703 = scmp.lt.s32.totalorder %s33, 1
        %s704 = scalar_select %p703, %s33, 1
        %s705 = smul.addr %s704, 4
        %s706 = smul.addr %s705, 8
        %s707 = scalar_lea.vmem %s10, %s706
        %p708 = scmp.lt.s32.totalorder %s33, 1
        %s709 = scalar_select %p708, %s33, 1
        %s710 = scalar_lea.vmem %s11, %s709
        %p711 = scmp.lt.s32.totalorder %s33, 1
        %s712 = scalar_select %p711, %s33, 1
        %s713 = smul.addr %s712, 8
        %s714 = smul.addr %s713, 8
        %s715 = scalar_lea.vmem %s12, %s714
        %p716 = scmp.lt.s32.totalorder %s33, 1
        %s717 = scalar_select %p716, %s33, 1
        %s718 = scalar_lea.vmem %s13, %s717
        %s719 = smul.u32 2, %s32
        %p720 = scmp.eq.s32.totalorder %s33, 0
        // Predicated region
        $region85: #{decoder_forward.1} parent=83 // pred_check
          %p721 = pneg %p720
        $region86: #{decoder_forward.1} parent=83 // pred_check_branch
          %723 = sbr.rel (%p721) target = $region88
        $region87: #{decoder_forward.1} parent=83 // pred_region
          %v724 = vld [vmem:[%s673] sm:$0xff]
          %v725 = vld [vmem:[%s673 + $0x8] sm:$0xff]
          %v726 = vmul.f32 %v724, 5.656854
          %v727 = vmul.f32 %v725, 5.656854
          %v728 = vld [vmem:[%s1] sm:$0xff]
          %v729 = vadd.f32 %v726, %v728
          %v730 = vadd.f32 %v727, %v728
          %vm731 = vcmask 261120
          %732 = vst.msk [vmem:[#allocation2] sm:$0xff] %vm731, %v729
          %733 = vst.msk [vmem:[#allocation2 + $0x8] sm:$0xff] %vm731, %v730
        $region88: #{decoder_forward.1} parent=83 // pred_fallthru
          _
        %v734 = vld [vmem:[#allocation2] sm:$0xff]
        %v735 = vld [vmem:[#allocation2 + $0x8] sm:$0xff]
        %v736 = vld [vmem:[%s677] sm:$0x1]
        %v737 = vld [vmem:[%s680] sm:$0x1]
        %vm738 = vcmask 261120
        %v739 = vsel %vm738, %v734, 0.0
        %740 = vadd.xlane.f32.xlu0 %v739
        %v741 = vpop.xlane.xlu0 %740
        %v742 = vsel %vm738, %v735, 0.0
        %743 = vadd.xlane.f32.xlu0 %v742
        %v744 = vpop.xlane.xlu0 %743
        %v745 = vrcp.pop 32.0
        %v746 = vmul.f32 %v741, %v745
        %v747 = vmul.f32 %v744, %v745
        %v748 = vsub.f32 %v734, %v746
        %v749 = vsub.f32 %v735, %v747
        %v750 = vmul.f32 %v748, %v748
        %v751 = vmul.f32 %v749, %v749
        %v752 = vsel %vm738, %v750, 0.0
        %753 = vadd.xlane.f32.xlu0 %v752
        %v754 = vpop.xlane.xlu0 %753
        %v755 = vsel %vm738, %v751, 0.0
        %756 = vadd.xlane.f32.xlu0 %v755
        %v757 = vpop.xlane.xlu0 %756
        %v758 = vmul.f32 %v754, %v745
        %v759 = vmul.f32 %v757, %v745
        %v760 = vadd.f32 %v758, 1e-05
        %v761 = vadd.f32 %v759, 1e-05
        %v762 = vrsqrt.pop %v760
        %v763 = vrsqrt.pop %v761
        %v764 = vmul.f32 %v748, %v762
        %v765 = vmul.f32 %v749, %v763
        %v767 = vlaneseq
        %v768 = vshrl.u32 %v767, 7
        %v769 = vsub.s32 0, %v768
        %v770 = vrot.slane %v736, %v769
        %v772 = vmul.f32 %v764, %v770
        %v773 = vmul.f32 %v765, %v770
        %v775 = vlaneseq
        %v776 = vshrl.u32 %v775, 7
        %v777 = vsub.s32 0, %v776
        %v778 = vrot.slane %v737, %v777
        %v780 = vadd.f32 %v772, %v778
        %v781 = vadd.f32 %v773, %v778
        %v782 = vld [vmem:[%s685] sm:$0xff]
        %v783 = vld [vmem:[%s685 + $0x8] sm:$0xff]
        %v784 = vld [vmem:[%s685 + $0x10] sm:$0xff]
        %v785 = vld [vmem:[%s685 + $0x18] sm:$0xff]
        %v786 = vld [vmem:[%s688] sm:$0x1]
        %v788 = vlaneseq
        %v789 = vshrl.u32 %v788, 7
        %v790 = vsub.s32 0, %v789
        %v791 = vrot.slane %v786, %v790
        %v794 = vsel %vm738, %v780, 0
        %v797 = vsel %vm738, %v781, 0
        %799 = vmatprep.subr.mxu0 0.0
        %v800 = vand.u32 %v782, 4294901760
        %801 = vmatpush1.msra.mxu0 %v800
        %802 = vmatprep.subr.mxu0 0.0
        %v803 = vand.u32 %v783, 4294901760
        %804 = vmatpush1.msra.mxu0 %v803
        %805 = vmatprep.subr.mxu0 0.0
        %v806 = vand.u32 %v784, 4294901760
        %807 = vmatpush1.msra.mxu0 %v806
        %808 = vmatprep.subr.mxu0 0.0
        %v809 = vand.u32 %v785, 4294901760
        %810 = vmatpush1.msra.mxu0 %v809
        %811 = vmatprep.subr.mxu0 0.0
        %812 = vmatpush1.msra.mxu0 0.0
        %813 = vmatprep.subr.mxu0 0.0
        %814 = vmatpush1.msra.mxu0 0.0
        %815 = vmatprep.subr.mxu0 0.0
        %816 = vmatpush1.msra.mxu0 0.0
        %817 = vmatprep.subr.mxu0 0.0
        %818 = vmatpush1.msra.mxu0 0.0
        %819 = vmatprep.subr.mxu0 0.0
        %820 = vmatpush1.msra.mxu0 0.0
        %821 = vmatprep.subr.mxu0 0.0
        %822 = vmatpush1.msra.mxu0 0.0
        %823 = vmatprep.subr.mxu0 0.0
        %824 = vmatpush1.msra.mxu0 0.0
        %825 = vmatprep.subr.mxu0 0.0
        %826 = vmatpush1.msra.mxu0 0.0
        %827 = vmatprep.subr.mxu0 0.0
        %828 = vmatpush1.msra.mxu0 0.0
        %829 = vmatprep.subr.mxu0 0.0
        %830 = vmatpush1.msra.mxu0 0.0
        %831 = vmatprep.subr.mxu0 0.0
        %832 = vmatpush1.msra.mxu0 0.0
        %833 = vmatprep.subr.mxu0 0.0
        %834 = vmatpush1.msra.mxu0 0.0
        %835 = vmatprep.subr.mxu0 0.0
        %836 = vmatpush1.msra.mxu0 0.0
        %837 = vmatprep.subr.mxu0 0.0
        %838 = vmatpush1.msra.mxu0 0.0
        %839 = vmatprep.subr.mxu0 0.0
        %840 = vmatpush1.msra.mxu0 0.0
        %841 = vmatprep.subr.mxu0 0.0
        %842 = vmatpush1.msra.mxu0 0.0
        %843 = vmatprep.subr.mxu0 0.0
        %844 = vmatpush1.msra.mxu0 0.0
        %845 = vmatprep.subr.mxu0 0.0
        %846 = vmatpush1.msra.mxu0 0.0
        %847 = vmatprep.subr.mxu0 0.0
        %848 = vmatpush1.msra.mxu0 0.0
        %849 = vmatprep.subr.mxu0 0.0
        %850 = vmatpush1.msra.mxu0 0.0
        %851 = vmatprep.subr.mxu0 0.0
        %852 = vmatpush1.msra.mxu0 0.0
        %853 = vmatprep.subr.mxu0 0.0
        %854 = vmatpush1.msra.mxu0 0.0
        %855 = vmatprep.subr.mxu0 0.0
        %856 = vmatpush1.msra.mxu0 0.0
        %857 = vmatprep.subr.mxu0 0.0
        %858 = vmatpush1.msra.mxu0 0.0
        %859 = vmatprep.subr.mxu0 0.0
        %860 = vmatpush1.msra.mxu0 0.0
        %861 = vmatprep.subr.mxu0 0.0
        %862 = vmatpush1.msra.mxu0 0.0
        %863 = vmatprep.subr.mxu0 0.0
        %864 = vmatpush1.msra.mxu0 0.0
        %865 = vmatprep.subr.mxu0 0.0
        %866 = vmatpush1.msra.mxu0 0.0
        %867 = vmatprep.mubr.f32.mxu0 0.0
        %v868 = vand.u32 %v794, 4294901760
        %v869 = vsub.f32 %v794, %v868
        %v870 = vand.u32 %v869, 4294901760
        %v871 = vsub.f32 %v869, %v870
        %v872 = vand.u32 %v871, 4294901760
        %873 = vmatmul.mubr.f32.gmra.mrb[0].mxu0 %v872
        %v874 = vpop.f32.mrb[0].mxu0
        %v875 = vadd.f32 %v791, %v874
        %v876 = vpop.f32.mrb[0].mxu0
        %877 = vmatprep.mubr.f32.mxu0 0.0
        %v878 = vand.u32 %v797, 4294901760
        %v879 = vsub.f32 %v797, %v878
        %v880 = vand.u32 %v879, 4294901760
        %v881 = vsub.f32 %v879, %v880
        %v882 = vand.u32 %v881, 4294901760
        %883 = vmatmul.mubr.f32.gmra.mrb[0].mxu0 %v882
        %v884 = vpop.f32.mrb[0].mxu0
        %v885 = vadd.f32 %v791, %v884
        %v886 = vpop.f32.mrb[0].mxu0
        %887 = vdwg.mxu0
        %888 = vmatprep.subr.mxu0 0.0
        %v889 = vand.u32 %v782, 4294901760
        %v890 = vsub.f32 %v782, %v889
        %v891 = vand.u32 %v890, 4294901760
        %v892 = vsub.f32 %v890, %v891
        %v893 = vand.u32 %v892, 4294901760
        %894 = vmatpush1.msra.mxu0 %v893
        %895 = vmatprep.subr.mxu0 0.0
        %v896 = vand.u32 %v783, 4294901760
        %v897 = vsub.f32 %v783, %v896
        %v898 = vand.u32 %v897, 4294901760
        %v899 = vsub.f32 %v897, %v898
        %v900 = vand.u32 %v899, 4294901760
        %901 = vmatpush1.msra.mxu0 %v900
        %902 = vmatprep.subr.mxu0 0.0
        %v903 = vand.u32 %v784, 4294901760
        %v904 = vsub.f32 %v784, %v903
        %v905 = vand.u32 %v904, 4294901760
        %v906 = vsub.f32 %v904, %v905
        %v907 = vand.u32 %v906, 4294901760
        %908 = vmatpush1.msra.mxu0 %v907
        %909 = vmatprep.subr.mxu0 0.0
        %v910 = vand.u32 %v785, 4294901760
        %v911 = vsub.f32 %v785, %v910
        %v912 = vand.u32 %v911, 4294901760
        %v913 = vsub.f32 %v911, %v912
        %v914 = vand.u32 %v913, 4294901760
        %915 = vmatpush1.msra.mxu0 %v914
        %916 = vmatprep.subr.mxu0 0.0
        %917 = vmatpush1.msra.mxu0 0.0
        %918 = vmatprep.subr.mxu0 0.0
        %919 = vmatpush1.msra.mxu0 0.0
        %920 = vmatprep.subr.mxu0 0.0
        %921 = vmatpush1.msra.mxu0 0.0
        %922 = vmatprep.subr.mxu0 0.0
        %923 = vmatpush1.msra.mxu0 0.0
        %924 = vmatprep.subr.mxu0 0.0
        %925 = vmatpush1.msra.mxu0 0.0
        %926 = vmatprep.subr.mxu0 0.0
        %927 = vmatpush1.msra.mxu0 0.0
        %928 = vmatprep.subr.mxu0 0.0
        %929 = vmatpush1.msra.mxu0 0.0
        %930 = vmatprep.subr.mxu0 0.0
        %931 = vmatpush1.msra.mxu0 0.0
        %932 = vmatprep.subr.mxu0 0.0
        %933 = vmatpush1.msra.mxu0 0.0
        %934 = vmatprep.subr.mxu0 0.0
        %935 = vmatpush1.msra.mxu0 0.0
        %936 = vmatprep.subr.mxu0 0.0
        %937 = vmatpush1.msra.mxu0 0.0
        %938 = vmatprep.subr.mxu0 0.0
        %939 = vmatpush1.msra.mxu0 0.0
        %940 = vmatprep.subr.mxu0 0.0
        %941 = vmatpush1.msra.mxu0 0.0
        %942 = vmatprep.subr.mxu0 0.0
        %943 = vmatpush1.msra.mxu0 0.0
        %944 = vmatprep.subr.mxu0 0.0
        %945 = vmatpush1.msra.mxu0 0.0
        %946 = vmatprep.subr.mxu0 0.0
        %947 = vmatpush1.msra.mxu0 0.0
        %948 = vmatprep.subr.mxu0 0.0
        %949 = vmatpush1.msra.mxu0 0.0
        %950 = vmatprep.subr.mxu0 0.0
        %951 = vmatpush1.msra.mxu0 0.0
        %952 = vmatprep.subr.mxu0 0.0
        %953 = vmatpush1.msra.mxu0 0.0
        %954 = vmatprep.subr.mxu0 0.0
        %955 = vmatpush1.msra.mxu0 0.0
        %956 = vmatprep.subr.mxu0 0.0
        %957 = vmatpush1.msra.mxu0 0.0
        %958 = vmatprep.subr.mxu0 0.0
        %959 = vmatpush1.msra.mxu0 0.0
        %960 = vmatprep.subr.mxu0 0.0
        %961 = vmatpush1.msra.mxu0 0.0
        %962 = vmatprep.subr.mxu0 0.0
        %963 = vmatpush1.msra.mxu0 0.0
        %964 = vmatprep.subr.mxu0 0.0
        %965 = vmatpush1.msra.mxu0 0.0
        %966 = vmatprep.subr.mxu0 0.0
        %967 = vmatpush1.msra.mxu0 0.0
        %968 = vmatprep.subr.mxu0 0.0
        %969 = vmatpush1.msra.mxu0 0.0
        %970 = vmatprep.subr.mxu0 0.0
        %971 = vmatpush1.msra.mxu0 0.0
        %972 = vmatprep.mubr.f32.mxu0 0.0
        %v973 = vand.u32 %v794, 4294901760
        %974 = vmatmul.mubr.f32.gmra.mrb[0].mxu0 %v973
        %v975 = vpop.f32.mrb[0].mxu0
        %v976 = vadd.f32 %v875, %v975
        %v977 = vpop.f32.mrb[0].mxu0
        %978 = vmatprep.mubr.f32.mxu0 0.0
        %v979 = vand.u32 %v797, 4294901760
        %980 = vmatmul.mubr.f32.gmra.mrb[0].mxu0 %v979
        %v981 = vpop.f32.mrb[0].mxu0
        %v982 = vadd.f32 %v885, %v981
        %v983 = vpop.f32.mrb[0].mxu0
        %984 = vdwg.mxu0
        %985 = vmatprep.subr.mxu0 0.0
        %v986 = vand.u32 %v782, 4294901760
        %v987 = vsub.f32 %v782, %v986
        %988 = vmatpush1.msra.mxu0 %v987
        %989 = vmatprep.subr.mxu0 0.0
        %v990 = vand.u32 %v783, 4294901760
        %v991 = vsub.f32 %v783, %v990
        %992 = vmatpush1.msra.mxu0 %v991
        %993 = vmatprep.subr.mxu0 0.0
        %v994 = vand.u32 %v784, 4294901760
        %v995 = vsub.f32 %v784, %v994
        %996 = vmatpush1.msra.mxu0 %v995
        %997 = vmatprep.subr.mxu0 0.0
        %v998 = vand.u32 %v785, 4294901760
        %v999 = vsub.f32 %v785, %v998
        %1000 = vmatpush1.msra.mxu0 %v999
        %1001 = vmatprep.subr.mxu0 0.0
        %1002 = vmatpush1.msra.mxu0 0.0
        %1003 = vmatprep.subr.mxu0 0.0
        %1004 = vmatpush1.msra.mxu0 0.0
        %1005 = vmatprep.subr.mxu0 0.0
        %1006 = vmatpush1.msra.mxu0 0.0
        %1007 = vmatprep.subr.mxu0 0.0
        %1008 = vmatpush1.msra.mxu0 0.0
        %1009 = vmatprep.subr.mxu0 0.0
        %1010 = vmatpush1.msra.mxu0 0.0
        %1011 = vmatprep.subr.mxu0 0.0
        %1012 = vmatpush1.msra.mxu0 0.0
        %1013 = vmatprep.subr.mxu0 0.0
        %1014 = vmatpush1.msra.mxu0 0.0
        %1015 = vmatprep.subr.mxu0 0.0
        %1016 = vmatpush1.msra.mxu0 0.0
        %1017 = vmatprep.subr.mxu0 0.0
        %1018 = vmatpush1.msra.mxu0 0.0
        %1019 = vmatprep.subr.mxu0 0.0
        %1020 = vmatpush1.msra.mxu0 0.0
        %1021 = vmatprep.subr.mxu0 0.0
        %1022 = vmatpush1.msra.mxu0 0.0
        %1023 = vmatprep.subr.mxu0 0.0
        %1024 = vmatpush1.msra.mxu0 0.0
        %1025 = vmatprep.subr.mxu0 0.0
        %1026 = vmatpush1.msra.mxu0 0.0
        %1027 = vmatprep.subr.mxu0 0.0
        %1028 = vmatpush1.msra.mxu0 0.0
        %1029 = vmatprep.subr.mxu0 0.0
        %1030 = vmatpush1.msra.mxu0 0.0
        %1031 = vmatprep.subr.mxu0 0.0
        %1032 = vmatpush1.msra.mxu0 0.0
        %1033 = vmatprep.subr.mxu0 0.0
        %1034 = vmatpush1.msra.mxu0 0.0
        %1035 = vmatprep.subr.mxu0 0.0
        %1036 = vmatpush1.msra.mxu0 0.0
        %1037 = vmatprep.subr.mxu0 0.0
        %1038 = vmatpush1.msra.mxu0 0.0
        %1039 = vmatprep.subr.mxu0 0.0
        %1040 = vmatpush1.msra.mxu0 0.0
        %1041 = vmatprep.subr.mxu0 0.0
        %1042 = vmatpush1.msra.mxu0 0.0
        %1043 = vmatprep.subr.mxu0 0.0
        %1044 = vmatpush1.msra.mxu0 0.0
        %1045 = vmatprep.subr.mxu0 0.0
        %1046 = vmatpush1.msra.mxu0 0.0
        %1047 = vmatprep.subr.mxu0 0.0
        %1048 = vmatpush1.msra.mxu0 0.0
        %1049 = vmatprep.subr.mxu0 0.0
        %1050 = vmatpush1.msra.mxu0 0.0
        %1051 = vmatprep.subr.mxu0 0.0
        %1052 = vmatpush1.msra.mxu0 0.0
        %1053 = vmatprep.subr.mxu0 0.0
        %1054 = vmatpush1.msra.mxu0 0.0
        %1055 = vmatprep.subr.mxu0 0.0
        %1056 = vmatpush1.msra.mxu0 0.0
        %1057 = vmatprep.mubr.f32.mxu0 0.0
        %v1058 = vand.u32 %v794, 4294901760
        %v1059 = vsub.f32 %v794, %v1058
        %1060 = vmatmul.mubr.f32.gmra.mrb[0].mxu0 %v1059
        %v1061 = vpop.f32.mrb[0].mxu0
        %v1062 = vadd.f32 %v976, %v1061
        %v1063 = vpop.f32.mrb[0].mxu0
        %1064 = vmatprep.mubr.f32.mxu0 0.0
        %v1065 = vand.u32 %v797, 4294901760
        %v1066 = vsub.f32 %v797, %v1065
        %1067 = vmatmul.mubr.f32.gmra.mrb[0].mxu0 %v1066
        %v1068 = vpop.f32.mrb[0].mxu0
        %v1069 = vadd.f32 %v982, %v1068
        %v1070 = vpop.f32.mrb[0].mxu0
        %1071 = vdwg.mxu0
        %1072 = vmatprep.subr.mxu0 0.0
        %v1073 = vand.u32 %v782, 4294901760
        %1074 = vmatpush1.msra.mxu0 %v1073
        %1075 = vmatprep.subr.mxu0 0.0
        %v1076 = vand.u32 %v783, 4294901760
        %1077 = vmatpush1.msra.mxu0 %v1076
        %1078 = vmatprep.subr.mxu0 0.0
        %v1079 = vand.u32 %v784, 4294901760
        %1080 = vmatpush1.msra.mxu0 %v1079
        %1081 = vmatprep.subr.mxu0 0.0
        %v1082 = vand.u32 %v785, 4294901760
        %1083 = vmatpush1.msra.mxu0 %v1082
        %1084 = vmatprep.subr.mxu0 0.0
        %1085 = vmatpush1.msra.mxu0 0.0
        %1086 = vmatprep.subr.mxu0 0.0
        %1087 = vmatpush1.msra.mxu0 0.0
        %1088 = vmatprep.subr.mxu0 0.0
        %1089 = vmatpush1.msra.mxu0 0.0
        %1090 = vmatprep.subr.mxu0 0.0
        %1091 = vmatpush1.msra.mxu0 0.0
        %1092 = vmatprep.subr.mxu0 0.0
        %1093 = vmatpush1.msra.mxu0 0.0
        %1094 = vmatprep.subr.mxu0 0.0
        %1095 = vmatpush1.msra.mxu0 0.0
        %1096 = vmatprep.subr.mxu0 0.0
        %1097 = vmatpush1.msra.mxu0 0.0
        %1098 = vmatprep.subr.mxu0 0.0
        %1099 = vmatpush1.msra.mxu0 0.0
        %1100 = vmatprep.subr.mxu0 0.0
        %1101 = vmatpush1.msra.mxu0 0.0
        %1102 = vmatprep.subr.mxu0 0.0
        %1103 = vmatpush1.msra.mxu0 0.0
        %1104 = vmatprep.subr.mxu0 0.0
        %1105 = vmatpush1.msra.mxu0 0.0
        %1106 = vmatprep.subr.mxu0 0.0
        %1107 = vmatpush1.msra.mxu0 0.0
        %1108 = vmatprep.subr.mxu0 0.0
        %1109 = vmatpush1.msra.mxu0 0.0
        %1110 = vmatprep.subr.mxu0 0.0
        %1111 = vmatpush1.msra.mxu0 0.0
        %1112 = vmatprep.subr.mxu0 0.0
        %1113 = vmatpush1.msra.mxu0 0.0
        %1114 = vmatprep.subr.mxu0 0.0
        %1115 = vmatpush1.msra.mxu0 0.0
        %1116 = vmatprep.subr.mxu0 0.0
        %1117 = vmatpush1.msra.mxu0 0.0
        %1118 = vmatprep.subr.mxu0 0.0
        %1119 = vmatpush1.msra.mxu0 0.0
        %1120 = vmatprep.subr.mxu0 0.0
        %1121 = vmatpush1.msra.mxu0 0.0
        %1122 = vmatprep.subr.mxu0 0.0
        %1123 = vmatpush1.msra.mxu0 0.0
        %1124 = vmatprep.subr.mxu0 0.0
        %1125 = vmatpush1.msra.mxu0 0.0
        %1126 = vmatprep.subr.mxu0 0.0
        %1127 = vmatpush1.msra.mxu0 0.0
        %1128 = vmatprep.subr.mxu0 0.0
        %1129 = vmatpush1.msra.mxu0 0.0
        %1130 = vmatprep.subr.mxu0 0.0
        %1131 = vmatpush1.msra.mxu0 0.0
        %1132 = vmatprep.subr.mxu0 0.0
        %1133 = vmatpush1.msra.mxu0 0.0
        %1134 = vmatprep.subr.mxu0 0.0
        %1135 = vmatpush1.msra.mxu0 0.0
        %1136 = vmatprep.subr.mxu0 0.0
        %1137 = vmatpush1.msra.mxu0 0.0
        %1138 = vmatprep.subr.mxu0 0.0
        %1139 = vmatpush1.msra.mxu0 0.0
        %1140 = vmatprep.mubr.f32.mxu0 0.0
        %v1141 = vand.u32 %v794, 4294901760
        %v1142 = vsub.f32 %v794, %v1141
        %v1143 = vand.u32 %v1142, 4294901760
        %1144 = vmatmul.mubr.f32.gmra.mrb[0].mxu0 %v1143
        %v1145 = vpop.f32.mrb[0].mxu0
        %v1146 = vadd.f32 %v1062, %v1145
        %v1147 = vpop.f32.mrb[0].mxu0
        %1148 = vmatprep.mubr.f32.mxu0 0.0
        %v1149 = vand.u32 %v797, 4294901760
        %v1150 = vsub.f32 %v797, %v1149
        %v1151 = vand.u32 %v1150, 4294901760
        %1152 = vmatmul.mubr.f32.gmra.mrb[0].mxu0 %v1151
        %v1153 = vpop.f32.mrb[0].mxu0
        %v1154 = vadd.f32 %v1069, %v1153
        %v1155 = vpop.f32.mrb[0].mxu0
        %1156 = vdwg.mxu0
        %1157 = vmatprep.subr.mxu0 0.0
        %v1158 = vand.u32 %v782, 4294901760
        %v1159 = vsub.f32 %v782, %v1158
        %v1160 = vand.u32 %v1159, 4294901760
        %1161 = vmatpush1.msra.mxu0 %v1160
        %1162 = vmatprep.subr.mxu0 0.0
        %v1163 = vand.u32 %v783, 4294901760
        %v1164 = vsub.f32 %v783, %v1163
        %v1165 = vand.u32 %v1164, 4294901760
        %1166 = vmatpush1.msra.mxu0 %v1165
        %1167 = vmatprep.subr.mxu0 0.0
        %v1168 = vand.u32 %v784, 4294901760
        %v1169 = vsub.f32 %v784, %v1168
        %v1170 = vand.u32 %v1169, 4294901760
        %1171 = vmatpush1.msra.mxu0 %v1170
        %1172 = vmatprep.subr.mxu0 0.0
        %v1173 = vand.u32 %v785, 4294901760
        %v1174 = vsub.f32 %v785, %v1173
        %v1175 = vand.u32 %v1174, 4294901760
        %1176 = vmatpush1.msra.mxu0 %v1175
        %1177 = vmatprep.subr.mxu0 0.0
        %1178 = vmatpush1.msra.mxu0 0.0
        %1179 = vmatprep.subr.mxu0 0.0
        %1180 = vmatpush1.msra.mxu0 0.0
        %1181 = vmatprep.subr.mxu0 0.0
        %1182 = vmatpush1.msra.mxu0 0.0
        %1183 = vmatprep.subr.mxu0 0.0
        %1184 = vmatpush1.msra.mxu0 0.0
        %1185 = vmatprep.subr.mxu0 0.0
        %1186 = vmatpush1.msra.mxu0 0.0
        %1187 = vmatprep.subr.mxu0 0.0
        %1188 = vmatpush1.msra.mxu0 0.0
        %1189 = vmatprep.subr.mxu0 0.0
        %1190 = vmatpush1.msra.mxu0 0.0
        %1191 = vmatprep.subr.mxu0 0.0
        %1192 = vmatpush1.msra.mxu0 0.0
        %1193 = vmatprep.subr.mxu0 0.0
        %1194 = vmatpush1.msra.mxu0 0.0
        %1195 = vmatprep.subr.mxu0 0.0
        %1196 = vmatpush1.msra.mxu0 0.0
        %1197 = vmatprep.subr.mxu0 0.0
        %1198 = vmatpush1.msra.mxu0 0.0
        %1199 = vmatprep.subr.mxu0 0.0
        %1200 = vmatpush1.msra.mxu0 0.0
        %1201 = vmatprep.subr.mxu0 0.0
        %1202 = vmatpush1.msra.mxu0 0.0
        %1203 = vmatprep.subr.mxu0 0.0
        %1204 = vmatpush1.msra.mxu0 0.0
        %1205 = vmatprep.subr.mxu0 0.0
        %1206 = vmatpush1.msra.mxu0 0.0
        %1207 = vmatprep.subr.mxu0 0.0
        %1208 = vmatpush1.msra.mxu0 0.0
        %1209 = vmatprep.subr.mxu0 0.0
        %1210 = vmatpush1.msra.mxu0 0.0
        %1211 = vmatprep.subr.mxu0 0.0
        %1212 = vmatpush1.msra.mxu0 0.0
        %1213 = vmatprep.subr.mxu0 0.0
        %1214 = vmatpush1.msra.mxu0 0.0
        %1215 = vmatprep.subr.mxu0 0.0
        %1216 = vmatpush1.msra.mxu0 0.0
        %1217 = vmatprep.subr.mxu0 0.0
        %1218 = vmatpush1.msra.mxu0 0.0
        %1219 = vmatprep.subr.mxu0 0.0
        %1220 = vmatpush1.msra.mxu0 0.0
        %1221 = vmatprep.subr.mxu0 0.0
        %1222 = vmatpush1.msra.mxu0 0.0
        %1223 = vmatprep.subr.mxu0 0.0
        %1224 = vmatpush1.msra.mxu0 0.0
        %1225 = vmatprep.subr.mxu0 0.0
        %1226 = vmatpush1.msra.mxu0 0.0
        %1227 = vmatprep.subr.mxu0 0.0
        %1228 = vmatpush1.msra.mxu0 0.0
        %1229 = vmatprep.subr.mxu0 0.0
        %1230 = vmatpush1.msra.mxu0 0.0
        %1231 = vmatprep.subr.mxu0 0.0
        %1232 = vmatpush1.msra.mxu0 0.0
        %1233 = vmatprep.mubr.f32.mxu0 0.0
        %v1234 = vand.u32 %v794, 4294901760
        %1235 = vmatmul.mubr.f32.gmra.mrb[0].mxu0 %v1234
        %v1236 = vpop.f32.mrb[0].mxu0
        %v1237 = vadd.f32 %v1146, %v1236
        %v1238 = vpop.f32.mrb[0].mxu0
        %1239 = vmatprep.mubr.f32.mxu0 0.0
        %v1240 = vand.u32 %v797, 4294901760
        %1241 = vmatmul.mubr.f32.gmra.mrb[0].mxu0 %v1240
        %v1242 = vpop.f32.mrb[0].mxu0
        %v1243 = vadd.f32 %v1154, %v1242
        %v1244 = vpop.f32.mrb[0].mxu0
        %1245 = vdwg.mxu0
        %1246 = vmatprep.subr.mxu0 0.0
        %v1247 = vand.u32 %v782, 4294901760
        %1248 = vmatpush1.msra.mxu0 %v1247
        %1249 = vmatprep.subr.mxu0 0.0
        %v1250 = vand.u32 %v783, 4294901760
        %1251 = vmatpush1.msra.mxu0 %v1250
        %1252 = vmatprep.subr.mxu0 0.0
        %v1253 = vand.u32 %v784, 4294901760
        %1254 = vmatpush1.msra.mxu0 %v1253
        %1255 = vmatprep.subr.mxu0 0.0
        %v1256 = vand.u32 %v785, 4294901760
        %1257 = vmatpush1.msra.mxu0 %v1256
        %1258 = vmatprep.subr.mxu0 0.0
        %1259 = vmatpush1.msra.mxu0 0.0
        %1260 = vmatprep.subr.mxu0 0.0
        %1261 = vmatpush1.msra.mxu0 0.0
        %1262 = vmatprep.subr.mxu0 0.0
        %1263 = vmatpush1.msra.mxu0 0.0
        %1264 = vmatprep.subr.mxu0 0.0
        %1265 = vmatpush1.msra.mxu0 0.0
        %1266 = vmatprep.subr.mxu0 0.0
        %1267 = vmatpush1.msra.mxu0 0.0
        %1268 = vmatprep.subr.mxu0 0.0
        %1269 = vmatpush1.msra.mxu0 0.0
        %1270 = vmatprep.subr.mxu0 0.0
        %1271 = vmatpush1.msra.mxu0 0.0
        %1272 = vmatprep.subr.mxu0 0.0
        %1273 = vmatpush1.msra.mxu0 0.0
        %1274 = vmatprep.subr.mxu0 0.0
        %1275 = vmatpush1.msra.mxu0 0.0
        %1276 = vmatprep.subr.mxu0 0.0
        %1277 = vmatpush1.msra.mxu0 0.0
        %1278 = vmatprep.subr.mxu0 0.0
        %1279 = vmatpush1.msra.mxu0 0.0
        %1280 = vmatprep.subr.mxu0 0.0
        %1281 = vmatpush1.msra.mxu0 0.0
        %1282 = vmatprep.subr.mxu0 0.0
        %1283 = vmatpush1.msra.mxu0 0.0
        %1284 = vmatprep.subr.mxu0 0.0
        %1285 = vmatpush1.msra.mxu0 0.0
        %1286 = vmatprep.subr.mxu0 0.0
        %1287 = vmatpush1.msra.mxu0 0.0
        %1288 = vmatprep.subr.mxu0 0.0
        %1289 = vmatpush1.msra.mxu0 0.0
        %1290 = vmatprep.subr.mxu0 0.0
        %1291 = vmatpush1.msra.mxu0 0.0
        %1292 = vmatprep.subr.mxu0 0.0
        %1293 = vmatpush1.msra.mxu0 0.0
        %1294 = vmatprep.subr.mxu0 0.0
        %1295 = vmatpush1.msra.mxu0 0.0
        %1296 = vmatprep.subr.mxu0 0.0
        %1297 = vmatpush1.msra.mxu0 0.0
        %1298 = vmatprep.subr.mxu0 0.0
        %1299 = vmatpush1.msra.mxu0 0.0
        %1300 = vmatprep.subr.mxu0 0.0
        %1301 = vmatpush1.msra.mxu0 0.0
        %1302 = vmatprep.subr.mxu0 0.0
        %1303 = vmatpush1.msra.mxu0 0.0
        %1304 = vmatprep.subr.mxu0 0.0
        %1305 = vmatpush1.msra.mxu0 0.0
        %1306 = vmatprep.subr.mxu0 0.0
        %1307 = vmatpush1.msra.mxu0 0.0
        %1308 = vmatprep.subr.mxu0 0.0
        %1309 = vmatpush1.msra.mxu0 0.0
        %1310 = vmatprep.subr.mxu0 0.0
        %1311 = vmatpush1.msra.mxu0 0.0
        %1312 = vmatprep.subr.mxu0 0.0
        %1313 = vmatpush1.msra.mxu0 0.0
        %1314 = vmatprep.mubr.f32.mxu0 0.0
        %v1315 = vand.u32 %v794, 4294901760
        %1316 = vmatmul.mubr.f32.gmra.mrb[0].mxu0 %v1315
        %v1317 = vpop.f32.mrb[0].mxu0
        %v1318 = vadd.f32 %v1237, %v1317
        %v1319 = vpop.f32.mrb[0].mxu0
        %1320 = vmatprep.mubr.f32.mxu0 0.0
        %v1321 = vand.u32 %v797, 4294901760
        %1322 = vmatmul.mubr.f32.gmra.mrb[0].mxu0 %v1321
        %v1323 = vpop.f32.mrb[0].mxu0
        %v1324 = vadd.f32 %v1243, %v1323
        %v1325 = vpop.f32.mrb[0].mxu0
        %1326 = vdwg.mxu0
        %v1327 = vlaneseq
        %v1328 = vshrl.u32 %v1327, 7
        %v1329 = vlaneseq
        %v1330 = vand.u32 %v1329, 127
        %vm1331 = vcmp.le.s32.totalorder %v1330, %v1328
        %1333 = vrot.lane.b32.xlu0 %v1318, 96
        %v1334 = vpop.permute.xlu0 %1333
        %vm1335 = vcmask 64512
        %v1336 = vsel %vm1335, %v1318, 0
        %v1338 = vsel %vm1335, %v1334, 0
        %1340 = vmatprep.subr.mxu0 0.0
        %v1341 = vand.u32 %v1338, 4294901760
        %1342 = vmatpush1.xpose.msra.mxu0 %v1341
        %1343 = vmatprep.subr.mxu0 0.0
        %1344 = vmatpush1.xpose.msra.mxu0 0.0
        %1345 = vmatprep.subr.mxu0 0.0
        %1346 = vmatpush1.xpose.msra.mxu0 0.0
        %1347 = vmatprep.subr.mxu0 0.0
        %1348 = vmatpush1.xpose.msra.mxu0 0.0
        %1349 = vmatprep.subr.mxu0 0.0
        %1350 = vmatpush1.xpose.msra.mxu0 0.0
        %1351 = vmatprep.subr.mxu0 0.0
        %1352 = vmatpush1.xpose.msra.mxu0 0.0
        %1353 = vmatprep.subr.mxu0 0.0
        %1354 = vmatpush1.xpose.msra.mxu0 0.0
        %1355 = vmatprep.subr.mxu0 0.0
        %1356 = vmatpush1.xpose.msra.mxu0 0.0
        %1357 = vmatprep.subr.mxu0 0.0
        %1358 = vmatpush1.xpose.msra.mxu0 0.0
        %1359 = vmatprep.subr.mxu0 0.0
        %1360 = vmatpush1.xpose.msra.mxu0 0.0
        %1361 = vmatprep.subr.mxu0 0.0
        %1362 = vmatpush1.xpose.msra.mxu0 0.0
        %1363 = vmatprep.subr.mxu0 0.0
        %1364 = vmatpush1.xpose.msra.mxu0 0.0
        %1365 = vmatprep.subr.mxu0 0.0
        %1366 = vmatpush1.xpose.msra.mxu0 0.0
        %1367 = vmatprep.subr.mxu0 0.0
        %1368 = vmatpush1.xpose.msra.mxu0 0.0
        %1369 = vmatprep.subr.mxu0 0.0
        %1370 = vmatpush1.xpose.msra.mxu0 0.0
        %1371 = vmatprep.subr.mxu0 0.0
        %1372 = vmatpush1.xpose.msra.mxu0 0.0
        %1373 = vmatprep.subr.mxu0 0.0
        %1374 = vmatpush1.xpose.msra.mxu0 0.0
        %1375 = vmatprep.subr.mxu0 0.0
        %1376 = vmatpush1.xpose.msra.mxu0 0.0
        %1377 = vmatprep.subr.mxu0 0.0
        %1378 = vmatpush1.xpose.msra.mxu0 0.0
        %1379 = vmatprep.subr.mxu0 0.0
        %1380 = vmatpush1.xpose.msra.mxu0 0.0
        %1381 = vmatprep.subr.mxu0 0.0
        %1382 = vmatpush1.xpose.msra.mxu0 0.0
        %1383 = vmatprep.subr.mxu0 0.0
        %1384 = vmatpush1.xpose.msra.mxu0 0.0
        %1385 = vmatprep.subr.mxu0 0.0
        %1386 = vmatpush1.xpose.msra.mxu0 0.0
        %1387 = vmatprep.subr.mxu0 0.0
        %1388 = vmatpush1.xpose.msra.mxu0 0.0
        %1389 = vmatprep.subr.mxu0 0.0
        %1390 = vmatpush1.xpose.msra.mxu0 0.0
        %1391 = vmatprep.subr.mxu0 0.0
        %1392 = vmatpush1.xpose.msra.mxu0 0.0
        %1393 = vmatprep.subr.mxu0 0.0
        %1394 = vmatpush1.xpose.msra.mxu0 0.0
        %1395 = vmatprep.subr.mxu0 0.0
        %1396 = vmatpush1.xpose.msra.mxu0 0.0
        %1397 = vmatprep.subr.mxu0 0.0
        %1398 = vmatpush1.xpose.msra.mxu0 0.0
        %1399 = vmatprep.subr.mxu0 0.0
        %1400 = vmatpush1.xpose.msra.mxu0 0.0
        %1401 = vmatprep.subr.mxu0 0.0
        %1402 = vmatpush1.xpose.msra.mxu0 0.0
        %1403 = vmatprep.subr.mxu0 0.0
        %1404 = vmatpush1.xpose.msra.mxu0 0.0
        %1405 = vmatprep.mubr.f32.mxu0 0.0
        %v1406 = vand.u32 %v1336, 4294901760
        %v1407 = vsub.f32 %v1336, %v1406
        %v1408 = vand.u32 %v1407, 4294901760
        %v1409 = vsub.f32 %v1407, %v1408
        %v1410 = vand.u32 %v1409, 4294901760
        %1411 = vmatmul.mubr.f32.gmra.mrb[0].mxu0 %v1410
        %v1412 = vpop.f32.mrb[0].mxu0
        %v1413 = vadd.f32 0.0, %v1412
        %v1414 = vpop.f32.mrb[0].mxu0
        %1415 = vdwg.mxu0
        %1416 = vmatprep.subr.mxu0 0.0
        %v1417 = vand.u32 %v1338, 4294901760
        %v1418 = vsub.f32 %v1338, %v1417
        %v1419 = vand.u32 %v1418, 4294901760
        %v1420 = vsub.f32 %v1418, %v1419
        %v1421 = vand.u32 %v1420, 4294901760
        %1422 = vmatpush1.xpose.msra.mxu0 %v1421
        %1423 = vmatprep.subr.mxu0 0.0
        %1424 = vmatpush1.xpose.msra.mxu0 0.0
        %1425 = vmatprep.subr.mxu0 0.0
        %1426 = vmatpush1.xpose.msra.mxu0 0.0
        %1427 = vmatprep.subr.mxu0 0.0
        %1428 = vmatpush1.xpose.msra.mxu0 0.0
        %1429 = vmatprep.subr.mxu0 0.0
        %1430 = vmatpush1.xpose.msra.mxu0 0.0
        %1431 = vmatprep.subr.mxu0 0.0
        %1432 = vmatpush1.xpose.msra.mxu0 0.0
        %1433 = vmatprep.subr.mxu0 0.0
        %1434 = vmatpush1.xpose.msra.mxu0 0.0
        %1435 = vmatprep.subr.mxu0 0.0
        %1436 = vmatpush1.xpose.msra.mxu0 0.0
        %1437 = vmatprep.subr.mxu0 0.0
        %1438 = vmatpush1.xpose.msra.mxu0 0.0
        %1439 = vmatprep.subr.mxu0 0.0
        %1440 = vmatpush1.xpose.msra.mxu0 0.0
        %1441 = vmatprep.subr.mxu0 0.0
        %1442 = vmatpush1.xpose.msra.mxu0 0.0
        %1443 = vmatprep.subr.mxu0 0.0
        %1444 = vmatpush1.xpose.msra.mxu0 0.0
        %1445 = vmatprep.subr.mxu0 0.0
        %1446 = vmatpush1.xpose.msra.mxu0 0.0
        %1447 = vmatprep.subr.mxu0 0.0
        %1448 = vmatpush1.xpose.msra.mxu0 0.0
        %1449 = vmatprep.subr.mxu0 0.0
        %1450 = vmatpush1.xpose.msra.mxu0 0.0
        %1451 = vmatprep.subr.mxu0 0.0
        %1452 = vmatpush1.xpose.msra.mxu0 0.0
        %1453 = vmatprep.subr.mxu0 0.0
        %1454 = vmatpush1.xpose.msra.mxu0 0.0
        %1455 = vmatprep.subr.mxu0 0.0
        %1456 = vmatpush1.xpose.msra.mxu0 0.0
        %1457 = vmatprep.subr.mxu0 0.0
        %1458 = vmatpush1.xpose.msra.mxu0 0.0
        %1459 = vmatprep.subr.mxu0 0.0
        %1460 = vmatpush1.xpose.msra.mxu0 0.0
        %1461 = vmatprep.subr.mxu0 0.0
        %1462 = vmatpush1.xpose.msra.mxu0 0.0
        %1463 = vmatprep.subr.mxu0 0.0
        %1464 = vmatpush1.xpose.msra.mxu0 0.0
        %1465 = vmatprep.subr.mxu0 0.0
        %1466 = vmatpush1.xpose.msra.mxu0 0.0
        %1467 = vmatprep.subr.mxu0 0.0
        %1468 = vmatpush1.xpose.msra.mxu0 0.0
        %1469 = vmatprep.subr.mxu0 0.0
        %1470 = vmatpush1.xpose.msra.mxu0 0.0
        %1471 = vmatprep.subr.mxu0 0.0
        %1472 = vmatpush1.xpose.msra.mxu0 0.0
        %1473 = vmatprep.subr.mxu0 0.0
        %1474 = vmatpush1.xpose.msra.mxu0 0.0
        %1475 = vmatprep.subr.mxu0 0.0
        %1476 = vmatpush1.xpose.msra.mxu0 0.0
        %1477 = vmatprep.subr.mxu0 0.0
        %1478 = vmatpush1.xpose.msra.mxu0 0.0
        %1479 = vmatprep.subr.mxu0 0.0
        %1480 = vmatpush1.xpose.msra.mxu0 0.0
        %1481 = vmatprep.subr.mxu0 0.0
        %1482 = vmatpush1.xpose.msra.mxu0 0.0
        %1483 = vmatprep.subr.mxu0 0.0
        %1484 = vmatpush1.xpose.msra.mxu0 0.0
        %1485 = vmatprep.mubr.f32.mxu0 0.0
        %v1486 = vand.u32 %v1336, 4294901760
        %1487 = vmatmul.mubr.f32.gmra.mrb[0].mxu0 %v1486
        %v1488 = vpop.f32.mrb[0].mxu0
        %v1489 = vadd.f32 %v1413, %v1488
        %v1490 = vpop.f32.mrb[0].mxu0
        %1491 = vdwg.mxu0
        %1492 = vmatprep.subr.mxu0 0.0
        %v1493 = vand.u32 %v1338, 4294901760
        %v1494 = vsub.f32 %v1338, %v1493
        %1495 = vmatpush1.xpose.msra.mxu0 %v1494
        %1496 = vmatprep.subr.mxu0 0.0
        %1497 = vmatpush1.xpose.msra.mxu0 0.0
        %1498 = vmatprep.subr.mxu0 0.0
        %1499 = vmatpush1.xpose.msra.mxu0 0.0
        %1500 = vmatprep.subr.mxu0 0.0
        %1501 = vmatpush1.xpose.msra.mxu0 0.0
        %1502 = vmatprep.subr.mxu0 0.0
        %1503 = vmatpush1.xpose.msra.mxu0 0.0
        %1504 = vmatprep.subr.mxu0 0.0
        %1505 = vmatpush1.xpose.msra.mxu0 0.0
        %1506 = vmatprep.subr.mxu0 0.0
        %1507 = vmatpush1.xpose.msra.mxu0 0.0
        %1508 = vmatprep.subr.mxu0 0.0
        %1509 = vmatpush1.xpose.msra.mxu0 0.0
        %1510 = vmatprep.subr.mxu0 0.0
        %1511 = vmatpush1.xpose.msra.mxu0 0.0
        %1512 = vmatprep.subr.mxu0 0.0
        %1513 = vmatpush1.xpose.msra.mxu0 0.0
        %1514 = vmatprep.subr.mxu0 0.0
        %1515 = vmatpush1.xpose.msra.mxu0 0.0
        %1516 = vmatprep.subr.mxu0 0.0
        %1517 = vmatpush1.xpose.msra.mxu0 0.0
        %1518 = vmatprep.subr.mxu0 0.0
        %1519 = vmatpush1.xpose.msra.mxu0 0.0
        %1520 = vmatprep.subr.mxu0 0.0
        %1521 = vmatpush1.xpose.msra.mxu0 0.0
        %1522 = vmatprep.subr.mxu0 0.0
        %1523 = vmatpush1.xpose.msra.mxu0 0.0
        %1524 = vmatprep.subr.mxu0 0.0
        %1525 = vmatpush1.xpose.msra.mxu0 0.0
        %1526 = vmatprep.subr.mxu0 0.0
        %1527 = vmatpush1.xpose.msra.mxu0 0.0
        %1528 = vmatprep.subr.mxu0 0.0
        %1529 = vmatpush1.xpose.msra.mxu0 0.0
        %1530 = vmatprep.subr.mxu0 0.0
        %1531 = vmatpush1.xpose.msra.mxu0 0.0
        %1532 = vmatprep.subr.mxu0 0.0
        %1533 = vmatpush1.xpose.msra.mxu0 0.0
        %1534 = vmatprep.subr.mxu0 0.0
        %1535 = vmatpush1.xpose.msra.mxu0 0.0
        %1536 = vmatprep.subr.mxu0 0.0
        %1537 = vmatpush1.xpose.msra.mxu0 0.0
        %1538 = vmatprep.subr.mxu0 0.0
        %1539 = vmatpush1.xpose.msra.mxu0 0.0
        %1540 = vmatprep.subr.mxu0 0.0
        %1541 = vmatpush1.xpose.msra.mxu0 0.0
        %1542 = vmatprep.subr.mxu0 0.0
        %1543 = vmatpush1.xpose.msra.mxu0 0.0
        %1544 = vmatprep.subr.mxu0 0.0
        %1545 = vmatpush1.xpose.msra.mxu0 0.0
        %1546 = vmatprep.subr.mxu0 0.0
        %1547 = vmatpush1.xpose.msra.mxu0 0.0
        %1548 = vmatprep.subr.mxu0 0.0
        %1549 = vmatpush1.xpose.msra.mxu0 0.0
        %1550 = vmatprep.subr.mxu0 0.0
        %1551 = vmatpush1.xpose.msra.mxu0 0.0
        %1552 = vmatprep.subr.mxu0 0.0
        %1553 = vmatpush1.xpose.msra.mxu0 0.0
        %1554 = vmatprep.subr.mxu0 0.0
        %1555 = vmatpush1.xpose.msra.mxu0 0.0
        %1556 = vmatprep.subr.mxu0 0.0
        %1557 = vmatpush1.xpose.msra.mxu0 0.0
        %1558 = vmatprep.mubr.f32.mxu0 0.0
        %v1559 = vand.u32 %v1336, 4294901760
        %v1560 = vsub.f32 %v1336, %v1559
        %1561 = vmatmul.mubr.f32.gmra.mrb[0].mxu0 %v1560
        %v1562 = vpop.f32.mrb[0].mxu0
        %v1563 = vadd.f32 %v1489, %v1562
        %v1564 = vpop.f32.mrb[0].mxu0
        %1565 = vdwg.mxu0
        %1566 = vmatprep.subr.mxu0 0.0
        %v1567 = vand.u32 %v1338, 4294901760
        %1568 = vmatpush1.xpose.msra.mxu0 %v1567
        %1569 = vmatprep.subr.mxu0 0.0
        %1570 = vmatpush1.xpose.msra.mxu0 0.0
        %1571 = vmatprep.subr.mxu0 0.0
        %1572 = vmatpush1.xpose.msra.mxu0 0.0
        %1573 = vmatprep.subr.mxu0 0.0
        %1574 = vmatpush1.xpose.msra.mxu0 0.0
        %1575 = vmatprep.subr.mxu0 0.0
        %1576 = vmatpush1.xpose.msra.mxu0 0.0
        %1577 = vmatprep.subr.mxu0 0.0
        %1578 = vmatpush1.xpose.msra.mxu0 0.0
        %1579 = vmatprep.subr.mxu0 0.0
        %1580 = vmatpush1.xpose.msra.mxu0 0.0
        %1581 = vmatprep.subr.mxu0 0.0
        %1582 = vmatpush1.xpose.msra.mxu0 0.0
        %1583 = vmatprep.subr.mxu0 0.0
        %1584 = vmatpush1.xpose.msra.mxu0 0.0
        %1585 = vmatprep.subr.mxu0 0.0
        %1586 = vmatpush1.xpose.msra.mxu0 0.0
        %1587 = vmatprep.subr.mxu0 0.0
        %1588 = vmatpush1.xpose.msra.mxu0 0.0
        %1589 = vmatprep.subr.mxu0 0.0
        %1590 = vmatpush1.xpose.msra.mxu0 0.0
        %1591 = vmatprep.subr.mxu0 0.0
        %1592 = vmatpush1.xpose.msra.mxu0 0.0
        %1593 = vmatprep.subr.mxu0 0.0
        %1594 = vmatpush1.xpose.msra.mxu0 0.0
        %1595 = vmatprep.subr.mxu0 0.0
        %1596 = vmatpush1.xpose.msra.mxu0 0.0
        %1597 = vmatprep.subr.mxu0 0.0
        %1598 = vmatpush1.xpose.msra.mxu0 0.0
        %1599 = vmatprep.subr.mxu0 0.0
        %1600 = vmatpush1.xpose.msra.mxu0 0.0
        %1601 = vmatprep.subr.mxu0 0.0
        %1602 = vmatpush1.xpose.msra.mxu0 0.0
        %1603 = vmatprep.subr.mxu0 0.0
        %1604 = vmatpush1.xpose.msra.mxu0 0.0
        %1605 = vmatprep.subr.mxu0 0.0
        %1606 = vmatpush1.xpose.msra.mxu0 0.0
        %1607 = vmatprep.subr.mxu0 0.0
        %1608 = vmatpush1.xpose.msra.mxu0 0.0
        %1609 = vmatprep.subr.mxu0 0.0
        %1610 = vmatpush1.xpose.msra.mxu0 0.0
        %1611 = vmatprep.subr.mxu0 0.0
        %1612 = vmatpush1.xpose.msra.mxu0 0.0
        %1613 = vmatprep.subr.mxu0 0.0
        %1614 = vmatpush1.xpose.msra.mxu0 0.0
        %1615 = vmatprep.subr.mxu0 0.0
        %1616 = vmatpush1.xpose.msra.mxu0 0.0
        %1617 = vmatprep.subr.mxu0 0.0
        %1618 = vmatpush1.xpose.msra.mxu0 0.0
        %1619 = vmatprep.subr.mxu0 0.0
        %1620 = vmatpush1.xpose.msra.mxu0 0.0
        %1621 = vmatprep.subr.mxu0 0.0
        %1622 = vmatpush1.xpose.msra.mxu0 0.0
        %1623 = vmatprep.subr.mxu0 0.0
        %1624 = vmatpush1.xpose.msra.mxu0 0.0
        %1625 = vmatprep.subr.mxu0 0.0
        %1626 = vmatpush1.xpose.msra.mxu0 0.0
        %1627 = vmatprep.subr.mxu0 0.0
        %1628 = vmatpush1.xpose.msra.mxu0 0.0
        %1629 = vmatprep.subr.mxu0 0.0
        %1630 = vmatpush1.xpose.msra.mxu0 0.0
        %1631 = vmatprep.mubr.f32.mxu0 0.0
        %v1632 = vand.u32 %v1336, 4294901760
        %v1633 = vsub.f32 %v1336, %v1632
        %v1634 = vand.u32 %v1633, 4294901760
        %1635 = vmatmul.mubr.f32.gmra.mrb[0].mxu0 %v1634
        %v1636 = vpop.f32.mrb[0].mxu0
        %v1637 = vadd.f32 %v1563, %v1636
        %v1638 = vpop.f32.mrb[0].mxu0
        %1639 = vdwg.mxu0
        %1640 = vmatprep.subr.mxu0 0.0
        %v1641 = vand.u32 %v1338, 4294901760
        %v1642 = vsub.f32 %v1338, %v1641
        %v1643 = vand.u32 %v1642, 4294901760
        %1644 = vmatpush1.xpose.msra.mxu0 %v1643
        %1645 = vmatprep.subr.mxu0 0.0
        %1646 = vmatpush1.xpose.msra.mxu0 0.0
        %1647 = vmatprep.subr.mxu0 0.0
        %1648 = vmatpush1.xpose.msra.mxu0 0.0
        %1649 = vmatprep.subr.mxu0 0.0
        %1650 = vmatpush1.xpose.msra.mxu0 0.0
        %1651 = vmatprep.subr.mxu0 0.0
        %1652 = vmatpush1.xpose.msra.mxu0 0.0
        %1653 = vmatprep.subr.mxu0 0.0
        %1654 = vmatpush1.xpose.msra.mxu0 0.0
        %1655 = vmatprep.subr.mxu0 0.0
        %1656 = vmatpush1.xpose.msra.mxu0 0.0
        %1657 = vmatprep.subr.mxu0 0.0
        %1658 = vmatpush1.xpose.msra.mxu0 0.0
        %1659 = vmatprep.subr.mxu0 0.0
        %1660 = vmatpush1.xpose.msra.mxu0 0.0
        %1661 = vmatprep.subr.mxu0 0.0
        %1662 = vmatpush1.xpose.msra.mxu0 0.0
        %1663 = vmatprep.subr.mxu0 0.0
        %1664 = vmatpush1.xpose.msra.mxu0 0.0
        %1665 = vmatprep.subr.mxu0 0.0
        %1666 = vmatpush1.xpose.msra.mxu0 0.0
        %1667 = vmatprep.subr.mxu0 0.0
        %1668 = vmatpush1.xpose.msra.mxu0 0.0
        %1669 = vmatprep.subr.mxu0 0.0
        %1670 = vmatpush1.xpose.msra.mxu0 0.0
        %1671 = vmatprep.subr.mxu0 0.0
        %1672 = vmatpush1.xpose.msra.mxu0 0.0
        %1673 = vmatprep.subr.mxu0 0.0
        %1674 = vmatpush1.xpose.msra.mxu0 0.0
        %1675 = vmatprep.subr.mxu0 0.0
        %1676 = vmatpush1.xpose.msra.mxu0 0.0
        %1677 = vmatprep.subr.mxu0 0.0
        %1678 = vmatpush1.xpose.msra.mxu0 0.0
        %1679 = vmatprep.subr.mxu0 0.0
        %1680 = vmatpush1.xpose.msra.mxu0 0.0
        %1681 = vmatprep.subr.mxu0 0.0
        %1682 = vmatpush1.xpose.msra.mxu0 0.0
        %1683 = vmatprep.subr.mxu0 0.0
        %1684 = vmatpush1.xpose.msra.mxu0 0.0
        %1685 = vmatprep.subr.mxu0 0.0
        %1686 = vmatpush1.xpose.msra.mxu0 0.0
        %1687 = vmatprep.subr.mxu0 0.0
        %1688 = vmatpush1.xpose.msra.mxu0 0.0
        %1689 = vmatprep.subr.mxu0 0.0
        %1690 = vmatpush1.xpose.msra.mxu0 0.0
        %1691 = vmatprep.subr.mxu0 0.0
        %1692 = vmatpush1.xpose.msra.mxu0 0.0
        %1693 = vmatprep.subr.mxu0 0.0
        %1694 = vmatpush1.xpose.msra.mxu0 0.0
        %1695 = vmatprep.subr.mxu0 0.0
        %1696 = vmatpush1.xpose.msra.mxu0 0.0
        %1697 = vmatprep.subr.mxu0 0.0
        %1698 = vmatpush1.xpose.msra.mxu0 0.0
        %1699 = vmatprep.subr.mxu0 0.0
        %1700 = vmatpush1.xpose.msra.mxu0 0.0
        %1701 = vmatprep.subr.mxu0 0.0
        %1702 = vmatpush1.xpose.msra.mxu0 0.0
        %1703 = vmatprep.subr.mxu0 0.0
        %1704 = vmatpush1.xpose.msra.mxu0 0.0
        %1705 = vmatprep.subr.mxu0 0.0
        %1706 = vmatpush1.xpose.msra.mxu0 0.0
        %1707 = vmatprep.mubr.f32.mxu0 0.0
        %v1708 = vand.u32 %v1336, 4294901760
        %1709 = vmatmul.mubr.f32.gmra.mrb[0].mxu0 %v1708
        %v1710 = vpop.f32.mrb[0].mxu0
        %v1711 = vadd.f32 %v1637, %v1710
        %v1712 = vpop.f32.mrb[0].mxu0
        %1713 = vdwg.mxu0
        %1714 = vmatprep.subr.mxu0 0.0
        %v1715 = vand.u32 %v1338, 4294901760
        %1716 = vmatpush1.xpose.msra.mxu0 %v1715
        %1717 = vmatprep.subr.mxu0 0.0
        %1718 = vmatpush1.xpose.msra.mxu0 0.0
        %1719 = vmatprep.subr.mxu0 0.0
        %1720 = vmatpush1.xpose.msra.mxu0 0.0
        %1721 = vmatprep.subr.mxu0 0.0
        %1722 = vmatpush1.xpose.msra.mxu0 0.0
        %1723 = vmatprep.subr.mxu0 0.0
        %1724 = vmatpush1.xpose.msra.mxu0 0.0
        %1725 = vmatprep.subr.mxu0 0.0
        %1726 = vmatpush1.xpose.msra.mxu0 0.0
        %1727 = vmatprep.subr.mxu0 0.0
        %1728 = vmatpush1.xpose.msra.mxu0 0.0
        %1729 = vmatprep.subr.mxu0 0.0
        %1730 = vmatpush1.xpose.msra.mxu0 0.0
        %1731 = vmatprep.subr.mxu0 0.0
        %1732 = vmatpush1.xpose.msra.mxu0 0.0
        %1733 = vmatprep.subr.mxu0 0.0
        %1734 = vmatpush1.xpose.msra.mxu0 0.0
        %1735 = vmatprep.subr.mxu0 0.0
        %1736 = vmatpush1.xpose.msra.mxu0 0.0
        %1737 = vmatprep.subr.mxu0 0.0
        %1738 = vmatpush1.xpose.msra.mxu0 0.0
        %1739 = vmatprep.subr.mxu0 0.0
        %1740 = vmatpush1.xpose.msra.mxu0 0.0
        %1741 = vmatprep.subr.mxu0 0.0
        %1742 = vmatpush1.xpose.msra.mxu0 0.0
        %1743 = vmatprep.subr.mxu0 0.0
        %1744 = vmatpush1.xpose.msra.mxu0 0.0
        %1745 = vmatprep.subr.mxu0 0.0
        %1746 = vmatpush1.xpose.msra.mxu0 0.0
        %1747 = vmatprep.subr.mxu0 0.0
        %1748 = vmatpush1.xpose.msra.mxu0 0.0
        %1749 = vmatprep.subr.mxu0 0.0
        %1750 = vmatpush1.xpose.msra.mxu0 0.0
        %1751 = vmatprep.subr.mxu0 0.0
        %1752 = vmatpush1.xpose.msra.mxu0 0.0
        %1753 = vmatprep.subr.mxu0 0.0
        %1754 = vmatpush1.xpose.msra.mxu0 0.0
        %1755 = vmatprep.subr.mxu0 0.0
        %1756 = vmatpush1.xpose.msra.mxu0 0.0
        %1757 = vmatprep.subr.mxu0 0.0
        %1758 = vmatpush1.xpose.msra.mxu0 0.0
        %1759 = vmatprep.subr.mxu0 0.0
        %1760 = vmatpush1.xpose.msra.mxu0 0.0
        %1761 = vmatprep.subr.mxu0 0.0
        %1762 = vmatpush1.xpose.msra.mxu0 0.0
        %1763 = vmatprep.subr.mxu0 0.0
        %1764 = vmatpush1.xpose.msra.mxu0 0.0
        %1765 = vmatprep.subr.mxu0 0.0
        %1766 = vmatpush1.xpose.msra.mxu0 0.0
        %1767 = vmatprep.subr.mxu0 0.0
        %1768 = vmatpush1.xpose.msra.mxu0 0.0
        %1769 = vmatprep.subr.mxu0 0.0
        %1770 = vmatpush1.xpose.msra.mxu0 0.0
        %1771 = vmatprep.subr.mxu0 0.0
        %1772 = vmatpush1.xpose.msra.mxu0 0.0
        %1773 = vmatprep.subr.mxu0 0.0
        %1774 = vmatpush1.xpose.msra.mxu0 0.0
        %1775 = vmatprep.subr.mxu0 0.0
        %1776 = vmatpush1.xpose.msra.mxu0 0.0
        %1777 = vmatprep.subr.mxu0 0.0
        %1778 = vmatpush1.xpose.msra.mxu0 0.0
        %1779 = vmatprep.mubr.f32.mxu0 0.0
        %v1780 = vand.u32 %v1336, 4294901760
        %1781 = vmatmul.mubr.f32.gmra.mrb[0].mxu0 %v1780
        %v1782 = vpop.f32.mrb[0].mxu0
        %v1783 = vadd.f32 %v1711, %v1782
        %v1784 = vpop.f32.mrb[0].mxu0
        %1785 = vdwg.mxu0
        %1787 = vrot.lane.b32.xlu0 %v1324, 96
        %v1788 = vpop.permute.xlu0 %1787
        %v1789 = vsel %vm1335, %v1324, 0
        %v1791 = vsel %vm1335, %v1788, 0
        %1793 = vmatprep.subr.mxu0 0.0
        %v1794 = vand.u32 %v1791, 4294901760
        %1795 = vmatpush1.xpose.msra.mxu0 %v1794
        %1796 = vmatprep.subr.mxu0 0.0
        %1797 = vmatpush1.xpose.msra.mxu0 0.0
        %1798 = vmatprep.subr.mxu0 0.0
        %1799 = vmatpush1.xpose.msra.mxu0 0.0
        %1800 = vmatprep.subr.mxu0 0.0
        %1801 = vmatpush1.xpose.msra.mxu0 0.0
        %1802 = vmatprep.subr.mxu0 0.0
        %1803 = vmatpush1.xpose.msra.mxu0 0.0
        %1804 = vmatprep.subr.mxu0 0.0
        %1805 = vmatpush1.xpose.msra.mxu0 0.0
        %1806 = vmatprep.subr.mxu0 0.0
        %1807 = vmatpush1.xpose.msra.mxu0 0.0
        %1808 = vmatprep.subr.mxu0 0.0
        %1809 = vmatpush1.xpose.msra.mxu0 0.0
        %1810 = vmatprep.subr.mxu0 0.0
        %1811 = vmatpush1.xpose.msra.mxu0 0.0
        %1812 = vmatprep.subr.mxu0 0.0
        %1813 = vmatpush1.xpose.msra.mxu0 0.0
        %1814 = vmatprep.subr.mxu0 0.0
        %1815 = vmatpush1.xpose.msra.mxu0 0.0
        %1816 = vmatprep.subr.mxu0 0.0
        %1817 = vmatpush1.xpose.msra.mxu0 0.0
        %1818 = vmatprep.subr.mxu0 0.0
        %1819 = vmatpush1.xpose.msra.mxu0 0.0
        %1820 = vmatprep.subr.mxu0 0.0
        %1821 = vmatpush1.xpose.msra.mxu0 0.0
        %1822 = vmatprep.subr.mxu0 0.0
        %1823 = vmatpush1.xpose.msra.mxu0 0.0
        %1824 = vmatprep.subr.mxu0 0.0
        %1825 = vmatpush1.xpose.msra.mxu0 0.0
        %1826 = vmatprep.subr.mxu0 0.0
        %1827 = vmatpush1.xpose.msra.mxu0 0.0
        %1828 = vmatprep.subr.mxu0 0.0
        %1829 = vmatpush1.xpose.msra.mxu0 0.0
        %1830 = vmatprep.subr.mxu0 0.0
        %1831 = vmatpush1.xpose.msra.mxu0 0.0
        %1832 = vmatprep.subr.mxu0 0.0
        %1833 = vmatpush1.xpose.msra.mxu0 0.0
        %1834 = vmatprep.subr.mxu0 0.0
        %1835 = vmatpush1.xpose.msra.mxu0 0.0
        %1836 = vmatprep.subr.mxu0 0.0
        %1837 = vmatpush1.xpose.msra.mxu0 0.0
        %1838 = vmatprep.subr.mxu0 0.0
        %1839 = vmatpush1.xpose.msra.mxu0 0.0
        %1840 = vmatprep.subr.mxu0 0.0
        %1841 = vmatpush1.xpose.msra.mxu0 0.0
        %1842 = vmatprep.subr.mxu0 0.0
        %1843 = vmatpush1.xpose.msra.mxu0 0.0
        %1844 = vmatprep.subr.mxu0 0.0
        %1845 = vmatpush1.xpose.msra.mxu0 0.0
        %1846 = vmatprep.subr.mxu0 0.0
        %1847 = vmatpush1.xpose.msra.mxu0 0.0
        %1848 = vmatprep.subr.mxu0 0.0
        %1849 = vmatpush1.xpose.msra.mxu0 0.0
        %1850 = vmatprep.subr.mxu0 0.0
        %1851 = vmatpush1.xpose.msra.mxu0 0.0
        %1852 = vmatprep.subr.mxu0 0.0
        %1853 = vmatpush1.xpose.msra.mxu0 0.0
        %1854 = vmatprep.subr.mxu0 0.0
        %1855 = vmatpush1.xpose.msra.mxu0 0.0
        %1856 = vmatprep.subr.mxu0 0.0
        %1857 = vmatpush1.xpose.msra.mxu0 0.0
        %1858 = vmatprep.mubr.f32.mxu0 0.0
        %v1859 = vand.u32 %v1789, 4294901760
        %v1860 = vsub.f32 %v1789, %v1859
        %v1861 = vand.u32 %v1860, 4294901760
        %v1862 = vsub.f32 %v1860, %v1861
        %v1863 = vand.u32 %v1862, 4294901760
        %1864 = vmatmul.mubr.f32.gmra.mrb[0].mxu0 %v1863
        %v1865 = vpop.f32.mrb[0].mxu0
        %v1866 = vadd.f32 0.0, %v1865
        %v1867 = vpop.f32.mrb[0].mxu0
        %1868 = vdwg.mxu0
        %1869 = vmatprep.subr.mxu0 0.0
        %v1870 = vand.u32 %v1791, 4294901760
        %v1871 = vsub.f32 %v1791, %v1870
        %v1872 = vand.u32 %v1871, 4294901760
        %v1873 = vsub.f32 %v1871, %v1872
        %v1874 = vand.u32 %v1873, 4294901760
        %1875 = vmatpush1.xpose.msra.mxu0 %v1874
        %1876 = vmatprep.subr.mxu0 0.0
        %1877 = vmatpush1.xpose.msra.mxu0 0.0
        %1878 = vmatprep.subr.mxu0 0.0
        %1879 = vmatpush1.xpose.msra.mxu0 0.0
        %1880 = vmatprep.subr.mxu0 0.0
        %1881 = vmatpush1.xpose.msra.mxu0 0.0
        %1882 = vmatprep.subr.mxu0 0.0
        %1883 = vmatpush1.xpose.msra.mxu0 0.0
        %1884 = vmatprep.subr.mxu0 0.0
        %1885 = vmatpush1.xpose.msra.mxu0 0.0
        %1886 = vmatprep.subr.mxu0 0.0
        %1887 = vmatpush1.xpose.msra.mxu0 0.0
        %1888 = vmatprep.subr.mxu0 0.0
        %1889 = vmatpush1.xpose.msra.mxu0 0.0
        %1890 = vmatprep.subr.mxu0 0.0
        %1891 = vmatpush1.xpose.msra.mxu0 0.0
        %1892 = vmatprep.subr.mxu0 0.0
        %1893 = vmatpush1.xpose.msra.mxu0 0.0
        %1894 = vmatprep.subr.mxu0 0.0
        %1895 = vmatpush1.xpose.msra.mxu0 0.0
        %1896 = vmatprep.subr.mxu0 0.0
        %1897 = vmatpush1.xpose.msra.mxu0 0.0
        %1898 = vmatprep.subr.mxu0 0.0
        %1899 = vmatpush1.xpose.msra.mxu0 0.0
        %1900 = vmatprep.subr.mxu0 0.0
        %1901 = vmatpush1.xpose.msra.mxu0 0.0
        %1902 = vmatprep.subr.mxu0 0.0
        %1903 = vmatpush1.xpose.msra.mxu0 0.0
        %1904 = vmatprep.subr.mxu0 0.0
        %1905 = vmatpush1.xpose.msra.mxu0 0.0
        %1906 = vmatprep.subr.mxu0 0.0
        %1907 = vmatpush1.xpose.msra.mxu0 0.0
        %1908 = vmatprep.subr.mxu0 0.0
        %1909 = vmatpush1.xpose.msra.mxu0 0.0
        %1910 = vmatprep.subr.mxu0 0.0
        %1911 = vmatpush1.xpose.msra.mxu0 0.0
        %1912 = vmatprep.subr.mxu0 0.0
        %1913 = vmatpush1.xpose.msra.mxu0 0.0
        %1914 = vmatprep.subr.mxu0 0.0
        %1915 = vmatpush1.xpose.msra.mxu0 0.0
        %1916 = vmatprep.subr.mxu0 0.0
        %1917 = vmatpush1.xpose.msra.mxu0 0.0
        %1918 = vmatprep.subr.mxu0 0.0
        %1919 = vmatpush1.xpose.msra.mxu0 0.0
        %1920 = vmatprep.subr.mxu0 0.0
        %1921 = vmatpush1.xpose.msra.mxu0 0.0
        %1922 = vmatprep.subr.mxu0 0.0
        %1923 = vmatpush1.xpose.msra.mxu0 0.0
        %1924 = vmatprep.subr.mxu0 0.0
        %1925 = vmatpush1.xpose.msra.mxu0 0.0
        %1926 = vmatprep.subr.mxu0 0.0
        %1927 = vmatpush1.xpose.msra.mxu0 0.0
        %1928 = vmatprep.subr.mxu0 0.0
        %1929 = vmatpush1.xpose.msra.mxu0 0.0
        %1930 = vmatprep.subr.mxu0 0.0
        %1931 = vmatpush1.xpose.msra.mxu0 0.0
        %1932 = vmatprep.subr.mxu0 0.0
        %1933 = vmatpush1.xpose.msra.mxu0 0.0
        %1934 = vmatprep.subr.mxu0 0.0
        %1935 = vmatpush1.xpose.msra.mxu0 0.0
        %1936 = vmatprep.subr.mxu0 0.0
        %1937 = vmatpush1.xpose.msra.mxu0 0.0
        %1938 = vmatprep.mubr.f32.mxu0 0.0
        %v1939 = vand.u32 %v1789, 4294901760
        %1940 = vmatmul.mubr.f32.gmra.mrb[0].mxu0 %v1939
        %v1941 = vpop.f32.mrb[0].mxu0
        %v1942 = vadd.f32 %v1866, %v1941
        %v1943 = vpop.f32.mrb[0].mxu0
        %1944 = vdwg.mxu0
        %1945 = vmatprep.subr.mxu0 0.0
        %v1946 = vand.u32 %v1791, 4294901760
        %v1947 = vsub.f32 %v1791, %v1946
        %1948 = vmatpush1.xpose.msra.mxu0 %v1947
        %1949 = vmatprep.subr.mxu0 0.0
        %1950 = vmatpush1.xpose.msra.mxu0 0.0
        %1951 = vmatprep.subr.mxu0 0.0
        %1952 = vmatpush1.xpose.msra.mxu0 0.0
        %1953 = vmatprep.subr.mxu0 0.0
        %1954 = vmatpush1.xpose.msra.mxu0 0.0
        %1955 = vmatprep.subr.mxu0 0.0
        %1956 = vmatpush1.xpose.msra.mxu0 0.0
        %1957 = vmatprep.subr.mxu0 0.0
        %1958 = vmatpush1.xpose.msra.mxu0 0.0
        %1959 = vmatprep.subr.mxu0 0.0
        %1960 = vmatpush1.xpose.msra.mxu0 0.0
        %1961 = vmatprep.subr.mxu0 0.0
        %1962 = vmatpush1.xpose.msra.mxu0 0.0
        %1963 = vmatprep.subr.mxu0 0.0
        %1964 = vmatpush1.xpose.msra.mxu0 0.0
        %1965 = vmatprep.subr.mxu0 0.0
        %1966 = vmatpush1.xpose.msra.mxu0 0.0
        %1967 = vmatprep.subr.mxu0 0.0
        %1968 = vmatpush1.xpose.msra.mxu0 0.0
        %1969 = vmatprep.subr.mxu0 0.0
        %1970 = vmatpush1.xpose.msra.mxu0 0.0
        %1971 = vmatprep.subr.mxu0 0.0
        %1972 = vmatpush1.xpose.msra.mxu0 0.0
        %1973 = vmatprep.subr.mxu0 0.0
        %1974 = vmatpush1.xpose.msra.mxu0 0.0
        %1975 = vmatprep.subr.mxu0 0.0
        %1976 = vmatpush1.xpose.msra.mxu0 0.0
        %1977 = vmatprep.subr.mxu0 0.0
        %1978 = vmatpush1.xpose.msra.mxu0 0.0
        %1979 = vmatprep.subr.mxu0 0.0
        %1980 = vmatpush1.xpose.msra.mxu0 0.0
        %1981 = vmatprep.subr.mxu0 0.0
        %1982 = vmatpush1.xpose.msra.mxu0 0.0
        %1983 = vmatprep.subr.mxu0 0.0
        %1984 = vmatpush1.xpose.msra.mxu0 0.0
        %1985 = vmatprep.subr.mxu0 0.0
        %1986 = vmatpush1.xpose.msra.mxu0 0.0
        %1987 = vmatprep.subr.mxu0 0.0
        %1988 = vmatpush1.xpose.msra.mxu0 0.0
        %1989 = vmatprep.subr.mxu0 0.0
        %1990 = vmatpush1.xpose.msra.mxu0 0.0
        %1991 = vmatprep.subr.mxu0 0.0
        %1992 = vmatpush1.xpose.msra.mxu0 0.0
        %1993 = vmatprep.subr.mxu0 0.0
        %1994 = vmatpush1.xpose.msra.mxu0 0.0
        %1995 = vmatprep.subr.mxu0 0.0
        %1996 = vmatpush1.xpose.msra.mxu0 0.0
        %1997 = vmatprep.subr.mxu0 0.0
        %1998 = vmatpush1.xpose.msra.mxu0 0.0
        %1999 = vmatprep.subr.mxu0 0.0
        %2000 = vmatpush1.xpose.msra.mxu0 0.0
        %2001 = vmatprep.subr.mxu0 0.0
        %2002 = vmatpush1.xpose.msra.mxu0 0.0
        %2003 = vmatprep.subr.mxu0 0.0
        %2004 = vmatpush1.xpose.msra.mxu0 0.0
        %2005 = vmatprep.subr.mxu0 0.0
        %2006 = vmatpush1.xpose.msra.mxu0 0.0
        %2007 = vmatprep.subr.mxu0 0.0
        %2008 = vmatpush1.xpose.msra.mxu0 0.0
        %2009 = vmatprep.subr.mxu0 0.0
        %2010 = vmatpush1.xpose.msra.mxu0 0.0
        %2011 = vmatprep.mubr.f32.mxu0 0.0
        %v2012 = vand.u32 %v1789, 4294901760
        %v2013 = vsub.f32 %v1789, %v2012
        %2014 = vmatmul.mubr.f32.gmra.mrb[0].mxu0 %v2013
        %v2015 = vpop.f32.mrb[0].mxu0
        %v2016 = vadd.f32 %v1942, %v2015
        %v2017 = vpop.f32.mrb[0].mxu0
        %2018 = vdwg.mxu0
        %2019 = vmatprep.subr.mxu0 0.0
        %v2020 = vand.u32 %v1791, 4294901760
        %2021 = vmatpush1.xpose.msra.mxu0 %v2020
        %2022 = vmatprep.subr.mxu0 0.0
        %2023 = vmatpush1.xpose.msra.mxu0 0.0
        %2024 = vmatprep.subr.mxu0 0.0
        %2025 = vmatpush1.xpose.msra.mxu0 0.0
        %2026 = vmatprep.subr.mxu0 0.0
        %2027 = vmatpush1.xpose.msra.mxu0 0.0
        %2028 = vmatprep.subr.mxu0 0.0
        %2029 = vmatpush1.xpose.msra.mxu0 0.0
        %2030 = vmatprep.subr.mxu0 0.0
        %2031 = vmatpush1.xpose.msra.mxu0 0.0
        %2032 = vmatprep.subr.mxu0 0.0
        %2033 = vmatpush1.xpose.msra.mxu0 0.0
        %2034 = vmatprep.subr.mxu0 0.0
        %2035 = vmatpush1.xpose.msra.mxu0 0.0
        %2036 = vmatprep.subr.mxu0 0.0
        %2037 = vmatpush1.xpose.msra.mxu0 0.0
        %2038 = vmatprep.subr.mxu0 0.0
        %2039 = vmatpush1.xpose.msra.mxu0 0.0
        %2040 = vmatprep.subr.mxu0 0.0
        %2041 = vmatpush1.xpose.msra.mxu0 0.0
        %2042 = vmatprep.subr.mxu0 0.0
        %2043 = vmatpush1.xpose.msra.mxu0 0.0
        %2044 = vmatprep.subr.mxu0 0.0
        %2045 = vmatpush1.xpose.msra.mxu0 0.0
        %2046 = vmatprep.subr.mxu0 0.0
        %2047 = vmatpush1.xpose.msra.mxu0 0.0
        %2048 = vmatprep.subr.mxu0 0.0
        %2049 = vmatpush1.xpose.msra.mxu0 0.0
        %2050 = vmatprep.subr.mxu0 0.0
        %2051 = vmatpush1.xpose.msra.mxu0 0.0
        %2052 = vmatprep.subr.mxu0 0.0
        %2053 = vmatpush1.xpose.msra.mxu0 0.0
        %2054 = vmatprep.subr.mxu0 0.0
        %2055 = vmatpush1.xpose.msra.mxu0 0.0
        %2056 = vmatprep.subr.mxu0 0.0
        %2057 = vmatpush1.xpose.msra.mxu0 0.0
        %2058 = vmatprep.subr.mxu0 0.0
        %2059 = vmatpush1.xpose.msra.mxu0 0.0
        %2060 = vmatprep.subr.mxu0 0.0
        %2061 = vmatpush1.xpose.msra.mxu0 0.0
        %2062 = vmatprep.subr.mxu0 0.0
        %2063 = vmatpush1.xpose.msra.mxu0 0.0
        %2064 = vmatprep.subr.mxu0 0.0
        %2065 = vmatpush1.xpose.msra.mxu0 0.0
        %2066 = vmatprep.subr.mxu0 0.0
        %2067 = vmatpush1.xpose.msra.mxu0 0.0
        %2068 = vmatprep.subr.mxu0 0.0
        %2069 = vmatpush1.xpose.msra.mxu0 0.0
        %2070 = vmatprep.subr.mxu0 0.0
        %2071 = vmatpush1.xpose.msra.mxu0 0.0
        %2072 = vmatprep.subr.mxu0 0.0
        %2073 = vmatpush1.xpose.msra.mxu0 0.0
        %2074 = vmatprep.subr.mxu0 0.0
        %2075 = vmatpush1.xpose.msra.mxu0 0.0
        %2076 = vmatprep.subr.mxu0 0.0
        %2077 = vmatpush1.xpose.msra.mxu0 0.0
        %2078 = vmatprep.subr.mxu0 0.0
        %2079 = vmatpush1.xpose.msra.mxu0 0.0
        %2080 = vmatprep.subr.mxu0 0.0
        %2081 = vmatpush1.xpose.msra.mxu0 0.0
        %2082 = vmatprep.subr.mxu0 0.0
        %2083 = vmatpush1.xpose.msra.mxu0 0.0
        %2084 = vmatprep.mubr.f32.mxu0 0.0
        %v2085 = vand.u32 %v1789, 4294901760
        %v2086 = vsub.f32 %v1789, %v2085
        %v2087 = vand.u32 %v2086, 4294901760
        %2088 = vmatmul.mubr.f32.gmra.mrb[0].mxu0 %v2087
        %v2089 = vpop.f32.mrb[0].mxu0
        %v2090 = vadd.f32 %v2016, %v2089
        %v2091 = vpop.f32.mrb[0].mxu0
        %2092 = vdwg.mxu0
        %2093 = vmatprep.subr.mxu0 0.0
        %v2094 = vand.u32 %v1791, 4294901760
        %v2095 = vsub.f32 %v1791, %v2094
        %v2096 = vand.u32 %v2095, 4294901760
        %2097 = vmatpush1.xpose.msra.mxu0 %v2096
        %2098 = vmatprep.subr.mxu0 0.0
        %2099 = vmatpush1.xpose.msra.mxu0 0.0
        %2100 = vmatprep.subr.mxu0 0.0
        %2101 = vmatpush1.xpose.msra.mxu0 0.0
        %2102 = vmatprep.subr.mxu0 0.0
        %2103 = vmatpush1.xpose.msra.mxu0 0.0
        %2104 = vmatprep.subr.mxu0 0.0
        %2105 = vmatpush1.xpose.msra.mxu0 0.0
        %2106 = vmatprep.subr.mxu0 0.0
        %2107 = vmatpush1.xpose.msra.mxu0 0.0
        %2108 = vmatprep.subr.mxu0 0.0
        %2109 = vmatpush1.xpose.msra.mxu0 0.0
        %2110 = vmatprep.subr.mxu0 0.0
        %2111 = vmatpush1.xpose.msra.mxu0 0.0
        %2112 = vmatprep.subr.mxu0 0.0
        %2113 = vmatpush1.xpose.msra.mxu0 0.0
        %2114 = vmatprep.subr.mxu0 0.0
        %2115 = vmatpush1.xpose.msra.mxu0 0.0
        %2116 = vmatprep.subr.mxu0 0.0
        %2117 = vmatpush1.xpose.msra.mxu0 0.0
        %2118 = vmatprep.subr.mxu0 0.0
        %2119 = vmatpush1.xpose.msra.mxu0 0.0
        %2120 = vmatprep.subr.mxu0 0.0
        %2121 = vmatpush1.xpose.msra.mxu0 0.0
        %2122 = vmatprep.subr.mxu0 0.0
        %2123 = vmatpush1.xpose.msra.mxu0 0.0
        %2124 = vmatprep.subr.mxu0 0.0
        %2125 = vmatpush1.xpose.msra.mxu0 0.0
        %2126 = vmatprep.subr.mxu0 0.0
        %2127 = vmatpush1.xpose.msra.mxu0 0.0
        %2128 = vmatprep.subr.mxu0 0.0
        %2129 = vmatpush1.xpose.msra.mxu0 0.0
        %2130 = vmatprep.subr.mxu0 0.0
        %2131 = vmatpush1.xpose.msra.mxu0 0.0
        %2132 = vmatprep.subr.mxu0 0.0
        %2133 = vmatpush1.xpose.msra.mxu0 0.0
        %2134 = vmatprep.subr.mxu0 0.0
        %2135 = vmatpush1.xpose.msra.mxu0 0.0
        %2136 = vmatprep.subr.mxu0 0.0
        %2137 = vmatpush1.xpose.msra.mxu0 0.0
        %2138 = vmatprep.subr.mxu0 0.0
        %2139 = vmatpush1.xpose.msra.mxu0 0.0
        %2140 = vmatprep.subr.mxu0 0.0
        %2141 = vmatpush1.xpose.msra.mxu0 0.0
        %2142 = vmatprep.subr.mxu0 0.0
        %2143 = vmatpush1.xpose.msra.mxu0 0.0
        %2144 = vmatprep.subr.mxu0 0.0
        %2145 = vmatpush1.xpose.msra.mxu0 0.0
        %2146 = vmatprep.subr.mxu0 0.0
        %2147 = vmatpush1.xpose.msra.mxu0 0.0
        %2148 = vmatprep.subr.mxu0 0.0
        %2149 = vmatpush1.xpose.msra.mxu0 0.0
        %2150 = vmatprep.subr.mxu0 0.0
        %2151 = vmatpush1.xpose.msra.mxu0 0.0
        %2152 = vmatprep.subr.mxu0 0.0
        %2153 = vmatpush1.xpose.msra.mxu0 0.0
        %2154 = vmatprep.subr.mxu0 0.0
        %2155 = vmatpush1.xpose.msra.mxu0 0.0
        %2156 = vmatprep.subr.mxu0 0.0
        %2157 = vmatpush1.xpose.msra.mxu0 0.0
        %2158 = vmatprep.subr.mxu0 0.0
        %2159 = vmatpush1.xpose.msra.mxu0 0.0
        %2160 = vmatprep.mubr.f32.mxu0 0.0
        %v2161 = vand.u32 %v1789, 4294901760
        %2162 = vmatmul.mubr.f32.gmra.mrb[0].mxu0 %v2161
        %v2163 = vpop.f32.mrb[0].mxu0
        %v2164 = vadd.f32 %v2090, %v2163
        %v2165 = vpop.f32.mrb[0].mxu0
        %2166 = vdwg.mxu0
        %2167 = vmatprep.subr.mxu0 0.0
        %v2168 = vand.u32 %v1791, 4294901760
        %2169 = vmatpush1.xpose.msra.mxu0 %v2168
        %2170 = vmatprep.subr.mxu0 0.0
        %2171 = vmatpush1.xpose.msra.mxu0 0.0
        %2172 = vmatprep.subr.mxu0 0.0
        %2173 = vmatpush1.xpose.msra.mxu0 0.0
        %2174 = vmatprep.subr.mxu0 0.0
        %2175 = vmatpush1.xpose.msra.mxu0 0.0
        %2176 = vmatprep.subr.mxu0 0.0
        %2177 = vmatpush1.xpose.msra.mxu0 0.0
        %2178 = vmatprep.subr.mxu0 0.0
        %2179 = vmatpush1.xpose.msra.mxu0 0.0
        %2180 = vmatprep.subr.mxu0 0.0
        %2181 = vmatpush1.xpose.msra.mxu0 0.0
        %2182 = vmatprep.subr.mxu0 0.0
        %2183 = vmatpush1.xpose.msra.mxu0 0.0
        %2184 = vmatprep.subr.mxu0 0.0
        %2185 = vmatpush1.xpose.msra.mxu0 0.0
        %2186 = vmatprep.subr.mxu0 0.0
        %2187 = vmatpush1.xpose.msra.mxu0 0.0
        %2188 = vmatprep.subr.mxu0 0.0
        %2189 = vmatpush1.xpose.msra.mxu0 0.0
        %2190 = vmatprep.subr.mxu0 0.0
        %2191 = vmatpush1.xpose.msra.mxu0 0.0
        %2192 = vmatprep.subr.mxu0 0.0
        %2193 = vmatpush1.xpose.msra.mxu0 0.0
        %2194 = vmatprep.subr.mxu0 0.0
        %2195 = vmatpush1.xpose.msra.mxu0 0.0
        %2196 = vmatprep.subr.mxu0 0.0
        %2197 = vmatpush1.xpose.msra.mxu0 0.0
        %2198 = vmatprep.subr.mxu0 0.0
        %2199 = vmatpush1.xpose.msra.mxu0 0.0
        %2200 = vmatprep.subr.mxu0 0.0
        %2201 = vmatpush1.xpose.msra.mxu0 0.0
        %2202 = vmatprep.subr.mxu0 0.0
        %2203 = vmatpush1.xpose.msra.mxu0 0.0
        %2204 = vmatprep.subr.mxu0 0.0
        %2205 = vmatpush1.xpose.msra.mxu0 0.0
        %2206 = vmatprep.subr.mxu0 0.0
        %2207 = vmatpush1.xpose.msra.mxu0 0.0
        %2208 = vmatprep.subr.mxu0 0.0
        %2209 = vmatpush1.xpose.msra.mxu0 0.0
        %2210 = vmatprep.subr.mxu0 0.0
        %2211 = vmatpush1.xpose.msra.mxu0 0.0
        %2212 = vmatprep.subr.mxu0 0.0
        %2213 = vmatpush1.xpose.msra.mxu0 0.0
        %2214 = vmatprep.subr.mxu0 0.0
        %2215 = vmatpush1.xpose.msra.mxu0 0.0
        %2216 = vmatprep.subr.mxu0 0.0
        %2217 = vmatpush1.xpose.msra.mxu0 0.0
        %2218 = vmatprep.subr.mxu0 0.0
        %2219 = vmatpush1.xpose.msra.mxu0 0.0
        %2220 = vmatprep.subr.mxu0 0.0
        %2221 = vmatpush1.xpose.msra.mxu0 0.0
        %2222 = vmatprep.subr.mxu0 0.0
        %2223 = vmatpush1.xpose.msra.mxu0 0.0
        %2224 = vmatprep.subr.mxu0 0.0
        %2225 = vmatpush1.xpose.msra.mxu0 0.0
        %2226 = vmatprep.subr.mxu0 0.0
        %2227 = vmatpush1.xpose.msra.mxu0 0.0
        %2228 = vmatprep.subr.mxu0 0.0
        %2229 = vmatpush1.xpose.msra.mxu0 0.0
        %2230 = vmatprep.subr.mxu0 0.0
        %2231 = vmatpush1.xpose.msra.mxu0 0.0
        %2232 = vmatprep.mubr.f32.mxu0 0.0
        %v2233 = vand.u32 %v1789, 4294901760
        %2234 = vmatmul.mubr.f32.gmra.mrb[0].mxu0 %v2233
        %v2235 = vpop.f32.mrb[0].mxu0
        %v2236 = vadd.f32 %v2164, %v2235
        %v2237 = vpop.f32.mrb[0].mxu0
        %2238 = vdwg.mxu0
        %v2239 = vsel %vm1331, 1, 0
        %vm2240 = vcmp.eq.s32.totalorder %v2239, 1
        %v2241 = vsel %vm2240, %v1783, -1e+30
        %v2242 = vsel %vm2240, %v2236, -1e+30
        %v2243 = vsel %vm1335, %v2241, -inf
        %2244 = vmax.xlane.f32.xlu0 %v2243
        %v2245 = vpop.xlane.xlu0 %2244
        %v2246 = vsel %vm1335, %v2242, -inf
        %2247 = vmax.xlane.f32.xlu0 %v2246
        %v2248 = vpop.xlane.xlu0 %2247
        %v2249 = vsub.f32 %v2241, %v2245
        %v2250 = vsub.f32 %v2242, %v2248
        %v2251 = vmul.f32 %v2249, 1.442695
        %v2252 = vpow.pop %v2251
        %v2253 = vmul.f32 %v2250, 1.442695
        %v2254 = vpow.pop %v2253
        %v2255 = vsel %vm1335, %v2252, 0.0
        %2256 = vadd.xlane.f32.xlu0 %v2255
        %v2257 = vpop.xlane.xlu0 %2256
        %v2258 = vsel %vm1335, %v2254, 0.0
        %2259 = vadd.xlane.f32.xlu0 %v2258
        %v2260 = vpop.xlane.xlu0 %2259
        %v2261 = vrcp.pop %v2257
        %v2262 = vrcp.pop %v2260
        %v2263 = vmul.f32 %v2252, %v2261
        %v2264 = vmul.f32 %v2254, %v2262
        %2265 = vrot.lane.b32.xlu0 %v1318, 64
        %v2266 = vpop.permute.xlu0 %2265
        %v2269 = vsel %vm1335, %v2263, 0
        %2271 = vmatprep.subr.mxu0 0.0
        %v2272 = vand.u32 %v2266, 4294901760
        %2273 = vmatpush1.msra.mxu0 %v2272
        %2274 = vmatprep.subr.mxu0 0.0
        %2275 = vmatpush1.msra.mxu0 0.0
        %2276 = vmatprep.subr.mxu0 0.0
        %2277 = vmatpush1.msra.mxu0 0.0
        %2278 = vmatprep.subr.mxu0 0.0
        %2279 = vmatpush1.msra.mxu0 0.0
        %2280 = vmatprep.subr.mxu0 0.0
        %2281 = vmatpush1.msra.mxu0 0.0
        %2282 = vmatprep.subr.mxu0 0.0
        %2283 = vmatpush1.msra.mxu0 0.0
        %2284 = vmatprep.subr.mxu0 0.0
        %2285 = vmatpush1.msra.mxu0 0.0
        %2286 = vmatprep.subr.mxu0 0.0
        %2287 = vmatpush1.msra.mxu0 0.0
        %2288 = vmatprep.subr.mxu0 0.0
        %2289 = vmatpush1.msra.mxu0 0.0
        %2290 = vmatprep.subr.mxu0 0.0
        %2291 = vmatpush1.msra.mxu0 0.0
        %2292 = vmatprep.subr.mxu0 0.0
        %2293 = vmatpush1.msra.mxu0 0.0
        %2294 = vmatprep.subr.mxu0 0.0
        %2295 = vmatpush1.msra.mxu0 0.0
        %2296 = vmatprep.subr.mxu0 0.0
        %2297 = vmatpush1.msra.mxu0 0.0
        %2298 = vmatprep.subr.mxu0 0.0
        %2299 = vmatpush1.msra.mxu0 0.0
        %2300 = vmatprep.subr.mxu0 0.0
        %2301 = vmatpush1.msra.mxu0 0.0
        %2302 = vmatprep.subr.mxu0 0.0
        %2303 = vmatpush1.msra.mxu0 0.0
        %2304 = vmatprep.subr.mxu0 0.0
        %2305 = vmatpush1.msra.mxu0 0.0
        %2306 = vmatprep.subr.mxu0 0.0
        %2307 = vmatpush1.msra.mxu0 0.0
        %2308 = vmatprep.subr.mxu0 0.0
        %2309 = vmatpush1.msra.mxu0 0.0
        %2310 = vmatprep.subr.mxu0 0.0
        %2311 = vmatpush1.msra.mxu0 0.0
        %2312 = vmatprep.subr.mxu0 0.0
        %2313 = vmatpush1.msra.mxu0 0.0
        %2314 = vmatprep.subr.mxu0 0.0
        %2315 = vmatpush1.msra.mxu0 0.0
        %2316 = vmatprep.subr.mxu0 0.0
        %2317 = vmatpush1.msra.mxu0 0.0
        %2318 = vmatprep.subr.mxu0 0.0
        %2319 = vmatpush1.msra.mxu0 0.0
        %2320 = vmatprep.subr.mxu0 0.0
        %2321 = vmatpush1.msra.mxu0 0.0
        %2322 = vmatprep.subr.mxu0 0.0
        %2323 = vmatpush1.msra.mxu0 0.0
        %2324 = vmatprep.subr.mxu0 0.0
        %2325 = vmatpush1.msra.mxu0 0.0
        %2326 = vmatprep.subr.mxu0 0.0
        %2327 = vmatpush1.msra.mxu0 0.0
        %2328 = vmatprep.subr.mxu0 0.0
        %2329 = vmatpush1.msra.mxu0 0.0
        %2330 = vmatprep.subr.mxu0 0.0
        %2331 = vmatpush1.msra.mxu0 0.0
        %2332 = vmatprep.subr.mxu0 0.0
        %2333 = vmatpush1.msra.mxu0 0.0
        %2334 = vmatprep.subr.mxu0 0.0
        %2335 = vmatpush1.msra.mxu0 0.0
        %2336 = vmatprep.mubr.f32.mxu0 0.0
        %v2337 = vand.u32 %v2269, 4294901760
        %v2338 = vsub.f32 %v2269, %v2337
        %v2339 = vand.u32 %v2338, 4294901760
        %v2340 = vsub.f32 %v2338, %v2339
        %v2341 = vand.u32 %v2340, 4294901760
        %2342 = vmatmul.mubr.f32.gmra.mrb[0].mxu0 %v2341
        %v2343 = vpop.f32.mrb[0].mxu0
        %v2344 = vadd.f32 0.0, %v2343
        %v2345 = vpop.f32.mrb[0].mxu0
        %2346 = vdwg.mxu0
        %2347 = vmatprep.subr.mxu0 0.0
        %v2348 = vand.u32 %v2266, 4294901760
        %v2349 = vsub.f32 %v2266, %v2348
        %v2350 = vand.u32 %v2349, 4294901760
        %v2351 = vsub.f32 %v2349, %v2350
        %v2352 = vand.u32 %v2351, 4294901760
        %2353 = vmatpush1.msra.mxu0 %v2352
        %2354 = vmatprep.subr.mxu0 0.0
        %2355 = vmatpush1.msra.mxu0 0.0
        %2356 = vmatprep.subr.mxu0 0.0
        %2357 = vmatpush1.msra.mxu0 0.0
        %2358 = vmatprep.subr.mxu0 0.0
        %2359 = vmatpush1.msra.mxu0 0.0
        %2360 = vmatprep.subr.mxu0 0.0
        %2361 = vmatpush1.msra.mxu0 0.0
        %2362 = vmatprep.subr.mxu0 0.0
        %2363 = vmatpush1.msra.mxu0 0.0
        %2364 = vmatprep.subr.mxu0 0.0
        %2365 = vmatpush1.msra.mxu0 0.0
        %2366 = vmatprep.subr.mxu0 0.0
        %2367 = vmatpush1.msra.mxu0 0.0
        %2368 = vmatprep.subr.mxu0 0.0
        %2369 = vmatpush1.msra.mxu0 0.0
        %2370 = vmatprep.subr.mxu0 0.0
        %2371 = vmatpush1.msra.mxu0 0.0
        %2372 = vmatprep.subr.mxu0 0.0
        %2373 = vmatpush1.msra.mxu0 0.0
        %2374 = vmatprep.subr.mxu0 0.0
        %2375 = vmatpush1.msra.mxu0 0.0
        %2376 = vmatprep.subr.mxu0 0.0
        %2377 = vmatpush1.msra.mxu0 0.0
        %2378 = vmatprep.subr.mxu0 0.0
        %2379 = vmatpush1.msra.mxu0 0.0
        %2380 = vmatprep.subr.mxu0 0.0
        %2381 = vmatpush1.msra.mxu0 0.0
        %2382 = vmatprep.subr.mxu0 0.0
        %2383 = vmatpush1.msra.mxu0 0.0
        %2384 = vmatprep.subr.mxu0 0.0
        %2385 = vmatpush1.msra.mxu0 0.0
        %2386 = vmatprep.subr.mxu0 0.0
        %2387 = vmatpush1.msra.mxu0 0.0
        %2388 = vmatprep.subr.mxu0 0.0
        %2389 = vmatpush1.msra.mxu0 0.0
        %2390 = vmatprep.subr.mxu0 0.0
        %2391 = vmatpush1.msra.mxu0 0.0
        %2392 = vmatprep.subr.mxu0 0.0
        %2393 = vmatpush1.msra.mxu0 0.0
        %2394 = vmatprep.subr.mxu0 0.0
        %2395 = vmatpush1.msra.mxu0 0.0
        %2396 = vmatprep.subr.mxu0 0.0
        %2397 = vmatpush1.msra.mxu0 0.0
        %2398 = vmatprep.subr.mxu0 0.0
        %2399 = vmatpush1.msra.mxu0 0.0
        %2400 = vmatprep.subr.mxu0 0.0
        %2401 = vmatpush1.msra.mxu0 0.0
        %2402 = vmatprep.subr.mxu0 0.0
        %2403 = vmatpush1.msra.mxu0 0.0
        %2404 = vmatprep.subr.mxu0 0.0
        %2405 = vmatpush1.msra.mxu0 0.0
        %2406 = vmatprep.subr.mxu0 0.0
        %2407 = vmatpush1.msra.mxu0 0.0
        %2408 = vmatprep.subr.mxu0 0.0
        %2409 = vmatpush1.msra.mxu0 0.0
        %2410 = vmatprep.subr.mxu0 0.0
        %2411 = vmatpush1.msra.mxu0 0.0
        %2412 = vmatprep.subr.mxu0 0.0
        %2413 = vmatpush1.msra.mxu0 0.0
        %2414 = vmatprep.subr.mxu0 0.0
        %2415 = vmatpush1.msra.mxu0 0.0
        %2416 = vmatprep.mubr.f32.mxu0 0.0
        %v2417 = vand.u32 %v2269, 4294901760
        %2418 = vmatmul.mubr.f32.gmra.mrb[0].mxu0 %v2417
        %v2419 = vpop.f32.mrb[0].mxu0
        %v2420 = vadd.f32 %v2344, %v2419
        %v2421 = vpop.f32.mrb[0].mxu0
        %2422 = vdwg.mxu0
        %2423 = vmatprep.subr.mxu0 0.0
        %v2424 = vand.u32 %v2266, 4294901760
        %v2425 = vsub.f32 %v2266, %v2424
        %2426 = vmatpush1.msra.mxu0 %v2425
        %2427 = vmatprep.subr.mxu0 0.0
        %2428 = vmatpush1.msra.mxu0 0.0
        %2429 = vmatprep.subr.mxu0 0.0
        %2430 = vmatpush1.msra.mxu0 0.0
        %2431 = vmatprep.subr.mxu0 0.0
        %2432 = vmatpush1.msra.mxu0 0.0
        %2433 = vmatprep.subr.mxu0 0.0
        %2434 = vmatpush1.msra.mxu0 0.0
        %2435 = vmatprep.subr.mxu0 0.0
        %2436 = vmatpush1.msra.mxu0 0.0
        %2437 = vmatprep.subr.mxu0 0.0
        %2438 = vmatpush1.msra.mxu0 0.0
        %2439 = vmatprep.subr.mxu0 0.0
        %2440 = vmatpush1.msra.mxu0 0.0
        %2441 = vmatprep.subr.mxu0 0.0
        %2442 = vmatpush1.msra.mxu0 0.0
        %2443 = vmatprep.subr.mxu0 0.0
        %2444 = vmatpush1.msra.mxu0 0.0
        %2445 = vmatprep.subr.mxu0 0.0
        %2446 = vmatpush1.msra.mxu0 0.0
        %2447 = vmatprep.subr.mxu0 0.0
        %2448 = vmatpush1.msra.mxu0 0.0
        %2449 = vmatprep.subr.mxu0 0.0
        %2450 = vmatpush1.msra.mxu0 0.0
        %2451 = vmatprep.subr.mxu0 0.0
        %2452 = vmatpush1.msra.mxu0 0.0
        %2453 = vmatprep.subr.mxu0 0.0
        %2454 = vmatpush1.msra.mxu0 0.0
        %2455 = vmatprep.subr.mxu0 0.0
        %2456 = vmatpush1.msra.mxu0 0.0
        %2457 = vmatprep.subr.mxu0 0.0
        %2458 = vmatpush1.msra.mxu0 0.0
        %2459 = vmatprep.subr.mxu0 0.0
        %2460 = vmatpush1.msra.mxu0 0.0
        %2461 = vmatprep.subr.mxu0 0.0
        %2462 = vmatpush1.msra.mxu0 0.0
        %2463 = vmatprep.subr.mxu0 0.0
        %2464 = vmatpush1.msra.mxu0 0.0
        %2465 = vmatprep.subr.mxu0 0.0
        %2466 = vmatpush1.msra.mxu0 0.0
        %2467 = vmatprep.subr.mxu0 0.0
        %2468 = vmatpush1.msra.mxu0 0.0
        %2469 = vmatprep.subr.mxu0 0.0
        %2470 = vmatpush1.msra.mxu0 0.0
        %2471 = vmatprep.subr.mxu0 0.0
        %2472 = vmatpush1.msra.mxu0 0.0
        %2473 = vmatprep.subr.mxu0 0.0
        %2474 = vmatpush1.msra.mxu0 0.0
        %2475 = vmatprep.subr.mxu0 0.0
        %2476 = vmatpush1.msra.mxu0 0.0
        %2477 = vmatprep.subr.mxu0 0.0
        %2478 = vmatpush1.msra.mxu0 0.0
        %2479 = vmatprep.subr.mxu0 0.0
        %2480 = vmatpush1.msra.mxu0 0.0
        %2481 = vmatprep.subr.mxu0 0.0
        %2482 = vmatpush1.msra.mxu0 0.0
        %2483 = vmatprep.subr.mxu0 0.0
        %2484 = vmatpush1.msra.mxu0 0.0
        %2485 = vmatprep.subr.mxu0 0.0
        %2486 = vmatpush1.msra.mxu0 0.0
        %2487 = vmatprep.subr.mxu0 0.0
        %2488 = vmatpush1.msra.mxu0 0.0
        %2489 = vmatprep.mubr.f32.mxu0 0.0
        %v2490 = vand.u32 %v2269, 4294901760
        %v2491 = vsub.f32 %v2269, %v2490
        %2492 = vmatmul.mubr.f32.gmra.mrb[0].mxu0 %v2491
        %v2493 = vpop.f32.mrb[0].mxu0
        %v2494 = vadd.f32 %v2420, %v2493
        %v2495 = vpop.f32.mrb[0].mxu0
        %2496 = vdwg.mxu0
        %2497 = vmatprep.subr.mxu0 0.0
        %v2498 = vand.u32 %v2266, 4294901760
        %2499 = vmatpush1.msra.mxu0 %v2498
        %2500 = vmatprep.subr.mxu0 0.0
        %2501 = vmatpush1.msra.mxu0 0.0
        %2502 = vmatprep.subr.mxu0 0.0
        %2503 = vmatpush1.msra.mxu0 0.0
        %2504 = vmatprep.subr.mxu0 0.0
        %2505 = vmatpush1.msra.mxu0 0.0
        %2506 = vmatprep.subr.mxu0 0.0
        %2507 = vmatpush1.msra.mxu0 0.0
        %2508 = vmatprep.subr.mxu0 0.0
        %2509 = vmatpush1.msra.mxu0 0.0
        %2510 = vmatprep.subr.mxu0 0.0
        %2511 = vmatpush1.msra.mxu0 0.0
        %2512 = vmatprep.subr.mxu0 0.0
        %2513 = vmatpush1.msra.mxu0 0.0
        %2514 = vmatprep.subr.mxu0 0.0
        %2515 = vmatpush1.msra.mxu0 0.0
        %2516 = vmatprep.subr.mxu0 0.0
        %2517 = vmatpush1.msra.mxu0 0.0
        %2518 = vmatprep.subr.mxu0 0.0
        %2519 = vmatpush1.msra.mxu0 0.0
        %2520 = vmatprep.subr.mxu0 0.0
        %2521 = vmatpush1.msra.mxu0 0.0
        %2522 = vmatprep.subr.mxu0 0.0
        %2523 = vmatpush1.msra.mxu0 0.0
        %2524 = vmatprep.subr.mxu0 0.0
        %2525 = vmatpush1.msra.mxu0 0.0
        %2526 = vmatprep.subr.mxu0 0.0
        %2527 = vmatpush1.msra.mxu0 0.0
        %2528 = vmatprep.subr.mxu0 0.0
        %2529 = vmatpush1.msra.mxu0 0.0
        %2530 = vmatprep.subr.mxu0 0.0
        %2531 = vmatpush1.msra.mxu0 0.0
        %2532 = vmatprep.subr.mxu0 0.0
        %2533 = vmatpush1.msra.mxu0 0.0
        %2534 = vmatprep.subr.mxu0 0.0
        %2535 = vmatpush1.msra.mxu0 0.0
        %2536 = vmatprep.subr.mxu0 0.0
        %2537 = vmatpush1.msra.mxu0 0.0
        %2538 = vmatprep.subr.mxu0 0.0
        %2539 = vmatpush1.msra.mxu0 0.0
        %2540 = vmatprep.subr.mxu0 0.0
        %2541 = vmatpush1.msra.mxu0 0.0
        %2542 = vmatprep.subr.mxu0 0.0
        %2543 = vmatpush1.msra.mxu0 0.0
        %2544 = vmatprep.subr.mxu0 0.0
        %2545 = vmatpush1.msra.mxu0 0.0
        %2546 = vmatprep.subr.mxu0 0.0
        %2547 = vmatpush1.msra.mxu0 0.0
        %2548 = vmatprep.subr.mxu0 0.0
        %2549 = vmatpush1.msra.mxu0 0.0
        %2550 = vmatprep.subr.mxu0 0.0
        %2551 = vmatpush1.msra.mxu0 0.0
        %2552 = vmatprep.subr.mxu0 0.0
        %2553 = vmatpush1.msra.mxu0 0.0
        %2554 = vmatprep.subr.mxu0 0.0
        %2555 = vmatpush1.msra.mxu0 0.0
        %2556 = vmatprep.subr.mxu0 0.0
        %2557 = vmatpush1.msra.mxu0 0.0
        %2558 = vmatprep.subr.mxu0 0.0
        %2559 = vmatpush1.msra.mxu0 0.0
        %2560 = vmatprep.subr.mxu0 0.0
        %2561 = vmatpush1.msra.mxu0 0.0
        %2562 = vmatprep.mubr.f32.mxu0 0.0
        %v2563 = vand.u32 %v2269, 4294901760
        %v2564 = vsub.f32 %v2269, %v2563
        %v2565 = vand.u32 %v2564, 4294901760
        %2566 = vmatmul.mubr.f32.gmra.mrb[0].mxu0 %v2565
        %v2567 = vpop.f32.mrb[0].mxu0
        %v2568 = vadd.f32 %v2494, %v2567
        %v2569 = vpop.f32.mrb[0].mxu0
        %2570 = vdwg.mxu0
        %2571 = vmatprep.subr.mxu0 0.0
        %v2572 = vand.u32 %v2266, 4294901760
        %v2573 = vsub.f32 %v2266, %v2572
        %v2574 = vand.u32 %v2573, 4294901760
        %2575 = vmatpush1.msra.mxu0 %v2574
        %2576 = vmatprep.subr.mxu0 0.0
        %2577 = vmatpush1.msra.mxu0 0.0
        %2578 = vmatprep.subr.mxu0 0.0
        %2579 = vmatpush1.msra.mxu0 0.0
        %2580 = vmatprep.subr.mxu0 0.0
        %2581 = vmatpush1.msra.mxu0 0.0
        %2582 = vmatprep.subr.mxu0 0.0
        %2583 = vmatpush1.msra.mxu0 0.0
        %2584 = vmatprep.subr.mxu0 0.0
        %2585 = vmatpush1.msra.mxu0 0.0
        %2586 = vmatprep.subr.mxu0 0.0
        %2587 = vmatpush1.msra.mxu0 0.0
        %2588 = vmatprep.subr.mxu0 0.0
        %2589 = vmatpush1.msra.mxu0 0.0
        %2590 = vmatprep.subr.mxu0 0.0
        %2591 = vmatpush1.msra.mxu0 0.0
        %2592 = vmatprep.subr.mxu0 0.0
        %2593 = vmatpush1.msra.mxu0 0.0
        %2594 = vmatprep.subr.mxu0 0.0
        %2595 = vmatpush1.msra.mxu0 0.0
        %2596 = vmatprep.subr.mxu0 0.0
        %2597 = vmatpush1.msra.mxu0 0.0
        %2598 = vmatprep.subr.mxu0 0.0
        %2599 = vmatpush1.msra.mxu0 0.0
        %2600 = vmatprep.subr.mxu0 0.0
        %2601 = vmatpush1.msra.mxu0 0.0
        %2602 = vmatprep.subr.mxu0 0.0
        %2603 = vmatpush1.msra.mxu0 0.0
        %2604 = vmatprep.subr.mxu0 0.0
        %2605 = vmatpush1.msra.mxu0 0.0
        %2606 = vmatprep.subr.mxu0 0.0
        %2607 = vmatpush1.msra.mxu0 0.0
        %2608 = vmatprep.subr.mxu0 0.0
        %2609 = vmatpush1.msra.mxu0 0.0
        %2610 = vmatprep.subr.mxu0 0.0
        %2611 = vmatpush1.msra.mxu0 0.0
        %2612 = vmatprep.subr.mxu0 0.0
        %2613 = vmatpush1.msra.mxu0 0.0
        %2614 = vmatprep.subr.mxu0 0.0
        %2615 = vmatpush1.msra.mxu0 0.0
        %2616 = vmatprep.subr.mxu0 0.0
        %2617 = vmatpush1.msra.mxu0 0.0
        %2618 = vmatprep.subr.mxu0 0.0
        %2619 = vmatpush1.msra.mxu0 0.0
        %2620 = vmatprep.subr.mxu0 0.0
        %2621 = vmatpush1.msra.mxu0 0.0
        %2622 = vmatprep.subr.mxu0 0.0
        %2623 = vmatpush1.msra.mxu0 0.0
        %2624 = vmatprep.subr.mxu0 0.0
        %2625 = vmatpush1.msra.mxu0 0.0
        %2626 = vmatprep.subr.mxu0 0.0
        %2627 = vmatpush1.msra.mxu0 0.0
        %2628 = vmatprep.subr.mxu0 0.0
        %2629 = vmatpush1.msra.mxu0 0.0
        %2630 = vmatprep.subr.mxu0 0.0
        %2631 = vmatpush1.msra.mxu0 0.0
        %2632 = vmatprep.subr.mxu0 0.0
        %2633 = vmatpush1.msra.mxu0 0.0
        %2634 = vmatprep.subr.mxu0 0.0
        %2635 = vmatpush1.msra.mxu0 0.0
        %2636 = vmatprep.subr.mxu0 0.0
        %2637 = vmatpush1.msra.mxu0 0.0
        %2638 = vmatprep.mubr.f32.mxu0 0.0
        %v2639 = vand.u32 %v2269, 4294901760
        %2640 = vmatmul.mubr.f32.gmra.mrb[0].mxu0 %v2639
        %v2641 = vpop.f32.mrb[0].mxu0
        %v2642 = vadd.f32 %v2568, %v2641
        %v2643 = vpop.f32.mrb[0].mxu0
        %2644 = vdwg.mxu0
        %2645 = vmatprep.subr.mxu0 0.0
        %v2646 = vand.u32 %v2266, 4294901760
        %2647 = vmatpush1.msra.mxu0 %v2646
        %2648 = vmatprep.subr.mxu0 0.0
        %2649 = vmatpush1.msra.mxu0 0.0
        %2650 = vmatprep.subr.mxu0 0.0
        %2651 = vmatpush1.msra.mxu0 0.0
        %2652 = vmatprep.subr.mxu0 0.0
        %2653 = vmatpush1.msra.mxu0 0.0
        %2654 = vmatprep.subr.mxu0 0.0
        %2655 = vmatpush1.msra.mxu0 0.0
        %2656 = vmatprep.subr.mxu0 0.0
        %2657 = vmatpush1.msra.mxu0 0.0
        %2658 = vmatprep.subr.mxu0 0.0
        %2659 = vmatpush1.msra.mxu0 0.0
        %2660 = vmatprep.subr.mxu0 0.0
        %2661 = vmatpush1.msra.mxu0 0.0
        %2662 = vmatprep.subr.mxu0 0.0
        %2663 = vmatpush1.msra.mxu0 0.0
        %2664 = vmatprep.subr.mxu0 0.0
        %2665 = vmatpush1.msra.mxu0 0.0
        %2666 = vmatprep.subr.mxu0 0.0
        %2667 = vmatpush1.msra.mxu0 0.0
        %2668 = vmatprep.subr.mxu0 0.0
        %2669 = vmatpush1.msra.mxu0 0.0
        %2670 = vmatprep.subr.mxu0 0.0
        %2671 = vmatpush1.msra.mxu0 0.0
        %2672 = vmatprep.subr.mxu0 0.0
        %2673 = vmatpush1.msra.mxu0 0.0
        %2674 = vmatprep.subr.mxu0 0.0
        %2675 = vmatpush1.msra.mxu0 0.0
        %2676 = vmatprep.subr.mxu0 0.0
        %2677 = vmatpush1.msra.mxu0 0.0
        %2678 = vmatprep.subr.mxu0 0.0
        %2679 = vmatpush1.msra.mxu0 0.0
        %2680 = vmatprep.subr.mxu0 0.0
        %2681 = vmatpush1.msra.mxu0 0.0
        %2682 = vmatprep.subr.mxu0 0.0
        %2683 = vmatpush1.msra.mxu0 0.0
        %2684 = vmatprep.subr.mxu0 0.0
        %2685 = vmatpush1.msra.mxu0 0.0
        %2686 = vmatprep.subr.mxu0 0.0
        %2687 = vmatpush1.msra.mxu0 0.0
        %2688 = vmatprep.subr.mxu0 0.0
        %2689 = vmatpush1.msra.mxu0 0.0
        %2690 = vmatprep.subr.mxu0 0.0
        %2691 = vmatpush1.msra.mxu0 0.0
        %2692 = vmatprep.subr.mxu0 0.0
        %2693 = vmatpush1.msra.mxu0 0.0
        %2694 = vmatprep.subr.mxu0 0.0
        %2695 = vmatpush1.msra.mxu0 0.0
        %2696 = vmatprep.subr.mxu0 0.0
        %2697 = vmatpush1.msra.mxu0 0.0
        %2698 = vmatprep.subr.mxu0 0.0
        %2699 = vmatpush1.msra.mxu0 0.0
        %2700 = vmatprep.subr.mxu0 0.0
        %2701 = vmatpush1.msra.mxu0 0.0
        %2702 = vmatprep.subr.mxu0 0.0
        %2703 = vmatpush1.msra.mxu0 0.0
        %2704 = vmatprep.subr.mxu0 0.0
        %2705 = vmatpush1.msra.mxu0 0.0
        %2706 = vmatprep.subr.mxu0 0.0
        %2707 = vmatpush1.msra.mxu0 0.0
        %2708 = vmatprep.subr.mxu0 0.0
        %2709 = vmatpush1.msra.mxu0 0.0
        %2710 = vmatprep.mubr.f32.mxu0 0.0
        %v2711 = vand.u32 %v2269, 4294901760
        %2712 = vmatmul.mubr.f32.gmra.mrb[0].mxu0 %v2711
        %v2713 = vpop.f32.mrb[0].mxu0
        %v2714 = vadd.f32 %v2642, %v2713
        %v2715 = vpop.f32.mrb[0].mxu0
        %2716 = vdwg.mxu0
        %2717 = vrot.lane.b32.xlu0 %v1324, 64
        %v2718 = vpop.permute.xlu0 %2717
        %v2721 = vsel %vm1335, %v2264, 0
        %2723 = vmatprep.subr.mxu0 0.0
        %v2724 = vand.u32 %v2718, 4294901760
        %2725 = vmatpush1.msra.mxu0 %v2724
        %2726 = vmatprep.subr.mxu0 0.0
        %2727 = vmatpush1.msra.mxu0 0.0
        %2728 = vmatprep.subr.mxu0 0.0
        %2729 = vmatpush1.msra.mxu0 0.0
        %2730 = vmatprep.subr.mxu0 0.0
        %2731 = vmatpush1.msra.mxu0 0.0
        %2732 = vmatprep.subr.mxu0 0.0
        %2733 = vmatpush1.msra.mxu0 0.0
        %2734 = vmatprep.subr.mxu0 0.0
        %2735 = vmatpush1.msra.mxu0 0.0
        %2736 = vmatprep.subr.mxu0 0.0
        %2737 = vmatpush1.msra.mxu0 0.0
        %2738 = vmatprep.subr.mxu0 0.0
        %2739 = vmatpush1.msra.mxu0 0.0
        %2740 = vmatprep.subr.mxu0 0.0
        %2741 = vmatpush1.msra.mxu0 0.0
        %2742 = vmatprep.subr.mxu0 0.0
        %2743 = vmatpush1.msra.mxu0 0.0
        %2744 = vmatprep.subr.mxu0 0.0
        %2745 = vmatpush1.msra.mxu0 0.0
        %2746 = vmatprep.subr.mxu0 0.0
        %2747 = vmatpush1.msra.mxu0 0.0
        %2748 = vmatprep.subr.mxu0 0.0
        %2749 = vmatpush1.msra.mxu0 0.0
        %2750 = vmatprep.subr.mxu0 0.0
        %2751 = vmatpush1.msra.mxu0 0.0
        %2752 = vmatprep.subr.mxu0 0.0
        %2753 = vmatpush1.msra.mxu0 0.0
        %2754 = vmatprep.subr.mxu0 0.0
        %2755 = vmatpush1.msra.mxu0 0.0
        %2756 = vmatprep.subr.mxu0 0.0
        %2757 = vmatpush1.msra.mxu0 0.0
        %2758 = vmatprep.subr.mxu0 0.0
        %2759 = vmatpush1.msra.mxu0 0.0
        %2760 = vmatprep.subr.mxu0 0.0
        %2761 = vmatpush1.msra.mxu0 0.0
        %2762 = vmatprep.subr.mxu0 0.0
        %2763 = vmatpush1.msra.mxu0 0.0
        %2764 = vmatprep.subr.mxu0 0.0
        %2765 = vmatpush1.msra.mxu0 0.0
        %2766 = vmatprep.subr.mxu0 0.0
        %2767 = vmatpush1.msra.mxu0 0.0
        %2768 = vmatprep.subr.mxu0 0.0
        %2769 = vmatpush1.msra.mxu0 0.0
        %2770 = vmatprep.subr.mxu0 0.0
        %2771 = vmatpush1.msra.mxu0 0.0
        %2772 = vmatprep.subr.mxu0 0.0
        %2773 = vmatpush1.msra.mxu0 0.0
        %2774 = vmatprep.subr.mxu0 0.0
        %2775 = vmatpush1.msra.mxu0 0.0
        %2776 = vmatprep.subr.mxu0 0.0
        %2777 = vmatpush1.msra.mxu0 0.0
        %2778 = vmatprep.subr.mxu0 0.0
        %2779 = vmatpush1.msra.mxu0 0.0
        %2780 = vmatprep.subr.mxu0 0.0
        %2781 = vmatpush1.msra.mxu0 0.0
        %2782 = vmatprep.subr.mxu0 0.0
        %2783 = vmatpush1.msra.mxu0 0.0
        %2784 = vmatprep.subr.mxu0 0.0
        %2785 = vmatpush1.msra.mxu0 0.0
        %2786 = vmatprep.subr.mxu0 0.0
        %2787 = vmatpush1.msra.mxu0 0.0
        %2788 = vmatprep.mubr.f32.mxu0 0.0
        %v2789 = vand.u32 %v2721, 4294901760
        %v2790 = vsub.f32 %v2721, %v2789
        %v2791 = vand.u32 %v2790, 4294901760
        %v2792 = vsub.f32 %v2790, %v2791
        %v2793 = vand.u32 %v2792, 4294901760
        %2794 = vmatmul.mubr.f32.gmra.mrb[0].mxu0 %v2793
        %v2795 = vpop.f32.mrb[0].mxu0
        %v2796 = vadd.f32 0.0, %v2795
        %v2797 = vpop.f32.mrb[0].mxu0
        %2798 = vdwg.mxu0
        %2799 = vmatprep.subr.mxu0 0.0
        %v2800 = vand.u32 %v2718, 4294901760
        %v2801 = vsub.f32 %v2718, %v2800
        %v2802 = vand.u32 %v2801, 4294901760
        %v2803 = vsub.f32 %v2801, %v2802
        %v2804 = vand.u32 %v2803, 4294901760
        %2805 = vmatpush1.msra.mxu0 %v2804
        %2806 = vmatprep.subr.mxu0 0.0
        %2807 = vmatpush1.msra.mxu0 0.0
        %2808 = vmatprep.subr.mxu0 0.0
        %2809 = vmatpush1.msra.mxu0 0.0
        %2810 = vmatprep.subr.mxu0 0.0
        %2811 = vmatpush1.msra.mxu0 0.0
        %2812 = vmatprep.subr.mxu0 0.0
        %2813 = vmatpush1.msra.mxu0 0.0
        %2814 = vmatprep.subr.mxu0 0.0
        %2815 = vmatpush1.msra.mxu0 0.0
        %2816 = vmatprep.subr.mxu0 0.0
        %2817 = vmatpush1.msra.mxu0 0.0
        %2818 = vmatprep.subr.mxu0 0.0
        %2819 = vmatpush1.msra.mxu0 0.0
        %2820 = vmatprep.subr.mxu0 0.0
        %2821 = vmatpush1.msra.mxu0 0.0
        %2822 = vmatprep.subr.mxu0 0.0
        %2823 = vmatpush1.msra.mxu0 0.0
        %2824 = vmatprep.subr.mxu0 0.0
        %2825 = vmatpush1.msra.mxu0 0.0
        %2826 = vmatprep.subr.mxu0 0.0
        %2827 = vmatpush1.msra.mxu0 0.0
        %2828 = vmatprep.subr.mxu0 0.0
        %2829 = vmatpush1.msra.mxu0 0.0
        %2830 = vmatprep.subr.mxu0 0.0
        %2831 = vmatpush1.msra.mxu0 0.0
        %2832 = vmatprep.subr.mxu0 0.0
        %2833 = vmatpush1.msra.mxu0 0.0
        %2834 = vmatprep.subr.mxu0 0.0
        %2835 = vmatpush1.msra.mxu0 0.0
        %2836 = vmatprep.subr.mxu0 0.0
        %2837 = vmatpush1.msra.mxu0 0.0
        %2838 = vmatprep.subr.mxu0 0.0
        %2839 = vmatpush1.msra.mxu0 0.0
        %2840 = vmatprep.subr.mxu0 0.0
        %2841 = vmatpush1.msra.mxu0 0.0
        %2842 = vmatprep.subr.mxu0 0.0
        %2843 = vmatpush1.msra.mxu0 0.0
        %2844 = vmatprep.subr.mxu0 0.0
        %2845 = vmatpush1.msra.mxu0 0.0
        %2846 = vmatprep.subr.mxu0 0.0
        %2847 = vmatpush1.msra.mxu0 0.0
        %2848 = vmatprep.subr.mxu0 0.0
        %2849 = vmatpush1.msra.mxu0 0.0
        %2850 = vmatprep.subr.mxu0 0.0
        %2851 = vmatpush1.msra.mxu0 0.0
        %2852 = vmatprep.subr.mxu0 0.0
        %2853 = vmatpush1.msra.mxu0 0.0
        %2854 = vmatprep.subr.mxu0 0.0
        %2855 = vmatpush1.msra.mxu0 0.0
        %2856 = vmatprep.subr.mxu0 0.0
        %2857 = vmatpush1.msra.mxu0 0.0
        %2858 = vmatprep.subr.mxu0 0.0
        %2859 = vmatpush1.msra.mxu0 0.0
        %2860 = vmatprep.subr.mxu0 0.0
        %2861 = vmatpush1.msra.mxu0 0.0
        %2862 = vmatprep.subr.mxu0 0.0
        %2863 = vmatpush1.msra.mxu0 0.0
        %2864 = vmatprep.subr.mxu0 0.0
        %2865 = vmatpush1.msra.mxu0 0.0
        %2866 = vmatprep.subr.mxu0 0.0
        %2867 = vmatpush1.msra.mxu0 0.0
        %2868 = vmatprep.mubr.f32.mxu0 0.0
        %v2869 = vand.u32 %v2721, 4294901760
        %2870 = vmatmul.mubr.f32.gmra.mrb[0].mxu0 %v2869
        %v2871 = vpop.f32.mrb[0].mxu0
        %v2872 = vadd.f32 %v2796, %v2871
        %v2873 = vpop.f32.mrb[0].mxu0
        %2874 = vdwg.mxu0
        %2875 = vmatprep.subr.mxu0 0.0
        %v2876 = vand.u32 %v2718, 4294901760
        %v2877 = vsub.f32 %v2718, %v2876
        %2878 = vmatpush1.msra.mxu0 %v2877
        %2879 = vmatprep.subr.mxu0 0.0
        %2880 = vmatpush1.msra.mxu0 0.0
        %2881 = vmatprep.subr.mxu0 0.0
        %2882 = vmatpush1.msra.mxu0 0.0
        %2883 = vmatprep.subr.mxu0 0.0
        %2884 = vmatpush1.msra.mxu0 0.0
        %2885 = vmatprep.subr.mxu0 0.0
        %2886 = vmatpush1.msra.mxu0 0.0
        %2887 = vmatprep.subr.mxu0 0.0
        %2888 = vmatpush1.msra.mxu0 0.0
        %2889 = vmatprep.subr.mxu0 0.0
        %2890 = vmatpush1.msra.mxu0 0.0
        %2891 = vmatprep.subr.mxu0 0.0
        %2892 = vmatpush1.msra.mxu0 0.0
        %2893 = vmatprep.subr.mxu0 0.0
        %2894 = vmatpush1.msra.mxu0 0.0
        %2895 = vmatprep.subr.mxu0 0.0
        %2896 = vmatpush1.msra.mxu0 0.0
        %2897 = vmatprep.subr.mxu0 0.0
        %2898 = vmatpush1.msra.mxu0 0.0
        %2899 = vmatprep.subr.mxu0 0.0
        %2900 = vmatpush1.msra.mxu0 0.0
        %2901 = vmatprep.subr.mxu0 0.0
        %2902 = vmatpush1.msra.mxu0 0.0
        %2903 = vmatprep.subr.mxu0 0.0
        %2904 = vmatpush1.msra.mxu0 0.0
        %2905 = vmatprep.subr.mxu0 0.0
        %2906 = vmatpush1.msra.mxu0 0.0
        %2907 = vmatprep.subr.mxu0 0.0
        %2908 = vmatpush1.msra.mxu0 0.0
        %2909 = vmatprep.subr.mxu0 0.0
        %2910 = vmatpush1.msra.mxu0 0.0
        %2911 = vmatprep.subr.mxu0 0.0
        %2912 = vmatpush1.msra.mxu0 0.0
        %2913 = vmatprep.subr.mxu0 0.0
        %2914 = vmatpush1.msra.mxu0 0.0
        %2915 = vmatprep.subr.mxu0 0.0
        %2916 = vmatpush1.msra.mxu0 0.0
        %2917 = vmatprep.subr.mxu0 0.0
        %2918 = vmatpush1.msra.mxu0 0.0
        %2919 = vmatprep.subr.mxu0 0.0
        %2920 = vmatpush1.msra.mxu0 0.0
        %2921 = vmatprep.subr.mxu0 0.0
        %2922 = vmatpush1.msra.mxu0 0.0
        %2923 = vmatprep.subr.mxu0 0.0
        %2924 = vmatpush1.msra.mxu0 0.0
        %2925 = vmatprep.subr.mxu0 0.0
        %2926 = vmatpush1.msra.mxu0 0.0
        %2927 = vmatprep.subr.mxu0 0.0
        %2928 = vmatpush1.msra.mxu0 0.0
        %2929 = vmatprep.subr.mxu0 0.0
        %2930 = vmatpush1.msra.mxu0 0.0
        %2931 = vmatprep.subr.mxu0 0.0
        %2932 = vmatpush1.msra.mxu0 0.0
        %2933 = vmatprep.subr.mxu0 0.0
        %2934 = vmatpush1.msra.mxu0 0.0
        %2935 = vmatprep.subr.mxu0 0.0
        %2936 = vmatpush1.msra.mxu0 0.0
        %2937 = vmatprep.subr.mxu0 0.0
        %2938 = vmatpush1.msra.mxu0 0.0
        %2939 = vmatprep.subr.mxu0 0.0
        %2940 = vmatpush1.msra.mxu0 0.0
        %2941 = vmatprep.mubr.f32.mxu0 0.0
        %v2942 = vand.u32 %v2721, 4294901760
        %v2943 = vsub.f32 %v2721, %v2942
        %2944 = vmatmul.mubr.f32.gmra.mrb[0].mxu0 %v2943
        %v2945 = vpop.f32.mrb[0].mxu0
        %v2946 = vadd.f32 %v2872, %v2945
        %v2947 = vpop.f32.mrb[0].mxu0
        %2948 = vdwg.mxu0
        %2949 = vmatprep.subr.mxu0 0.0
        %v2950 = vand.u32 %v2718, 4294901760
        %2951 = vmatpush1.msra.mxu0 %v2950
        %2952 = vmatprep.subr.mxu0 0.0
        %2953 = vmatpush1.msra.mxu0 0.0
        %2954 = vmatprep.subr.mxu0 0.0
        %2955 = vmatpush1.msra.mxu0 0.0
        %2956 = vmatprep.subr.mxu0 0.0
        %2957 = vmatpush1.msra.mxu0 0.0
        %2958 = vmatprep.subr.mxu0 0.0
        %2959 = vmatpush1.msra.mxu0 0.0
        %2960 = vmatprep.subr.mxu0 0.0
        %2961 = vmatpush1.msra.mxu0 0.0
        %2962 = vmatprep.subr.mxu0 0.0
        %2963 = vmatpush1.msra.mxu0 0.0
        %2964 = vmatprep.subr.mxu0 0.0
        %2965 = vmatpush1.msra.mxu0 0.0
        %2966 = vmatprep.subr.mxu0 0.0
        %2967 = vmatpush1.msra.mxu0 0.0
        %2968 = vmatprep.subr.mxu0 0.0
        %2969 = vmatpush1.msra.mxu0 0.0
        %2970 = vmatprep.subr.mxu0 0.0
        %2971 = vmatpush1.msra.mxu0 0.0
        %2972 = vmatprep.subr.mxu0 0.0
        %2973 = vmatpush1.msra.mxu0 0.0
        %2974 = vmatprep.subr.mxu0 0.0
        %2975 = vmatpush1.msra.mxu0 0.0
        %2976 = vmatprep.subr.mxu0 0.0
        %2977 = vmatpush1.msra.mxu0 0.0
        %2978 = vmatprep.subr.mxu0 0.0
        %2979 = vmatpush1.msra.mxu0 0.0
        %2980 = vmatprep.subr.mxu0 0.0
        %2981 = vmatpush1.msra.mxu0 0.0
        %2982 = vmatprep.subr.mxu0 0.0
        %2983 = vmatpush1.msra.mxu0 0.0
        %2984 = vmatprep.subr.mxu0 0.0
        %2985 = vmatpush1.msra.mxu0 0.0
        %2986 = vmatprep.subr.mxu0 0.0
        %2987 = vmatpush1.msra.mxu0 0.0
        %2988 = vmatprep.subr.mxu0 0.0
        %2989 = vmatpush1.msra.mxu0 0.0
        %2990 = vmatprep.subr.mxu0 0.0
        %2991 = vmatpush1.msra.mxu0 0.0
        %2992 = vmatprep.subr.mxu0 0.0
        %2993 = vmatpush1.msra.mxu0 0.0
        %2994 = vmatprep.subr.mxu0 0.0
        %2995 = vmatpush1.msra.mxu0 0.0
        %2996 = vmatprep.subr.mxu0 0.0
        %2997 = vmatpush1.msra.mxu0 0.0
        %2998 = vmatprep.subr.mxu0 0.0
        %2999 = vmatpush1.msra.mxu0 0.0
        %3000 = vmatprep.subr.mxu0 0.0
        %3001 = vmatpush1.msra.mxu0 0.0
        %3002 = vmatprep.subr.mxu0 0.0
        %3003 = vmatpush1.msra.mxu0 0.0
        %3004 = vmatprep.subr.mxu0 0.0
        %3005 = vmatpush1.msra.mxu0 0.0
        %3006 = vmatprep.subr.mxu0 0.0
        %3007 = vmatpush1.msra.mxu0 0.0
        %3008 = vmatprep.subr.mxu0 0.0
        %3009 = vmatpush1.msra.mxu0 0.0
        %3010 = vmatprep.subr.mxu0 0.0
        %3011 = vmatpush1.msra.mxu0 0.0
        %3012 = vmatprep.subr.mxu0 0.0
        %3013 = vmatpush1.msra.mxu0 0.0
        %3014 = vmatprep.mubr.f32.mxu0 0.0
        %v3015 = vand.u32 %v2721, 4294901760
        %v3016 = vsub.f32 %v2721, %v3015
        %v3017 = vand.u32 %v3016, 4294901760
        %3018 = vmatmul.mubr.f32.gmra.mrb[0].mxu0 %v3017
        %v3019 = vpop.f32.mrb[0].mxu0
        %v3020 = vadd.f32 %v2946, %v3019
        %v3021 = vpop.f32.mrb[0].mxu0
        %3022 = vdwg.mxu0
        %3023 = vmatprep.subr.mxu0 0.0
        %v3024 = vand.u32 %v2718, 4294901760
        %v3025 = vsub.f32 %v2718, %v3024
        %v3026 = vand.u32 %v3025, 4294901760
        %3027 = vmatpush1.msra.mxu0 %v3026
        %3028 = vmatprep.subr.mxu0 0.0
        %3029 = vmatpush1.msra.mxu0 0.0
        %3030 = vmatprep.subr.mxu0 0.0
        %3031 = vmatpush1.msra.mxu0 0.0
        %3032 = vmatprep.subr.mxu0 0.0
        %3033 = vmatpush1.msra.mxu0 0.0
        %3034 = vmatprep.subr.mxu0 0.0
        %3035 = vmatpush1.msra.mxu0 0.0
        %3036 = vmatprep.subr.mxu0 0.0
        %3037 = vmatpush1.msra.mxu0 0.0
        %3038 = vmatprep.subr.mxu0 0.0
        %3039 = vmatpush1.msra.mxu0 0.0
        %3040 = vmatprep.subr.mxu0 0.0
        %3041 = vmatpush1.msra.mxu0 0.0
        %3042 = vmatprep.subr.mxu0 0.0
        %3043 = vmatpush1.msra.mxu0 0.0
        %3044 = vmatprep.subr.mxu0 0.0
        %3045 = vmatpush1.msra.mxu0 0.0
        %3046 = vmatprep.subr.mxu0 0.0
        %3047 = vmatpush1.msra.mxu0 0.0
        %3048 = vmatprep.subr.mxu0 0.0
        %3049 = vmatpush1.msra.mxu0 0.0
        %3050 = vmatprep.subr.mxu0 0.0
        %3051 = vmatpush1.msra.mxu0 0.0
        %3052 = vmatprep.subr.mxu0 0.0
        %3053 = vmatpush1.msra.mxu0 0.0
        %3054 = vmatprep.subr.mxu0 0.0
        %3055 = vmatpush1.msra.mxu0 0.0
        %3056 = vmatprep.subr.mxu0 0.0
        %3057 = vmatpush1.msra.mxu0 0.0
        %3058 = vmatprep.subr.mxu0 0.0
        %3059 = vmatpush1.msra.mxu0 0.0
        %3060 = vmatprep.subr.mxu0 0.0
        %3061 = vmatpush1.msra.mxu0 0.0
        %3062 = vmatprep.subr.mxu0 0.0
        %3063 = vmatpush1.msra.mxu0 0.0
        %3064 = vmatprep.subr.mxu0 0.0
        %3065 = vmatpush1.msra.mxu0 0.0
        %3066 = vmatprep.subr.mxu0 0.0
        %3067 = vmatpush1.msra.mxu0 0.0
        %3068 = vmatprep.subr.mxu0 0.0
        %3069 = vmatpush1.msra.mxu0 0.0
        %3070 = vmatprep.subr.mxu0 0.0
        %3071 = vmatpush1.msra.mxu0 0.0
        %3072 = vmatprep.subr.mxu0 0.0
        %3073 = vmatpush1.msra.mxu0 0.0
        %3074 = vmatprep.subr.mxu0 0.0
        %3075 = vmatpush1.msra.mxu0 0.0
        %3076 = vmatprep.subr.mxu0 0.0
        %3077 = vmatpush1.msra.mxu0 0.0
        %3078 = vmatprep.subr.mxu0 0.0
        %3079 = vmatpush1.msra.mxu0 0.0
        %3080 = vmatprep.subr.mxu0 0.0
        %3081 = vmatpush1.msra.mxu0 0.0
        %3082 = vmatprep.subr.mxu0 0.0
        %3083 = vmatpush1.msra.mxu0 0.0
        %3084 = vmatprep.subr.mxu0 0.0
        %3085 = vmatpush1.msra.mxu0 0.0
        %3086 = vmatprep.subr.mxu0 0.0
        %3087 = vmatpush1.msra.mxu0 0.0
        %3088 = vmatprep.subr.mxu0 0.0
        %3089 = vmatpush1.msra.mxu0 0.0
        %3090 = vmatprep.mubr.f32.mxu0 0.0
        %v3091 = vand.u32 %v2721, 4294901760
        %3092 = vmatmul.mubr.f32.gmra.mrb[0].mxu0 %v3091
        %v3093 = vpop.f32.mrb[0].mxu0
        %v3094 = vadd.f32 %v3020, %v3093
        %v3095 = vpop.f32.mrb[0].mxu0
        %3096 = vdwg.mxu0
        %3097 = vmatprep.subr.mxu0 0.0
        %v3098 = vand.u32 %v2718, 4294901760
        %3099 = vmatpush1.msra.mxu0 %v3098
        %3100 = vmatprep.subr.mxu0 0.0
        %3101 = vmatpush1.msra.mxu0 0.0
        %3102 = vmatprep.subr.mxu0 0.0
        %3103 = vmatpush1.msra.mxu0 0.0
        %3104 = vmatprep.subr.mxu0 0.0
        %3105 = vmatpush1.msra.mxu0 0.0
        %3106 = vmatprep.subr.mxu0 0.0
        %3107 = vmatpush1.msra.mxu0 0.0
        %3108 = vmatprep.subr.mxu0 0.0
        %3109 = vmatpush1.msra.mxu0 0.0
        %3110 = vmatprep.subr.mxu0 0.0
        %3111 = vmatpush1.msra.mxu0 0.0
        %3112 = vmatprep.subr.mxu0 0.0
        %3113 = vmatpush1.msra.mxu0 0.0
        %3114 = vmatprep.subr.mxu0 0.0
        %3115 = vmatpush1.msra.mxu0 0.0
        %3116 = vmatprep.subr.mxu0 0.0
        %3117 = vmatpush1.msra.mxu0 0.0
        %3118 = vmatprep.subr.mxu0 0.0
        %3119 = vmatpush1.msra.mxu0 0.0
        %3120 = vmatprep.subr.mxu0 0.0
        %3121 = vmatpush1.msra.mxu0 0.0
        %3122 = vmatprep.subr.mxu0 0.0
        %3123 = vmatpush1.msra.mxu0 0.0
        %3124 = vmatprep.subr.mxu0 0.0
        %3125 = vmatpush1.msra.mxu0 0.0
        %3126 = vmatprep.subr.mxu0 0.0
        %3127 = vmatpush1.msra.mxu0 0.0
        %3128 = vmatprep.subr.mxu0 0.0
        %3129 = vmatpush1.msra.mxu0 0.0
        %3130 = vmatprep.subr.mxu0 0.0
        %3131 = vmatpush1.msra.mxu0 0.0
        %3132 = vmatprep.subr.mxu0 0.0
        %3133 = vmatpush1.msra.mxu0 0.0
        %3134 = vmatprep.subr.mxu0 0.0
        %3135 = vmatpush1.msra.mxu0 0.0
        %3136 = vmatprep.subr.mxu0 0.0
        %3137 = vmatpush1.msra.mxu0 0.0
        %3138 = vmatprep.subr.mxu0 0.0
        %3139 = vmatpush1.msra.mxu0 0.0
        %3140 = vmatprep.subr.mxu0 0.0
        %3141 = vmatpush1.msra.mxu0 0.0
        %3142 = vmatprep.subr.mxu0 0.0
        %3143 = vmatpush1.msra.mxu0 0.0
        %3144 = vmatprep.subr.mxu0 0.0
        %3145 = vmatpush1.msra.mxu0 0.0
        %3146 = vmatprep.subr.mxu0 0.0
        %3147 = vmatpush1.msra.mxu0 0.0
        %3148 = vmatprep.subr.mxu0 0.0
        %3149 = vmatpush1.msra.mxu0 0.0
        %3150 = vmatprep.subr.mxu0 0.0
        %3151 = vmatpush1.msra.mxu0 0.0
        %3152 = vmatprep.subr.mxu0 0.0
        %3153 = vmatpush1.msra.mxu0 0.0
        %3154 = vmatprep.subr.mxu0 0.0
        %3155 = vmatpush1.msra.mxu0 0.0
        %3156 = vmatprep.subr.mxu0 0.0
        %3157 = vmatpush1.msra.mxu0 0.0
        %3158 = vmatprep.subr.mxu0 0.0
        %3159 = vmatpush1.msra.mxu0 0.0
        %3160 = vmatprep.subr.mxu0 0.0
        %3161 = vmatpush1.msra.mxu0 0.0
        %3162 = vmatprep.mubr.f32.mxu0 0.0
        %v3163 = vand.u32 %v2721, 4294901760
        %3164 = vmatmul.mubr.f32.gmra.mrb[0].mxu0 %v3163
        %v3165 = vpop.f32.mrb[0].mxu0
        %v3166 = vadd.f32 %v3094, %v3165
        %v3167 = vpop.f32.mrb[0].mxu0
        %3168 = vdwg.mxu0
        %3169 = vst.msk [vmem:[#allocation3] sm:$0xff] %vm1335, %v2714
        %3170 = vst.msk [vmem:[#allocation3 + $0x8] sm:$0xff] %vm1335, %v3166
        %3171 = vrot.lane.b32.xlu0 %v1318, 120
        %v3172 = vpop.permute.xlu0 %3171
        %3173 = vrot.lane.b32.xlu0 %v1318, 88
        %v3174 = vpop.permute.xlu0 %3173
        %v3175 = vsel %vm1335, %v3172, 0
        %v3177 = vsel %vm1335, %v3174, 0
        %3179 = vmatprep.subr.mxu0 0.0
        %v3180 = vand.u32 %v3177, 4294901760
        %3181 = vmatpush1.xpose.msra.mxu0 %v3180
        %3182 = vmatprep.subr.mxu0 0.0
        %3183 = vmatpush1.xpose.msra.mxu0 0.0
        %3184 = vmatprep.subr.mxu0 0.0
        %3185 = vmatpush1.xpose.msra.mxu0 0.0
        %3186 = vmatprep.subr.mxu0 0.0
        %3187 = vmatpush1.xpose.msra.mxu0 0.0
        %3188 = vmatprep.subr.mxu0 0.0
        %3189 = vmatpush1.xpose.msra.mxu0 0.0
        %3190 = vmatprep.subr.mxu0 0.0
        %3191 = vmatpush1.xpose.msra.mxu0 0.0
        %3192 = vmatprep.subr.mxu0 0.0
        %3193 = vmatpush1.xpose.msra.mxu0 0.0
        %3194 = vmatprep.subr.mxu0 0.0
        %3195 = vmatpush1.xpose.msra.mxu0 0.0
        %3196 = vmatprep.subr.mxu0 0.0
        %3197 = vmatpush1.xpose.msra.mxu0 0.0
        %3198 = vmatprep.subr.mxu0 0.0
        %3199 = vmatpush1.xpose.msra.mxu0 0.0
        %3200 = vmatprep.subr.mxu0 0.0
        %3201 = vmatpush1.xpose.msra.mxu0 0.0
        %3202 = vmatprep.subr.mxu0 0.0
        %3203 = vmatpush1.xpose.msra.mxu0 0.0
        %3204 = vmatprep.subr.mxu0 0.0
        %3205 = vmatpush1.xpose.msra.mxu0 0.0
        %3206 = vmatprep.subr.mxu0 0.0
        %3207 = vmatpush1.xpose.msra.mxu0 0.0
        %3208 = vmatprep.subr.mxu0 0.0
        %3209 = vmatpush1.xpose.msra.mxu0 0.0
        %3210 = vmatprep.subr.mxu0 0.0
        %3211 = vmatpush1.xpose.msra.mxu0 0.0
        %3212 = vmatprep.subr.mxu0 0.0
        %3213 = vmatpush1.xpose.msra.mxu0 0.0
        %3214 = vmatprep.subr.mxu0 0.0
        %3215 = vmatpush1.xpose.msra.mxu0 0.0
        %3216 = vmatprep.subr.mxu0 0.0
        %3217 = vmatpush1.xpose.msra.mxu0 0.0
        %3218 = vmatprep.subr.mxu0 0.0
        %3219 = vmatpush1.xpose.msra.mxu0 0.0
        %3220 = vmatprep.subr.mxu0 0.0
        %3221 = vmatpush1.xpose.msra.mxu0 0.0
        %3222 = vmatprep.subr.mxu0 0.0
        %3223 = vmatpush1.xpose.msra.mxu0 0.0
        %3224 = vmatprep.subr.mxu0 0.0
        %3225 = vmatpush1.xpose.msra.mxu0 0.0
        %3226 = vmatprep.subr.mxu0 0.0
        %3227 = vmatpush1.xpose.msra.mxu0 0.0
        %3228 = vmatprep.subr.mxu0 0.0
        %3229 = vmatpush1.xpose.msra.mxu0 0.0
        %3230 = vmatprep.subr.mxu0 0.0
        %3231 = vmatpush1.xpose.msra.mxu0 0.0
        %3232 = vmatprep.subr.mxu0 0.0
        %3233 = vmatpush1.xpose.msra.mxu0 0.0
        %3234 = vmatprep.subr.mxu0 0.0
        %3235 = vmatpush1.xpose.msra.mxu0 0.0
        %3236 = vmatprep.subr.mxu0 0.0
        %3237 = vmatpush1.xpose.msra.mxu0 0.0
        %3238 = vmatprep.subr.mxu0 0.0
        %3239 = vmatpush1.xpose.msra.mxu0 0.0
        %3240 = vmatprep.subr.mxu0 0.0
        %3241 = vmatpush1.xpose.msra.mxu0 0.0
        %3242 = vmatprep.subr.mxu0 0.0
        %3243 = vmatpush1.xpose.msra.mxu0 0.0
        %3244 = vmatprep.mubr.f32.mxu0 0.0
        %v3245 = vand.u32 %v3175, 4294901760
        %v3246 = vsub.f32 %v3175, %v3245
        %v3247 = vand.u32 %v3246, 4294901760
        %v3248 = vsub.f32 %v3246, %v3247
        %v3249 = vand.u32 %v3248, 4294901760
        %3250 = vmatmul.mubr.f32.gmra.mrb[0].mxu0 %v3249
        %v3251 = vpop.f32.mrb[0].mxu0
        %v3252 = vadd.f32 0.0, %v3251
        %v3253 = vpop.f32.mrb[0].mxu0
        %3254 = vdwg.mxu0
        %3255 = vmatprep.subr.mxu0 0.0
        %v3256 = vand.u32 %v3177, 4294901760
        %v3257 = vsub.f32 %v3177, %v3256
        %v3258 = vand.u32 %v3257, 4294901760
        %v3259 = vsub.f32 %v3257, %v3258
        %v3260 = vand.u32 %v3259, 4294901760
        %3261 = vmatpush1.xpose.msra.mxu0 %v3260
        %3262 = vmatprep.subr.mxu0 0.0
        %3263 = vmatpush1.xpose.msra.mxu0 0.0
        %3264 = vmatprep.subr.mxu0 0.0
        %3265 = vmatpush1.xpose.msra.mxu0 0.0
        %3266 = vmatprep.subr.mxu0 0.0
        %3267 = vmatpush1.xpose.msra.mxu0 0.0
        %3268 = vmatprep.subr.mxu0 0.0
        %3269 = vmatpush1.xpose.msra.mxu0 0.0
        %3270 = vmatprep.subr.mxu0 0.0
        %3271 = vmatpush1.xpose.msra.mxu0 0.0
        %3272 = vmatprep.subr.mxu0 0.0
        %3273 = vmatpush1.xpose.msra.mxu0 0.0
        %3274 = vmatprep.subr.mxu0 0.0
        %3275 = vmatpush1.xpose.msra.mxu0 0.0
        %3276 = vmatprep.subr.mxu0 0.0
        %3277 = vmatpush1.xpose.msra.mxu0 0.0
        %3278 = vmatprep.subr.mxu0 0.0
        %3279 = vmatpush1.xpose.msra.mxu0 0.0
        %3280 = vmatprep.subr.mxu0 0.0
        %3281 = vmatpush1.xpose.msra.mxu0 0.0
        %3282 = vmatprep.subr.mxu0 0.0
        %3283 = vmatpush1.xpose.msra.mxu0 0.0
        %3284 = vmatprep.subr.mxu0 0.0
        %3285 = vmatpush1.xpose.msra.mxu0 0.0
        %3286 = vmatprep.subr.mxu0 0.0
        %3287 = vmatpush1.xpose.msra.mxu0 0.0
        %3288 = vmatprep.subr.mxu0 0.0
        %3289 = vmatpush1.xpose.msra.mxu0 0.0
        %3290 = vmatprep.subr.mxu0 0.0
        %3291 = vmatpush1.xpose.msra.mxu0 0.0
        %3292 = vmatprep.subr.mxu0 0.0
        %3293 = vmatpush1.xpose.msra.mxu0 0.0
        %3294 = vmatprep.subr.mxu0 0.0
        %3295 = vmatpush1.xpose.msra.mxu0 0.0
        %3296 = vmatprep.subr.mxu0 0.0
        %3297 = vmatpush1.xpose.msra.mxu0 0.0
        %3298 = vmatprep.subr.mxu0 0.0
        %3299 = vmatpush1.xpose.msra.mxu0 0.0
        %3300 = vmatprep.subr.mxu0 0.0
        %3301 = vmatpush1.xpose.msra.mxu0 0.0
        %3302 = vmatprep.subr.mxu0 0.0
        %3303 = vmatpush1.xpose.msra.mxu0 0.0
        %3304 = vmatprep.subr.mxu0 0.0
        %3305 = vmatpush1.xpose.msra.mxu0 0.0
        %3306 = vmatprep.subr.mxu0 0.0
        %3307 = vmatpush1.xpose.msra.mxu0 0.0
        %3308 = vmatprep.subr.mxu0 0.0
        %3309 = vmatpush1.xpose.msra.mxu0 0.0
        %3310 = vmatprep.subr.mxu0 0.0
        %3311 = vmatpush1.xpose.msra.mxu0 0.0
        %3312 = vmatprep.subr.mxu0 0.0
        %3313 = vmatpush1.xpose.msra.mxu0 0.0
        %3314 = vmatprep.subr.mxu0 0.0
        %3315 = vmatpush1.xpose.msra.mxu0 0.0
        %3316 = vmatprep.subr.mxu0 0.0
        %3317 = vmatpush1.xpose.msra.mxu0 0.0
        %3318 = vmatprep.subr.mxu0 0.0
        %3319 = vmatpush1.xpose.msra.mxu0 0.0
        %3320 = vmatprep.subr.mxu0 0.0
        %3321 = vmatpush1.xpose.msra.mxu0 0.0
        %3322 = vmatprep.subr.mxu0 0.0
        %3323 = vmatpush1.xpose.msra.mxu0 0.0
        %3324 = vmatprep.mubr.f32.mxu0 0.0
        %v3325 = vand.u32 %v3175, 4294901760
        %3326 = vmatmul.mubr.f32.gmra.mrb[0].mxu0 %v3325
        %v3327 = vpop.f32.mrb[0].mxu0
        %v3328 = vadd.f32 %v3252, %v3327
        %v3329 = vpop.f32.mrb[0].mxu0
        %3330 = vdwg.mxu0
        %3331 = vmatprep.subr.mxu0 0.0
        %v3332 = vand.u32 %v3177, 4294901760
        %v3333 = vsub.f32 %v3177, %v3332
        %3334 = vmatpush1.xpose.msra.mxu0 %v3333
        %3335 = vmatprep.subr.mxu0 0.0
        %3336 = vmatpush1.xpose.msra.mxu0 0.0
        %3337 = vmatprep.subr.mxu0 0.0
        %3338 = vmatpush1.xpose.msra.mxu0 0.0
        %3339 = vmatprep.subr.mxu0 0.0
        %3340 = vmatpush1.xpose.msra.mxu0 0.0
        %3341 = vmatprep.subr.mxu0 0.0
        %3342 = vmatpush1.xpose.msra.mxu0 0.0
        %3343 = vmatprep.subr.mxu0 0.0
        %3344 = vmatpush1.xpose.msra.mxu0 0.0
        %3345 = vmatprep.subr.mxu0 0.0
        %3346 = vmatpush1.xpose.msra.mxu0 0.0
        %3347 = vmatprep.subr.mxu0 0.0
        %3348 = vmatpush1.xpose.msra.mxu0 0.0
        %3349 = vmatprep.subr.mxu0 0.0
        %3350 = vmatpush1.xpose.msra.mxu0 0.0
        %3351 = vmatprep.subr.mxu0 0.0
        %3352 = vmatpush1.xpose.msra.mxu0 0.0
        %3353 = vmatprep.subr.mxu0 0.0
        %3354 = vmatpush1.xpose.msra.mxu0 0.0
        %3355 = vmatprep.subr.mxu0 0.0
        %3356 = vmatpush1.xpose.msra.mxu0 0.0
        %3357 = vmatprep.subr.mxu0 0.0
        %3358 = vmatpush1.xpose.msra.mxu0 0.0
        %3359 = vmatprep.subr.mxu0 0.0
        %3360 = vmatpush1.xpose.msra.mxu0 0.0
        %3361 = vmatprep.subr.mxu0 0.0
        %3362 = vmatpush1.xpose.msra.mxu0 0.0
        %3363 = vmatprep.subr.mxu0 0.0
        %3364 = vmatpush1.xpose.msra.mxu0 0.0
        %3365 = vmatprep.subr.mxu0 0.0
        %3366 = vmatpush1.xpose.msra.mxu0 0.0
        %3367 = vmatprep.subr.mxu0 0.0
        %3368 = vmatpush1.xpose.msra.mxu0 0.0
        %3369 = vmatprep.subr.mxu0 0.0
        %3370 = vmatpush1.xpose.msra.mxu0 0.0
        %3371 = vmatprep.subr.mxu0 0.0
        %3372 = vmatpush1.xpose.msra.mxu0 0.0
        %3373 = vmatprep.subr.mxu0 0.0
        %3374 = vmatpush1.xpose.msra.mxu0 0.0
        %3375 = vmatprep.subr.mxu0 0.0
        %3376 = vmatpush1.xpose.msra.mxu0 0.0
        %3377 = vmatprep.subr.mxu0 0.0
        %3378 = vmatpush1.xpose.msra.mxu0 0.0
        %3379 = vmatprep.subr.mxu0 0.0
        %3380 = vmatpush1.xpose.msra.mxu0 0.0
        %3381 = vmatprep.subr.mxu0 0.0
        %3382 = vmatpush1.xpose.msra.mxu0 0.0
        %3383 = vmatprep.subr.mxu0 0.0
        %3384 = vmatpush1.xpose.msra.mxu0 0.0
        %3385 = vmatprep.subr.mxu0 0.0
        %3386 = vmatpush1.xpose.msra.mxu0 0.0
        %3387 = vmatprep.subr.mxu0 0.0
        %3388 = vmatpush1.xpose.msra.mxu0 0.0
        %3389 = vmatprep.subr.mxu0 0.0
        %3390 = vmatpush1.xpose.msra.mxu0 0.0
        %3391 = vmatprep.subr.mxu0 0.0
        %3392 = vmatpush1.xpose.msra.mxu0 0.0
        %3393 = vmatprep.subr.mxu0 0.0
        %3394 = vmatpush1.xpose.msra.mxu0 0.0
        %3395 = vmatprep.subr.mxu0 0.0
        %3396 = vmatpush1.xpose.msra.mxu0 0.0
        %3397 = vmatprep.mubr.f32.mxu0 0.0
        %v3398 = vand.u32 %v3175, 4294901760
        %v3399 = vsub.f32 %v3175, %v3398
        %3400 = vmatmul.mubr.f32.gmra.mrb[0].mxu0 %v3399
        %v3401 = vpop.f32.mrb[0].mxu0
        %v3402 = vadd.f32 %v3328, %v3401
        %v3403 = vpop.f32.mrb[0].mxu0
        %3404 = vdwg.mxu0
        %3405 = vmatprep.subr.mxu0 0.0
        %v3406 = vand.u32 %v3177, 4294901760
        %3407 = vmatpush1.xpose.msra.mxu0 %v3406
        %3408 = vmatprep.subr.mxu0 0.0
        %3409 = vmatpush1.xpose.msra.mxu0 0.0
        %3410 = vmatprep.subr.mxu0 0.0
        %3411 = vmatpush1.xpose.msra.mxu0 0.0
        %3412 = vmatprep.subr.mxu0 0.0
        %3413 = vmatpush1.xpose.msra.mxu0 0.0
        %3414 = vmatprep.subr.mxu0 0.0
        %3415 = vmatpush1.xpose.msra.mxu0 0.0
        %3416 = vmatprep.subr.mxu0 0.0
        %3417 = vmatpush1.xpose.msra.mxu0 0.0
        %3418 = vmatprep.subr.mxu0 0.0
        %3419 = vmatpush1.xpose.msra.mxu0 0.0
        %3420 = vmatprep.subr.mxu0 0.0
        %3421 = vmatpush1.xpose.msra.mxu0 0.0
        %3422 = vmatprep.subr.mxu0 0.0
        %3423 = vmatpush1.xpose.msra.mxu0 0.0
        %3424 = vmatprep.subr.mxu0 0.0
        %3425 = vmatpush1.xpose.msra.mxu0 0.0
        %3426 = vmatprep.subr.mxu0 0.0
        %3427 = vmatpush1.xpose.msra.mxu0 0.0
        %3428 = vmatprep.subr.mxu0 0.0
        %3429 = vmatpush1.xpose.msra.mxu0 0.0
        %3430 = vmatprep.subr.mxu0 0.0
        %3431 = vmatpush1.xpose.msra.mxu0 0.0
        %3432 = vmatprep.subr.mxu0 0.0
        %3433 = vmatpush1.xpose.msra.mxu0 0.0
        %3434 = vmatprep.subr.mxu0 0.0
        %3435 = vmatpush1.xpose.msra.mxu0 0.0
        %3436 = vmatprep.subr.mxu0 0.0
        %3437 = vmatpush1.xpose.msra.mxu0 0.0
        %3438 = vmatprep.subr.mxu0 0.0
        %3439 = vmatpush1.xpose.msra.mxu0 0.0
        %3440 = vmatprep.subr.mxu0 0.0
        %3441 = vmatpush1.xpose.msra.mxu0 0.0
        %3442 = vmatprep.subr.mxu0 0.0
        %3443 = vmatpush1.xpose.msra.mxu0 0.0
        %3444 = vmatprep.subr.mxu0 0.0
        %3445 = vmatpush1.xpose.msra.mxu0 0.0
        %3446 = vmatprep.subr.mxu0 0.0
        %3447 = vmatpush1.xpose.msra.mxu0 0.0
        %3448 = vmatprep.subr.mxu0 0.0
        %3449 = vmatpush1.xpose.msra.mxu0 0.0
        %3450 = vmatprep.subr.mxu0 0.0
        %3451 = vmatpush1.xpose.msra.mxu0 0.0
        %3452 = vmatprep.subr.mxu0 0.0
        %3453 = vmatpush1.xpose.msra.mxu0 0.0
        %3454 = vmatprep.subr.mxu0 0.0
        %3455 = vmatpush1.xpose.msra.mxu0 0.0
        %3456 = vmatprep.subr.mxu0 0.0
        %3457 = vmatpush1.xpose.msra.mxu0 0.0
        %3458 = vmatprep.subr.mxu0 0.0
        %3459 = vmatpush1.xpose.msra.mxu0 0.0
        %3460 = vmatprep.subr.mxu0 0.0
        %3461 = vmatpush1.xpose.msra.mxu0 0.0
        %3462 = vmatprep.subr.mxu0 0.0
        %3463 = vmatpush1.xpose.msra.mxu0 0.0
        %3464 = vmatprep.subr.mxu0 0.0
        %3465 = vmatpush1.xpose.msra.mxu0 0.0
        %3466 = vmatprep.subr.mxu0 0.0
        %3467 = vmatpush1.xpose.msra.mxu0 0.0
        %3468 = vmatprep.subr.mxu0 0.0
        %3469 = vmatpush1.xpose.msra.mxu0 0.0
        %3470 = vmatprep.mubr.f32.mxu0 0.0
        %v3471 = vand.u32 %v3175, 4294901760
        %v3472 = vsub.f32 %v3175, %v3471
        %v3473 = vand.u32 %v3472, 4294901760
        %3474 = vmatmul.mubr.f32.gmra.mrb[0].mxu0 %v3473
        %v3475 = vpop.f32.mrb[0].mxu0
        %v3476 = vadd.f32 %v3402, %v3475
        %v3477 = vpop.f32.mrb[0].mxu0
        %3478 = vdwg.mxu0
        %3479 = vmatprep.subr.mxu0 0.0
        %v3480 = vand.u32 %v3177, 4294901760
        %v3481 = vsub.f32 %v3177, %v3480
        %v3482 = vand.u32 %v3481, 4294901760
        %3483 = vmatpush1.xpose.msra.mxu0 %v3482
        %3484 = vmatprep.subr.mxu0 0.0
        %3485 = vmatpush1.xpose.msra.mxu0 0.0
        %3486 = vmatprep.subr.mxu0 0.0
        %3487 = vmatpush1.xpose.msra.mxu0 0.0
        %3488 = vmatprep.subr.mxu0 0.0
        %3489 = vmatpush1.xpose.msra.mxu0 0.0
        %3490 = vmatprep.subr.mxu0 0.0
        %3491 = vmatpush1.xpose.msra.mxu0 0.0
        %3492 = vmatprep.subr.mxu0 0.0
        %3493 = vmatpush1.xpose.msra.mxu0 0.0
        %3494 = vmatprep.subr.mxu0 0.0
        %3495 = vmatpush1.xpose.msra.mxu0 0.0
        %3496 = vmatprep.subr.mxu0 0.0
        %3497 = vmatpush1.xpose.msra.mxu0 0.0
        %3498 = vmatprep.subr.mxu0 0.0
        %3499 = vmatpush1.xpose.msra.mxu0 0.0
        %3500 = vmatprep.subr.mxu0 0.0
        %3501 = vmatpush1.xpose.msra.mxu0 0.0
        %3502 = vmatprep.subr.mxu0 0.0
        %3503 = vmatpush1.xpose.msra.mxu0 0.0
        %3504 = vmatprep.subr.mxu0 0.0
        %3505 = vmatpush1.xpose.msra.mxu0 0.0
        %3506 = vmatprep.subr.mxu0 0.0
        %3507 = vmatpush1.xpose.msra.mxu0 0.0
        %3508 = vmatprep.subr.mxu0 0.0
        %3509 = vmatpush1.xpose.msra.mxu0 0.0
        %3510 = vmatprep.subr.mxu0 0.0
        %3511 = vmatpush1.xpose.msra.mxu0 0.0
        %3512 = vmatprep.subr.mxu0 0.0
        %3513 = vmatpush1.xpose.msra.mxu0 0.0
        %3514 = vmatprep.subr.mxu0 0.0
        %3515 = vmatpush1.xpose.msra.mxu0 0.0
        %3516 = vmatprep.subr.mxu0 0.0
        %3517 = vmatpush1.xpose.msra.mxu0 0.0
        %3518 = vmatprep.subr.mxu0 0.0
        %3519 = vmatpush1.xpose.msra.mxu0 0.0
        %3520 = vmatprep.subr.mxu0 0.0
        %3521 = vmatpush1.xpose.msra.mxu0 0.0
        %3522 = vmatprep.subr.mxu0 0.0
        %3523 = vmatpush1.xpose.msra.mxu0 0.0
        %3524 = vmatprep.subr.mxu0 0.0
        %3525 = vmatpush1.xpose.msra.mxu0 0.0
        %3526 = vmatprep.subr.mxu0 0.0
        %3527 = vmatpush1.xpose.msra.mxu0 0.0
        %3528 = vmatprep.subr.mxu0 0.0
        %3529 = vmatpush1.xpose.msra.mxu0 0.0
        %3530 = vmatprep.subr.mxu0 0.0
        %3531 = vmatpush1.xpose.msra.mxu0 0.0
        %3532 = vmatprep.subr.mxu0 0.0
        %3533 = vmatpush1.xpose.msra.mxu0 0.0
        %3534 = vmatprep.subr.mxu0 0.0
        %3535 = vmatpush1.xpose.msra.mxu0 0.0
        %3536 = vmatprep.subr.mxu0 0.0
        %3537 = vmatpush1.xpose.msra.mxu0 0.0
        %3538 = vmatprep.subr.mxu0 0.0
        %3539 = vmatpush1.xpose.msra.mxu0 0.0
        %3540 = vmatprep.subr.mxu0 0.0
        %3541 = vmatpush1.xpose.msra.mxu0 0.0
        %3542 = vmatprep.subr.mxu0 0.0
        %3543 = vmatpush1.xpose.msra.mxu0 0.0
        %3544 = vmatprep.subr.mxu0 0.0
        %3545 = vmatpush1.xpose.msra.mxu0 0.0
        %3546 = vmatprep.mubr.f32.mxu0 0.0
        %v3547 = vand.u32 %v3175, 4294901760
        %3548 = vmatmul.mubr.f32.gmra.mrb[0].mxu0 %v3547
        %v3549 = vpop.f32.mrb[0].mxu0
        %v3550 = vadd.f32 %v3476, %v3549
        %v3551 = vpop.f32.mrb[0].mxu0
        %3552 = vdwg.mxu0
        %3553 = vmatprep.subr.mxu0 0.0
        %v3554 = vand.u32 %v3177, 4294901760
        %3555 = vmatpush1.xpose.msra.mxu0 %v3554
        %3556 = vmatprep.subr.mxu0 0.0
        %3557 = vmatpush1.xpose.msra.mxu0 0.0
        %3558 = vmatprep.subr.mxu0 0.0
        %3559 = vmatpush1.xpose.msra.mxu0 0.0
        %3560 = vmatprep.subr.mxu0 0.0
        %3561 = vmatpush1.xpose.msra.mxu0 0.0
        %3562 = vmatprep.subr.mxu0 0.0
        %3563 = vmatpush1.xpose.msra.mxu0 0.0
        %3564 = vmatprep.subr.mxu0 0.0
        %3565 = vmatpush1.xpose.msra.mxu0 0.0
        %3566 = vmatprep.subr.mxu0 0.0
        %3567 = vmatpush1.xpose.msra.mxu0 0.0
        %3568 = vmatprep.subr.mxu0 0.0
        %3569 = vmatpush1.xpose.msra.mxu0 0.0
        %3570 = vmatprep.subr.mxu0 0.0
        %3571 = vmatpush1.xpose.msra.mxu0 0.0
        %3572 = vmatprep.subr.mxu0 0.0
        %3573 = vmatpush1.xpose.msra.mxu0 0.0
        %3574 = vmatprep.subr.mxu0 0.0
        %3575 = vmatpush1.xpose.msra.mxu0 0.0
        %3576 = vmatprep.subr.mxu0 0.0
        %3577 = vmatpush1.xpose.msra.mxu0 0.0
        %3578 = vmatprep.subr.mxu0 0.0
        %3579 = vmatpush1.xpose.msra.mxu0 0.0
        %3580 = vmatprep.subr.mxu0 0.0
        %3581 = vmatpush1.xpose.msra.mxu0 0.0
        %3582 = vmatprep.subr.mxu0 0.0
        %3583 = vmatpush1.xpose.msra.mxu0 0.0
        %3584 = vmatprep.subr.mxu0 0.0
        %3585 = vmatpush1.xpose.msra.mxu0 0.0
        %3586 = vmatprep.subr.mxu0 0.0
        %3587 = vmatpush1.xpose.msra.mxu0 0.0
        %3588 = vmatprep.subr.mxu0 0.0
        %3589 = vmatpush1.xpose.msra.mxu0 0.0
        %3590 = vmatprep.subr.mxu0 0.0
        %3591 = vmatpush1.xpose.msra.mxu0 0.0
        %3592 = vmatprep.subr.mxu0 0.0
        %3593 = vmatpush1.xpose.msra.mxu0 0.0
        %3594 = vmatprep.subr.mxu0 0.0
        %3595 = vmatpush1.xpose.msra.mxu0 0.0
        %3596 = vmatprep.subr.mxu0 0.0
        %3597 = vmatpush1.xpose.msra.mxu0 0.0
        %3598 = vmatprep.subr.mxu0 0.0
        %3599 = vmatpush1.xpose.msra.mxu0 0.0
        %3600 = vmatprep.subr.mxu0 0.0
        %3601 = vmatpush1.xpose.msra.mxu0 0.0
        %3602 = vmatprep.subr.mxu0 0.0
        %3603 = vmatpush1.xpose.msra.mxu0 0.0
        %3604 = vmatprep.subr.mxu0 0.0
        %3605 = vmatpush1.xpose.msra.mxu0 0.0
        %3606 = vmatprep.subr.mxu0 0.0
        %3607 = vmatpush1.xpose.msra.mxu0 0.0
        %3608 = vmatprep.subr.mxu0 0.0
        %3609 = vmatpush1.xpose.msra.mxu0 0.0
        %3610 = vmatprep.subr.mxu0 0.0
        %3611 = vmatpush1.xpose.msra.mxu0 0.0
        %3612 = vmatprep.subr.mxu0 0.0
        %3613 = vmatpush1.xpose.msra.mxu0 0.0
        %3614 = vmatprep.subr.mxu0 0.0
        %3615 = vmatpush1.xpose.msra.mxu0 0.0
        %3616 = vmatprep.subr.mxu0 0.0
        %3617 = vmatpush1.xpose.msra.mxu0 0.0
        %3618 = vmatprep.mubr.f32.mxu0 0.0
        %v3619 = vand.u32 %v3175, 4294901760
        %3620 = vmatmul.mubr.f32.gmra.mrb[0].mxu0 %v3619
        %v3621 = vpop.f32.mrb[0].mxu0
        %v3622 = vadd.f32 %v3550, %v3621
        %v3623 = vpop.f32.mrb[0].mxu0
        %3624 = vdwg.mxu0
        %3625 = vrot.lane.b32.xlu0 %v1324, 120
        %v3626 = vpop.permute.xlu0 %3625
        %3627 = vrot.lane.b32.xlu0 %v1324, 88
        %v3628 = vpop.permute.xlu0 %3627
        %v3629 = vsel %vm1335, %v3626, 0
        %v3631 = vsel %vm1335, %v3628, 0
        %3633 = vmatprep.subr.mxu0 0.0
        %v3634 = vand.u32 %v3631, 4294901760
        %3635 = vmatpush1.xpose.msra.mxu0 %v3634
        %3636 = vmatprep.subr.mxu0 0.0
        %3637 = vmatpush1.xpose.msra.mxu0 0.0
        %3638 = vmatprep.subr.mxu0 0.0
        %3639 = vmatpush1.xpose.msra.mxu0 0.0
        %3640 = vmatprep.subr.mxu0 0.0
        %3641 = vmatpush1.xpose.msra.mxu0 0.0
        %3642 = vmatprep.subr.mxu0 0.0
        %3643 = vmatpush1.xpose.msra.mxu0 0.0
        %3644 = vmatprep.subr.mxu0 0.0
        %3645 = vmatpush1.xpose.msra.mxu0 0.0
        %3646 = vmatprep.subr.mxu0 0.0
        %3647 = vmatpush1.xpose.msra.mxu0 0.0
        %3648 = vmatprep.subr.mxu0 0.0
        %3649 = vmatpush1.xpose.msra.mxu0 0.0
        %3650 = vmatprep.subr.mxu0 0.0
        %3651 = vmatpush1.xpose.msra.mxu0 0.0
        %3652 = vmatprep.subr.mxu0 0.0
        %3653 = vmatpush1.xpose.msra.mxu0 0.0
        %3654 = vmatprep.subr.mxu0 0.0
        %3655 = vmatpush1.xpose.msra.mxu0 0.0
        %3656 = vmatprep.subr.mxu0 0.0
        %3657 = vmatpush1.xpose.msra.mxu0 0.0
        %3658 = vmatprep.subr.mxu0 0.0
        %3659 = vmatpush1.xpose.msra.mxu0 0.0
        %3660 = vmatprep.subr.mxu0 0.0
        %3661 = vmatpush1.xpose.msra.mxu0 0.0
        %3662 = vmatprep.subr.mxu0 0.0
        %3663 = vmatpush1.xpose.msra.mxu0 0.0
        %3664 = vmatprep.subr.mxu0 0.0
        %3665 = vmatpush1.xpose.msra.mxu0 0.0
        %3666 = vmatprep.subr.mxu0 0.0
        %3667 = vmatpush1.xpose.msra.mxu0 0.0
        %3668 = vmatprep.subr.mxu0 0.0
        %3669 = vmatpush1.xpose.msra.mxu0 0.0
        %3670 = vmatprep.subr.mxu0 0.0
        %3671 = vmatpush1.xpose.msra.mxu0 0.0
        %3672 = vmatprep.subr.mxu0 0.0
        %3673 = vmatpush1.xpose.msra.mxu0 0.0
        %3674 = vmatprep.subr.mxu0 0.0
        %3675 = vmatpush1.xpose.msra.mxu0 0.0
        %3676 = vmatprep.subr.mxu0 0.0
        %3677 = vmatpush1.xpose.msra.mxu0 0.0
        %3678 = vmatprep.subr.mxu0 0.0
        %3679 = vmatpush1.xpose.msra.mxu0 0.0
        %3680 = vmatprep.subr.mxu0 0.0
        %3681 = vmatpush1.xpose.msra.mxu0 0.0
        %3682 = vmatprep.subr.mxu0 0.0
        %3683 = vmatpush1.xpose.msra.mxu0 0.0
        %3684 = vmatprep.subr.mxu0 0.0
        %3685 = vmatpush1.xpose.msra.mxu0 0.0
        %3686 = vmatprep.subr.mxu0 0.0
        %3687 = vmatpush1.xpose.msra.mxu0 0.0
        %3688 = vmatprep.subr.mxu0 0.0
        %3689 = vmatpush1.xpose.msra.mxu0 0.0
        %3690 = vmatprep.subr.mxu0 0.0
        %3691 = vmatpush1.xpose.msra.mxu0 0.0
        %3692 = vmatprep.subr.mxu0 0.0
        %3693 = vmatpush1.xpose.msra.mxu0 0.0
        %3694 = vmatprep.subr.mxu0 0.0
        %3695 = vmatpush1.xpose.msra.mxu0 0.0
        %3696 = vmatprep.subr.mxu0 0.0
        %3697 = vmatpush1.xpose.msra.mxu0 0.0
        %3698 = vmatprep.mubr.f32.mxu0 0.0
        %v3699 = vand.u32 %v3629, 4294901760
        %v3700 = vsub.f32 %v3629, %v3699
        %v3701 = vand.u32 %v3700, 4294901760
        %v3702 = vsub.f32 %v3700, %v3701
        %v3703 = vand.u32 %v3702, 4294901760
        %3704 = vmatmul.mubr.f32.gmra.mrb[0].mxu0 %v3703
        %v3705 = vpop.f32.mrb[0].mxu0
        %v3706 = vadd.f32 0.0, %v3705
        %v3707 = vpop.f32.mrb[0].mxu0
        %3708 = vdwg.mxu0
        %3709 = vmatprep.subr.mxu0 0.0
        %v3710 = vand.u32 %v3631, 4294901760
        %v3711 = vsub.f32 %v3631, %v3710
        %v3712 = vand.u32 %v3711, 4294901760
        %v3713 = vsub.f32 %v3711, %v3712
        %v3714 = vand.u32 %v3713, 4294901760
        %3715 = vmatpush1.xpose.msra.mxu0 %v3714
        %3716 = vmatprep.subr.mxu0 0.0
        %3717 = vmatpush1.xpose.msra.mxu0 0.0
        %3718 = vmatprep.subr.mxu0 0.0
        %3719 = vmatpush1.xpose.msra.mxu0 0.0
        %3720 = vmatprep.subr.mxu0 0.0
        %3721 = vmatpush1.xpose.msra.mxu0 0.0
        %3722 = vmatprep.subr.mxu0 0.0
        %3723 = vmatpush1.xpose.msra.mxu0 0.0
        %3724 = vmatprep.subr.mxu0 0.0
        %3725 = vmatpush1.xpose.msra.mxu0 0.0
        %3726 = vmatprep.subr.mxu0 0.0
        %3727 = vmatpush1.xpose.msra.mxu0 0.0
        %3728 = vmatprep.subr.mxu0 0.0
        %3729 = vmatpush1.xpose.msra.mxu0 0.0
        %3730 = vmatprep.subr.mxu0 0.0
        %3731 = vmatpush1.xpose.msra.mxu0 0.0
        %3732 = vmatprep.subr.mxu0 0.0
        %3733 = vmatpush1.xpose.msra.mxu0 0.0
        %3734 = vmatprep.subr.mxu0 0.0
        %3735 = vmatpush1.xpose.msra.mxu0 0.0
        %3736 = vmatprep.subr.mxu0 0.0
        %3737 = vmatpush1.xpose.msra.mxu0 0.0
        %3738 = vmatprep.subr.mxu0 0.0
        %3739 = vmatpush1.xpose.msra.mxu0 0.0
        %3740 = vmatprep.subr.mxu0 0.0
        %3741 = vmatpush1.xpose.msra.mxu0 0.0
        %3742 = vmatprep.subr.mxu0 0.0
        %3743 = vmatpush1.xpose.msra.mxu0 0.0
        %3744 = vmatprep.subr.mxu0 0.0
        %3745 = vmatpush1.xpose.msra.mxu0 0.0
        %3746 = vmatprep.subr.mxu0 0.0
        %3747 = vmatpush1.xpose.msra.mxu0 0.0
        %3748 = vmatprep.subr.mxu0 0.0
        %3749 = vmatpush1.xpose.msra.mxu0 0.0
        %3750 = vmatprep.subr.mxu0 0.0
        %3751 = vmatpush1.xpose.msra.mxu0 0.0
        %3752 = vmatprep.subr.mxu0 0.0
        %3753 = vmatpush1.xpose.msra.mxu0 0.0
        %3754 = vmatprep.subr.mxu0 0.0
        %3755 = vmatpush1.xpose.msra.mxu0 0.0
        %3756 = vmatprep.subr.mxu0 0.0
        %3757 = vmatpush1.xpose.msra.mxu0 0.0
        %3758 = vmatprep.subr.mxu0 0.0
        %3759 = vmatpush1.xpose.msra.mxu0 0.0
        %3760 = vmatprep.subr.mxu0 0.0
        %3761 = vmatpush1.xpose.msra.mxu0 0.0
        %3762 = vmatprep.subr.mxu0 0.0
        %3763 = vmatpush1.xpose.msra.mxu0 0.0
        %3764 = vmatprep.subr.mxu0 0.0
        %3765 = vmatpush1.xpose.msra.mxu0 0.0
        %3766 = vmatprep.subr.mxu0 0.0
        %3767 = vmatpush1.xpose.msra.mxu0 0.0
        %3768 = vmatprep.subr.mxu0 0.0
        %3769 = vmatpush1.xpose.msra.mxu0 0.0
        %3770 = vmatprep.subr.mxu0 0.0
        %3771 = vmatpush1.xpose.msra.mxu0 0.0
        %3772 = vmatprep.subr.mxu0 0.0
        %3773 = vmatpush1.xpose.msra.mxu0 0.0
        %3774 = vmatprep.subr.mxu0 0.0
        %3775 = vmatpush1.xpose.msra.mxu0 0.0
        %3776 = vmatprep.subr.mxu0 0.0
        %3777 = vmatpush1.xpose.msra.mxu0 0.0
        %3778 = vmatprep.mubr.f32.mxu0 0.0
        %v3779 = vand.u32 %v3629, 4294901760
        %3780 = vmatmul.mubr.f32.gmra.mrb[0].mxu0 %v3779
        %v3781 = vpop.f32.mrb[0].mxu0
        %v3782 = vadd.f32 %v3706, %v3781
        %v3783 = vpop.f32.mrb[0].mxu0
        %3784 = vdwg.mxu0
        %3785 = vmatprep.subr.mxu0 0.0
        %v3786 = vand.u32 %v3631, 4294901760
        %v3787 = vsub.f32 %v3631, %v3786
        %3788 = vmatpush1.xpose.msra.mxu0 %v3787
        %3789 = vmatprep.subr.mxu0 0.0
        %3790 = vmatpush1.xpose.msra.mxu0 0.0
        %3791 = vmatprep.subr.mxu0 0.0
        %3792 = vmatpush1.xpose.msra.mxu0 0.0
        %3793 = vmatprep.subr.mxu0 0.0
        %3794 = vmatpush1.xpose.msra.mxu0 0.0
        %3795 = vmatprep.subr.mxu0 0.0
        %3796 = vmatpush1.xpose.msra.mxu0 0.0
        %3797 = vmatprep.subr.mxu0 0.0
        %3798 = vmatpush1.xpose.msra.mxu0 0.0
        %3799 = vmatprep.subr.mxu0 0.0
        %3800 = vmatpush1.xpose.msra.mxu0 0.0
        %3801 = vmatprep.subr.mxu0 0.0
        %3802 = vmatpush1.xpose.msra.mxu0 0.0
        %3803 = vmatprep.subr.mxu0 0.0
        %3804 = vmatpush1.xpose.msra.mxu0 0.0
        %3805 = vmatprep.subr.mxu0 0.0
        %3806 = vmatpush1.xpose.msra.mxu0 0.0
        %3807 = vmatprep.subr.mxu0 0.0
        %3808 = vmatpush1.xpose.msra.mxu0 0.0
        %3809 = vmatprep.subr.mxu0 0.0
        %3810 = vmatpush1.xpose.msra.mxu0 0.0
        %3811 = vmatprep.subr.mxu0 0.0
        %3812 = vmatpush1.xpose.msra.mxu0 0.0
        %3813 = vmatprep.subr.mxu0 0.0
        %3814 = vmatpush1.xpose.msra.mxu0 0.0
        %3815 = vmatprep.subr.mxu0 0.0
        %3816 = vmatpush1.xpose.msra.mxu0 0.0
        %3817 = vmatprep.subr.mxu0 0.0
        %3818 = vmatpush1.xpose.msra.mxu0 0.0
        %3819 = vmatprep.subr.mxu0 0.0
        %3820 = vmatpush1.xpose.msra.mxu0 0.0
        %3821 = vmatprep.subr.mxu0 0.0
        %3822 = vmatpush1.xpose.msra.mxu0 0.0
        %3823 = vmatprep.subr.mxu0 0.0
        %3824 = vmatpush1.xpose.msra.mxu0 0.0
        %3825 = vmatprep.subr.mxu0 0.0
        %3826 = vmatpush1.xpose.msra.mxu0 0.0
        %3827 = vmatprep.subr.mxu0 0.0
        %3828 = vmatpush1.xpose.msra.mxu0 0.0
        %3829 = vmatprep.subr.mxu0 0.0
        %3830 = vmatpush1.xpose.msra.mxu0 0.0
        %3831 = vmatprep.subr.mxu0 0.0
        %3832 = vmatpush1.xpose.msra.mxu0 0.0
        %3833 = vmatprep.subr.mxu0 0.0
        %3834 = vmatpush1.xpose.msra.mxu0 0.0
        %3835 = vmatprep.subr.mxu0 0.0
        %3836 = vmatpush1.xpose.msra.mxu0 0.0
        %3837 = vmatprep.subr.mxu0 0.0
        %3838 = vmatpush1.xpose.msra.mxu0 0.0
        %3839 = vmatprep.subr.mxu0 0.0
        %3840 = vmatpush1.xpose.msra.mxu0 0.0
        %3841 = vmatprep.subr.mxu0 0.0
        %3842 = vmatpush1.xpose.msra.mxu0 0.0
        %3843 = vmatprep.subr.mxu0 0.0
        %3844 = vmatpush1.xpose.msra.mxu0 0.0
        %3845 = vmatprep.subr.mxu0 0.0
        %3846 = vmatpush1.xpose.msra.mxu0 0.0
        %3847 = vmatprep.subr.mxu0 0.0
        %3848 = vmatpush1.xpose.msra.mxu0 0.0
        %3849 = vmatprep.subr.mxu0 0.0
        %3850 = vmatpush1.xpose.msra.mxu0 0.0
        %3851 = vmatprep.mubr.f32.mxu0 0.0
        %v3852 = vand.u32 %v3629, 4294901760
        %v3853 = vsub.f32 %v3629, %v3852
        %3854 = vmatmul.mubr.f32.gmra.mrb[0].mxu0 %v3853
        %v3855 = vpop.f32.mrb[0].mxu0
        %v3856 = vadd.f32 %v3782, %v3855
        %v3857 = vpop.f32.mrb[0].mxu0
        %3858 = vdwg.mxu0
        %3859 = vmatprep.subr.mxu0 0.0
        %v3860 = vand.u32 %v3631, 4294901760
        %3861 = vmatpush1.xpose.msra.mxu0 %v3860
        %3862 = vmatprep.subr.mxu0 0.0
        %3863 = vmatpush1.xpose.msra.mxu0 0.0
        %3864 = vmatprep.subr.mxu0 0.0
        %3865 = vmatpush1.xpose.msra.mxu0 0.0
        %3866 = vmatprep.subr.mxu0 0.0
        %3867 = vmatpush1.xpose.msra.mxu0 0.0
        %3868 = vmatprep.subr.mxu0 0.0
        %3869 = vmatpush1.xpose.msra.mxu0 0.0
        %3870 = vmatprep.subr.mxu0 0.0
        %3871 = vmatpush1.xpose.msra.mxu0 0.0
        %3872 = vmatprep.subr.mxu0 0.0
        %3873 = vmatpush1.xpose.msra.mxu0 0.0
        %3874 = vmatprep.subr.mxu0 0.0
        %3875 = vmatpush1.xpose.msra.mxu0 0.0
        %3876 = vmatprep.subr.mxu0 0.0
        %3877 = vmatpush1.xpose.msra.mxu0 0.0
        %3878 = vmatprep.subr.mxu0 0.0
        %3879 = vmatpush1.xpose.msra.mxu0 0.0
        %3880 = vmatprep.subr.mxu0 0.0
        %3881 = vmatpush1.xpose.msra.mxu0 0.0
        %3882 = vmatprep.subr.mxu0 0.0
        %3883 = vmatpush1.xpose.msra.mxu0 0.0
        %3884 = vmatprep.subr.mxu0 0.0
        %3885 = vmatpush1.xpose.msra.mxu0 0.0
        %3886 = vmatprep.subr.mxu0 0.0
        %3887 = vmatpush1.xpose.msra.mxu0 0.0
        %3888 = vmatprep.subr.mxu0 0.0
        %3889 = vmatpush1.xpose.msra.mxu0 0.0
        %3890 = vmatprep.subr.mxu0 0.0
        %3891 = vmatpush1.xpose.msra.mxu0 0.0
        %3892 = vmatprep.subr.mxu0 0.0
        %3893 = vmatpush1.xpose.msra.mxu0 0.0
        %3894 = vmatprep.subr.mxu0 0.0
        %3895 = vmatpush1.xpose.msra.mxu0 0.0
        %3896 = vmatprep.subr.mxu0 0.0
        %3897 = vmatpush1.xpose.msra.mxu0 0.0
        %3898 = vmatprep.subr.mxu0 0.0
        %3899 = vmatpush1.xpose.msra.mxu0 0.0
        %3900 = vmatprep.subr.mxu0 0.0
        %3901 = vmatpush1.xpose.msra.mxu0 0.0
        %3902 = vmatprep.subr.mxu0 0.0
        %3903 = vmatpush1.xpose.msra.mxu0 0.0
        %3904 = vmatprep.subr.mxu0 0.0
        %3905 = vmatpush1.xpose.msra.mxu0 0.0
        %3906 = vmatprep.subr.mxu0 0.0
        %3907 = vmatpush1.xpose.msra.mxu0 0.0
        %3908 = vmatprep.subr.mxu0 0.0
        %3909 = vmatpush1.xpose.msra.mxu0 0.0
        %3910 = vmatprep.subr.mxu0 0.0
        %3911 = vmatpush1.xpose.msra.mxu0 0.0
        %3912 = vmatprep.subr.mxu0 0.0
        %3913 = vmatpush1.xpose.msra.mxu0 0.0
        %3914 = vmatprep.subr.mxu0 0.0
        %3915 = vmatpush1.xpose.msra.mxu0 0.0
        %3916 = vmatprep.subr.mxu0 0.0
        %3917 = vmatpush1.xpose.msra.mxu0 0.0
        %3918 = vmatprep.subr.mxu0 0.0
        %3919 = vmatpush1.xpose.msra.mxu0 0.0
        %3920 = vmatprep.subr.mxu0 0.0
        %3921 = vmatpush1.xpose.msra.mxu0 0.0
        %3922 = vmatprep.subr.mxu0 0.0
        %3923 = vmatpush1.xpose.msra.mxu0 0.0
        %3924 = vmatprep.mubr.f32.mxu0 0.0
        %v3925 = vand.u32 %v3629, 4294901760
        %v3926 = vsub.f32 %v3629, %v3925
        %v3927 = vand.u32 %v3926, 4294901760
        %3928 = vmatmul.mubr.f32.gmra.mrb[0].mxu0 %v3927
        %v3929 = vpop.f32.mrb[0].mxu0
        %v3930 = vadd.f32 %v3856, %v3929
        %v3931 = vpop.f32.mrb[0].mxu0
        %3932 = vdwg.mxu0
        %3933 = vmatprep.subr.mxu0 0.0
        %v3934 = vand.u32 %v3631, 4294901760
        %v3935 = vsub.f32 %v3631, %v3934
        %v3936 = vand.u32 %v3935, 4294901760
        %3937 = vmatpush1.xpose.msra.mxu0 %v3936
        %3938 = vmatprep.subr.mxu0 0.0
        %3939 = vmatpush1.xpose.msra.mxu0 0.0
        %3940 = vmatprep.subr.mxu0 0.0
        %3941 = vmatpush1.xpose.msra.mxu0 0.0
        %3942 = vmatprep.subr.mxu0 0.0
        %3943 = vmatpush1.xpose.msra.mxu0 0.0
        %3944 = vmatprep.subr.mxu0 0.0
        %3945 = vmatpush1.xpose.msra.mxu0 0.0
        %3946 = vmatprep.subr.mxu0 0.0
        %3947 = vmatpush1.xpose.msra.mxu0 0.0
        %3948 = vmatprep.subr.mxu0 0.0
        %3949 = vmatpush1.xpose.msra.mxu0 0.0
        %3950 = vmatprep.subr.mxu0 0.0
        %3951 = vmatpush1.xpose.msra.mxu0 0.0
        %3952 = vmatprep.subr.mxu0 0.0
        %3953 = vmatpush1.xpose.msra.mxu0 0.0
        %3954 = vmatprep.subr.mxu0 0.0
        %3955 = vmatpush1.xpose.msra.mxu0 0.0
        %3956 = vmatprep.subr.mxu0 0.0
        %3957 = vmatpush1.xpose.msra.mxu0 0.0
        %3958 = vmatprep.subr.mxu0 0.0
        %3959 = vmatpush1.xpose.msra.mxu0 0.0
        %3960 = vmatprep.subr.mxu0 0.0
        %3961 = vmatpush1.xpose.msra.mxu0 0.0
        %3962 = vmatprep.subr.mxu0 0.0
        %3963 = vmatpush1.xpose.msra.mxu0 0.0
        %3964 = vmatprep.subr.mxu0 0.0
        %3965 = vmatpush1.xpose.msra.mxu0 0.0
        %3966 = vmatprep.subr.mxu0 0.0
        %3967 = vmatpush1.xpose.msra.mxu0 0.0
        %3968 = vmatprep.subr.mxu0 0.0
        %3969 = vmatpush1.xpose.msra.mxu0 0.0
        %3970 = vmatprep.subr.mxu0 0.0
        %3971 = vmatpush1.xpose.msra.mxu0 0.0
        %3972 = vmatprep.subr.mxu0 0.0
        %3973 = vmatpush1.xpose.msra.mxu0 0.0
        %3974 = vmatprep.subr.mxu0 0.0
        %3975 = vmatpush1.xpose.msra.mxu0 0.0
        %3976 = vmatprep.subr.mxu0 0.0
        %3977 = vmatpush1.xpose.msra.mxu0 0.0
        %3978 = vmatprep.subr.mxu0 0.0
        %3979 = vmatpush1.xpose.msra.mxu0 0.0
        %3980 = vmatprep.subr.mxu0 0.0
        %3981 = vmatpush1.xpose.msra.mxu0 0.0
        %3982 = vmatprep.subr.mxu0 0.0
        %3983 = vmatpush1.xpose.msra.mxu0 0.0
        %3984 = vmatprep.subr.mxu0 0.0
        %3985 = vmatpush1.xpose.msra.mxu0 0.0
        %3986 = vmatprep.subr.mxu0 0.0
        %3987 = vmatpush1.xpose.msra.mxu0 0.0
        %3988 = vmatprep.subr.mxu0 0.0
        %3989 = vmatpush1.xpose.msra.mxu0 0.0
        %3990 = vmatprep.subr.mxu0 0.0
        %3991 = vmatpush1.xpose.msra.mxu0 0.0
        %3992 = vmatprep.subr.mxu0 0.0
        %3993 = vmatpush1.xpose.msra.mxu0 0.0
        %3994 = vmatprep.subr.mxu0 0.0
        %3995 = vmatpush1.xpose.msra.mxu0 0.0
        %3996 = vmatprep.subr.mxu0 0.0
        %3997 = vmatpush1.xpose.msra.mxu0 0.0
        %3998 = vmatprep.subr.mxu0 0.0
        %3999 = vmatpush1.xpose.msra.mxu0 0.0
        %4000 = vmatprep.mubr.f32.mxu0 0.0
        %v4001 = vand.u32 %v3629, 4294901760
        %4002 = vmatmul.mubr.f32.gmra.mrb[0].mxu0 %v4001
        %v4003 = vpop.f32.mrb[0].mxu0
        %v4004 = vadd.f32 %v3930, %v4003
        %v4005 = vpop.f32.mrb[0].mxu0
        %4006 = vdwg.mxu0
        %4007 = vmatprep.subr.mxu0 0.0
        %v4008 = vand.u32 %v3631, 4294901760
        %4009 = vmatpush1.xpose.msra.mxu0 %v4008
        %4010 = vmatprep.subr.mxu0 0.0
        %4011 = vmatpush1.xpose.msra.mxu0 0.0
        %4012 = vmatprep.subr.mxu0 0.0
        %4013 = vmatpush1.xpose.msra.mxu0 0.0
        %4014 = vmatprep.subr.mxu0 0.0
        %4015 = vmatpush1.xpose.msra.mxu0 0.0
        %4016 = vmatprep.subr.mxu0 0.0
        %4017 = vmatpush1.xpose.msra.mxu0 0.0
        %4018 = vmatprep.subr.mxu0 0.0
        %4019 = vmatpush1.xpose.msra.mxu0 0.0
        %4020 = vmatprep.subr.mxu0 0.0
        %4021 = vmatpush1.xpose.msra.mxu0 0.0
        %4022 = vmatprep.subr.mxu0 0.0
        %4023 = vmatpush1.xpose.msra.mxu0 0.0
        %4024 = vmatprep.subr.mxu0 0.0
        %4025 = vmatpush1.xpose.msra.mxu0 0.0
        %4026 = vmatprep.subr.mxu0 0.0
        %4027 = vmatpush1.xpose.msra.mxu0 0.0
        %4028 = vmatprep.subr.mxu0 0.0
        %4029 = vmatpush1.xpose.msra.mxu0 0.0
        %4030 = vmatprep.subr.mxu0 0.0
        %4031 = vmatpush1.xpose.msra.mxu0 0.0
        %4032 = vmatprep.subr.mxu0 0.0
        %4033 = vmatpush1.xpose.msra.mxu0 0.0
        %4034 = vmatprep.subr.mxu0 0.0
        %4035 = vmatpush1.xpose.msra.mxu0 0.0
        %4036 = vmatprep.subr.mxu0 0.0
        %4037 = vmatpush1.xpose.msra.mxu0 0.0
        %4038 = vmatprep.subr.mxu0 0.0
        %4039 = vmatpush1.xpose.msra.mxu0 0.0
        %4040 = vmatprep.subr.mxu0 0.0
        %4041 = vmatpush1.xpose.msra.mxu0 0.0
        %4042 = vmatprep.subr.mxu0 0.0
        %4043 = vmatpush1.xpose.msra.mxu0 0.0
        %4044 = vmatprep.subr.mxu0 0.0
        %4045 = vmatpush1.xpose.msra.mxu0 0.0
        %4046 = vmatprep.subr.mxu0 0.0
        %4047 = vmatpush1.xpose.msra.mxu0 0.0
        %4048 = vmatprep.subr.mxu0 0.0
        %4049 = vmatpush1.xpose.msra.mxu0 0.0
        %4050 = vmatprep.subr.mxu0 0.0
        %4051 = vmatpush1.xpose.msra.mxu0 0.0
        %4052 = vmatprep.subr.mxu0 0.0
        %4053 = vmatpush1.xpose.msra.mxu0 0.0
        %4054 = vmatprep.subr.mxu0 0.0
        %4055 = vmatpush1.xpose.msra.mxu0 0.0
        %4056 = vmatprep.subr.mxu0 0.0
        %4057 = vmatpush1.xpose.msra.mxu0 0.0
        %4058 = vmatprep.subr.mxu0 0.0
        %4059 = vmatpush1.xpose.msra.mxu0 0.0
        %4060 = vmatprep.subr.mxu0 0.0
        %4061 = vmatpush1.xpose.msra.mxu0 0.0
        %4062 = vmatprep.subr.mxu0 0.0
        %4063 = vmatpush1.xpose.msra.mxu0 0.0
        %4064 = vmatprep.subr.mxu0 0.0
        %4065 = vmatpush1.xpose.msra.mxu0 0.0
        %4066 = vmatprep.subr.mxu0 0.0
        %4067 = vmatpush1.xpose.msra.mxu0 0.0
        %4068 = vmatprep.subr.mxu0 0.0
        %4069 = vmatpush1.xpose.msra.mxu0 0.0
        %4070 = vmatprep.subr.mxu0 0.0
        %4071 = vmatpush1.xpose.msra.mxu0 0.0
        %4072 = vmatprep.mubr.f32.mxu0 0.0
        %v4073 = vand.u32 %v3629, 4294901760
        %4074 = vmatmul.mubr.f32.gmra.mrb[0].mxu0 %v4073
        %v4075 = vpop.f32.mrb[0].mxu0
        %v4076 = vadd.f32 %v4004, %v4075
        %v4077 = vpop.f32.mrb[0].mxu0
        %4078 = vdwg.mxu0
        %v4079 = vsel %vm2240, %v3622, -1e+30
        %v4080 = vsel %vm2240, %v4076, -1e+30
        %v4081 = vsel %vm1335, %v4079, -inf
        %4082 = vmax.xlane.f32.xlu0 %v4081
        %v4083 = vpop.xlane.xlu0 %4082
        %v4084 = vsel %vm1335, %v4080, -inf
        %4085 = vmax.xlane.f32.xlu0 %v4084
        %v4086 = vpop.xlane.xlu0 %4085
        %v4087 = vsub.f32 %v4079, %v4083
        %v4088 = vsub.f32 %v4080, %v4086
        %v4089 = vmul.f32 %v4087, 1.442695
        %v4090 = vpow.pop %v4089
        %v4091 = vmul.f32 %v4088, 1.442695
        %v4092 = vpow.pop %v4091
        %v4093 = vsel %vm1335, %v4090, 0.0
        %4094 = vadd.xlane.f32.xlu0 %v4093
        %v4095 = vpop.xlane.xlu0 %4094
        %v4096 = vsel %vm1335, %v4092, 0.0
        %4097 = vadd.xlane.f32.xlu0 %v4096
        %v4098 = vpop.xlane.xlu0 %4097
        %v4099 = vrcp.pop %v4095
        %v4100 = vrcp.pop %v4098
        %v4101 = vmul.f32 %v4090, %v4099
        %v4102 = vmul.f32 %v4092, %v4100
        %4103 = vrot.lane.b32.xlu0 %v1318, 56
        %v4104 = vpop.permute.xlu0 %4103
        %v4107 = vsel %vm1335, %v4101, 0
        %4109 = vmatprep.subr.mxu0 0.0
        %v4110 = vand.u32 %v4104, 4294901760
        %4111 = vmatpush1.msra.mxu0 %v4110
        %4112 = vmatprep.subr.mxu0 0.0
        %4113 = vmatpush1.msra.mxu0 0.0
        %4114 = vmatprep.subr.mxu0 0.0
        %4115 = vmatpush1.msra.mxu0 0.0
        %4116 = vmatprep.subr.mxu0 0.0
        %4117 = vmatpush1.msra.mxu0 0.0
        %4118 = vmatprep.subr.mxu0 0.0
        %4119 = vmatpush1.msra.mxu0 0.0
        %4120 = vmatprep.subr.mxu0 0.0
        %4121 = vmatpush1.msra.mxu0 0.0
        %4122 = vmatprep.subr.mxu0 0.0
        %4123 = vmatpush1.msra.mxu0 0.0
        %4124 = vmatprep.subr.mxu0 0.0
        %4125 = vmatpush1.msra.mxu0 0.0
        %4126 = vmatprep.subr.mxu0 0.0
        %4127 = vmatpush1.msra.mxu0 0.0
        %4128 = vmatprep.subr.mxu0 0.0
        %4129 = vmatpush1.msra.mxu0 0.0
        %4130 = vmatprep.subr.mxu0 0.0
        %4131 = vmatpush1.msra.mxu0 0.0
        %4132 = vmatprep.subr.mxu0 0.0
        %4133 = vmatpush1.msra.mxu0 0.0
        %4134 = vmatprep.subr.mxu0 0.0
        %4135 = vmatpush1.msra.mxu0 0.0
        %4136 = vmatprep.subr.mxu0 0.0
        %4137 = vmatpush1.msra.mxu0 0.0
        %4138 = vmatprep.subr.mxu0 0.0
        %4139 = vmatpush1.msra.mxu0 0.0
        %4140 = vmatprep.subr.mxu0 0.0
        %4141 = vmatpush1.msra.mxu0 0.0
        %4142 = vmatprep.subr.mxu0 0.0
        %4143 = vmatpush1.msra.mxu0 0.0
        %4144 = vmatprep.subr.mxu0 0.0
        %4145 = vmatpush1.msra.mxu0 0.0
        %4146 = vmatprep.subr.mxu0 0.0
        %4147 = vmatpush1.msra.mxu0 0.0
        %4148 = vmatprep.subr.mxu0 0.0
        %4149 = vmatpush1.msra.mxu0 0.0
        %4150 = vmatprep.subr.mxu0 0.0
        %4151 = vmatpush1.msra.mxu0 0.0
        %4152 = vmatprep.subr.mxu0 0.0
        %4153 = vmatpush1.msra.mxu0 0.0
        %4154 = vmatprep.subr.mxu0 0.0
        %4155 = vmatpush1.msra.mxu0 0.0
        %4156 = vmatprep.subr.mxu0 0.0
        %4157 = vmatpush1.msra.mxu0 0.0
        %4158 = vmatprep.subr.mxu0 0.0
        %4159 = vmatpush1.msra.mxu0 0.0
        %4160 = vmatprep.subr.mxu0 0.0
        %4161 = vmatpush1.msra.mxu0 0.0
        %4162 = vmatprep.subr.mxu0 0.0
        %4163 = vmatpush1.msra.mxu0 0.0
        %4164 = vmatprep.subr.mxu0 0.0
        %4165 = vmatpush1.msra.mxu0 0.0
        %4166 = vmatprep.subr.mxu0 0.0
        %4167 = vmatpush1.msra.mxu0 0.0
        %4168 = vmatprep.subr.mxu0 0.0
        %4169 = vmatpush1.msra.mxu0 0.0
        %4170 = vmatprep.subr.mxu0 0.0
        %4171 = vmatpush1.msra.mxu0 0.0
        %4172 = vmatprep.subr.mxu0 0.0
        %4173 = vmatpush1.msra.mxu0 0.0
        %4174 = vmatprep.mubr.f32.mxu0 0.0
        %v4175 = vand.u32 %v4107, 4294901760
        %v4176 = vsub.f32 %v4107, %v4175
        %v4177 = vand.u32 %v4176, 4294901760
        %v4178 = vsub.f32 %v4176, %v4177
        %v4179 = vand.u32 %v4178, 4294901760
        %4180 = vmatmul.mubr.f32.gmra.mrb[0].mxu0 %v4179
        %v4181 = vpop.f32.mrb[0].mxu0
        %v4182 = vadd.f32 0.0, %v4181
        %v4183 = vpop.f32.mrb[0].mxu0
        %4184 = vdwg.mxu0
        %4185 = vmatprep.subr.mxu0 0.0
        %v4186 = vand.u32 %v4104, 4294901760
        %v4187 = vsub.f32 %v4104, %v4186
        %v4188 = vand.u32 %v4187, 4294901760
        %v4189 = vsub.f32 %v4187, %v4188
        %v4190 = vand.u32 %v4189, 4294901760
        %4191 = vmatpush1.msra.mxu0 %v4190
        %4192 = vmatprep.subr.mxu0 0.0
        %4193 = vmatpush1.msra.mxu0 0.0
        %4194 = vmatprep.subr.mxu0 0.0
        %4195 = vmatpush1.msra.mxu0 0.0
        %4196 = vmatprep.subr.mxu0 0.0
        %4197 = vmatpush1.msra.mxu0 0.0
        %4198 = vmatprep.subr.mxu0 0.0
        %4199 = vmatpush1.msra.mxu0 0.0
        %4200 = vmatprep.subr.mxu0 0.0
        %4201 = vmatpush1.msra.mxu0 0.0
        %4202 = vmatprep.subr.mxu0 0.0
        %4203 = vmatpush1.msra.mxu0 0.0
        %4204 = vmatprep.subr.mxu0 0.0
        %4205 = vmatpush1.msra.mxu0 0.0
        %4206 = vmatprep.subr.mxu0 0.0
        %4207 = vmatpush1.msra.mxu0 0.0
        %4208 = vmatprep.subr.mxu0 0.0
        %4209 = vmatpush1.msra.mxu0 0.0
        %4210 = vmatprep.subr.mxu0 0.0
        %4211 = vmatpush1.msra.mxu0 0.0
        %4212 = vmatprep.subr.mxu0 0.0
        %4213 = vmatpush1.msra.mxu0 0.0
        %4214 = vmatprep.subr.mxu0 0.0
        %4215 = vmatpush1.msra.mxu0 0.0
        %4216 = vmatprep.subr.mxu0 0.0
        %4217 = vmatpush1.msra.mxu0 0.0
        %4218 = vmatprep.subr.mxu0 0.0
        %4219 = vmatpush1.msra.mxu0 0.0
        %4220 = vmatprep.subr.mxu0 0.0
        %4221 = vmatpush1.msra.mxu0 0.0
        %4222 = vmatprep.subr.mxu0 0.0
        %4223 = vmatpush1.msra.mxu0 0.0
        %4224 = vmatprep.subr.mxu0 0.0
        %4225 = vmatpush1.msra.mxu0 0.0
        %4226 = vmatprep.subr.mxu0 0.0
        %4227 = vmatpush1.msra.mxu0 0.0
        %4228 = vmatprep.subr.mxu0 0.0
        %4229 = vmatpush1.msra.mxu0 0.0
        %4230 = vmatprep.subr.mxu0 0.0
        %4231 = vmatpush1.msra.mxu0 0.0
        %4232 = vmatprep.subr.mxu0 0.0
        %4233 = vmatpush1.msra.mxu0 0.0
        %4234 = vmatprep.subr.mxu0 0.0
        %4235 = vmatpush1.msra.mxu0 0.0
        %4236 = vmatprep.subr.mxu0 0.0
        %4237 = vmatpush1.msra.mxu0 0.0
        %4238 = vmatprep.subr.mxu0 0.0
        %4239 = vmatpush1.msra.mxu0 0.0
        %4240 = vmatprep.subr.mxu0 0.0
        %4241 = vmatpush1.msra.mxu0 0.0
        %4242 = vmatprep.subr.mxu0 0.0
        %4243 = vmatpush1.msra.mxu0 0.0
        %4244 = vmatprep.subr.mxu0 0.0
        %4245 = vmatpush1.msra.mxu0 0.0
        %4246 = vmatprep.subr.mxu0 0.0
        %4247 = vmatpush1.msra.mxu0 0.0
        %4248 = vmatprep.subr.mxu0 0.0
        %4249 = vmatpush1.msra.mxu0 0.0
        %4250 = vmatprep.subr.mxu0 0.0
        %4251 = vmatpush1.msra.mxu0 0.0
        %4252 = vmatprep.subr.mxu0 0.0
        %4253 = vmatpush1.msra.mxu0 0.0
        %4254 = vmatprep.mubr.f32.mxu0 0.0
        %v4255 = vand.u32 %v4107, 4294901760
        %4256 = vmatmul.mubr.f32.gmra.mrb[0].mxu0 %v4255
        %v4257 = vpop.f32.mrb[0].mxu0
        %v4258 = vadd.f32 %v4182, %v4257
        %v4259 = vpop.f32.mrb[0].mxu0
        %4260 = vdwg.mxu0
        %4261 = vmatprep.subr.mxu0 0.0
        %v4262 = vand.u32 %v4104, 4294901760
        %v4263 = vsub.f32 %v4104, %v4262
        %4264 = vmatpush1.msra.mxu0 %v4263
        %4265 = vmatprep.subr.mxu0 0.0
        %4266 = vmatpush1.msra.mxu0 0.0
        %4267 = vmatprep.subr.mxu0 0.0
        %4268 = vmatpush1.msra.mxu0 0.0
        %4269 = vmatprep.subr.mxu0 0.0
        %4270 = vmatpush1.msra.mxu0 0.0
        %4271 = vmatprep.subr.mxu0 0.0
        %4272 = vmatpush1.msra.mxu0 0.0
        %4273 = vmatprep.subr.mxu0 0.0
        %4274 = vmatpush1.msra.mxu0 0.0
        %4275 = vmatprep.subr.mxu0 0.0
        %4276 = vmatpush1.msra.mxu0 0.0
        %4277 = vmatprep.subr.mxu0 0.0
        %4278 = vmatpush1.msra.mxu0 0.0
        %4279 = vmatprep.subr.mxu0 0.0
        %4280 = vmatpush1.msra.mxu0 0.0
        %4281 = vmatprep.subr.mxu0 0.0
        %4282 = vmatpush1.msra.mxu0 0.0
        %4283 = vmatprep.subr.mxu0 0.0
        %4284 = vmatpush1.msra.mxu0 0.0
        %4285 = vmatprep.subr.mxu0 0.0
        %4286 = vmatpush1.msra.mxu0 0.0
        %4287 = vmatprep.subr.mxu0 0.0
        %4288 = vmatpush1.msra.mxu0 0.0
        %4289 = vmatprep.subr.mxu0 0.0
        %4290 = vmatpush1.msra.mxu0 0.0
        %4291 = vmatprep.subr.mxu0 0.0
        %4292 = vmatpush1.msra.mxu0 0.0
        %4293 = vmatprep.subr.mxu0 0.0
        %4294 = vmatpush1.msra.mxu0 0.0
        %4295 = vmatprep.subr.mxu0 0.0
        %4296 = vmatpush1.msra.mxu0 0.0
        %4297 = vmatprep.subr.mxu0 0.0
        %4298 = vmatpush1.msra.mxu0 0.0
        %4299 = vmatprep.subr.mxu0 0.0
        %4300 = vmatpush1.msra.mxu0 0.0
        %4301 = vmatprep.subr.mxu0 0.0
        %4302 = vmatpush1.msra.mxu0 0.0
        %4303 = vmatprep.subr.mxu0 0.0
        %4304 = vmatpush1.msra.mxu0 0.0
        %4305 = vmatprep.subr.mxu0 0.0
        %4306 = vmatpush1.msra.mxu0 0.0
        %4307 = vmatprep.subr.mxu0 0.0
        %4308 = vmatpush1.msra.mxu0 0.0
        %4309 = vmatprep.subr.mxu0 0.0
        %4310 = vmatpush1.msra.mxu0 0.0
        %4311 = vmatprep.subr.mxu0 0.0
        %4312 = vmatpush1.msra.mxu0 0.0
        %4313 = vmatprep.subr.mxu0 0.0
        %4314 = vmatpush1.msra.mxu0 0.0
        %4315 = vmatprep.subr.mxu0 0.0
        %4316 = vmatpush1.msra.mxu0 0.0
        %4317 = vmatprep.subr.mxu0 0.0
        %4318 = vmatpush1.msra.mxu0 0.0
        %4319 = vmatprep.subr.mxu0 0.0
        %4320 = vmatpush1.msra.mxu0 0.0
        %4321 = vmatprep.subr.mxu0 0.0
        %4322 = vmatpush1.msra.mxu0 0.0
        %4323 = vmatprep.subr.mxu0 0.0
        %4324 = vmatpush1.msra.mxu0 0.0
        %4325 = vmatprep.subr.mxu0 0.0
        %4326 = vmatpush1.msra.mxu0 0.0
        %4327 = vmatprep.mubr.f32.mxu0 0.0
        %v4328 = vand.u32 %v4107, 4294901760
        %v4329 = vsub.f32 %v4107, %v4328
        %4330 = vmatmul.mubr.f32.gmra.mrb[0].mxu0 %v4329
        %v4331 = vpop.f32.mrb[0].mxu0
        %v4332 = vadd.f32 %v4258, %v4331
        %v4333 = vpop.f32.mrb[0].mxu0
        %4334 = vdwg.mxu0
        %4335 = vmatprep.subr.mxu0 0.0
        %v4336 = vand.u32 %v4104, 4294901760
        %4337 = vmatpush1.msra.mxu0 %v4336
        %4338 = vmatprep.subr.mxu0 0.0
        %4339 = vmatpush1.msra.mxu0 0.0
        %4340 = vmatprep.subr.mxu0 0.0
        %4341 = vmatpush1.msra.mxu0 0.0
        %4342 = vmatprep.subr.mxu0 0.0
        %4343 = vmatpush1.msra.mxu0 0.0
        %4344 = vmatprep.subr.mxu0 0.0
        %4345 = vmatpush1.msra.mxu0 0.0
        %4346 = vmatprep.subr.mxu0 0.0
        %4347 = vmatpush1.msra.mxu0 0.0
        %4348 = vmatprep.subr.mxu0 0.0
        %4349 = vmatpush1.msra.mxu0 0.0
        %4350 = vmatprep.subr.mxu0 0.0
        %4351 = vmatpush1.msra.mxu0 0.0
        %4352 = vmatprep.subr.mxu0 0.0
        %4353 = vmatpush1.msra.mxu0 0.0
        %4354 = vmatprep.subr.mxu0 0.0
        %4355 = vmatpush1.msra.mxu0 0.0
        %4356 = vmatprep.subr.mxu0 0.0
        %4357 = vmatpush1.msra.mxu0 0.0
        %4358 = vmatprep.subr.mxu0 0.0
        %4359 = vmatpush1.msra.mxu0 0.0
        %4360 = vmatprep.subr.mxu0 0.0
        %4361 = vmatpush1.msra.mxu0 0.0
        %4362 = vmatprep.subr.mxu0 0.0
        %4363 = vmatpush1.msra.mxu0 0.0
        %4364 = vmatprep.subr.mxu0 0.0
        %4365 = vmatpush1.msra.mxu0 0.0
        %4366 = vmatprep.subr.mxu0 0.0
        %4367 = vmatpush1.msra.mxu0 0.0
        %4368 = vmatprep.subr.mxu0 0.0
        %4369 = vmatpush1.msra.mxu0 0.0
        %4370 = vmatprep.subr.mxu0 0.0
        %4371 = vmatpush1.msra.mxu0 0.0
        %4372 = vmatprep.subr.mxu0 0.0
        %4373 = vmatpush1.msra.mxu0 0.0
        %4374 = vmatprep.subr.mxu0 0.0
        %4375 = vmatpush1.msra.mxu0 0.0
        %4376 = vmatprep.subr.mxu0 0.0
        %4377 = vmatpush1.msra.mxu0 0.0
        %4378 = vmatprep.subr.mxu0 0.0
        %4379 = vmatpush1.msra.mxu0 0.0
        %4380 = vmatprep.subr.mxu0 0.0
        %4381 = vmatpush1.msra.mxu0 0.0
        %4382 = vmatprep.subr.mxu0 0.0
        %4383 = vmatpush1.msra.mxu0 0.0
        %4384 = vmatprep.subr.mxu0 0.0
        %4385 = vmatpush1.msra.mxu0 0.0
        %4386 = vmatprep.subr.mxu0 0.0
        %4387 = vmatpush1.msra.mxu0 0.0
        %4388 = vmatprep.subr.mxu0 0.0
        %4389 = vmatpush1.msra.mxu0 0.0
        %4390 = vmatprep.subr.mxu0 0.0
        %4391 = vmatpush1.msra.mxu0 0.0
        %4392 = vmatprep.subr.mxu0 0.0
        %4393 = vmatpush1.msra.mxu0 0.0
        %4394 = vmatprep.subr.mxu0 0.0
        %4395 = vmatpush1.msra.mxu0 0.0
        %4396 = vmatprep.subr.mxu0 0.0
        %4397 = vmatpush1.msra.mxu0 0.0
        %4398 = vmatprep.subr.mxu0 0.0
        %4399 = vmatpush1.msra.mxu0 0.0
        %4400 = vmatprep.mubr.f32.mxu0 0.0
        %v4401 = vand.u32 %v4107, 4294901760
        %v4402 = vsub.f32 %v4107, %v4401
        %v4403 = vand.u32 %v4402, 4294901760
        %4404 = vmatmul.mubr.f32.gmra.mrb[0].mxu0 %v4403
        %v4405 = vpop.f32.mrb[0].mxu0
        %v4406 = vadd.f32 %v4332, %v4405
        %v4407 = vpop.f32.mrb[0].mxu0
        %4408 = vdwg.mxu0
        %4409 = vmatprep.subr.mxu0 0.0
        %v4410 = vand.u32 %v4104, 4294901760
        %v4411 = vsub.f32 %v4104, %v4410
        %v4412 = vand.u32 %v4411, 4294901760
        %4413 = vmatpush1.msra.mxu0 %v4412
        %4414 = vmatprep.subr.mxu0 0.0
        %4415 = vmatpush1.msra.mxu0 0.0
        %4416 = vmatprep.subr.mxu0 0.0
        %4417 = vmatpush1.msra.mxu0 0.0
        %4418 = vmatprep.subr.mxu0 0.0
        %4419 = vmatpush1.msra.mxu0 0.0
        %4420 = vmatprep.subr.mxu0 0.0
        %4421 = vmatpush1.msra.mxu0 0.0
        %4422 = vmatprep.subr.mxu0 0.0
        %4423 = vmatpush1.msra.mxu0 0.0
        %4424 = vmatprep.subr.mxu0 0.0
        %4425 = vmatpush1.msra.mxu0 0.0
        %4426 = vmatprep.subr.mxu0 0.0
        %4427 = vmatpush1.msra.mxu0 0.0
        %4428 = vmatprep.subr.mxu0 0.0
        %4429 = vmatpush1.msra.mxu0 0.0
        %4430 = vmatprep.subr.mxu0 0.0
        %4431 = vmatpush1.msra.mxu0 0.0
        %4432 = vmatprep.subr.mxu0 0.0
        %4433 = vmatpush1.msra.mxu0 0.0
        %4434 = vmatprep.subr.mxu0 0.0
        %4435 = vmatpush1.msra.mxu0 0.0
        %4436 = vmatprep.subr.mxu0 0.0
        %4437 = vmatpush1.msra.mxu0 0.0
        %4438 = vmatprep.subr.mxu0 0.0
        %4439 = vmatpush1.msra.mxu0 0.0
        %4440 = vmatprep.subr.mxu0 0.0
        %4441 = vmatpush1.msra.mxu0 0.0
        %4442 = vmatprep.subr.mxu0 0.0
        %4443 = vmatpush1.msra.mxu0 0.0
        %4444 = vmatprep.subr.mxu0 0.0
        %4445 = vmatpush1.msra.mxu0 0.0
        %4446 = vmatprep.subr.mxu0 0.0
        %4447 = vmatpush1.msra.mxu0 0.0
        %4448 = vmatprep.subr.mxu0 0.0
        %4449 = vmatpush1.msra.mxu0 0.0
        %4450 = vmatprep.subr.mxu0 0.0
        %4451 = vmatpush1.msra.mxu0 0.0
        %4452 = vmatprep.subr.mxu0 0.0
        %4453 = vmatpush1.msra.mxu0 0.0
        %4454 = vmatprep.subr.mxu0 0.0
        %4455 = vmatpush1.msra.mxu0 0.0
        %4456 = vmatprep.subr.mxu0 0.0
        %4457 = vmatpush1.msra.mxu0 0.0
        %4458 = vmatprep.subr.mxu0 0.0
        %4459 = vmatpush1.msra.mxu0 0.0
        %4460 = vmatprep.subr.mxu0 0.0
        %4461 = vmatpush1.msra.mxu0 0.0
        %4462 = vmatprep.subr.mxu0 0.0
        %4463 = vmatpush1.msra.mxu0 0.0
        %4464 = vmatprep.subr.mxu0 0.0
        %4465 = vmatpush1.msra.mxu0 0.0
        %4466 = vmatprep.subr.mxu0 0.0
        %4467 = vmatpush1.msra.mxu0 0.0
        %4468 = vmatprep.subr.mxu0 0.0
        %4469 = vmatpush1.msra.mxu0 0.0
        %4470 = vmatprep.subr.mxu0 0.0
        %4471 = vmatpush1.msra.mxu0 0.0
        %4472 = vmatprep.subr.mxu0 0.0
        %4473 = vmatpush1.msra.mxu0 0.0
        %4474 = vmatprep.subr.mxu0 0.0
        %4475 = vmatpush1.msra.mxu0 0.0
        %4476 = vmatprep.mubr.f32.mxu0 0.0
        %v4477 = vand.u32 %v4107, 4294901760
        %4478 = vmatmul.mubr.f32.gmra.mrb[0].mxu0 %v4477
        %v4479 = vpop.f32.mrb[0].mxu0
        %v4480 = vadd.f32 %v4406, %v4479
        %v4481 = vpop.f32.mrb[0].mxu0
        %4482 = vdwg.mxu0
        %4483 = vmatprep.subr.mxu0 0.0
        %v4484 = vand.u32 %v4104, 4294901760
        %4485 = vmatpush1.msra.mxu0 %v4484
        %4486 = vmatprep.subr.mxu0 0.0
        %4487 = vmatpush1.msra.mxu0 0.0
        %4488 = vmatprep.subr.mxu0 0.0
        %4489 = vmatpush1.msra.mxu0 0.0
        %4490 = vmatprep.subr.mxu0 0.0
        %4491 = vmatpush1.msra.mxu0 0.0
        %4492 = vmatprep.subr.mxu0 0.0
        %4493 = vmatpush1.msra.mxu0 0.0
        %4494 = vmatprep.subr.mxu0 0.0
        %4495 = vmatpush1.msra.mxu0 0.0
        %4496 = vmatprep.subr.mxu0 0.0
        %4497 = vmatpush1.msra.mxu0 0.0
        %4498 = vmatprep.subr.mxu0 0.0
        %4499 = vmatpush1.msra.mxu0 0.0
        %4500 = vmatprep.subr.mxu0 0.0
        %4501 = vmatpush1.msra.mxu0 0.0
        %4502 = vmatprep.subr.mxu0 0.0
        %4503 = vmatpush1.msra.mxu0 0.0
        %4504 = vmatprep.subr.mxu0 0.0
        %4505 = vmatpush1.msra.mxu0 0.0
        %4506 = vmatprep.subr.mxu0 0.0
        %4507 = vmatpush1.msra.mxu0 0.0
        %4508 = vmatprep.subr.mxu0 0.0
        %4509 = vmatpush1.msra.mxu0 0.0
        %4510 = vmatprep.subr.mxu0 0.0
        %4511 = vmatpush1.msra.mxu0 0.0
        %4512 = vmatprep.subr.mxu0 0.0
        %4513 = vmatpush1.msra.mxu0 0.0
        %4514 = vmatprep.subr.mxu0 0.0
        %4515 = vmatpush1.msra.mxu0 0.0
        %4516 = vmatprep.subr.mxu0 0.0
        %4517 = vmatpush1.msra.mxu0 0.0
        %4518 = vmatprep.subr.mxu0 0.0
        %4519 = vmatpush1.msra.mxu0 0.0
        %4520 = vmatprep.subr.mxu0 0.0
        %4521 = vmatpush1.msra.mxu0 0.0
        %4522 = vmatprep.subr.mxu0 0.0
        %4523 = vmatpush1.msra.mxu0 0.0
        %4524 = vmatprep.subr.mxu0 0.0
        %4525 = vmatpush1.msra.mxu0 0.0
        %4526 = vmatprep.subr.mxu0 0.0
        %4527 = vmatpush1.msra.mxu0 0.0
        %4528 = vmatprep.subr.mxu0 0.0
        %4529 = vmatpush1.msra.mxu0 0.0
        %4530 = vmatprep.subr.mxu0 0.0
        %4531 = vmatpush1.msra.mxu0 0.0
        %4532 = vmatprep.subr.mxu0 0.0
        %4533 = vmatpush1.msra.mxu0 0.0
        %4534 = vmatprep.subr.mxu0 0.0
        %4535 = vmatpush1.msra.mxu0 0.0
        %4536 = vmatprep.subr.mxu0 0.0
        %4537 = vmatpush1.msra.mxu0 0.0
        %4538 = vmatprep.subr.mxu0 0.0
        %4539 = vmatpush1.msra.mxu0 0.0
        %4540 = vmatprep.subr.mxu0 0.0
        %4541 = vmatpush1.msra.mxu0 0.0
        %4542 = vmatprep.subr.mxu0 0.0
        %4543 = vmatpush1.msra.mxu0 0.0
        %4544 = vmatprep.subr.mxu0 0.0
        %4545 = vmatpush1.msra.mxu0 0.0
        %4546 = vmatprep.subr.mxu0 0.0
        %4547 = vmatpush1.msra.mxu0 0.0
        %4548 = vmatprep.mubr.f32.mxu0 0.0
        %v4549 = vand.u32 %v4107, 4294901760
        %4550 = vmatmul.mubr.f32.gmra.mrb[0].mxu0 %v4549
        %v4551 = vpop.f32.mrb[0].mxu0
        %v4552 = vadd.f32 %v4480, %v4551
        %v4553 = vpop.f32.mrb[0].mxu0
        %4554 = vdwg.mxu0
        %4555 = vrot.lane.b32.xlu0 %v1324, 56
        %v4556 = vpop.permute.xlu0 %4555
        %v4559 = vsel %vm1335, %v4102, 0
        %4561 = vmatprep.subr.mxu0 0.0
        %v4562 = vand.u32 %v4556, 4294901760
        %4563 = vmatpush1.msra.mxu0 %v4562
        %4564 = vmatprep.subr.mxu0 0.0
        %4565 = vmatpush1.msra.mxu0 0.0
        %4566 = vmatprep.subr.mxu0 0.0
        %4567 = vmatpush1.msra.mxu0 0.0
        %4568 = vmatprep.subr.mxu0 0.0
        %4569 = vmatpush1.msra.mxu0 0.0
        %4570 = vmatprep.subr.mxu0 0.0
        %4571 = vmatpush1.msra.mxu0 0.0
        %4572 = vmatprep.subr.mxu0 0.0
        %4573 = vmatpush1.msra.mxu0 0.0
        %4574 = vmatprep.subr.mxu0 0.0
        %4575 = vmatpush1.msra.mxu0 0.0
        %4576 = vmatprep.subr.mxu0 0.0
        %4577 = vmatpush1.msra.mxu0 0.0
        %4578 = vmatprep.subr.mxu0 0.0
        %4579 = vmatpush1.msra.mxu0 0.0
        %4580 = vmatprep.subr.mxu0 0.0
        %4581 = vmatpush1.msra.mxu0 0.0
        %4582 = vmatprep.subr.mxu0 0.0
        %4583 = vmatpush1.msra.mxu0 0.0
        %4584 = vmatprep.subr.mxu0 0.0
        %4585 = vmatpush1.msra.mxu0 0.0
        %4586 = vmatprep.subr.mxu0 0.0
        %4587 = vmatpush1.msra.mxu0 0.0
        %4588 = vmatprep.subr.mxu0 0.0
        %4589 = vmatpush1.msra.mxu0 0.0
        %4590 = vmatprep.subr.mxu0 0.0
        %4591 = vmatpush1.msra.mxu0 0.0
        %4592 = vmatprep.subr.mxu0 0.0
        %4593 = vmatpush1.msra.mxu0 0.0
        %4594 = vmatprep.subr.mxu0 0.0
        %4595 = vmatpush1.msra.mxu0 0.0
        %4596 = vmatprep.subr.mxu0 0.0
        %4597 = vmatpush1.msra.mxu0 0.0
        %4598 = vmatprep.subr.mxu0 0.0
        %4599 = vmatpush1.msra.mxu0 0.0
        %4600 = vmatprep.subr.mxu0 0.0
        %4601 = vmatpush1.msra.mxu0 0.0
        %4602 = vmatprep.subr.mxu0 0.0
        %4603 = vmatpush1.msra.mxu0 0.0
        %4604 = vmatprep.subr.mxu0 0.0
        %4605 = vmatpush1.msra.mxu0 0.0
        %4606 = vmatprep.subr.mxu0 0.0
        %4607 = vmatpush1.msra.mxu0 0.0
        %4608 = vmatprep.subr.mxu0 0.0
        %4609 = vmatpush1.msra.mxu0 0.0
        %4610 = vmatprep.subr.mxu0 0.0
        %4611 = vmatpush1.msra.mxu0 0.0
        %4612 = vmatprep.subr.mxu0 0.0
        %4613 = vmatpush1.msra.mxu0 0.0
        %4614 = vmatprep.subr.mxu0 0.0
        %4615 = vmatpush1.msra.mxu0 0.0
        %4616 = vmatprep.subr.mxu0 0.0
        %4617 = vmatpush1.msra.mxu0 0.0
        %4618 = vmatprep.subr.mxu0 0.0
        %4619 = vmatpush1.msra.mxu0 0.0
        %4620 = vmatprep.subr.mxu0 0.0
        %4621 = vmatpush1.msra.mxu0 0.0
        %4622 = vmatprep.subr.mxu0 0.0
        %4623 = vmatpush1.msra.mxu0 0.0
        %4624 = vmatprep.subr.mxu0 0.0
        %4625 = vmatpush1.msra.mxu0 0.0
        %4626 = vmatprep.mubr.f32.mxu0 0.0
        %v4627 = vand.u32 %v4559, 4294901760
        %v4628 = vsub.f32 %v4559, %v4627
        %v4629 = vand.u32 %v4628, 4294901760
        %v4630 = vsub.f32 %v4628, %v4629
        %v4631 = vand.u32 %v4630, 4294901760
        %4632 = vmatmul.mubr.f32.gmra.mrb[0].mxu0 %v4631
        %v4633 = vpop.f32.mrb[0].mxu0
        %v4634 = vadd.f32 0.0, %v4633
        %v4635 = vpop.f32.mrb[0].mxu0
        %4636 = vdwg.mxu0
        %4637 = vmatprep.subr.mxu0 0.0
        %v4638 = vand.u32 %v4556, 4294901760
        %v4639 = vsub.f32 %v4556, %v4638
        %v4640 = vand.u32 %v4639, 4294901760
        %v4641 = vsub.f32 %v4639, %v4640
        %v4642 = vand.u32 %v4641, 4294901760
        %4643 = vmatpush1.msra.mxu0 %v4642
        %4644 = vmatprep.subr.mxu0 0.0
        %4645 = vmatpush1.msra.mxu0 0.0
        %4646 = vmatprep.subr.mxu0 0.0
        %4647 = vmatpush1.msra.mxu0 0.0
        %4648 = vmatprep.subr.mxu0 0.0
        %4649 = vmatpush1.msra.mxu0 0.0
        %4650 = vmatprep.subr.mxu0 0.0
        %4651 = vmatpush1.msra.mxu0 0.0
        %4652 = vmatprep.subr.mxu0 0.0
        %4653 = vmatpush1.msra.mxu0 0.0
        %4654 = vmatprep.subr.mxu0 0.0
        %4655 = vmatpush1.msra.mxu0 0.0
        %4656 = vmatprep.subr.mxu0 0.0
        %4657 = vmatpush1.msra.mxu0 0.0
        %4658 = vmatprep.subr.mxu0 0.0
        %4659 = vmatpush1.msra.mxu0 0.0
        %4660 = vmatprep.subr.mxu0 0.0
        %4661 = vmatpush1.msra.mxu0 0.0
        %4662 = vmatprep.subr.mxu0 0.0
        %4663 = vmatpush1.msra.mxu0 0.0
        %4664 = vmatprep.subr.mxu0 0.0
        %4665 = vmatpush1.msra.mxu0 0.0
        %4666 = vmatprep.subr.mxu0 0.0
        %4667 = vmatpush1.msra.mxu0 0.0
        %4668 = vmatprep.subr.mxu0 0.0
        %4669 = vmatpush1.msra.mxu0 0.0
        %4670 = vmatprep.subr.mxu0 0.0
        %4671 = vmatpush1.msra.mxu0 0.0
        %4672 = vmatprep.subr.mxu0 0.0
        %4673 = vmatpush1.msra.mxu0 0.0
        %4674 = vmatprep.subr.mxu0 0.0
        %4675 = vmatpush1.msra.mxu0 0.0
        %4676 = vmatprep.subr.mxu0 0.0
        %4677 = vmatpush1.msra.mxu0 0.0
        %4678 = vmatprep.subr.mxu0 0.0
        %4679 = vmatpush1.msra.mxu0 0.0
        %4680 = vmatprep.subr.mxu0 0.0
        %4681 = vmatpush1.msra.mxu0 0.0
        %4682 = vmatprep.subr.mxu0 0.0
        %4683 = vmatpush1.msra.mxu0 0.0
        %4684 = vmatprep.subr.mxu0 0.0
        %4685 = vmatpush1.msra.mxu0 0.0
        %4686 = vmatprep.subr.mxu0 0.0
        %4687 = vmatpush1.msra.mxu0 0.0
        %4688 = vmatprep.subr.mxu0 0.0
        %4689 = vmatpush1.msra.mxu0 0.0
        %4690 = vmatprep.subr.mxu0 0.0
        %4691 = vmatpush1.msra.mxu0 0.0
        %4692 = vmatprep.subr.mxu0 0.0
        %4693 = vmatpush1.msra.mxu0 0.0
        %4694 = vmatprep.subr.mxu0 0.0
        %4695 = vmatpush1.msra.mxu0 0.0
        %4696 = vmatprep.subr.mxu0 0.0
        %4697 = vmatpush1.msra.mxu0 0.0
        %4698 = vmatprep.subr.mxu0 0.0
        %4699 = vmatpush1.msra.mxu0 0.0
        %4700 = vmatprep.subr.mxu0 0.0
        %4701 = vmatpush1.msra.mxu0 0.0
        %4702 = vmatprep.subr.mxu0 0.0
        %4703 = vmatpush1.msra.mxu0 0.0
        %4704 = vmatprep.subr.mxu0 0.0
        %4705 = vmatpush1.msra.mxu0 0.0
        %4706 = vmatprep.mubr.f32.mxu0 0.0
        %v4707 = vand.u32 %v4559, 4294901760
        %4708 = vmatmul.mubr.f32.gmra.mrb[0].mxu0 %v4707
        %v4709 = vpop.f32.mrb[0].mxu0
        %v4710 = vadd.f32 %v4634, %v4709
        %v4711 = vpop.f32.mrb[0].mxu0
        %4712 = vdwg.mxu0
        %4713 = vmatprep.subr.mxu0 0.0
        %v4714 = vand.u32 %v4556, 4294901760
        %v4715 = vsub.f32 %v4556, %v4714
        %4716 = vmatpush1.msra.mxu0 %v4715
        %4717 = vmatprep.subr.mxu0 0.0
        %4718 = vmatpush1.msra.mxu0 0.0
        %4719 = vmatprep.subr.mxu0 0.0
        %4720 = vmatpush1.msra.mxu0 0.0
        %4721 = vmatprep.subr.mxu0 0.0
        %4722 = vmatpush1.msra.mxu0 0.0
        %4723 = vmatprep.subr.mxu0 0.0
        %4724 = vmatpush1.msra.mxu0 0.0
        %4725 = vmatprep.subr.mxu0 0.0
        %4726 = vmatpush1.msra.mxu0 0.0
        %4727 = vmatprep.subr.mxu0 0.0
        %4728 = vmatpush1.msra.mxu0 0.0
        %4729 = vmatprep.subr.mxu0 0.0
        %4730 = vmatpush1.msra.mxu0 0.0
        %4731 = vmatprep.subr.mxu0 0.0
        %4732 = vmatpush1.msra.mxu0 0.0
        %4733 = vmatprep.subr.mxu0 0.0
        %4734 = vmatpush1.msra.mxu0 0.0
        %4735 = vmatprep.subr.mxu0 0.0
        %4736 = vmatpush1.msra.mxu0 0.0
        %4737 = vmatprep.subr.mxu0 0.0
        %4738 = vmatpush1.msra.mxu0 0.0
        %4739 = vmatprep.subr.mxu0 0.0
        %4740 = vmatpush1.msra.mxu0 0.0
        %4741 = vmatprep.subr.mxu0 0.0
        %4742 = vmatpush1.msra.mxu0 0.0
        %4743 = vmatprep.subr.mxu0 0.0
        %4744 = vmatpush1.msra.mxu0 0.0
        %4745 = vmatprep.subr.mxu0 0.0
        %4746 = vmatpush1.msra.mxu0 0.0
        %4747 = vmatprep.subr.mxu0 0.0
        %4748 = vmatpush1.msra.mxu0 0.0
        %4749 = vmatprep.subr.mxu0 0.0
        %4750 = vmatpush1.msra.mxu0 0.0
        %4751 = vmatprep.subr.mxu0 0.0
        %4752 = vmatpush1.msra.mxu0 0.0
        %4753 = vmatprep.subr.mxu0 0.0
        %4754 = vmatpush1.msra.mxu0 0.0
        %4755 = vmatprep.subr.mxu0 0.0
        %4756 = vmatpush1.msra.mxu0 0.0
        %4757 = vmatprep.subr.mxu0 0.0
        %4758 = vmatpush1.msra.mxu0 0.0
        %4759 = vmatprep.subr.mxu0 0.0
        %4760 = vmatpush1.msra.mxu0 0.0
        %4761 = vmatprep.subr.mxu0 0.0
        %4762 = vmatpush1.msra.mxu0 0.0
        %4763 = vmatprep.subr.mxu0 0.0
        %4764 = vmatpush1.msra.mxu0 0.0
        %4765 = vmatprep.subr.mxu0 0.0
        %4766 = vmatpush1.msra.mxu0 0.0
        %4767 = vmatprep.subr.mxu0 0.0
        %4768 = vmatpush1.msra.mxu0 0.0
        %4769 = vmatprep.subr.mxu0 0.0
        %4770 = vmatpush1.msra.mxu0 0.0
        %4771 = vmatprep.subr.mxu0 0.0
        %4772 = vmatpush1.msra.mxu0 0.0
        %4773 = vmatprep.subr.mxu0 0.0
        %4774 = vmatpush1.msra.mxu0 0.0
        %4775 = vmatprep.subr.mxu0 0.0
        %4776 = vmatpush1.msra.mxu0 0.0
        %4777 = vmatprep.subr.mxu0 0.0
        %4778 = vmatpush1.msra.mxu0 0.0
        %4779 = vmatprep.mubr.f32.mxu0 0.0
        %v4780 = vand.u32 %v4559, 4294901760
        %v4781 = vsub.f32 %v4559, %v4780
        %4782 = vmatmul.mubr.f32.gmra.mrb[0].mxu0 %v4781
        %v4783 = vpop.f32.mrb[0].mxu0
        %v4784 = vadd.f32 %v4710, %v4783
        %v4785 = vpop.f32.mrb[0].mxu0
        %4786 = vdwg.mxu0
        %4787 = vmatprep.subr.mxu0 0.0
        %v4788 = vand.u32 %v4556, 4294901760
        %4789 = vmatpush1.msra.mxu0 %v4788
        %4790 = vmatprep.subr.mxu0 0.0
        %4791 = vmatpush1.msra.mxu0 0.0
        %4792 = vmatprep.subr.mxu0 0.0
        %4793 = vmatpush1.msra.mxu0 0.0
        %4794 = vmatprep.subr.mxu0 0.0
        %4795 = vmatpush1.msra.mxu0 0.0
        %4796 = vmatprep.subr.mxu0 0.0
        %4797 = vmatpush1.msra.mxu0 0.0
        %4798 = vmatprep.subr.mxu0 0.0
        %4799 = vmatpush1.msra.mxu0 0.0
        %4800 = vmatprep.subr.mxu0 0.0
        %4801 = vmatpush1.msra.mxu0 0.0
        %4802 = vmatprep.subr.mxu0 0.0
        %4803 = vmatpush1.msra.mxu0 0.0
        %4804 = vmatprep.subr.mxu0 0.0
        %4805 = vmatpush1.msra.mxu0 0.0
        %4806 = vmatprep.subr.mxu0 0.0
        %4807 = vmatpush1.msra.mxu0 0.0
        %4808 = vmatprep.subr.mxu0 0.0
        %4809 = vmatpush1.msra.mxu0 0.0
        %4810 = vmatprep.subr.mxu0 0.0
        %4811 = vmatpush1.msra.mxu0 0.0
        %4812 = vmatprep.subr.mxu0 0.0
        %4813 = vmatpush1.msra.mxu0 0.0
        %4814 = vmatprep.subr.mxu0 0.0
        %4815 = vmatpush1.msra.mxu0 0.0
        %4816 = vmatprep.subr.mxu0 0.0
        %4817 = vmatpush1.msra.mxu0 0.0
        %4818 = vmatprep.subr.mxu0 0.0
        %4819 = vmatpush1.msra.mxu0 0.0
        %4820 = vmatprep.subr.mxu0 0.0
        %4821 = vmatpush1.msra.mxu0 0.0
        %4822 = vmatprep.subr.mxu0 0.0
        %4823 = vmatpush1.msra.mxu0 0.0
        %4824 = vmatprep.subr.mxu0 0.0
        %4825 = vmatpush1.msra.mxu0 0.0
        %4826 = vmatprep.subr.mxu0 0.0
        %4827 = vmatpush1.msra.mxu0 0.0
        %4828 = vmatprep.subr.mxu0 0.0
        %4829 = vmatpush1.msra.mxu0 0.0
        %4830 = vmatprep.subr.mxu0 0.0
        %4831 = vmatpush1.msra.mxu0 0.0
        %4832 = vmatprep.subr.mxu0 0.0
        %4833 = vmatpush1.msra.mxu0 0.0
        %4834 = vmatprep.subr.mxu0 0.0
        %4835 = vmatpush1.msra.mxu0 0.0
        %4836 = vmatprep.subr.mxu0 0.0
        %4837 = vmatpush1.msra.mxu0 0.0
        %4838 = vmatprep.subr.mxu0 0.0
        %4839 = vmatpush1.msra.mxu0 0.0
        %4840 = vmatprep.subr.mxu0 0.0
        %4841 = vmatpush1.msra.mxu0 0.0
        %4842 = vmatprep.subr.mxu0 0.0
        %4843 = vmatpush1.msra.mxu0 0.0
        %4844 = vmatprep.subr.mxu0 0.0
        %4845 = vmatpush1.msra.mxu0 0.0
        %4846 = vmatprep.subr.mxu0 0.0
        %4847 = vmatpush1.msra.mxu0 0.0
        %4848 = vmatprep.subr.mxu0 0.0
        %4849 = vmatpush1.msra.mxu0 0.0
        %4850 = vmatprep.subr.mxu0 0.0
        %4851 = vmatpush1.msra.mxu0 0.0
        %4852 = vmatprep.mubr.f32.mxu0 0.0
        %v4853 = vand.u32 %v4559, 4294901760
        %v4854 = vsub.f32 %v4559, %v4853
        %v4855 = vand.u32 %v4854, 4294901760
        %4856 = vmatmul.mubr.f32.gmra.mrb[0].mxu0 %v4855
        %v4857 = vpop.f32.mrb[0].mxu0
        %v4858 = vadd.f32 %v4784, %v4857
        %v4859 = vpop.f32.mrb[0].mxu0
        %4860 = vdwg.mxu0
        %4861 = vmatprep.subr.mxu0 0.0
        %v4862 = vand.u32 %v4556, 4294901760
        %v4863 = vsub.f32 %v4556, %v4862
        %v4864 = vand.u32 %v4863, 4294901760
        %4865 = vmatpush1.msra.mxu0 %v4864
        %4866 = vmatprep.subr.mxu0 0.0
        %4867 = vmatpush1.msra.mxu0 0.0
        %4868 = vmatprep.subr.mxu0 0.0
        %4869 = vmatpush1.msra.mxu0 0.0
        %4870 = vmatprep.subr.mxu0 0.0
        %4871 = vmatpush1.msra.mxu0 0.0
        %4872 = vmatprep.subr.mxu0 0.0
        %4873 = vmatpush1.msra.mxu0 0.0
        %4874 = vmatprep.subr.mxu0 0.0
        %4875 = vmatpush1.msra.mxu0 0.0
        %4876 = vmatprep.subr.mxu0 0.0
        %4877 = vmatpush1.msra.mxu0 0.0
        %4878 = vmatprep.subr.mxu0 0.0
        %4879 = vmatpush1.msra.mxu0 0.0
        %4880 = vmatprep.subr.mxu0 0.0
        %4881 = vmatpush1.msra.mxu0 0.0
        %4882 = vmatprep.subr.mxu0 0.0
        %4883 = vmatpush1.msra.mxu0 0.0
        %4884 = vmatprep.subr.mxu0 0.0
        %4885 = vmatpush1.msra.mxu0 0.0
        %4886 = vmatprep.subr.mxu0 0.0
        %4887 = vmatpush1.msra.mxu0 0.0
        %4888 = vmatprep.subr.mxu0 0.0
        %4889 = vmatpush1.msra.mxu0 0.0
        %4890 = vmatprep.subr.mxu0 0.0
        %4891 = vmatpush1.msra.mxu0 0.0
        %4892 = vmatprep.subr.mxu0 0.0
        %4893 = vmatpush1.msra.mxu0 0.0
        %4894 = vmatprep.subr.mxu0 0.0
        %4895 = vmatpush1.msra.mxu0 0.0
        %4896 = vmatprep.subr.mxu0 0.0
        %4897 = vmatpush1.msra.mxu0 0.0
        %4898 = vmatprep.subr.mxu0 0.0
        %4899 = vmatpush1.msra.mxu0 0.0
        %4900 = vmatprep.subr.mxu0 0.0
        %4901 = vmatpush1.msra.mxu0 0.0
        %4902 = vmatprep.subr.mxu0 0.0
        %4903 = vmatpush1.msra.mxu0 0.0
        %4904 = vmatprep.subr.mxu0 0.0
        %4905 = vmatpush1.msra.mxu0 0.0
        %4906 = vmatprep.subr.mxu0 0.0
        %4907 = vmatpush1.msra.mxu0 0.0
        %4908 = vmatprep.subr.mxu0 0.0
        %4909 = vmatpush1.msra.mxu0 0.0
        %4910 = vmatprep.subr.mxu0 0.0
        %4911 = vmatpush1.msra.mxu0 0.0
        %4912 = vmatprep.subr.mxu0 0.0
        %4913 = vmatpush1.msra.mxu0 0.0
        %4914 = vmatprep.subr.mxu0 0.0
        %4915 = vmatpush1.msra.mxu0 0.0
        %4916 = vmatprep.subr.mxu0 0.0
        %4917 = vmatpush1.msra.mxu0 0.0
        %4918 = vmatprep.subr.mxu0 0.0
        %4919 = vmatpush1.msra.mxu0 0.0
        %4920 = vmatprep.subr.mxu0 0.0
        %4921 = vmatpush1.msra.mxu0 0.0
        %4922 = vmatprep.subr.mxu0 0.0
        %4923 = vmatpush1.msra.mxu0 0.0
        %4924 = vmatprep.subr.mxu0 0.0
        %4925 = vmatpush1.msra.mxu0 0.0
        %4926 = vmatprep.subr.mxu0 0.0
        %4927 = vmatpush1.msra.mxu0 0.0
        %4928 = vmatprep.mubr.f32.mxu0 0.0
        %v4929 = vand.u32 %v4559, 4294901760
        %4930 = vmatmul.mubr.f32.gmra.mrb[0].mxu0 %v4929
        %v4931 = vpop.f32.mrb[0].mxu0
        %v4932 = vadd.f32 %v4858, %v4931
        %v4933 = vpop.f32.mrb[0].mxu0
        %4934 = vdwg.mxu0
        %4935 = vmatprep.subr.mxu0 0.0
        %v4936 = vand.u32 %v4556, 4294901760
        %4937 = vmatpush1.msra.mxu0 %v4936
        %4938 = vmatprep.subr.mxu0 0.0
        %4939 = vmatpush1.msra.mxu0 0.0
        %4940 = vmatprep.subr.mxu0 0.0
        %4941 = vmatpush1.msra.mxu0 0.0
        %4942 = vmatprep.subr.mxu0 0.0
        %4943 = vmatpush1.msra.mxu0 0.0
        %4944 = vmatprep.subr.mxu0 0.0
        %4945 = vmatpush1.msra.mxu0 0.0
        %4946 = vmatprep.subr.mxu0 0.0
        %4947 = vmatpush1.msra.mxu0 0.0
        %4948 = vmatprep.subr.mxu0 0.0
        %4949 = vmatpush1.msra.mxu0 0.0
        %4950 = vmatprep.subr.mxu0 0.0
        %4951 = vmatpush1.msra.mxu0 0.0
        %4952 = vmatprep.subr.mxu0 0.0
        %4953 = vmatpush1.msra.mxu0 0.0
        %4954 = vmatprep.subr.mxu0 0.0
        %4955 = vmatpush1.msra.mxu0 0.0
        %4956 = vmatprep.subr.mxu0 0.0
        %4957 = vmatpush1.msra.mxu0 0.0
        %4958 = vmatprep.subr.mxu0 0.0
        %4959 = vmatpush1.msra.mxu0 0.0
        %4960 = vmatprep.subr.mxu0 0.0
        %4961 = vmatpush1.msra.mxu0 0.0
        %4962 = vmatprep.subr.mxu0 0.0
        %4963 = vmatpush1.msra.mxu0 0.0
        %4964 = vmatprep.subr.mxu0 0.0
        %4965 = vmatpush1.msra.mxu0 0.0
        %4966 = vmatprep.subr.mxu0 0.0
        %4967 = vmatpush1.msra.mxu0 0.0
        %4968 = vmatprep.subr.mxu0 0.0
        %4969 = vmatpush1.msra.mxu0 0.0
        %4970 = vmatprep.subr.mxu0 0.0
        %4971 = vmatpush1.msra.mxu0 0.0
        %4972 = vmatprep.subr.mxu0 0.0
        %4973 = vmatpush1.msra.mxu0 0.0
        %4974 = vmatprep.subr.mxu0 0.0
        %4975 = vmatpush1.msra.mxu0 0.0
        %4976 = vmatprep.subr.mxu0 0.0
        %4977 = vmatpush1.msra.mxu0 0.0
        %4978 = vmatprep.subr.mxu0 0.0
        %4979 = vmatpush1.msra.mxu0 0.0
        %4980 = vmatprep.subr.mxu0 0.0
        %4981 = vmatpush1.msra.mxu0 0.0
        %4982 = vmatprep.subr.mxu0 0.0
        %4983 = vmatpush1.msra.mxu0 0.0
        %4984 = vmatprep.subr.mxu0 0.0
        %4985 = vmatpush1.msra.mxu0 0.0
        %4986 = vmatprep.subr.mxu0 0.0
        %4987 = vmatpush1.msra.mxu0 0.0
        %4988 = vmatprep.subr.mxu0 0.0
        %4989 = vmatpush1.msra.mxu0 0.0
        %4990 = vmatprep.subr.mxu0 0.0
        %4991 = vmatpush1.msra.mxu0 0.0
        %4992 = vmatprep.subr.mxu0 0.0
        %4993 = vmatpush1.msra.mxu0 0.0
        %4994 = vmatprep.subr.mxu0 0.0
        %4995 = vmatpush1.msra.mxu0 0.0
        %4996 = vmatprep.subr.mxu0 0.0
        %4997 = vmatpush1.msra.mxu0 0.0
        %4998 = vmatprep.subr.mxu0 0.0
        %4999 = vmatpush1.msra.mxu0 0.0
        %5000 = vmatprep.mubr.f32.mxu0 0.0
        %v5001 = vand.u32 %v4559, 4294901760
        %5002 = vmatmul.mubr.f32.gmra.mrb[0].mxu0 %v5001
        %v5003 = vpop.f32.mrb[0].mxu0
        %v5004 = vadd.f32 %v4932, %v5003
        %v5005 = vpop.f32.mrb[0].mxu0
        %5006 = vdwg.mxu0
        %5009 = vrot.lane.b32.xlu0 %v4552, 8
        %v5010 = vpop.permute.xlu0 %5009
        %5011 = vrot.lane.b32.xlu0 %v5004, 8
        %v5012 = vpop.permute.xlu0 %5011
        %vm5015 = vcmask 130112
        %5016 = vst.msk [vmem:[#allocation3] sm:$0xff] %vm5015, %v5010
        %5017 = vst.msk [vmem:[#allocation3 + $0x8] sm:$0xff] %vm5015, %v5012
        %5018 = vrot.lane.b32.xlu0 %v1318, 112
        %v5019 = vpop.permute.xlu0 %5018
        %5020 = vrot.lane.b32.xlu0 %v1318, 80
        %v5021 = vpop.permute.xlu0 %5020
        %v5022 = vsel %vm1335, %v5019, 0
        %v5024 = vsel %vm1335, %v5021, 0
        %5026 = vmatprep.subr.mxu0 0.0
        %v5027 = vand.u32 %v5024, 4294901760
        %5028 = vmatpush1.xpose.msra.mxu0 %v5027
        %5029 = vmatprep.subr.mxu0 0.0
        %5030 = vmatpush1.xpose.msra.mxu0 0.0
        %5031 = vmatprep.subr.mxu0 0.0
        %5032 = vmatpush1.xpose.msra.mxu0 0.0
        %5033 = vmatprep.subr.mxu0 0.0
        %5034 = vmatpush1.xpose.msra.mxu0 0.0
        %5035 = vmatprep.subr.mxu0 0.0
        %5036 = vmatpush1.xpose.msra.mxu0 0.0
        %5037 = vmatprep.subr.mxu0 0.0
        %5038 = vmatpush1.xpose.msra.mxu0 0.0
        %5039 = vmatprep.subr.mxu0 0.0
        %5040 = vmatpush1.xpose.msra.mxu0 0.0
        %5041 = vmatprep.subr.mxu0 0.0
        %5042 = vmatpush1.xpose.msra.mxu0 0.0
        %5043 = vmatprep.subr.mxu0 0.0
        %5044 = vmatpush1.xpose.msra.mxu0 0.0
        %5045 = vmatprep.subr.mxu0 0.0
        %5046 = vmatpush1.xpose.msra.mxu0 0.0
        %5047 = vmatprep.subr.mxu0 0.0
        %5048 = vmatpush1.xpose.msra.mxu0 0.0
        %5049 = vmatprep.subr.mxu0 0.0
        %5050 = vmatpush1.xpose.msra.mxu0 0.0
        %5051 = vmatprep.subr.mxu0 0.0
        %5052 = vmatpush1.xpose.msra.mxu0 0.0
        %5053 = vmatprep.subr.mxu0 0.0
        %5054 = vmatpush1.xpose.msra.mxu0 0.0
        %5055 = vmatprep.subr.mxu0 0.0
        %5056 = vmatpush1.xpose.msra.mxu0 0.0
        %5057 = vmatprep.subr.mxu0 0.0
        %5058 = vmatpush1.xpose.msra.mxu0 0.0
        %5059 = vmatprep.subr.mxu0 0.0
        %5060 = vmatpush1.xpose.msra.mxu0 0.0
        %5061 = vmatprep.subr.mxu0 0.0
        %5062 = vmatpush1.xpose.msra.mxu0 0.0
        %5063 = vmatprep.subr.mxu0 0.0
        %5064 = vmatpush1.xpose.msra.mxu0 0.0
        %5065 = vmatprep.subr.mxu0 0.0
        %5066 = vmatpush1.xpose.msra.mxu0 0.0
        %5067 = vmatprep.subr.mxu0 0.0
        %5068 = vmatpush1.xpose.msra.mxu0 0.0
        %5069 = vmatprep.subr.mxu0 0.0
        %5070 = vmatpush1.xpose.msra.mxu0 0.0
        %5071 = vmatprep.subr.mxu0 0.0
        %5072 = vmatpush1.xpose.msra.mxu0 0.0
        %5073 = vmatprep.subr.mxu0 0.0
        %5074 = vmatpush1.xpose.msra.mxu0 0.0
        %5075 = vmatprep.subr.mxu0 0.0
        %5076 = vmatpush1.xpose.msra.mxu0 0.0
        %5077 = vmatprep.subr.mxu0 0.0
        %5078 = vmatpush1.xpose.msra.mxu0 0.0
        %5079 = vmatprep.subr.mxu0 0.0
        %5080 = vmatpush1.xpose.msra.mxu0 0.0
        %5081 = vmatprep.subr.mxu0 0.0
        %5082 = vmatpush1.xpose.msra.mxu0 0.0
        %5083 = vmatprep.subr.mxu0 0.0
        %5084 = vmatpush1.xpose.msra.mxu0 0.0
        %5085 = vmatprep.subr.mxu0 0.0
        %5086 = vmatpush1.xpose.msra.mxu0 0.0
        %5087 = vmatprep.subr.mxu0 0.0
        %5088 = vmatpush1.xpose.msra.mxu0 0.0
        %5089 = vmatprep.subr.mxu0 0.0
        %5090 = vmatpush1.xpose.msra.mxu0 0.0
        %5091 = vmatprep.mubr.f32.mxu0 0.0
        %v5092 = vand.u32 %v5022, 4294901760
        %v5093 = vsub.f32 %v5022, %v5092
        %v5094 = vand.u32 %v5093, 4294901760
        %v5095 = vsub.f32 %v5093, %v5094
        %v5096 = vand.u32 %v5095, 4294901760
        %5097 = vmatmul.mubr.f32.gmra.mrb[0].mxu0 %v5096
        %v5098 = vpop.f32.mrb[0].mxu0
        %v5099 = vadd.f32 0.0, %v5098
        %v5100 = vpop.f32.mrb[0].mxu0
        %5101 = vdwg.mxu0
        %5102 = vmatprep.subr.mxu0 0.0
        %v5103 = vand.u32 %v5024, 4294901760
        %v5104 = vsub.f32 %v5024, %v5103
        %v5105 = vand.u32 %v5104, 4294901760
        %v5106 = vsub.f32 %v5104, %v5105
        %v5107 = vand.u32 %v5106, 4294901760
        %5108 = vmatpush1.xpose.msra.mxu0 %v5107
        %5109 = vmatprep.subr.mxu0 0.0
        %5110 = vmatpush1.xpose.msra.mxu0 0.0
        %5111 = vmatprep.subr.mxu0 0.0
        %5112 = vmatpush1.xpose.msra.mxu0 0.0
        %5113 = vmatprep.subr.mxu0 0.0
        %5114 = vmatpush1.xpose.msra.mxu0 0.0
        %5115 = vmatprep.subr.mxu0 0.0
        %5116 = vmatpush1.xpose.msra.mxu0 0.0
        %5117 = vmatprep.subr.mxu0 0.0
        %5118 = vmatpush1.xpose.msra.mxu0 0.0
        %5119 = vmatprep.subr.mxu0 0.0
        %5120 = vmatpush1.xpose.msra.mxu0 0.0
        %5121 = vmatprep.subr.mxu0 0.0
        %5122 = vmatpush1.xpose.msra.mxu0 0.0
        %5123 = vmatprep.subr.mxu0 0.0
        %5124 = vmatpush1.xpose.msra.mxu0 0.0
        %5125 = vmatprep.subr.mxu0 0.0
        %5126 = vmatpush1.xpose.msra.mxu0 0.0
        %5127 = vmatprep.subr.mxu0 0.0
        %5128 = vmatpush1.xpose.msra.mxu0 0.0
        %5129 = vmatprep.subr.mxu0 0.0
        %5130 = vmatpush1.xpose.msra.mxu0 0.0
        %5131 = vmatprep.subr.mxu0 0.0
        %5132 = vmatpush1.xpose.msra.mxu0 0.0
        %5133 = vmatprep.subr.mxu0 0.0
        %5134 = vmatpush1.xpose.msra.mxu0 0.0
        %5135 = vmatprep.subr.mxu0 0.0
        %5136 = vmatpush1.xpose.msra.mxu0 0.0
        %5137 = vmatprep.subr.mxu0 0.0
        %5138 = vmatpush1.xpose.msra.mxu0 0.0
        %5139 = vmatprep.subr.mxu0 0.0
        %5140 = vmatpush1.xpose.msra.mxu0 0.0
        %5141 = vmatprep.subr.mxu0 0.0
        %5142 = vmatpush1.xpose.msra.mxu0 0.0
        %5143 = vmatprep.subr.mxu0 0.0
        %5144 = vmatpush1.xpose.msra.mxu0 0.0
        %5145 = vmatprep.subr.mxu0 0.0
        %5146 = vmatpush1.xpose.msra.mxu0 0.0
        %5147 = vmatprep.subr.mxu0 0.0
        %5148 = vmatpush1.xpose.msra.mxu0 0.0
        %5149 = vmatprep.subr.mxu0 0.0
        %5150 = vmatpush1.xpose.msra.mxu0 0.0
        %5151 = vmatprep.subr.mxu0 0.0
        %5152 = vmatpush1.xpose.msra.mxu0 0.0
        %5153 = vmatprep.subr.mxu0 0.0
        %5154 = vmatpush1.xpose.msra.mxu0 0.0
        %5155 = vmatprep.subr.mxu0 0.0
        %5156 = vmatpush1.xpose.msra.mxu0 0.0
        %5157 = vmatprep.subr.mxu0 0.0
        %5158 = vmatpush1.xpose.msra.mxu0 0.0
        %5159 = vmatprep.subr.mxu0 0.0
        %5160 = vmatpush1.xpose.msra.mxu0 0.0
        %5161 = vmatprep.subr.mxu0 0.0
        %5162 = vmatpush1.xpose.msra.mxu0 0.0
        %5163 = vmatprep.subr.mxu0 0.0
        %5164 = vmatpush1.xpose.msra.mxu0 0.0
        %5165 = vmatprep.subr.mxu0 0.0
        %5166 = vmatpush1.xpose.msra.mxu0 0.0
        %5167 = vmatprep.subr.mxu0 0.0
        %5168 = vmatpush1.xpose.msra.mxu0 0.0
        %5169 = vmatprep.subr.mxu0 0.0
        %5170 = vmatpush1.xpose.msra.mxu0 0.0
        %5171 = vmatprep.mubr.f32.mxu0 0.0
        %v5172 = vand.u32 %v5022, 4294901760
        %5173 = vmatmul.mubr.f32.gmra.mrb[0].mxu0 %v5172
        %v5174 = vpop.f32.mrb[0].mxu0
        %v5175 = vadd.f32 %v5099, %v5174
        %v5176 = vpop.f32.mrb[0].mxu0
        %5177 = vdwg.mxu0
        %5178 = vmatprep.subr.mxu0 0.0
        %v5179 = vand.u32 %v5024, 4294901760
        %v5180 = vsub.f32 %v5024, %v5179
        %5181 = vmatpush1.xpose.msra.mxu0 %v5180
        %5182 = vmatprep.subr.mxu0 0.0
        %5183 = vmatpush1.xpose.msra.mxu0 0.0
        %5184 = vmatprep.subr.mxu0 0.0
        %5185 = vmatpush1.xpose.msra.mxu0 0.0
        %5186 = vmatprep.subr.mxu0 0.0
        %5187 = vmatpush1.xpose.msra.mxu0 0.0
        %5188 = vmatprep.subr.mxu0 0.0
        %5189 = vmatpush1.xpose.msra.mxu0 0.0
        %5190 = vmatprep.subr.mxu0 0.0
        %5191 = vmatpush1.xpose.msra.mxu0 0.0
        %5192 = vmatprep.subr.mxu0 0.0
        %5193 = vmatpush1.xpose.msra.mxu0 0.0
        %5194 = vmatprep.subr.mxu0 0.0
        %5195 = vmatpush1.xpose.msra.mxu0 0.0
        %5196 = vmatprep.subr.mxu0 0.0
        %5197 = vmatpush1.xpose.msra.mxu0 0.0
        %5198 = vmatprep.subr.mxu0 0.0
        %5199 = vmatpush1.xpose.msra.mxu0 0.0
        %5200 = vmatprep.subr.mxu0 0.0
        %5201 = vmatpush1.xpose.msra.mxu0 0.0
        %5202 = vmatprep.subr.mxu0 0.0
        %5203 = vmatpush1.xpose.msra.mxu0 0.0
        %5204 = vmatprep.subr.mxu0 0.0
        %5205 = vmatpush1.xpose.msra.mxu0 0.0
        %5206 = vmatprep.subr.mxu0 0.0
        %5207 = vmatpush1.xpose.msra.mxu0 0.0
        %5208 = vmatprep.subr.mxu0 0.0
        %5209 = vmatpush1.xpose.msra.mxu0 0.0
        %5210 = vmatprep.subr.mxu0 0.0
        %5211 = vmatpush1.xpose.msra.mxu0 0.0
        %5212 = vmatprep.subr.mxu0 0.0
        %5213 = vmatpush1.xpose.msra.mxu0 0.0
        %5214 = vmatprep.subr.mxu0 0.0
        %5215 = vmatpush1.xpose.msra.mxu0 0.0
        %5216 = vmatprep.subr.mxu0 0.0
        %5217 = vmatpush1.xpose.msra.mxu0 0.0
        %5218 = vmatprep.subr.mxu0 0.0
        %5219 = vmatpush1.xpose.msra.mxu0 0.0
        %5220 = vmatprep.subr.mxu0 0.0
        %5221 = vmatpush1.xpose.msra.mxu0 0.0
        %5222 = vmatprep.subr.mxu0 0.0
        %5223 = vmatpush1.xpose.msra.mxu0 0.0
        %5224 = vmatprep.subr.mxu0 0.0
        %5225 = vmatpush1.xpose.msra.mxu0 0.0
        %5226 = vmatprep.subr.mxu0 0.0
        %5227 = vmatpush1.xpose.msra.mxu0 0.0
        %5228 = vmatprep.subr.mxu0 0.0
        %5229 = vmatpush1.xpose.msra.mxu0 0.0
        %5230 = vmatprep.subr.mxu0 0.0
        %5231 = vmatpush1.xpose.msra.mxu0 0.0
        %5232 = vmatprep.subr.mxu0 0.0
        %5233 = vmatpush1.xpose.msra.mxu0 0.0
        %5234 = vmatprep.subr.mxu0 0.0
        %5235 = vmatpush1.xpose.msra.mxu0 0.0
        %5236 = vmatprep.subr.mxu0 0.0
        %5237 = vmatpush1.xpose.msra.mxu0 0.0
        %5238 = vmatprep.subr.mxu0 0.0
        %5239 = vmatpush1.xpose.msra.mxu0 0.0
        %5240 = vmatprep.subr.mxu0 0.0
        %5241 = vmatpush1.xpose.msra.mxu0 0.0
        %5242 = vmatprep.subr.mxu0 0.0
        %5243 = vmatpush1.xpose.msra.mxu0 0.0
        %5244 = vmatprep.mubr.f32.mxu0 0.0
        %v5245 = vand.u32 %v5022, 4294901760
        %v5246 = vsub.f32 %v5022, %v5245
        %5247 = vmatmul.mubr.f32.gmra.mrb[0].mxu0 %v5246
        %v5248 = vpop.f32.mrb[0].mxu0
        %v5249 = vadd.f32 %v5175, %v5248
        %v5250 = vpop.f32.mrb[0].mxu0
        %5251 = vdwg.mxu0
        %5252 = vmatprep.subr.mxu0 0.0
        %v5253 = vand.u32 %v5024, 4294901760
        %5254 = vmatpush1.xpose.msra.mxu0 %v5253
        %5255 = vmatprep.subr.mxu0 0.0
        %5256 = vmatpush1.xpose.msra.mxu0 0.0
        %5257 = vmatprep.subr.mxu0 0.0
        %5258 = vmatpush1.xpose.msra.mxu0 0.0
        %5259 = vmatprep.subr.mxu0 0.0
        %5260 = vmatpush1.xpose.msra.mxu0 0.0
        %5261 = vmatprep.subr.mxu0 0.0
        %5262 = vmatpush1.xpose.msra.mxu0 0.0
        %5263 = vmatprep.subr.mxu0 0.0
        %5264 = vmatpush1.xpose.msra.mxu0 0.0
        %5265 = vmatprep.subr.mxu0 0.0
        %5266 = vmatpush1.xpose.msra.mxu0 0.0
        %5267 = vmatprep.subr.mxu0 0.0
        %5268 = vmatpush1.xpose.msra.mxu0 0.0
        %5269 = vmatprep.subr.mxu0 0.0
        %5270 = vmatpush1.xpose.msra.mxu0 0.0
        %5271 = vmatprep.subr.mxu0 0.0
        %5272 = vmatpush1.xpose.msra.mxu0 0.0
        %5273 = vmatprep.subr.mxu0 0.0
        %5274 = vmatpush1.xpose.msra.mxu0 0.0
        %5275 = vmatprep.subr.mxu0 0.0
        %5276 = vmatpush1.xpose.msra.mxu0 0.0
        %5277 = vmatprep.subr.mxu0 0.0
        %5278 = vmatpush1.xpose.msra.mxu0 0.0
        %5279 = vmatprep.subr.mxu0 0.0
        %5280 = vmatpush1.xpose.msra.mxu0 0.0
        %5281 = vmatprep.subr.mxu0 0.0
        %5282 = vmatpush1.xpose.msra.mxu0 0.0
        %5283 = vmatprep.subr.mxu0 0.0
        %5284 = vmatpush1.xpose.msra.mxu0 0.0
        %5285 = vmatprep.subr.mxu0 0.0
        %5286 = vmatpush1.xpose.msra.mxu0 0.0
        %5287 = vmatprep.subr.mxu0 0.0
        %5288 = vmatpush1.xpose.msra.mxu0 0.0
        %5289 = vmatprep.subr.mxu0 0.0
        %5290 = vmatpush1.xpose.msra.mxu0 0.0
        %5291 = vmatprep.subr.mxu0 0.0
        %5292 = vmatpush1.xpose.msra.mxu0 0.0
        %5293 = vmatprep.subr.mxu0 0.0
        %5294 = vmatpush1.xpose.msra.mxu0 0.0
        %5295 = vmatprep.subr.mxu0 0.0
        %5296 = vmatpush1.xpose.msra.mxu0 0.0
        %5297 = vmatprep.subr.mxu0 0.0
        %5298 = vmatpush1.xpose.msra.mxu0 0.0
        %5299 = vmatprep.subr.mxu0 0.0
        %5300 = vmatpush1.xpose.msra.mxu0 0.0
        %5301 = vmatprep.subr.mxu0 0.0
        %5302 = vmatpush1.xpose.msra.mxu0 0.0
        %5303 = vmatprep.subr.mxu0 0.0
        %5304 = vmatpush1.xpose.msra.mxu0 0.0
        %5305 = vmatprep.subr.mxu0 0.0
        %5306 = vmatpush1.xpose.msra.mxu0 0.0
        %5307 = vmatprep.subr.mxu0 0.0
        %5308 = vmatpush1.xpose.msra.mxu0 0.0
        %5309 = vmatprep.subr.mxu0 0.0
        %5310 = vmatpush1.xpose.msra.mxu0 0.0
        %5311 = vmatprep.subr.mxu0 0.0
        %5312 = vmatpush1.xpose.msra.mxu0 0.0
        %5313 = vmatprep.subr.mxu0 0.0
        %5314 = vmatpush1.xpose.msra.mxu0 0.0
        %5315 = vmatprep.subr.mxu0 0.0
        %5316 = vmatpush1.xpose.msra.mxu0 0.0
        %5317 = vmatprep.mubr.f32.mxu0 0.0
        %v5318 = vand.u32 %v5022, 4294901760
        %v5319 = vsub.f32 %v5022, %v5318
        %v5320 = vand.u32 %v5319, 4294901760
        %5321 = vmatmul.mubr.f32.gmra.mrb[0].mxu0 %v5320
        %v5322 = vpop.f32.mrb[0].mxu0
        %v5323 = vadd.f32 %v5249, %v5322
        %v5324 = vpop.f32.mrb[0].mxu0
        %5325 = vdwg.mxu0
        %5326 = vmatprep.subr.mxu0 0.0
        %v5327 = vand.u32 %v5024, 4294901760
        %v5328 = vsub.f32 %v5024, %v5327
        %v5329 = vand.u32 %v5328, 4294901760
        %5330 = vmatpush1.xpose.msra.mxu0 %v5329
        %5331 = vmatprep.subr.mxu0 0.0
        %5332 = vmatpush1.xpose.msra.mxu0 0.0
        %5333 = vmatprep.subr.mxu0 0.0
        %5334 = vmatpush1.xpose.msra.mxu0 0.0
        %5335 = vmatprep.subr.mxu0 0.0
        %5336 = vmatpush1.xpose.msra.mxu0 0.0
        %5337 = vmatprep.subr.mxu0 0.0
        %5338 = vmatpush1.xpose.msra.mxu0 0.0
        %5339 = vmatprep.subr.mxu0 0.0
        %5340 = vmatpush1.xpose.msra.mxu0 0.0
        %5341 = vmatprep.subr.mxu0 0.0
        %5342 = vmatpush1.xpose.msra.mxu0 0.0
        %5343 = vmatprep.subr.mxu0 0.0
        %5344 = vmatpush1.xpose.msra.mxu0 0.0
        %5345 = vmatprep.subr.mxu0 0.0
        %5346 = vmatpush1.xpose.msra.mxu0 0.0
        %5347 = vmatprep.subr.mxu0 0.0
        %5348 = vmatpush1.xpose.msra.mxu0 0.0
        %5349 = vmatprep.subr.mxu0 0.0
        %5350 = vmatpush1.xpose.msra.mxu0 0.0
        %5351 = vmatprep.subr.mxu0 0.0
        %5352 = vmatpush1.xpose.msra.mxu0 0.0
        %5353 = vmatprep.subr.mxu0 0.0
        %5354 = vmatpush1.xpose.msra.mxu0 0.0
        %5355 = vmatprep.subr.mxu0 0.0
        %5356 = vmatpush1.xpose.msra.mxu0 0.0
        %5357 = vmatprep.subr.mxu0 0.0
        %5358 = vmatpush1.xpose.msra.mxu0 0.0
        %5359 = vmatprep.subr.mxu0 0.0
        %5360 = vmatpush1.xpose.msra.mxu0 0.0
        %5361 = vmatprep.subr.mxu0 0.0
        %5362 = vmatpush1.xpose.msra.mxu0 0.0
        %5363 = vmatprep.subr.mxu0 0.0
        %5364 = vmatpush1.xpose.msra.mxu0 0.0
        %5365 = vmatprep.subr.mxu0 0.0
        %5366 = vmatpush1.xpose.msra.mxu0 0.0
        %5367 = vmatprep.subr.mxu0 0.0
        %5368 = vmatpush1.xpose.msra.mxu0 0.0
        %5369 = vmatprep.subr.mxu0 0.0
        %5370 = vmatpush1.xpose.msra.mxu0 0.0
        %5371 = vmatprep.subr.mxu0 0.0
        %5372 = vmatpush1.xpose.msra.mxu0 0.0
        %5373 = vmatprep.subr.mxu0 0.0
        %5374 = vmatpush1.xpose.msra.mxu0 0.0
        %5375 = vmatprep.subr.mxu0 0.0
        %5376 = vmatpush1.xpose.msra.mxu0 0.0
        %5377 = vmatprep.subr.mxu0 0.0
        %5378 = vmatpush1.xpose.msra.mxu0 0.0
        %5379 = vmatprep.subr.mxu0 0.0
        %5380 = vmatpush1.xpose.msra.mxu0 0.0
        %5381 = vmatprep.subr.mxu0 0.0
        %5382 = vmatpush1.xpose.msra.mxu0 0.0
        %5383 = vmatprep.subr.mxu0 0.0
        %5384 = vmatpush1.xpose.msra.mxu0 0.0
        %5385 = vmatprep.subr.mxu0 0.0
        %5386 = vmatpush1.xpose.msra.mxu0 0.0
        %5387 = vmatprep.subr.mxu0 0.0
        %5388 = vmatpush1.xpose.msra.mxu0 0.0
        %5389 = vmatprep.subr.mxu0 0.0
        %5390 = vmatpush1.xpose.msra.mxu0 0.0
        %5391 = vmatprep.subr.mxu0 0.0
        %5392 = vmatpush1.xpose.msra.mxu0 0.0
        %5393 = vmatprep.mubr.f32.mxu0 0.0
        %v5394 = vand.u32 %v5022, 4294901760
        %5395 = vmatmul.mubr.f32.gmra.mrb[0].mxu0 %v5394
        %v5396 = vpop.f32.mrb[0].mxu0
        %v5397 = vadd.f32 %v5323, %v5396
        %v5398 = vpop.f32.mrb[0].mxu0
        %5399 = vdwg.mxu0
        %5400 = vmatprep.subr.mxu0 0.0
        %v5401 = vand.u32 %v5024, 4294901760
        %5402 = vmatpush1.xpose.msra.mxu0 %v5401
        %5403 = vmatprep.subr.mxu0 0.0
        %5404 = vmatpush1.xpose.msra.mxu0 0.0
        %5405 = vmatprep.subr.mxu0 0.0
        %5406 = vmatpush1.xpose.msra.mxu0 0.0
        %5407 = vmatprep.subr.mxu0 0.0
        %5408 = vmatpush1.xpose.msra.mxu0 0.0
        %5409 = vmatprep.subr.mxu0 0.0
        %5410 = vmatpush1.xpose.msra.mxu0 0.0
        %5411 = vmatprep.subr.mxu0 0.0
        %5412 = vmatpush1.xpose.msra.mxu0 0.0
        %5413 = vmatprep.subr.mxu0 0.0
        %5414 = vmatpush1.xpose.msra.mxu0 0.0
        %5415 = vmatprep.subr.mxu0 0.0
        %5416 = vmatpush1.xpose.msra.mxu0 0.0
        %5417 = vmatprep.subr.mxu0 0.0
        %5418 = vmatpush1.xpose.msra.mxu0 0.0
        %5419 = vmatprep.subr.mxu0 0.0
        %5420 = vmatpush1.xpose.msra.mxu0 0.0
        %5421 = vmatprep.subr.mxu0 0.0
        %5422 = vmatpush1.xpose.msra.mxu0 0.0
        %5423 = vmatprep.subr.mxu0 0.0
        %5424 = vmatpush1.xpose.msra.mxu0 0.0
        %5425 = vmatprep.subr.mxu0 0.0
        %5426 = vmatpush1.xpose.msra.mxu0 0.0
        %5427 = vmatprep.subr.mxu0 0.0
        %5428 = vmatpush1.xpose.msra.mxu0 0.0
        %5429 = vmatprep.subr.mxu0 0.0
        %5430 = vmatpush1.xpose.msra.mxu0 0.0
        %5431 = vmatprep.subr.mxu0 0.0
        %5432 = vmatpush1.xpose.msra.mxu0 0.0
        %5433 = vmatprep.subr.mxu0 0.0
        %5434 = vmatpush1.xpose.msra.mxu0 0.0
        %5435 = vmatprep.subr.mxu0 0.0
        %5436 = vmatpush1.xpose.msra.mxu0 0.0
        %5437 = vmatprep.subr.mxu0 0.0
        %5438 = vmatpush1.xpose.msra.mxu0 0.0
        %5439 = vmatprep.subr.mxu0 0.0
        %5440 = vmatpush1.xpose.msra.mxu0 0.0
        %5441 = vmatprep.subr.mxu0 0.0
        %5442 = vmatpush1.xpose.msra.mxu0 0.0
        %5443 = vmatprep.subr.mxu0 0.0
        %5444 = vmatpush1.xpose.msra.mxu0 0.0
        %5445 = vmatprep.subr.mxu0 0.0
        %5446 = vmatpush1.xpose.msra.mxu0 0.0
        %5447 = vmatprep.subr.mxu0 0.0
        %5448 = vmatpush1.xpose.msra.mxu0 0.0
        %5449 = vmatprep.subr.mxu0 0.0
        %5450 = vmatpush1.xpose.msra.mxu0 0.0
        %5451 = vmatprep.subr.mxu0 0.0
        %5452 = vmatpush1.xpose.msra.mxu0 0.0
        %5453 = vmatprep.subr.mxu0 0.0
        %5454 = vmatpush1.xpose.msra.mxu0 0.0
        %5455 = vmatprep.subr.mxu0 0.0
        %5456 = vmatpush1.xpose.msra.mxu0 0.0
        %5457 = vmatprep.subr.mxu0 0.0
        %5458 = vmatpush1.xpose.msra.mxu0 0.0
        %5459 = vmatprep.subr.mxu0 0.0
        %5460 = vmatpush1.xpose.msra.mxu0 0.0
        %5461 = vmatprep.subr.mxu0 0.0
        %5462 = vmatpush1.xpose.msra.mxu0 0.0
        %5463 = vmatprep.subr.mxu0 0.0
        %5464 = vmatpush1.xpose.msra.mxu0 0.0
        %5465 = vmatprep.mubr.f32.mxu0 0.0
        %v5466 = vand.u32 %v5022, 4294901760
        %5467 = vmatmul.mubr.f32.gmra.mrb[0].mxu0 %v5466
        %v5468 = vpop.f32.mrb[0].mxu0
        %v5469 = vadd.f32 %v5397, %v5468
        %v5470 = vpop.f32.mrb[0].mxu0
        %5471 = vdwg.mxu0
        %5472 = vrot.lane.b32.xlu0 %v1324, 112
        %v5473 = vpop.permute.xlu0 %5472
        %5474 = vrot.lane.b32.xlu0 %v1324, 80
        %v5475 = vpop.permute.xlu0 %5474
        %v5476 = vsel %vm1335, %v5473, 0
        %v5478 = vsel %vm1335, %v5475, 0
        %5480 = vmatprep.subr.mxu0 0.0
        %v5481 = vand.u32 %v5478, 4294901760
        %5482 = vmatpush1.xpose.msra.mxu0 %v5481
        %5483 = vmatprep.subr.mxu0 0.0
        %5484 = vmatpush1.xpose.msra.mxu0 0.0
        %5485 = vmatprep.subr.mxu0 0.0
        %5486 = vmatpush1.xpose.msra.mxu0 0.0
        %5487 = vmatprep.subr.mxu0 0.0
        %5488 = vmatpush1.xpose.msra.mxu0 0.0
        %5489 = vmatprep.subr.mxu0 0.0
        %5490 = vmatpush1.xpose.msra.mxu0 0.0
        %5491 = vmatprep.subr.mxu0 0.0
        %5492 = vmatpush1.xpose.msra.mxu0 0.0
        %5493 = vmatprep.subr.mxu0 0.0
        %5494 = vmatpush1.xpose.msra.mxu0 0.0
        %5495 = vmatprep.subr.mxu0 0.0
        %5496 = vmatpush1.xpose.msra.mxu0 0.0
        %5497 = vmatprep.subr.mxu0 0.0
        %5498 = vmatpush1.xpose.msra.mxu0 0.0
        %5499 = vmatprep.subr.mxu0 0.0
        %5500 = vmatpush1.xpose.msra.mxu0 0.0
        %5501 = vmatprep.subr.mxu0 0.0
        %5502 = vmatpush1.xpose.msra.mxu0 0.0
        %5503 = vmatprep.subr.mxu0 0.0
        %5504 = vmatpush1.xpose.msra.mxu0 0.0
        %5505 = vmatprep.subr.mxu0 0.0
        %5506 = vmatpush1.xpose.msra.mxu0 0.0
        %5507 = vmatprep.subr.mxu0 0.0
        %5508 = vmatpush1.xpose.msra.mxu0 0.0
        %5509 = vmatprep.subr.mxu0 0.0
        %5510 = vmatpush1.xpose.msra.mxu0 0.0
        %5511 = vmatprep.subr.mxu0 0.0
        %5512 = vmatpush1.xpose.msra.mxu0 0.0
        %5513 = vmatprep.subr.mxu0 0.0
        %5514 = vmatpush1.xpose.msra.mxu0 0.0
        %5515 = vmatprep.subr.mxu0 0.0
        %5516 = vmatpush1.xpose.msra.mxu0 0.0
        %5517 = vmatprep.subr.mxu0 0.0
        %5518 = vmatpush1.xpose.msra.mxu0 0.0
        %5519 = vmatprep.subr.mxu0 0.0
        %5520 = vmatpush1.xpose.msra.mxu0 0.0
        %5521 = vmatprep.subr.mxu0 0.0
        %5522 = vmatpush1.xpose.msra.mxu0 0.0
        %5523 = vmatprep.subr.mxu0 0.0
        %5524 = vmatpush1.xpose.msra.mxu0 0.0
        %5525 = vmatprep.subr.mxu0 0.0
        %5526 = vmatpush1.xpose.msra.mxu0 0.0
        %5527 = vmatprep.subr.mxu0 0.0
        %5528 = vmatpush1.xpose.msra.mxu0 0.0
        %5529 = vmatprep.subr.mxu0 0.0
        %5530 = vmatpush1.xpose.msra.mxu0 0.0
        %5531 = vmatprep.subr.mxu0 0.0
        %5532 = vmatpush1.xpose.msra.mxu0 0.0
        %5533 = vmatprep.subr.mxu0 0.0
        %5534 = vmatpush1.xpose.msra.mxu0 0.0
        %5535 = vmatprep.subr.mxu0 0.0
        %5536 = vmatpush1.xpose.msra.mxu0 0.0
        %5537 = vmatprep.subr.mxu0 0.0
        %5538 = vmatpush1.xpose.msra.mxu0 0.0
        %5539 = vmatprep.subr.mxu0 0.0
        %5540 = vmatpush1.xpose.msra.mxu0 0.0
        %5541 = vmatprep.subr.mxu0 0.0
        %5542 = vmatpush1.xpose.msra.mxu0 0.0
        %5543 = vmatprep.subr.mxu0 0.0
        %5544 = vmatpush1.xpose.msra.mxu0 0.0
        %5545 = vmatprep.mubr.f32.mxu0 0.0
        %v5546 = vand.u32 %v5476, 4294901760
        %v5547 = vsub.f32 %v5476, %v5546
        %v5548 = vand.u32 %v5547, 4294901760
        %v5549 = vsub.f32 %v5547, %v5548
        %v5550 = vand.u32 %v5549, 4294901760
        %5551 = vmatmul.mubr.f32.gmra.mrb[0].mxu0 %v5550
        %v5552 = vpop.f32.mrb[0].mxu0
        %v5553 = vadd.f32 0.0, %v5552
        %v5554 = vpop.f32.mrb[0].mxu0
        %5555 = vdwg.mxu0
        %5556 = vmatprep.subr.mxu0 0.0
        %v5557 = vand.u32 %v5478, 4294901760
        %v5558 = vsub.f32 %v5478, %v5557
        %v5559 = vand.u32 %v5558, 4294901760
        %v5560 = vsub.f32 %v5558, %v5559
        %v5561 = vand.u32 %v5560, 4294901760
        %5562 = vmatpush1.xpose.msra.mxu0 %v5561
        %5563 = vmatprep.subr.mxu0 0.0
        %5564 = vmatpush1.xpose.msra.mxu0 0.0
        %5565 = vmatprep.subr.mxu0 0.0
        %5566 = vmatpush1.xpose.msra.mxu0 0.0
        %5567 = vmatprep.subr.mxu0 0.0
        %5568 = vmatpush1.xpose.msra.mxu0 0.0
        %5569 = vmatprep.subr.mxu0 0.0
        %5570 = vmatpush1.xpose.msra.mxu0 0.0
        %5571 = vmatprep.subr.mxu0 0.0
        %5572 = vmatpush1.xpose.msra.mxu0 0.0
        %5573 = vmatprep.subr.mxu0 0.0
        %5574 = vmatpush1.xpose.msra.mxu0 0.0
        %5575 = vmatprep.subr.mxu0 0.0
        %5576 = vmatpush1.xpose.msra.mxu0 0.0
        %5577 = vmatprep.subr.mxu0 0.0
        %5578 = vmatpush1.xpose.msra.mxu0 0.0
        %5579 = vmatprep.subr.mxu0 0.0
        %5580 = vmatpush1.xpose.msra.mxu0 0.0
        %5581 = vmatprep.subr.mxu0 0.0
        %5582 = vmatpush1.xpose.msra.mxu0 0.0
        %5583 = vmatprep.subr.mxu0 0.0
        %5584 = vmatpush1.xpose.msra.mxu0 0.0
        %5585 = vmatprep.subr.mxu0 0.0
        %5586 = vmatpush1.xpose.msra.mxu0 0.0
        %5587 = vmatprep.subr.mxu0 0.0
        %5588 = vmatpush1.xpose.msra.mxu0 0.0
        %5589 = vmatprep.subr.mxu0 0.0
        %5590 = vmatpush1.xpose.msra.mxu0 0.0
        %5591 = vmatprep.subr.mxu0 0.0
        %5592 = vmatpush1.xpose.msra.mxu0 0.0
        %5593 = vmatprep.subr.mxu0 0.0
        %5594 = vmatpush1.xpose.msra.mxu0 0.0
        %5595 = vmatprep.subr.mxu0 0.0
        %5596 = vmatpush1.xpose.msra.mxu0 0.0
        %5597 = vmatprep.subr.mxu0 0.0
        %5598 = vmatpush1.xpose.msra.mxu0 0.0
        %5599 = vmatprep.subr.mxu0 0.0
        %5600 = vmatpush1.xpose.msra.mxu0 0.0
        %5601 = vmatprep.subr.mxu0 0.0
        %5602 = vmatpush1.xpose.msra.mxu0 0.0
        %5603 = vmatprep.subr.mxu0 0.0
        %5604 = vmatpush1.xpose.msra.mxu0 0.0
        %5605 = vmatprep.subr.mxu0 0.0
        %5606 = vmatpush1.xpose.msra.mxu0 0.0
        %5607 = vmatprep.subr.mxu0 0.0
        %5608 = vmatpush1.xpose.msra.mxu0 0.0
        %5609 = vmatprep.subr.mxu0 0.0
        %5610 = vmatpush1.xpose.msra.mxu0 0.0
        %5611 = vmatprep.subr.mxu0 0.0
        %5612 = vmatpush1.xpose.msra.mxu0 0.0
        %5613 = vmatprep.subr.mxu0 0.0
        %5614 = vmatpush1.xpose.msra.mxu0 0.0
        %5615 = vmatprep.subr.mxu0 0.0
        %5616 = vmatpush1.xpose.msra.mxu0 0.0
        %5617 = vmatprep.subr.mxu0 0.0
        %5618 = vmatpush1.xpose.msra.mxu0 0.0
        %5619 = vmatprep.subr.mxu0 0.0
        %5620 = vmatpush1.xpose.msra.mxu0 0.0
        %5621 = vmatprep.subr.mxu0 0.0
        %5622 = vmatpush1.xpose.msra.mxu0 0.0
        %5623 = vmatprep.subr.mxu0 0.0
        %5624 = vmatpush1.xpose.msra.mxu0 0.0
        %5625 = vmatprep.mubr.f32.mxu0 0.0
        %v5626 = vand.u32 %v5476, 4294901760
        %5627 = vmatmul.mubr.f32.gmra.mrb[0].mxu0 %v5626
        %v5628 = vpop.f32.mrb[0].mxu0
        %v5629 = vadd.f32 %v5553, %v5628
        %v5630 = vpop.f32.mrb[0].mxu0
        %5631 = vdwg.mxu0
        %5632 = vmatprep.subr.mxu0 0.0
        %v5633 = vand.u32 %v5478, 4294901760
        %v5634 = vsub.f32 %v5478, %v5633
        %5635 = vmatpush1.xpose.msra.mxu0 %v5634
        %5636 = vmatprep.subr.mxu0 0.0
        %5637 = vmatpush1.xpose.msra.mxu0 0.0
        %5638 = vmatprep.subr.mxu0 0.0
        %5639 = vmatpush1.xpose.msra.mxu0 0.0
        %5640 = vmatprep.subr.mxu0 0.0
        %5641 = vmatpush1.xpose.msra.mxu0 0.0
        %5642 = vmatprep.subr.mxu0 0.0
        %5643 = vmatpush1.xpose.msra.mxu0 0.0
        %5644 = vmatprep.subr.mxu0 0.0
        %5645 = vmatpush1.xpose.msra.mxu0 0.0
        %5646 = vmatprep.subr.mxu0 0.0
        %5647 = vmatpush1.xpose.msra.mxu0 0.0
        %5648 = vmatprep.subr.mxu0 0.0
        %5649 = vmatpush1.xpose.msra.mxu0 0.0
        %5650 = vmatprep.subr.mxu0 0.0
        %5651 = vmatpush1.xpose.msra.mxu0 0.0
        %5652 = vmatprep.subr.mxu0 0.0
        %5653 = vmatpush1.xpose.msra.mxu0 0.0
        %5654 = vmatprep.subr.mxu0 0.0
        %5655 = vmatpush1.xpose.msra.mxu0 0.0
        %5656 = vmatprep.subr.mxu0 0.0
        %5657 = vmatpush1.xpose.msra.mxu0 0.0
        %5658 = vmatprep.subr.mxu0 0.0
        %5659 = vmatpush1.xpose.msra.mxu0 0.0
        %5660 = vmatprep.subr.mxu0 0.0
        %5661 = vmatpush1.xpose.msra.mxu0 0.0
        %5662 = vmatprep.subr.mxu0 0.0
        %5663 = vmatpush1.xpose.msra.mxu0 0.0
        %5664 = vmatprep.subr.mxu0 0.0
        %5665 = vmatpush1.xpose.msra.mxu0 0.0
        %5666 = vmatprep.subr.mxu0 0.0
        %5667 = vmatpush1.xpose.msra.mxu0 0.0
        %5668 = vmatprep.subr.mxu0 0.0
        %5669 = vmatpush1.xpose.msra.mxu0 0.0
        %5670 = vmatprep.subr.mxu0 0.0
        %5671 = vmatpush1.xpose.msra.mxu0 0.0
        %5672 = vmatprep.subr.mxu0 0.0
        %5673 = vmatpush1.xpose.msra.mxu0 0.0
        %5674 = vmatprep.subr.mxu0 0.0
        %5675 = vmatpush1.xpose.msra.mxu0 0.0
        %5676 = vmatprep.subr.mxu0 0.0
        %5677 = vmatpush1.xpose.msra.mxu0 0.0
        %5678 = vmatprep.subr.mxu0 0.0
        %5679 = vmatpush1.xpose.msra.mxu0 0.0
        %5680 = vmatprep.subr.mxu0 0.0
        %5681 = vmatpush1.xpose.msra.mxu0 0.0
        %5682 = vmatprep.subr.mxu0 0.0
        %5683 = vmatpush1.xpose.msra.mxu0 0.0
        %5684 = vmatprep.subr.mxu0 0.0
        %5685 = vmatpush1.xpose.msra.mxu0 0.0
        %5686 = vmatprep.subr.mxu0 0.0
        %5687 = vmatpush1.xpose.msra.mxu0 0.0
        %5688 = vmatprep.subr.mxu0 0.0
        %5689 = vmatpush1.xpose.msra.mxu0 0.0
        %5690 = vmatprep.subr.mxu0 0.0
        %5691 = vmatpush1.xpose.msra.mxu0 0.0
        %5692 = vmatprep.subr.mxu0 0.0
        %5693 = vmatpush1.xpose.msra.mxu0 0.0
        %5694 = vmatprep.subr.mxu0 0.0
        %5695 = vmatpush1.xpose.msra.mxu0 0.0
        %5696 = vmatprep.subr.mxu0 0.0
        %5697 = vmatpush1.xpose.msra.mxu0 0.0
        %5698 = vmatprep.mubr.f32.mxu0 0.0
        %v5699 = vand.u32 %v5476, 4294901760
        %v5700 = vsub.f32 %v5476, %v5699
        %5701 = vmatmul.mubr.f32.gmra.mrb[0].mxu0 %v5700
        %v5702 = vpop.f32.mrb[0].mxu0
        %v5703 = vadd.f32 %v5629, %v5702
        %v5704 = vpop.f32.mrb[0].mxu0
        %5705 = vdwg.mxu0
        %5706 = vmatprep.subr.mxu0 0.0
        %v5707 = vand.u32 %v5478, 4294901760
        %5708 = vmatpush1.xpose.msra.mxu0 %v5707
        %5709 = vmatprep.subr.mxu0 0.0
        %5710 = vmatpush1.xpose.msra.mxu0 0.0
        %5711 = vmatprep.subr.mxu0 0.0
        %5712 = vmatpush1.xpose.msra.mxu0 0.0
        %5713 = vmatprep.subr.mxu0 0.0
        %5714 = vmatpush1.xpose.msra.mxu0 0.0
        %5715 = vmatprep.subr.mxu0 0.0
        %5716 = vmatpush1.xpose.msra.mxu0 0.0
        %5717 = vmatprep.subr.mxu0 0.0
        %5718 = vmatpush1.xpose.msra.mxu0 0.0
        %5719 = vmatprep.subr.mxu0 0.0
        %5720 = vmatpush1.xpose.msra.mxu0 0.0
        %5721 = vmatprep.subr.mxu0 0.0
        %5722 = vmatpush1.xpose.msra.mxu0 0.0
        %5723 = vmatprep.subr.mxu0 0.0
        %5724 = vmatpush1.xpose.msra.mxu0 0.0
        %5725 = vmatprep.subr.mxu0 0.0
        %5726 = vmatpush1.xpose.msra.mxu0 0.0
        %5727 = vmatprep.subr.mxu0 0.0
        %5728 = vmatpush1.xpose.msra.mxu0 0.0
        %5729 = vmatprep.subr.mxu0 0.0
        %5730 = vmatpush1.xpose.msra.mxu0 0.0
        %5731 = vmatprep.subr.mxu0 0.0
        %5732 = vmatpush1.xpose.msra.mxu0 0.0
        %5733 = vmatprep.subr.mxu0 0.0
        %5734 = vmatpush1.xpose.msra.mxu0 0.0
        %5735 = vmatprep.subr.mxu0 0.0
        %5736 = vmatpush1.xpose.msra.mxu0 0.0
        %5737 = vmatprep.subr.mxu0 0.0
        %5738 = vmatpush1.xpose.msra.mxu0 0.0
        %5739 = vmatprep.subr.mxu0 0.0
        %5740 = vmatpush1.xpose.msra.mxu0 0.0
        %5741 = vmatprep.subr.mxu0 0.0
        %5742 = vmatpush1.xpose.msra.mxu0 0.0
        %5743 = vmatprep.subr.mxu0 0.0
        %5744 = vmatpush1.xpose.msra.mxu0 0.0
        %5745 = vmatprep.subr.mxu0 0.0
        %5746 = vmatpush1.xpose.msra.mxu0 0.0
        %5747 = vmatprep.subr.mxu0 0.0
        %5748 = vmatpush1.xpose.msra.mxu0 0.0
        %5749 = vmatprep.subr.mxu0 0.0
        %5750 = vmatpush1.xpose.msra.mxu0 0.0
        %5751 = vmatprep.subr.mxu0 0.0
        %5752 = vmatpush1.xpose.msra.mxu0 0.0
        %5753 = vmatprep.subr.mxu0 0.0
        %5754 = vmatpush1.xpose.msra.mxu0 0.0
        %5755 = vmatprep.subr.mxu0 0.0
        %5756 = vmatpush1.xpose.msra.mxu0 0.0
        %5757 = vmatprep.subr.mxu0 0.0
        %5758 = vmatpush1.xpose.msra.mxu0 0.0
        %5759 = vmatprep.subr.mxu0 0.0
        %5760 = vmatpush1.xpose.msra.mxu0 0.0
        %5761 = vmatprep.subr.mxu0 0.0
        %5762 = vmatpush1.xpose.msra.mxu0 0.0
        %5763 = vmatprep.subr.mxu0 0.0
        %5764 = vmatpush1.xpose.msra.mxu0 0.0
        %5765 = vmatprep.subr.mxu0 0.0
        %5766 = vmatpush1.xpose.msra.mxu0 0.0
        %5767 = vmatprep.subr.mxu0 0.0
        %5768 = vmatpush1.xpose.msra.mxu0 0.0
        %5769 = vmatprep.subr.mxu0 0.0
        %5770 = vmatpush1.xpose.msra.mxu0 0.0
        %5771 = vmatprep.mubr.f32.mxu0 0.0
        %v5772 = vand.u32 %v5476, 4294901760
        %v5773 = vsub.f32 %v5476, %v5772
        %v5774 = vand.u32 %v5773, 4294901760
        %5775 = vmatmul.mubr.f32.gmra.mrb[0].mxu0 %v5774
        %v5776 = vpop.f32.mrb[0].mxu0
        %v5777 = vadd.f32 %v5703, %v5776
        %v5778 = vpop.f32.mrb[0].mxu0
        %5779 = vdwg.mxu0
        %5780 = vmatprep.subr.mxu0 0.0
        %v5781 = vand.u32 %v5478, 4294901760
        %v5782 = vsub.f32 %v5478, %v5781
        %v5783 = vand.u32 %v5782, 4294901760
        %5784 = vmatpush1.xpose.msra.mxu0 %v5783
        %5785 = vmatprep.subr.mxu0 0.0
        %5786 = vmatpush1.xpose.msra.mxu0 0.0
        %5787 = vmatprep.subr.mxu0 0.0
        %5788 = vmatpush1.xpose.msra.mxu0 0.0
        %5789 = vmatprep.subr.mxu0 0.0
        %5790 = vmatpush1.xpose.msra.mxu0 0.0
        %5791 = vmatprep.subr.mxu0 0.0
        %5792 = vmatpush1.xpose.msra.mxu0 0.0
        %5793 = vmatprep.subr.mxu0 0.0
        %5794 = vmatpush1.xpose.msra.mxu0 0.0
        %5795 = vmatprep.subr.mxu0 0.0
        %5796 = vmatpush1.xpose.msra.mxu0 0.0
        %5797 = vmatprep.subr.mxu0 0.0
        %5798 = vmatpush1.xpose.msra.mxu0 0.0
        %5799 = vmatprep.subr.mxu0 0.0
        %5800 = vmatpush1.xpose.msra.mxu0 0.0
        %5801 = vmatprep.subr.mxu0 0.0
        %5802 = vmatpush1.xpose.msra.mxu0 0.0
        %5803 = vmatprep.subr.mxu0 0.0
        %5804 = vmatpush1.xpose.msra.mxu0 0.0
        %5805 = vmatprep.subr.mxu0 0.0
        %5806 = vmatpush1.xpose.msra.mxu0 0.0
        %5807 = vmatprep.subr.mxu0 0.0
        %5808 = vmatpush1.xpose.msra.mxu0 0.0
        %5809 = vmatprep.subr.mxu0 0.0
        %5810 = vmatpush1.xpose.msra.mxu0 0.0
        %5811 = vmatprep.subr.mxu0 0.0
        %5812 = vmatpush1.xpose.msra.mxu0 0.0
        %5813 = vmatprep.subr.mxu0 0.0
        %5814 = vmatpush1.xpose.msra.mxu0 0.0
        %5815 = vmatprep.subr.mxu0 0.0
        %5816 = vmatpush1.xpose.msra.mxu0 0.0
        %5817 = vmatprep.subr.mxu0 0.0
        %5818 = vmatpush1.xpose.msra.mxu0 0.0
        %5819 = vmatprep.subr.mxu0 0.0
        %5820 = vmatpush1.xpose.msra.mxu0 0.0
        %5821 = vmatprep.subr.mxu0 0.0
        %5822 = vmatpush1.xpose.msra.mxu0 0.0
        %5823 = vmatprep.subr.mxu0 0.0
        %5824 = vmatpush1.xpose.msra.mxu0 0.0
        %5825 = vmatprep.subr.mxu0 0.0
        %5826 = vmatpush1.xpose.msra.mxu0 0.0
        %5827 = vmatprep.subr.mxu0 0.0
        %5828 = vmatpush1.xpose.msra.mxu0 0.0
        %5829 = vmatprep.subr.mxu0 0.0
        %5830 = vmatpush1.xpose.msra.mxu0 0.0
        %5831 = vmatprep.subr.mxu0 0.0
        %5832 = vmatpush1.xpose.msra.mxu0 0.0
        %5833 = vmatprep.subr.mxu0 0.0
        %5834 = vmatpush1.xpose.msra.mxu0 0.0
        %5835 = vmatprep.subr.mxu0 0.0
        %5836 = vmatpush1.xpose.msra.mxu0 0.0
        %5837 = vmatprep.subr.mxu0 0.0
        %5838 = vmatpush1.xpose.msra.mxu0 0.0
        %5839 = vmatprep.subr.mxu0 0.0
        %5840 = vmatpush1.xpose.msra.mxu0 0.0
        %5841 = vmatprep.subr.mxu0 0.0
        %5842 = vmatpush1.xpose.msra.mxu0 0.0
        %5843 = vmatprep.subr.mxu0 0.0
        %5844 = vmatpush1.xpose.msra.mxu0 0.0
        %5845 = vmatprep.subr.mxu0 0.0
        %5846 = vmatpush1.xpose.msra.mxu0 0.0
        %5847 = vmatprep.mubr.f32.mxu0 0.0
        %v5848 = vand.u32 %v5476, 4294901760
        %5849 = vmatmul.mubr.f32.gmra.mrb[0].mxu0 %v5848
        %v5850 = vpop.f32.mrb[0].mxu0
        %v5851 = vadd.f32 %v5777, %v5850
        %v5852 = vpop.f32.mrb[0].mxu0
        %5853 = vdwg.mxu0
        %5854 = vmatprep.subr.mxu0 0.0
        %v5855 = vand.u32 %v5478, 4294901760
        %5856 = vmatpush1.xpose.msra.mxu0 %v5855
        %5857 = vmatprep.subr.mxu0 0.0
        %5858 = vmatpush1.xpose.msra.mxu0 0.0
        %5859 = vmatprep.subr.mxu0 0.0
        %5860 = vmatpush1.xpose.msra.mxu0 0.0
        %5861 = vmatprep.subr.mxu0 0.0
        %5862 = vmatpush1.xpose.msra.mxu0 0.0
        %5863 = vmatprep.subr.mxu0 0.0
        %5864 = vmatpush1.xpose.msra.mxu0 0.0
        %5865 = vmatprep.subr.mxu0 0.0
        %5866 = vmatpush1.xpose.msra.mxu0 0.0
        %5867 = vmatprep.subr.mxu0 0.0
        %5868 = vmatpush1.xpose.msra.mxu0 0.0
        %5869 = vmatprep.subr.mxu0 0.0
        %5870 = vmatpush1.xpose.msra.mxu0 0.0
        %5871 = vmatprep.subr.mxu0 0.0
        %5872 = vmatpush1.xpose.msra.mxu0 0.0
        %5873 = vmatprep.subr.mxu0 0.0
        %5874 = vmatpush1.xpose.msra.mxu0 0.0
        %5875 = vmatprep.subr.mxu0 0.0
        %5876 = vmatpush1.xpose.msra.mxu0 0.0
        %5877 = vmatprep.subr.mxu0 0.0
        %5878 = vmatpush1.xpose.msra.mxu0 0.0
        %5879 = vmatprep.subr.mxu0 0.0
        %5880 = vmatpush1.xpose.msra.mxu0 0.0
        %5881 = vmatprep.subr.mxu0 0.0
        %5882 = vmatpush1.xpose.msra.mxu0 0.0
        %5883 = vmatprep.subr.mxu0 0.0
        %5884 = vmatpush1.xpose.msra.mxu0 0.0
        %5885 = vmatprep.subr.mxu0 0.0
        %5886 = vmatpush1.xpose.msra.mxu0 0.0
        %5887 = vmatprep.subr.mxu0 0.0
        %5888 = vmatpush1.xpose.msra.mxu0 0.0
        %5889 = vmatprep.subr.mxu0 0.0
        %5890 = vmatpush1.xpose.msra.mxu0 0.0
        %5891 = vmatprep.subr.mxu0 0.0
        %5892 = vmatpush1.xpose.msra.mxu0 0.0
        %5893 = vmatprep.subr.mxu0 0.0
        %5894 = vmatpush1.xpose.msra.mxu0 0.0
        %5895 = vmatprep.subr.mxu0 0.0
        %5896 = vmatpush1.xpose.msra.mxu0 0.0
        %5897 = vmatprep.subr.mxu0 0.0
        %5898 = vmatpush1.xpose.msra.mxu0 0.0
        %5899 = vmatprep.subr.mxu0 0.0
        %5900 = vmatpush1.xpose.msra.mxu0 0.0
        %5901 = vmatprep.subr.mxu0 0.0
        %5902 = vmatpush1.xpose.msra.mxu0 0.0
        %5903 = vmatprep.subr.mxu0 0.0
        %5904 = vmatpush1.xpose.msra.mxu0 0.0
        %5905 = vmatprep.subr.mxu0 0.0
        %5906 = vmatpush1.xpose.msra.mxu0 0.0
        %5907 = vmatprep.subr.mxu0 0.0
        %5908 = vmatpush1.xpose.msra.mxu0 0.0
        %5909 = vmatprep.subr.mxu0 0.0
        %5910 = vmatpush1.xpose.msra.mxu0 0.0
        %5911 = vmatprep.subr.mxu0 0.0
        %5912 = vmatpush1.xpose.msra.mxu0 0.0
        %5913 = vmatprep.subr.mxu0 0.0
        %5914 = vmatpush1.xpose.msra.mxu0 0.0
        %5915 = vmatprep.subr.mxu0 0.0
        %5916 = vmatpush1.xpose.msra.mxu0 0.0
        %5917 = vmatprep.subr.mxu0 0.0
        %5918 = vmatpush1.xpose.msra.mxu0 0.0
        %5919 = vmatprep.mubr.f32.mxu0 0.0
        %v5920 = vand.u32 %v5476, 4294901760
        %5921 = vmatmul.mubr.f32.gmra.mrb[0].mxu0 %v5920
        %v5922 = vpop.f32.mrb[0].mxu0
        %v5923 = vadd.f32 %v5851, %v5922
        %v5924 = vpop.f32.mrb[0].mxu0
        %5925 = vdwg.mxu0
        %v5926 = vsel %vm2240, %v5469, -1e+30
        %v5927 = vsel %vm2240, %v5923, -1e+30
        %v5928 = vsel %vm1335, %v5926, -inf
        %5929 = vmax.xlane.f32.xlu0 %v5928
        %v5930 = vpop.xlane.xlu0 %5929
        %v5931 = vsel %vm1335, %v5927, -inf
        %5932 = vmax.xlane.f32.xlu0 %v5931
        %v5933 = vpop.xlane.xlu0 %5932
        %v5934 = vsub.f32 %v5926, %v5930
        %v5935 = vsub.f32 %v5927, %v5933
        %v5936 = vmul.f32 %v5934, 1.442695
        %v5937 = vpow.pop %v5936
        %v5938 = vmul.f32 %v5935, 1.442695
        %v5939 = vpow.pop %v5938
        %v5940 = vsel %vm1335, %v5937, 0.0
        %5941 = vadd.xlane.f32.xlu0 %v5940
        %v5942 = vpop.xlane.xlu0 %5941
        %v5943 = vsel %vm1335, %v5939, 0.0
        %5944 = vadd.xlane.f32.xlu0 %v5943
        %v5945 = vpop.xlane.xlu0 %5944
        %v5946 = vrcp.pop %v5942
        %v5947 = vrcp.pop %v5945
        %v5948 = vmul.f32 %v5937, %v5946
        %v5949 = vmul.f32 %v5939, %v5947
        %5950 = vrot.lane.b32.xlu0 %v1318, 48
        %v5951 = vpop.permute.xlu0 %5950
        %v5954 = vsel %vm1335, %v5948, 0
        %5956 = vmatprep.subr.mxu0 0.0
        %v5957 = vand.u32 %v5951, 4294901760
        %5958 = vmatpush1.msra.mxu0 %v5957
        %5959 = vmatprep.subr.mxu0 0.0
        %5960 = vmatpush1.msra.mxu0 0.0
        %5961 = vmatprep.subr.mxu0 0.0
        %5962 = vmatpush1.msra.mxu0 0.0
        %5963 = vmatprep.subr.mxu0 0.0
        %5964 = vmatpush1.msra.mxu0 0.0
        %5965 = vmatprep.subr.mxu0 0.0
        %5966 = vmatpush1.msra.mxu0 0.0
        %5967 = vmatprep.subr.mxu0 0.0
        %5968 = vmatpush1.msra.mxu0 0.0
        %5969 = vmatprep.subr.mxu0 0.0
        %5970 = vmatpush1.msra.mxu0 0.0
        %5971 = vmatprep.subr.mxu0 0.0
        %5972 = vmatpush1.msra.mxu0 0.0
        %5973 = vmatprep.subr.mxu0 0.0
        %5974 = vmatpush1.msra.mxu0 0.0
        %5975 = vmatprep.subr.mxu0 0.0
        %5976 = vmatpush1.msra.mxu0 0.0
        %5977 = vmatprep.subr.mxu0 0.0
        %5978 = vmatpush1.msra.mxu0 0.0
        %5979 = vmatprep.subr.mxu0 0.0
        %5980 = vmatpush1.msra.mxu0 0.0
        %5981 = vmatprep.subr.mxu0 0.0
        %5982 = vmatpush1.msra.mxu0 0.0
        %5983 = vmatprep.subr.mxu0 0.0
        %5984 = vmatpush1.msra.mxu0 0.0
        %5985 = vmatprep.subr.mxu0 0.0
        %5986 = vmatpush1.msra.mxu0 0.0
        %5987 = vmatprep.subr.mxu0 0.0
        %5988 = vmatpush1.msra.mxu0 0.0
        %5989 = vmatprep.subr.mxu0 0.0
        %5990 = vmatpush1.msra.mxu0 0.0
        %5991 = vmatprep.subr.mxu0 0.0
        %5992 = vmatpush1.msra.mxu0 0.0
        %5993 = vmatprep.subr.mxu0 0.0
        %5994 = vmatpush1.msra.mxu0 0.0
        %5995 = vmatprep.subr.mxu0 0.0
        %5996 = vmatpush1.msra.mxu0 0.0
        %5997 = vmatprep.subr.mxu0 0.0
        %5998 = vmatpush1.msra.mxu0 0.0
        %5999 = vmatprep.subr.mxu0 0.0
        %6000 = vmatpush1.msra.mxu0 0.0
        %6001 = vmatprep.subr.mxu0 0.0
        %6002 = vmatpush1.msra.mxu0 0.0
        %6003 = vmatprep.subr.mxu0 0.0
        %6004 = vmatpush1.msra.mxu0 0.0
        %6005 = vmatprep.subr.mxu0 0.0
        %6006 = vmatpush1.msra.mxu0 0.0
        %6007 = vmatprep.subr.mxu0 0.0
        %6008 = vmatpush1.msra.mxu0 0.0
        %6009 = vmatprep.subr.mxu0 0.0
        %6010 = vmatpush1.msra.mxu0 0.0
        %6011 = vmatprep.subr.mxu0 0.0
        %6012 = vmatpush1.msra.mxu0 0.0
        %6013 = vmatprep.subr.mxu0 0.0
        %6014 = vmatpush1.msra.mxu0 0.0
        %6015 = vmatprep.subr.mxu0 0.0
        %6016 = vmatpush1.msra.mxu0 0.0
        %6017 = vmatprep.subr.mxu0 0.0
        %6018 = vmatpush1.msra.mxu0 0.0
        %6019 = vmatprep.subr.mxu0 0.0
        %6020 = vmatpush1.msra.mxu0 0.0
        %6021 = vmatprep.mubr.f32.mxu0 0.0
        %v6022 = vand.u32 %v5954, 4294901760
        %v6023 = vsub.f32 %v5954, %v6022
        %v6024 = vand.u32 %v6023, 4294901760
        %v6025 = vsub.f32 %v6023, %v6024
        %v6026 = vand.u32 %v6025, 4294901760
        %6027 = vmatmul.mubr.f32.gmra.mrb[0].mxu0 %v6026
        %v6028 = vpop.f32.mrb[0].mxu0
        %v6029 = vadd.f32 0.0, %v6028
        %v6030 = vpop.f32.mrb[0].mxu0
        %6031 = vdwg.mxu0
        %6032 = vmatprep.subr.mxu0 0.0
        %v6033 = vand.u32 %v5951, 4294901760
        %v6034 = vsub.f32 %v5951, %v6033
        %v6035 = vand.u32 %v6034, 4294901760
        %v6036 = vsub.f32 %v6034, %v6035
        %v6037 = vand.u32 %v6036, 4294901760
        %6038 = vmatpush1.msra.mxu0 %v6037
        %6039 = vmatprep.subr.mxu0 0.0
        %6040 = vmatpush1.msra.mxu0 0.0
        %6041 = vmatprep.subr.mxu0 0.0
        %6042 = vmatpush1.msra.mxu0 0.0
        %6043 = vmatprep.subr.mxu0 0.0
        %6044 = vmatpush1.msra.mxu0 0.0
        %6045 = vmatprep.subr.mxu0 0.0
        %6046 = vmatpush1.msra.mxu0 0.0
        %6047 = vmatprep.subr.mxu0 0.0
        %6048 = vmatpush1.msra.mxu0 0.0
        %6049 = vmatprep.subr.mxu0 0.0
        %6050 = vmatpush1.msra.mxu0 0.0
        %6051 = vmatprep.subr.mxu0 0.0
        %6052 = vmatpush1.msra.mxu0 0.0
        %6053 = vmatprep.subr.mxu0 0.0
        %6054 = vmatpush1.msra.mxu0 0.0
        %6055 = vmatprep.subr.mxu0 0.0
        %6056 = vmatpush1.msra.mxu0 0.0
        %6057 = vmatprep.subr.mxu0 0.0
        %6058 = vmatpush1.msra.mxu0 0.0
        %6059 = vmatprep.subr.mxu0 0.0
        %6060 = vmatpush1.msra.mxu0 0.0
        %6061 = vmatprep.subr.mxu0 0.0
        %6062 = vmatpush1.msra.mxu0 0.0
        %6063 = vmatprep.subr.mxu0 0.0
        %6064 = vmatpush1.msra.mxu0 0.0
        %6065 = vmatprep.subr.mxu0 0.0
        %6066 = vmatpush1.msra.mxu0 0.0
        %6067 = vmatprep.subr.mxu0 0.0
        %6068 = vmatpush1.msra.mxu0 0.0
        %6069 = vmatprep.subr.mxu0 0.0
        %6070 = vmatpush1.msra.mxu0 0.0
        %6071 = vmatprep.subr.mxu0 0.0
        %6072 = vmatpush1.msra.mxu0 0.0
        %6073 = vmatprep.subr.mxu0 0.0
        %6074 = vmatpush1.msra.mxu0 0.0
        %6075 = vmatprep.subr.mxu0 0.0
        %6076 = vmatpush1.msra.mxu0 0.0
        %6077 = vmatprep.subr.mxu0 0.0
        %6078 = vmatpush1.msra.mxu0 0.0
        %6079 = vmatprep.subr.mxu0 0.0
        %6080 = vmatpush1.msra.mxu0 0.0
        %6081 = vmatprep.subr.mxu0 0.0
        %6082 = vmatpush1.msra.mxu0 0.0
        %6083 = vmatprep.subr.mxu0 0.0
        %6084 = vmatpush1.msra.mxu0 0.0
        %6085 = vmatprep.subr.mxu0 0.0
        %6086 = vmatpush1.msra.mxu0 0.0
        %6087 = vmatprep.subr.mxu0 0.0
        %6088 = vmatpush1.msra.mxu0 0.0
        %6089 = vmatprep.subr.mxu0 0.0
        %6090 = vmatpush1.msra.mxu0 0.0
        %6091 = vmatprep.subr.mxu0 0.0
        %6092 = vmatpush1.msra.mxu0 0.0
        %6093 = vmatprep.subr.mxu0 0.0
        %6094 = vmatpush1.msra.mxu0 0.0
        %6095 = vmatprep.subr.mxu0 0.0
        %6096 = vmatpush1.msra.mxu0 0.0
        %6097 = vmatprep.subr.mxu0 0.0
        %6098 = vmatpush1.msra.mxu0 0.0
        %6099 = vmatprep.subr.mxu0 0.0
        %6100 = vmatpush1.msra.mxu0 0.0
        %6101 = vmatprep.mubr.f32.mxu0 0.0
        %v6102 = vand.u32 %v5954, 4294901760
        %6103 = vmatmul.mubr.f32.gmra.mrb[0].mxu0 %v6102
        %v6104 = vpop.f32.mrb[0].mxu0
        %v6105 = vadd.f32 %v6029, %v6104
        %v6106 = vpop.f32.mrb[0].mxu0
        %6107 = vdwg.mxu0
        %6108 = vmatprep.subr.mxu0 0.0
        %v6109 = vand.u32 %v5951, 4294901760
        %v6110 = vsub.f32 %v5951, %v6109
        %6111 = vmatpush1.msra.mxu0 %v6110
        %6112 = vmatprep.subr.mxu0 0.0
        %6113 = vmatpush1.msra.mxu0 0.0
        %6114 = vmatprep.subr.mxu0 0.0
        %6115 = vmatpush1.msra.mxu0 0.0
        %6116 = vmatprep.subr.mxu0 0.0
        %6117 = vmatpush1.msra.mxu0 0.0
        %6118 = vmatprep.subr.mxu0 0.0
        %6119 = vmatpush1.msra.mxu0 0.0
        %6120 = vmatprep.subr.mxu0 0.0
        %6121 = vmatpush1.msra.mxu0 0.0
        %6122 = vmatprep.subr.mxu0 0.0
        %6123 = vmatpush1.msra.mxu0 0.0
        %6124 = vmatprep.subr.mxu0 0.0
        %6125 = vmatpush1.msra.mxu0 0.0
        %6126 = vmatprep.subr.mxu0 0.0
        %6127 = vmatpush1.msra.mxu0 0.0
        %6128 = vmatprep.subr.mxu0 0.0
        %6129 = vmatpush1.msra.mxu0 0.0
        %6130 = vmatprep.subr.mxu0 0.0
        %6131 = vmatpush1.msra.mxu0 0.0
        %6132 = vmatprep.subr.mxu0 0.0
        %6133 = vmatpush1.msra.mxu0 0.0
        %6134 = vmatprep.subr.mxu0 0.0
        %6135 = vmatpush1.msra.mxu0 0.0
        %6136 = vmatprep.subr.mxu0 0.0
        %6137 = vmatpush1.msra.mxu0 0.0
        %6138 = vmatprep.subr.mxu0 0.0
        %6139 = vmatpush1.msra.mxu0 0.0
        %6140 = vmatprep.subr.mxu0 0.0
        %6141 = vmatpush1.msra.mxu0 0.0
        %6142 = vmatprep.subr.mxu0 0.0
        %6143 = vmatpush1.msra.mxu0 0.0
        %6144 = vmatprep.subr.mxu0 0.0
        %6145 = vmatpush1.msra.mxu0 0.0
        %6146 = vmatprep.subr.mxu0 0.0
        %6147 = vmatpush1.msra.mxu0 0.0
        %6148 = vmatprep.subr.mxu0 0.0
        %6149 = vmatpush1.msra.mxu0 0.0
        %6150 = vmatprep.subr.mxu0 0.0
        %6151 = vmatpush1.msra.mxu0 0.0
        %6152 = vmatprep.subr.mxu0 0.0
        %6153 = vmatpush1.msra.mxu0 0.0
        %6154 = vmatprep.subr.mxu0 0.0
        %6155 = vmatpush1.msra.mxu0 0.0
        %6156 = vmatprep.subr.mxu0 0.0
        %6157 = vmatpush1.msra.mxu0 0.0
        %6158 = vmatprep.subr.mxu0 0.0
        %6159 = vmatpush1.msra.mxu0 0.0
        %6160 = vmatprep.subr.mxu0 0.0
        %6161 = vmatpush1.msra.mxu0 0.0
        %6162 = vmatprep.subr.mxu0 0.0
        %6163 = vmatpush1.msra.mxu0 0.0
        %6164 = vmatprep.subr.mxu0 0.0
        %6165 = vmatpush1.msra.mxu0 0.0
        %6166 = vmatprep.subr.mxu0 0.0
        %6167 = vmatpush1.msra.mxu0 0.0
        %6168 = vmatprep.subr.mxu0 0.0
        %6169 = vmatpush1.msra.mxu0 0.0
        %6170 = vmatprep.subr.mxu0 0.0
        %6171 = vmatpush1.msra.mxu0 0.0
        %6172 = vmatprep.subr.mxu0 0.0
        %6173 = vmatpush1.msra.mxu0 0.0
        %6174 = vmatprep.mubr.f32.mxu0 0.0
        %v6175 = vand.u32 %v5954, 4294901760
        %v6176 = vsub.f32 %v5954, %v6175
        %6177 = vmatmul.mubr.f32.gmra.mrb[0].mxu0 %v6176
        %v6178 = vpop.f32.mrb[0].mxu0
        %v6179 = vadd.f32 %v6105, %v6178
        %v6180 = vpop.f32.mrb[0].mxu0
        %6181 = vdwg.mxu0
        %6182 = vmatprep.subr.mxu0 0.0
        %v6183 = vand.u32 %v5951, 4294901760
        %6184 = vmatpush1.msra.mxu0 %v6183
        %6185 = vmatprep.subr.mxu0 0.0
        %6186 = vmatpush1.msra.mxu0 0.0
        %6187 = vmatprep.subr.mxu0 0.0
        %6188 = vmatpush1.msra.mxu0 0.0
        %6189 = vmatprep.subr.mxu0 0.0
        %6190 = vmatpush1.msra.mxu0 0.0
        %6191 = vmatprep.subr.mxu0 0.0
        %6192 = vmatpush1.msra.mxu0 0.0
        %6193 = vmatprep.subr.mxu0 0.0
        %6194 = vmatpush1.msra.mxu0 0.0
        %6195 = vmatprep.subr.mxu0 0.0
        %6196 = vmatpush1.msra.mxu0 0.0
        %6197 = vmatprep.subr.mxu0 0.0
        %6198 = vmatpush1.msra.mxu0 0.0
        %6199 = vmatprep.subr.mxu0 0.0
        %6200 = vmatpush1.msra.mxu0 0.0
        %6201 = vmatprep.subr.mxu0 0.0
        %6202 = vmatpush1.msra.mxu0 0.0
        %6203 = vmatprep.subr.mxu0 0.0
        %6204 = vmatpush1.msra.mxu0 0.0
        %6205 = vmatprep.subr.mxu0 0.0
        %6206 = vmatpush1.msra.mxu0 0.0
        %6207 = vmatprep.subr.mxu0 0.0
        %6208 = vmatpush1.msra.mxu0 0.0
        %6209 = vmatprep.subr.mxu0 0.0
        %6210 = vmatpush1.msra.mxu0 0.0
        %6211 = vmatprep.subr.mxu0 0.0
        %6212 = vmatpush1.msra.mxu0 0.0
        %6213 = vmatprep.subr.mxu0 0.0
        %6214 = vmatpush1.msra.mxu0 0.0
        %6215 = vmatprep.subr.mxu0 0.0
        %6216 = vmatpush1.msra.mxu0 0.0
        %6217 = vmatprep.subr.mxu0 0.0
        %6218 = vmatpush1.msra.mxu0 0.0
        %6219 = vmatprep.subr.mxu0 0.0
        %6220 = vmatpush1.msra.mxu0 0.0
        %6221 = vmatprep.subr.mxu0 0.0
        %6222 = vmatpush1.msra.mxu0 0.0
        %6223 = vmatprep.subr.mxu0 0.0
        %6224 = vmatpush1.msra.mxu0 0.0
        %6225 = vmatprep.subr.mxu0 0.0
        %6226 = vmatpush1.msra.mxu0 0.0
        %6227 = vmatprep.subr.mxu0 0.0
        %6228 = vmatpush1.msra.mxu0 0.0
        %6229 = vmatprep.subr.mxu0 0.0
        %6230 = vmatpush1.msra.mxu0 0.0
        %6231 = vmatprep.subr.mxu0 0.0
        %6232 = vmatpush1.msra.mxu0 0.0
        %6233 = vmatprep.subr.mxu0 0.0
        %6234 = vmatpush1.msra.mxu0 0.0
        %6235 = vmatprep.subr.mxu0 0.0
        %6236 = vmatpush1.msra.mxu0 0.0
        %6237 = vmatprep.subr.mxu0 0.0
        %6238 = vmatpush1.msra.mxu0 0.0
        %6239 = vmatprep.subr.mxu0 0.0
        %6240 = vmatpush1.msra.mxu0 0.0
        %6241 = vmatprep.subr.mxu0 0.0
        %6242 = vmatpush1.msra.mxu0 0.0
        %6243 = vmatprep.subr.mxu0 0.0
        %6244 = vmatpush1.msra.mxu0 0.0
        %6245 = vmatprep.subr.mxu0 0.0
        %6246 = vmatpush1.msra.mxu0 0.0
        %6247 = vmatprep.mubr.f32.mxu0 0.0
        %v6248 = vand.u32 %v5954, 4294901760
        %v6249 = vsub.f32 %v5954, %v6248
        %v6250 = vand.u32 %v6249, 4294901760
        %6251 = vmatmul.mubr.f32.gmra.mrb[0].mxu0 %v6250
        %v6252 = vpop.f32.mrb[0].mxu0
        %v6253 = vadd.f32 %v6179, %v6252
        %v6254 = vpop.f32.mrb[0].mxu0
        %6255 = vdwg.mxu0
        %6256 = vmatprep.subr.mxu0 0.0
        %v6257 = vand.u32 %v5951, 4294901760
        %v6258 = vsub.f32 %v5951, %v6257
        %v6259 = vand.u32 %v6258, 4294901760
        %6260 = vmatpush1.msra.mxu0 %v6259
        %6261 = vmatprep.subr.mxu0 0.0
        %6262 = vmatpush1.msra.mxu0 0.0
        %6263 = vmatprep.subr.mxu0 0.0
        %6264 = vmatpush1.msra.mxu0 0.0
        %6265 = vmatprep.subr.mxu0 0.0
        %6266 = vmatpush1.msra.mxu0 0.0
        %6267 = vmatprep.subr.mxu0 0.0
        %6268 = vmatpush1.msra.mxu0 0.0
        %6269 = vmatprep.subr.mxu0 0.0
        %6270 = vmatpush1.msra.mxu0 0.0
        %6271 = vmatprep.subr.mxu0 0.0
        %6272 = vmatpush1.msra.mxu0 0.0
        %6273 = vmatprep.subr.mxu0 0.0
        %6274 = vmatpush1.msra.mxu0 0.0
        %6275 = vmatprep.subr.mxu0 0.0
        %6276 = vmatpush1.msra.mxu0 0.0
        %6277 = vmatprep.subr.mxu0 0.0
        %6278 = vmatpush1.msra.mxu0 0.0
        %6279 = vmatprep.subr.mxu0 0.0
        %6280 = vmatpush1.msra.mxu0 0.0
        %6281 = vmatprep.subr.mxu0 0.0
        %6282 = vmatpush1.msra.mxu0 0.0
        %6283 = vmatprep.subr.mxu0 0.0
        %6284 = vmatpush1.msra.mxu0 0.0
        %6285 = vmatprep.subr.mxu0 0.0
        %6286 = vmatpush1.msra.mxu0 0.0
        %6287 = vmatprep.subr.mxu0 0.0
        %6288 = vmatpush1.msra.mxu0 0.0
        %6289 = vmatprep.subr.mxu0 0.0
        %6290 = vmatpush1.msra.mxu0 0.0
        %6291 = vmatprep.subr.mxu0 0.0
        %6292 = vmatpush1.msra.mxu0 0.0
        %6293 = vmatprep.subr.mxu0 0.0
        %6294 = vmatpush1.msra.mxu0 0.0
        %6295 = vmatprep.subr.mxu0 0.0
        %6296 = vmatpush1.msra.mxu0 0.0
        %6297 = vmatprep.subr.mxu0 0.0
        %6298 = vmatpush1.msra.mxu0 0.0
        %6299 = vmatprep.subr.mxu0 0.0
        %6300 = vmatpush1.msra.mxu0 0.0
        %6301 = vmatprep.subr.mxu0 0.0
        %6302 = vmatpush1.msra.mxu0 0.0
        %6303 = vmatprep.subr.mxu0 0.0
        %6304 = vmatpush1.msra.mxu0 0.0
        %6305 = vmatprep.subr.mxu0 0.0
        %6306 = vmatpush1.msra.mxu0 0.0
        %6307 = vmatprep.subr.mxu0 0.0
        %6308 = vmatpush1.msra.mxu0 0.0
        %6309 = vmatprep.subr.mxu0 0.0
        %6310 = vmatpush1.msra.mxu0 0.0
        %6311 = vmatprep.subr.mxu0 0.0
        %6312 = vmatpush1.msra.mxu0 0.0
        %6313 = vmatprep.subr.mxu0 0.0
        %6314 = vmatpush1.msra.mxu0 0.0
        %6315 = vmatprep.subr.mxu0 0.0
        %6316 = vmatpush1.msra.mxu0 0.0
        %6317 = vmatprep.subr.mxu0 0.0
        %6318 = vmatpush1.msra.mxu0 0.0
        %6319 = vmatprep.subr.mxu0 0.0
        %6320 = vmatpush1.msra.mxu0 0.0
        %6321 = vmatprep.subr.mxu0 0.0
        %6322 = vmatpush1.msra.mxu0 0.0
        %6323 = vmatprep.mubr.f32.mxu0 0.0
        %v6324 = vand.u32 %v5954, 4294901760
        %6325 = vmatmul.mubr.f32.gmra.mrb[0].mxu0 %v6324
        %v6326 = vpop.f32.mrb[0].mxu0
        %v6327 = vadd.f32 %v6253, %v6326
        %v6328 = vpop.f32.mrb[0].mxu0
        %6329 = vdwg.mxu0
        %6330 = vmatprep.subr.mxu0 0.0
        %v6331 = vand.u32 %v5951, 4294901760
        %6332 = vmatpush1.msra.mxu0 %v6331
        %6333 = vmatprep.subr.mxu0 0.0
        %6334 = vmatpush1.msra.mxu0 0.0
        %6335 = vmatprep.subr.mxu0 0.0
        %6336 = vmatpush1.msra.mxu0 0.0
        %6337 = vmatprep.subr.mxu0 0.0
        %6338 = vmatpush1.msra.mxu0 0.0
        %6339 = vmatprep.subr.mxu0 0.0
        %6340 = vmatpush1.msra.mxu0 0.0
        %6341 = vmatprep.subr.mxu0 0.0
        %6342 = vmatpush1.msra.mxu0 0.0
        %6343 = vmatprep.subr.mxu0 0.0
        %6344 = vmatpush1.msra.mxu0 0.0
        %6345 = vmatprep.subr.mxu0 0.0
        %6346 = vmatpush1.msra.mxu0 0.0
        %6347 = vmatprep.subr.mxu0 0.0
        %6348 = vmatpush1.msra.mxu0 0.0
        %6349 = vmatprep.subr.mxu0 0.0
        %6350 = vmatpush1.msra.mxu0 0.0
        %6351 = vmatprep.subr.mxu0 0.0
        %6352 = vmatpush1.msra.mxu0 0.0
        %6353 = vmatprep.subr.mxu0 0.0
        %6354 = vmatpush1.msra.mxu0 0.0
        %6355 = vmatprep.subr.mxu0 0.0
        %6356 = vmatpush1.msra.mxu0 0.0
        %6357 = vmatprep.subr.mxu0 0.0
        %6358 = vmatpush1.msra.mxu0 0.0
        %6359 = vmatprep.subr.mxu0 0.0
        %6360 = vmatpush1.msra.mxu0 0.0
        %6361 = vmatprep.subr.mxu0 0.0
        %6362 = vmatpush1.msra.mxu0 0.0
        %6363 = vmatprep.subr.mxu0 0.0
        %6364 = vmatpush1.msra.mxu0 0.0
        %6365 = vmatprep.subr.mxu0 0.0
        %6366 = vmatpush1.msra.mxu0 0.0
        %6367 = vmatprep.subr.mxu0 0.0
        %6368 = vmatpush1.msra.mxu0 0.0
        %6369 = vmatprep.subr.mxu0 0.0
        %6370 = vmatpush1.msra.mxu0 0.0
        %6371 = vmatprep.subr.mxu0 0.0
        %6372 = vmatpush1.msra.mxu0 0.0
        %6373 = vmatprep.subr.mxu0 0.0
        %6374 = vmatpush1.msra.mxu0 0.0
        %6375 = vmatprep.subr.mxu0 0.0
        %6376 = vmatpush1.msra.mxu0 0.0
        %6377 = vmatprep.subr.mxu0 0.0
        %6378 = vmatpush1.msra.mxu0 0.0
        %6379 = vmatprep.subr.mxu0 0.0
        %6380 = vmatpush1.msra.mxu0 0.0
        %6381 = vmatprep.subr.mxu0 0.0
        %6382 = vmatpush1.msra.mxu0 0.0
        %6383 = vmatprep.subr.mxu0 0.0
        %6384 = vmatpush1.msra.mxu0 0.0
        %6385 = vmatprep.subr.mxu0 0.0
        %6386 = vmatpush1.msra.mxu0 0.0
        %6387 = vmatprep.subr.mxu0 0.0
        %6388 = vmatpush1.msra.mxu0 0.0
        %6389 = vmatprep.subr.mxu0 0.0
        %6390 = vmatpush1.msra.mxu0 0.0
        %6391 = vmatprep.subr.mxu0 0.0
        %6392 = vmatpush1.msra.mxu0 0.0
        %6393 = vmatprep.subr.mxu0 0.0
        %6394 = vmatpush1.msra.mxu0 0.0
        %6395 = vmatprep.mubr.f32.mxu0 0.0
        %v6396 = vand.u32 %v5954, 4294901760
        %6397 = vmatmul.mubr.f32.gmra.mrb[0].mxu0 %v6396
        %v6398 = vpop.f32.mrb[0].mxu0
        %v6399 = vadd.f32 %v6327, %v6398
        %v6400 = vpop.f32.mrb[0].mxu0
        %6401 = vdwg.mxu0
        %6402 = vrot.lane.b32.xlu0 %v1324, 48
        %v6403 = vpop.permute.xlu0 %6402
        %v6406 = vsel %vm1335, %v5949, 0
        %6408 = vmatprep.subr.mxu0 0.0
        %v6409 = vand.u32 %v6403, 4294901760
        %6410 = vmatpush1.msra.mxu0 %v6409
        %6411 = vmatprep.subr.mxu0 0.0
        %6412 = vmatpush1.msra.mxu0 0.0
        %6413 = vmatprep.subr.mxu0 0.0
        %6414 = vmatpush1.msra.mxu0 0.0
        %6415 = vmatprep.subr.mxu0 0.0
        %6416 = vmatpush1.msra.mxu0 0.0
        %6417 = vmatprep.subr.mxu0 0.0
        %6418 = vmatpush1.msra.mxu0 0.0
        %6419 = vmatprep.subr.mxu0 0.0
        %6420 = vmatpush1.msra.mxu0 0.0
        %6421 = vmatprep.subr.mxu0 0.0
        %6422 = vmatpush1.msra.mxu0 0.0
        %6423 = vmatprep.subr.mxu0 0.0
        %6424 = vmatpush1.msra.mxu0 0.0
        %6425 = vmatprep.subr.mxu0 0.0
        %6426 = vmatpush1.msra.mxu0 0.0
        %6427 = vmatprep.subr.mxu0 0.0
        %6428 = vmatpush1.msra.mxu0 0.0
        %6429 = vmatprep.subr.mxu0 0.0
        %6430 = vmatpush1.msra.mxu0 0.0
        %6431 = vmatprep.subr.mxu0 0.0
        %6432 = vmatpush1.msra.mxu0 0.0
        %6433 = vmatprep.subr.mxu0 0.0
        %6434 = vmatpush1.msra.mxu0 0.0
        %6435 = vmatprep.subr.mxu0 0.0
        %6436 = vmatpush1.msra.mxu0 0.0
        %6437 = vmatprep.subr.mxu0 0.0
        %6438 = vmatpush1.msra.mxu0 0.0
        %6439 = vmatprep.subr.mxu0 0.0
        %6440 = vmatpush1.msra.mxu0 0.0
        %6441 = vmatprep.subr.mxu0 0.0
        %6442 = vmatpush1.msra.mxu0 0.0
        %6443 = vmatprep.subr.mxu0 0.0
        %6444 = vmatpush1.msra.mxu0 0.0
        %6445 = vmatprep.subr.mxu0 0.0
        %6446 = vmatpush1.msra.mxu0 0.0
        %6447 = vmatprep.subr.mxu0 0.0
        %6448 = vmatpush1.msra.mxu0 0.0
        %6449 = vmatprep.subr.mxu0 0.0
        %6450 = vmatpush1.msra.mxu0 0.0
        %6451 = vmatprep.subr.mxu0 0.0
        %6452 = vmatpush1.msra.mxu0 0.0
        %6453 = vmatprep.subr.mxu0 0.0
        %6454 = vmatpush1.msra.mxu0 0.0
        %6455 = vmatprep.subr.mxu0 0.0
        %6456 = vmatpush1.msra.mxu0 0.0
        %6457 = vmatprep.subr.mxu0 0.0
        %6458 = vmatpush1.msra.mxu0 0.0
        %6459 = vmatprep.subr.mxu0 0.0
        %6460 = vmatpush1.msra.mxu0 0.0
        %6461 = vmatprep.subr.mxu0 0.0
        %6462 = vmatpush1.msra.mxu0 0.0
        %6463 = vmatprep.subr.mxu0 0.0
        %6464 = vmatpush1.msra.mxu0 0.0
        %6465 = vmatprep.subr.mxu0 0.0
        %6466 = vmatpush1.msra.mxu0 0.0
        %6467 = vmatprep.subr.mxu0 0.0
        %6468 = vmatpush1.msra.mxu0 0.0
        %6469 = vmatprep.subr.mxu0 0.0
        %6470 = vmatpush1.msra.mxu0 0.0
        %6471 = vmatprep.subr.mxu0 0.0
        %6472 = vmatpush1.msra.mxu0 0.0
        %6473 = vmatprep.mubr.f32.mxu0 0.0
        %v6474 = vand.u32 %v6406, 4294901760
        %v6475 = vsub.f32 %v6406, %v6474
        %v6476 = vand.u32 %v6475, 4294901760
        %v6477 = vsub.f32 %v6475, %v6476
        %v6478 = vand.u32 %v6477, 4294901760
        %6479 = vmatmul.mubr.f32.gmra.mrb[0].mxu0 %v6478
        %v6480 = vpop.f32.mrb[0].mxu0
        %v6481 = vadd.f32 0.0, %v6480
        %v6482 = vpop.f32.mrb[0].mxu0
        %6483 = vdwg.mxu0
        %6484 = vmatprep.subr.mxu0 0.0
        %v6485 = vand.u32 %v6403, 4294901760
        %v6486 = vsub.f32 %v6403, %v6485
        %v6487 = vand.u32 %v6486, 4294901760
        %v6488 = vsub.f32 %v6486, %v6487
        %v6489 = vand.u32 %v6488, 4294901760
        %6490 = vmatpush1.msra.mxu0 %v6489
        %6491 = vmatprep.subr.mxu0 0.0
        %6492 = vmatpush1.msra.mxu0 0.0
        %6493 = vmatprep.subr.mxu0 0.0
        %6494 = vmatpush1.msra.mxu0 0.0
        %6495 = vmatprep.subr.mxu0 0.0
        %6496 = vmatpush1.msra.mxu0 0.0
        %6497 = vmatprep.subr.mxu0 0.0
        %6498 = vmatpush1.msra.mxu0 0.0
        %6499 = vmatprep.subr.mxu0 0.0
        %6500 = vmatpush1.msra.mxu0 0.0
        %6501 = vmatprep.subr.mxu0 0.0
        %6502 = vmatpush1.msra.mxu0 0.0
        %6503 = vmatprep.subr.mxu0 0.0
        %6504 = vmatpush1.msra.mxu0 0.0
        %6505 = vmatprep.subr.mxu0 0.0
        %6506 = vmatpush1.msra.mxu0 0.0
        %6507 = vmatprep.subr.mxu0 0.0
        %6508 = vmatpush1.msra.mxu0 0.0
        %6509 = vmatprep.subr.mxu0 0.0
        %6510 = vmatpush1.msra.mxu0 0.0
        %6511 = vmatprep.subr.mxu0 0.0
        %6512 = vmatpush1.msra.mxu0 0.0
        %6513 = vmatprep.subr.mxu0 0.0
        %6514 = vmatpush1.msra.mxu0 0.0
        %6515 = vmatprep.subr.mxu0 0.0
        %6516 = vmatpush1.msra.mxu0 0.0
        %6517 = vmatprep.subr.mxu0 0.0
        %6518 = vmatpush1.msra.mxu0 0.0
        %6519 = vmatprep.subr.mxu0 0.0
        %6520 = vmatpush1.msra.mxu0 0.0
        %6521 = vmatprep.subr.mxu0 0.0
        %6522 = vmatpush1.msra.mxu0 0.0
        %6523 = vmatprep.subr.mxu0 0.0
        %6524 = vmatpush1.msra.mxu0 0.0
        %6525 = vmatprep.subr.mxu0 0.0
        %6526 = vmatpush1.msra.mxu0 0.0
        %6527 = vmatprep.subr.mxu0 0.0
        %6528 = vmatpush1.msra.mxu0 0.0
        %6529 = vmatprep.subr.mxu0 0.0
        %6530 = vmatpush1.msra.mxu0 0.0
        %6531 = vmatprep.subr.mxu0 0.0
        %6532 = vmatpush1.msra.mxu0 0.0
        %6533 = vmatprep.subr.mxu0 0.0
        %6534 = vmatpush1.msra.mxu0 0.0
        %6535 = vmatprep.subr.mxu0 0.0
        %6536 = vmatpush1.msra.mxu0 0.0
        %6537 = vmatprep.subr.mxu0 0.0
        %6538 = vmatpush1.msra.mxu0 0.0
        %6539 = vmatprep.subr.mxu0 0.0
        %6540 = vmatpush1.msra.mxu0 0.0
        %6541 = vmatprep.subr.mxu0 0.0
        %6542 = vmatpush1.msra.mxu0 0.0
        %6543 = vmatprep.subr.mxu0 0.0
        %6544 = vmatpush1.msra.mxu0 0.0
        %6545 = vmatprep.subr.mxu0 0.0
        %6546 = vmatpush1.msra.mxu0 0.0
        %6547 = vmatprep.subr.mxu0 0.0
        %6548 = vmatpush1.msra.mxu0 0.0
        %6549 = vmatprep.subr.mxu0 0.0
        %6550 = vmatpush1.msra.mxu0 0.0
        %6551 = vmatprep.subr.mxu0 0.0
        %6552 = vmatpush1.msra.mxu0 0.0
        %6553 = vmatprep.mubr.f32.mxu0 0.0
        %v6554 = vand.u32 %v6406, 4294901760
        %6555 = vmatmul.mubr.f32.gmra.mrb[0].mxu0 %v6554
        %v6556 = vpop.f32.mrb[0].mxu0
        %v6557 = vadd.f32 %v6481, %v6556
        %v6558 = vpop.f32.mrb[0].mxu0
        %6559 = vdwg.mxu0
        %6560 = vmatprep.subr.mxu0 0.0
        %v6561 = vand.u32 %v6403, 4294901760
        %v6562 = vsub.f32 %v6403, %v6561
        %6563 = vmatpush1.msra.mxu0 %v6562
        %6564 = vmatprep.subr.mxu0 0.0
        %6565 = vmatpush1.msra.mxu0 0.0
        %6566 = vmatprep.subr.mxu0 0.0
        %6567 = vmatpush1.msra.mxu0 0.0
        %6568 = vmatprep.subr.mxu0 0.0
        %6569 = vmatpush1.msra.mxu0 0.0
        %6570 = vmatprep.subr.mxu0 0.0
        %6571 = vmatpush1.msra.mxu0 0.0
        %6572 = vmatprep.subr.mxu0 0.0
        %6573 = vmatpush1.msra.mxu0 0.0
        %6574 = vmatprep.subr.mxu0 0.0
        %6575 = vmatpush1.msra.mxu0 0.0
        %6576 = vmatprep.subr.mxu0 0.0
        %6577 = vmatpush1.msra.mxu0 0.0
        %6578 = vmatprep.subr.mxu0 0.0
        %6579 = vmatpush1.msra.mxu0 0.0
        %6580 = vmatprep.subr.mxu0 0.0
        %6581 = vmatpush1.msra.mxu0 0.0
        %6582 = vmatprep.subr.mxu0 0.0
        %6583 = vmatpush1.msra.mxu0 0.0
        %6584 = vmatprep.subr.mxu0 0.0
        %6585 = vmatpush1.msra.mxu0 0.0
        %6586 = vmatprep.subr.mxu0 0.0
        %6587 = vmatpush1.msra.mxu0 0.0
        %6588 = vmatprep.subr.mxu0 0.0
        %6589 = vmatpush1.msra.mxu0 0.0
        %6590 = vmatprep.subr.mxu0 0.0
        %6591 = vmatpush1.msra.mxu0 0.0
        %6592 = vmatprep.subr.mxu0 0.0
        %6593 = vmatpush1.msra.mxu0 0.0
        %6594 = vmatprep.subr.mxu0 0.0
        %6595 = vmatpush1.msra.mxu0 0.0
        %6596 = vmatprep.subr.mxu0 0.0
        %6597 = vmatpush1.msra.mxu0 0.0
        %6598 = vmatprep.subr.mxu0 0.0
        %6599 = vmatpush1.msra.mxu0 0.0
        %6600 = vmatprep.subr.mxu0 0.0
        %6601 = vmatpush1.msra.mxu0 0.0
        %6602 = vmatprep.subr.mxu0 0.0
        %6603 = vmatpush1.msra.mxu0 0.0
        %6604 = vmatprep.subr.mxu0 0.0
        %6605 = vmatpush1.msra.mxu0 0.0
        %6606 = vmatprep.subr.mxu0 0.0
        %6607 = vmatpush1.msra.mxu0 0.0
        %6608 = vmatprep.subr.mxu0 0.0
        %6609 = vmatpush1.msra.mxu0 0.0
        %6610 = vmatprep.subr.mxu0 0.0
        %6611 = vmatpush1.msra.mxu0 0.0
        %6612 = vmatprep.subr.mxu0 0.0
        %6613 = vmatpush1.msra.mxu0 0.0
        %6614 = vmatprep.subr.mxu0 0.0
        %6615 = vmatpush1.msra.mxu0 0.0
        %6616 = vmatprep.subr.mxu0 0.0
        %6617 = vmatpush1.msra.mxu0 0.0
        %6618 = vmatprep.subr.mxu0 0.0
        %6619 = vmatpush1.msra.mxu0 0.0
        %6620 = vmatprep.subr.mxu0 0.0
        %6621 = vmatpush1.msra.mxu0 0.0
        %6622 = vmatprep.subr.mxu0 0.0
        %6623 = vmatpush1.msra.mxu0 0.0
        %6624 = vmatprep.subr.mxu0 0.0
        %6625 = vmatpush1.msra.mxu0 0.0
        %6626 = vmatprep.mubr.f32.mxu0 0.0
        %v6627 = vand.u32 %v6406, 4294901760
        %v6628 = vsub.f32 %v6406, %v6627
        %6629 = vmatmul.mubr.f32.gmra.mrb[0].mxu0 %v6628
        %v6630 = vpop.f32.mrb[0].mxu0
        %v6631 = vadd.f32 %v6557, %v6630
        %v6632 = vpop.f32.mrb[0].mxu0
        %6633 = vdwg.mxu0
        %6634 = vmatprep.subr.mxu0 0.0
        %v6635 = vand.u32 %v6403, 4294901760
        %6636 = vmatpush1.msra.mxu0 %v6635
        %6637 = vmatprep.subr.mxu0 0.0
        %6638 = vmatpush1.msra.mxu0 0.0
        %6639 = vmatprep.subr.mxu0 0.0
        %6640 = vmatpush1.msra.mxu0 0.0
        %6641 = vmatprep.subr.mxu0 0.0
        %6642 = vmatpush1.msra.mxu0 0.0
        %6643 = vmatprep.subr.mxu0 0.0
        %6644 = vmatpush1.msra.mxu0 0.0
        %6645 = vmatprep.subr.mxu0 0.0
        %6646 = vmatpush1.msra.mxu0 0.0
        %6647 = vmatprep.subr.mxu0 0.0
        %6648 = vmatpush1.msra.mxu0 0.0
        %6649 = vmatprep.subr.mxu0 0.0
        %6650 = vmatpush1.msra.mxu0 0.0
        %6651 = vmatprep.subr.mxu0 0.0
        %6652 = vmatpush1.msra.mxu0 0.0
        %6653 = vmatprep.subr.mxu0 0.0
        %6654 = vmatpush1.msra.mxu0 0.0
        %6655 = vmatprep.subr.mxu0 0.0
        %6656 = vmatpush1.msra.mxu0 0.0
        %6657 = vmatprep.subr.mxu0 0.0
        %6658 = vmatpush1.msra.mxu0 0.0
        %6659 = vmatprep.subr.mxu0 0.0
        %6660 = vmatpush1.msra.mxu0 0.0
        %6661 = vmatprep.subr.mxu0 0.0
        %6662 = vmatpush1.msra.mxu0 0.0
        %6663 = vmatprep.subr.mxu0 0.0
        %6664 = vmatpush1.msra.mxu0 0.0
        %6665 = vmatprep.subr.mxu0 0.0
        %6666 = vmatpush1.msra.mxu0 0.0
        %6667 = vmatprep.subr.mxu0 0.0
        %6668 = vmatpush1.msra.mxu0 0.0
        %6669 = vmatprep.subr.mxu0 0.0
        %6670 = vmatpush1.msra.mxu0 0.0
        %6671 = vmatprep.subr.mxu0 0.0
        %6672 = vmatpush1.msra.mxu0 0.0
        %6673 = vmatprep.subr.mxu0 0.0
        %6674 = vmatpush1.msra.mxu0 0.0
        %6675 = vmatprep.subr.mxu0 0.0
        %6676 = vmatpush1.msra.mxu0 0.0
        %6677 = vmatprep.subr.mxu0 0.0
        %6678 = vmatpush1.msra.mxu0 0.0
        %6679 = vmatprep.subr.mxu0 0.0
        %6680 = vmatpush1.msra.mxu0 0.0
        %6681 = vmatprep.subr.mxu0 0.0
        %6682 = vmatpush1.msra.mxu0 0.0
        %6683 = vmatprep.subr.mxu0 0.0
        %6684 = vmatpush1.msra.mxu0 0.0
        %6685 = vmatprep.subr.mxu0 0.0
        %6686 = vmatpush1.msra.mxu0 0.0
        %6687 = vmatprep.subr.mxu0 0.0
        %6688 = vmatpush1.msra.mxu0 0.0
        %6689 = vmatprep.subr.mxu0 0.0
        %6690 = vmatpush1.msra.mxu0 0.0
        %6691 = vmatprep.subr.mxu0 0.0
        %6692 = vmatpush1.msra.mxu0 0.0
        %6693 = vmatprep.subr.mxu0 0.0
        %6694 = vmatpush1.msra.mxu0 0.0
        %6695 = vmatprep.subr.mxu0 0.0
        %6696 = vmatpush1.msra.mxu0 0.0
        %6697 = vmatprep.subr.mxu0 0.0
        %6698 = vmatpush1.msra.mxu0 0.0
        %6699 = vmatprep.mubr.f32.mxu0 0.0
        %v6700 = vand.u32 %v6406, 4294901760
        %v6701 = vsub.f32 %v6406, %v6700
        %v6702 = vand.u32 %v6701, 4294901760
        %6703 = vmatmul.mubr.f32.gmra.mrb[0].mxu0 %v6702
        %v6704 = vpop.f32.mrb[0].mxu0
        %v6705 = vadd.f32 %v6631, %v6704
        %v6706 = vpop.f32.mrb[0].mxu0
        %6707 = vdwg.mxu0
        %6708 = vmatprep.subr.mxu0 0.0
        %v6709 = vand.u32 %v6403, 4294901760
        %v6710 = vsub.f32 %v6403, %v6709
        %v6711 = vand.u32 %v6710, 4294901760
        %6712 = vmatpush1.msra.mxu0 %v6711
        %6713 = vmatprep.subr.mxu0 0.0
        %6714 = vmatpush1.msra.mxu0 0.0
        %6715 = vmatprep.subr.mxu0 0.0
        %6716 = vmatpush1.msra.mxu0 0.0
        %6717 = vmatprep.subr.mxu0 0.0
        %6718 = vmatpush1.msra.mxu0 0.0
        %6719 = vmatprep.subr.mxu0 0.0
        %6720 = vmatpush1.msra.mxu0 0.0
        %6721 = vmatprep.subr.mxu0 0.0
        %6722 = vmatpush1.msra.mxu0 0.0
        %6723 = vmatprep.subr.mxu0 0.0
        %6724 = vmatpush1.msra.mxu0 0.0
        %6725 = vmatprep.subr.mxu0 0.0
        %6726 = vmatpush1.msra.mxu0 0.0
        %6727 = vmatprep.subr.mxu0 0.0
        %6728 = vmatpush1.msra.mxu0 0.0
        %6729 = vmatprep.subr.mxu0 0.0
        %6730 = vmatpush1.msra.mxu0 0.0
        %6731 = vmatprep.subr.mxu0 0.0
        %6732 = vmatpush1.msra.mxu0 0.0
        %6733 = vmatprep.subr.mxu0 0.0
        %6734 = vmatpush1.msra.mxu0 0.0
        %6735 = vmatprep.subr.mxu0 0.0
        %6736 = vmatpush1.msra.mxu0 0.0
        %6737 = vmatprep.subr.mxu0 0.0
        %6738 = vmatpush1.msra.mxu0 0.0
        %6739 = vmatprep.subr.mxu0 0.0
        %6740 = vmatpush1.msra.mxu0 0.0
        %6741 = vmatprep.subr.mxu0 0.0
        %6742 = vmatpush1.msra.mxu0 0.0
        %6743 = vmatprep.subr.mxu0 0.0
        %6744 = vmatpush1.msra.mxu0 0.0
        %6745 = vmatprep.subr.mxu0 0.0
        %6746 = vmatpush1.msra.mxu0 0.0
        %6747 = vmatprep.subr.mxu0 0.0
        %6748 = vmatpush1.msra.mxu0 0.0
        %6749 = vmatprep.subr.mxu0 0.0
        %6750 = vmatpush1.msra.mxu0 0.0
        %6751 = vmatprep.subr.mxu0 0.0
        %6752 = vmatpush1.msra.mxu0 0.0
        %6753 = vmatprep.subr.mxu0 0.0
        %6754 = vmatpush1.msra.mxu0 0.0
        %6755 = vmatprep.subr.mxu0 0.0
        %6756 = vmatpush1.msra.mxu0 0.0
        %6757 = vmatprep.subr.mxu0 0.0
        %6758 = vmatpush1.msra.mxu0 0.0
        %6759 = vmatprep.subr.mxu0 0.0
        %6760 = vmatpush1.msra.mxu0 0.0
        %6761 = vmatprep.subr.mxu0 0.0
        %6762 = vmatpush1.msra.mxu0 0.0
        %6763 = vmatprep.subr.mxu0 0.0
        %6764 = vmatpush1.msra.mxu0 0.0
        %6765 = vmatprep.subr.mxu0 0.0
        %6766 = vmatpush1.msra.mxu0 0.0
        %6767 = vmatprep.subr.mxu0 0.0
        %6768 = vmatpush1.msra.mxu0 0.0
        %6769 = vmatprep.subr.mxu0 0.0
        %6770 = vmatpush1.msra.mxu0 0.0
        %6771 = vmatprep.subr.mxu0 0.0
        %6772 = vmatpush1.msra.mxu0 0.0
        %6773 = vmatprep.subr.mxu0 0.0
        %6774 = vmatpush1.msra.mxu0 0.0
        %6775 = vmatprep.mubr.f32.mxu0 0.0
        %v6776 = vand.u32 %v6406, 4294901760
        %6777 = vmatmul.mubr.f32.gmra.mrb[0].mxu0 %v6776
        %v6778 = vpop.f32.mrb[0].mxu0
        %v6779 = vadd.f32 %v6705, %v6778
        %v6780 = vpop.f32.mrb[0].mxu0
        %6781 = vdwg.mxu0
        %6782 = vmatprep.subr.mxu0 0.0
        %v6783 = vand.u32 %v6403, 4294901760
        %6784 = vmatpush1.msra.mxu0 %v6783
        %6785 = vmatprep.subr.mxu0 0.0
        %6786 = vmatpush1.msra.mxu0 0.0
        %6787 = vmatprep.subr.mxu0 0.0
        %6788 = vmatpush1.msra.mxu0 0.0
        %6789 = vmatprep.subr.mxu0 0.0
        %6790 = vmatpush1.msra.mxu0 0.0
        %6791 = vmatprep.subr.mxu0 0.0
        %6792 = vmatpush1.msra.mxu0 0.0
        %6793 = vmatprep.subr.mxu0 0.0
        %6794 = vmatpush1.msra.mxu0 0.0
        %6795 = vmatprep.subr.mxu0 0.0
        %6796 = vmatpush1.msra.mxu0 0.0
        %6797 = vmatprep.subr.mxu0 0.0
        %6798 = vmatpush1.msra.mxu0 0.0
        %6799 = vmatprep.subr.mxu0 0.0
        %6800 = vmatpush1.msra.mxu0 0.0
        %6801 = vmatprep.subr.mxu0 0.0
        %6802 = vmatpush1.msra.mxu0 0.0
        %6803 = vmatprep.subr.mxu0 0.0
        %6804 = vmatpush1.msra.mxu0 0.0
        %6805 = vmatprep.subr.mxu0 0.0
        %6806 = vmatpush1.msra.mxu0 0.0
        %6807 = vmatprep.subr.mxu0 0.0
        %6808 = vmatpush1.msra.mxu0 0.0
        %6809 = vmatprep.subr.mxu0 0.0
        %6810 = vmatpush1.msra.mxu0 0.0
        %6811 = vmatprep.subr.mxu0 0.0
        %6812 = vmatpush1.msra.mxu0 0.0
        %6813 = vmatprep.subr.mxu0 0.0
        %6814 = vmatpush1.msra.mxu0 0.0
        %6815 = vmatprep.subr.mxu0 0.0
        %6816 = vmatpush1.msra.mxu0 0.0
        %6817 = vmatprep.subr.mxu0 0.0
        %6818 = vmatpush1.msra.mxu0 0.0
        %6819 = vmatprep.subr.mxu0 0.0
        %6820 = vmatpush1.msra.mxu0 0.0
        %6821 = vmatprep.subr.mxu0 0.0
        %6822 = vmatpush1.msra.mxu0 0.0
        %6823 = vmatprep.subr.mxu0 0.0
        %6824 = vmatpush1.msra.mxu0 0.0
        %6825 = vmatprep.subr.mxu0 0.0
        %6826 = vmatpush1.msra.mxu0 0.0
        %6827 = vmatprep.subr.mxu0 0.0
        %6828 = vmatpush1.msra.mxu0 0.0
        %6829 = vmatprep.subr.mxu0 0.0
        %6830 = vmatpush1.msra.mxu0 0.0
        %6831 = vmatprep.subr.mxu0 0.0
        %6832 = vmatpush1.msra.mxu0 0.0
        %6833 = vmatprep.subr.mxu0 0.0
        %6834 = vmatpush1.msra.mxu0 0.0
        %6835 = vmatprep.subr.mxu0 0.0
        %6836 = vmatpush1.msra.mxu0 0.0
        %6837 = vmatprep.subr.mxu0 0.0
        %6838 = vmatpush1.msra.mxu0 0.0
        %6839 = vmatprep.subr.mxu0 0.0
        %6840 = vmatpush1.msra.mxu0 0.0
        %6841 = vmatprep.subr.mxu0 0.0
        %6842 = vmatpush1.msra.mxu0 0.0
        %6843 = vmatprep.subr.mxu0 0.0
        %6844 = vmatpush1.msra.mxu0 0.0
        %6845 = vmatprep.subr.mxu0 0.0
        %6846 = vmatpush1.msra.mxu0 0.0
        %6847 = vmatprep.mubr.f32.mxu0 0.0
        %v6848 = vand.u32 %v6406, 4294901760
        %6849 = vmatmul.mubr.f32.gmra.mrb[0].mxu0 %v6848
        %v6850 = vpop.f32.mrb[0].mxu0
        %v6851 = vadd.f32 %v6779, %v6850
        %v6852 = vpop.f32.mrb[0].mxu0
        %6853 = vdwg.mxu0
        %6856 = vrot.lane.b32.xlu0 %v6399, 16
        %v6857 = vpop.permute.xlu0 %6856
        %6858 = vrot.lane.b32.xlu0 %v6851, 16
        %v6859 = vpop.permute.xlu0 %6858
        %vm6862 = vcmask 195712
        %6863 = vst.msk [vmem:[#allocation3] sm:$0xff] %vm6862, %v6857
        %6864 = vst.msk [vmem:[#allocation3 + $0x8] sm:$0xff] %vm6862, %v6859
        %6865 = vrot.lane.b32.xlu0 %v1318, 104
        %v6866 = vpop.permute.xlu0 %6865
        %6867 = vrot.lane.b32.xlu0 %v1318, 72
        %v6868 = vpop.permute.xlu0 %6867
        %v6869 = vsel %vm1335, %v6866, 0
        %v6871 = vsel %vm1335, %v6868, 0
        %6873 = vmatprep.subr.mxu0 0.0
        %v6874 = vand.u32 %v6871, 4294901760
        %6875 = vmatpush1.xpose.msra.mxu0 %v6874
        %6876 = vmatprep.subr.mxu0 0.0
        %6877 = vmatpush1.xpose.msra.mxu0 0.0
        %6878 = vmatprep.subr.mxu0 0.0
        %6879 = vmatpush1.xpose.msra.mxu0 0.0
        %6880 = vmatprep.subr.mxu0 0.0
        %6881 = vmatpush1.xpose.msra.mxu0 0.0
        %6882 = vmatprep.subr.mxu0 0.0
        %6883 = vmatpush1.xpose.msra.mxu0 0.0
        %6884 = vmatprep.subr.mxu0 0.0
        %6885 = vmatpush1.xpose.msra.mxu0 0.0
        %6886 = vmatprep.subr.mxu0 0.0
        %6887 = vmatpush1.xpose.msra.mxu0 0.0
        %6888 = vmatprep.subr.mxu0 0.0
        %6889 = vmatpush1.xpose.msra.mxu0 0.0
        %6890 = vmatprep.subr.mxu0 0.0
        %6891 = vmatpush1.xpose.msra.mxu0 0.0
        %6892 = vmatprep.subr.mxu0 0.0
        %6893 = vmatpush1.xpose.msra.mxu0 0.0
        %6894 = vmatprep.subr.mxu0 0.0
        %6895 = vmatpush1.xpose.msra.mxu0 0.0
        %6896 = vmatprep.subr.mxu0 0.0
        %6897 = vmatpush1.xpose.msra.mxu0 0.0
        %6898 = vmatprep.subr.mxu0 0.0
        %6899 = vmatpush1.xpose.msra.mxu0 0.0
        %6900 = vmatprep.subr.mxu0 0.0
        %6901 = vmatpush1.xpose.msra.mxu0 0.0
        %6902 = vmatprep.subr.mxu0 0.0
        %6903 = vmatpush1.xpose.msra.mxu0 0.0
        %6904 = vmatprep.subr.mxu0 0.0
        %6905 = vmatpush1.xpose.msra.mxu0 0.0
        %6906 = vmatprep.subr.mxu0 0.0
        %6907 = vmatpush1.xpose.msra.mxu0 0.0
        %6908 = vmatprep.subr.mxu0 0.0
        %6909 = vmatpush1.xpose.msra.mxu0 0.0
        %6910 = vmatprep.subr.mxu0 0.0
        %6911 = vmatpush1.xpose.msra.mxu0 0.0
        %6912 = vmatprep.subr.mxu0 0.0
        %6913 = vmatpush1.xpose.msra.mxu0 0.0
        %6914 = vmatprep.subr.mxu0 0.0
        %6915 = vmatpush1.xpose.msra.mxu0 0.0
        %6916 = vmatprep.subr.mxu0 0.0
        %6917 = vmatpush1.xpose.msra.mxu0 0.0
        %6918 = vmatprep.subr.mxu0 0.0
        %6919 = vmatpush1.xpose.msra.mxu0 0.0
        %6920 = vmatprep.subr.mxu0 0.0
        %6921 = vmatpush1.xpose.msra.mxu0 0.0
        %6922 = vmatprep.subr.mxu0 0.0
        %6923 = vmatpush1.xpose.msra.mxu0 0.0
        %6924 = vmatprep.subr.mxu0 0.0
        %6925 = vmatpush1.xpose.msra.mxu0 0.0
        %6926 = vmatprep.subr.mxu0 0.0
        %6927 = vmatpush1.xpose.msra.mxu0 0.0
        %6928 = vmatprep.subr.mxu0 0.0
        %6929 = vmatpush1.xpose.msra.mxu0 0.0
        %6930 = vmatprep.subr.mxu0 0.0
        %6931 = vmatpush1.xpose.msra.mxu0 0.0
        %6932 = vmatprep.subr.mxu0 0.0
        %6933 = vmatpush1.xpose.msra.mxu0 0.0
        %6934 = vmatprep.subr.mxu0 0.0
        %6935 = vmatpush1.xpose.msra.mxu0 0.0
        %6936 = vmatprep.subr.mxu0 0.0
        %6937 = vmatpush1.xpose.msra.mxu0 0.0
        %6938 = vmatprep.mubr.f32.mxu0 0.0
        %v6939 = vand.u32 %v6869, 4294901760
        %v6940 = vsub.f32 %v6869, %v6939
        %v6941 = vand.u32 %v6940, 4294901760
        %v6942 = vsub.f32 %v6940, %v6941
        %v6943 = vand.u32 %v6942, 4294901760
        %6944 = vmatmul.mubr.f32.gmra.mrb[0].mxu0 %v6943
        %v6945 = vpop.f32.mrb[0].mxu0
        %v6946 = vadd.f32 0.0, %v6945
        %v6947 = vpop.f32.mrb[0].mxu0
        %6948 = vdwg.mxu0
        %6949 = vmatprep.subr.mxu0 0.0
        %v6950 = vand.u32 %v6871, 4294901760
        %v6951 = vsub.f32 %v6871, %v6950
        %v6952 = vand.u32 %v6951, 4294901760
        %v6953 = vsub.f32 %v6951, %v6952
        %v6954 = vand.u32 %v6953, 4294901760
        %6955 = vmatpush1.xpose.msra.mxu0 %v6954
        %6956 = vmatprep.subr.mxu0 0.0
        %6957 = vmatpush1.xpose.msra.mxu0 0.0
        %6958 = vmatprep.subr.mxu0 0.0
        %6959 = vmatpush1.xpose.msra.mxu0 0.0
        %6960 = vmatprep.subr.mxu0 0.0
        %6961 = vmatpush1.xpose.msra.mxu0 0.0
        %6962 = vmatprep.subr.mxu0 0.0
        %6963 = vmatpush1.xpose.msra.mxu0 0.0
        %6964 = vmatprep.subr.mxu0 0.0
        %6965 = vmatpush1.xpose.msra.mxu0 0.0
        %6966 = vmatprep.subr.mxu0 0.0
        %6967 = vmatpush1.xpose.msra.mxu0 0.0
        %6968 = vmatprep.subr.mxu0 0.0
        %6969 = vmatpush1.xpose.msra.mxu0 0.0
        %6970 = vmatprep.subr.mxu0 0.0
        %6971 = vmatpush1.xpose.msra.mxu0 0.0
        %6972 = vmatprep.subr.mxu0 0.0
        %6973 = vmatpush1.xpose.msra.mxu0 0.0
        %6974 = vmatprep.subr.mxu0 0.0
        %6975 = vmatpush1.xpose.msra.mxu0 0.0
        %6976 = vmatprep.subr.mxu0 0.0
        %6977 = vmatpush1.xpose.msra.mxu0 0.0
        %6978 = vmatprep.subr.mxu0 0.0
        %6979 = vmatpush1.xpose.msra.mxu0 0.0
        %6980 = vmatprep.subr.mxu0 0.0
        %6981 = vmatpush1.xpose.msra.mxu0 0.0
        %6982 = vmatprep.subr.mxu0 0.0
        %6983 = vmatpush1.xpose.msra.mxu0 0.0
        %6984 = vmatprep.subr.mxu0 0.0
        %6985 = vmatpush1.xpose.msra.mxu0 0.0
        %6986 = vmatprep.subr.mxu0 0.0
        %6987 = vmatpush1.xpose.msra.mxu0 0.0
        %6988 = vmatprep.subr.mxu0 0.0
        %6989 = vmatpush1.xpose.msra.mxu0 0.0
        %6990 = vmatprep.subr.mxu0 0.0
        %6991 = vmatpush1.xpose.msra.mxu0 0.0
        %6992 = vmatprep.subr.mxu0 0.0
        %6993 = vmatpush1.xpose.msra.mxu0 0.0
        %6994 = vmatprep.subr.mxu0 0.0
        %6995 = vmatpush1.xpose.msra.mxu0 0.0
        %6996 = vmatprep.subr.mxu0 0.0
        %6997 = vmatpush1.xpose.msra.mxu0 0.0
        %6998 = vmatprep.subr.mxu0 0.0
        %6999 = vmatpush1.xpose.msra.mxu0 0.0
        %7000 = vmatprep.subr.mxu0 0.0
        %7001 = vmatpush1.xpose.msra.mxu0 0.0
        %7002 = vmatprep.subr.mxu0 0.0
        %7003 = vmatpush1.xpose.msra.mxu0 0.0
        %7004 = vmatprep.subr.mxu0 0.0
        %7005 = vmatpush1.xpose.msra.mxu0 0.0
        %7006 = vmatprep.subr.mxu0 0.0
        %7007 = vmatpush1.xpose.msra.mxu0 0.0
        %7008 = vmatprep.subr.mxu0 0.0
        %7009 = vmatpush1.xpose.msra.mxu0 0.0
        %7010 = vmatprep.subr.mxu0 0.0
        %7011 = vmatpush1.xpose.msra.mxu0 0.0
        %7012 = vmatprep.subr.mxu0 0.0
        %7013 = vmatpush1.xpose.msra.mxu0 0.0
        %7014 = vmatprep.subr.mxu0 0.0
        %7015 = vmatpush1.xpose.msra.mxu0 0.0
        %7016 = vmatprep.subr.mxu0 0.0
        %7017 = vmatpush1.xpose.msra.mxu0 0.0
        %7018 = vmatprep.mubr.f32.mxu0 0.0
        %v7019 = vand.u32 %v6869, 4294901760
        %7020 = vmatmul.mubr.f32.gmra.mrb[0].mxu0 %v7019
        %v7021 = vpop.f32.mrb[0].mxu0
        %v7022 = vadd.f32 %v6946, %v7021
        %v7023 = vpop.f32.mrb[0].mxu0
        %7024 = vdwg.mxu0
        %7025 = vmatprep.subr.mxu0 0.0
        %v7026 = vand.u32 %v6871, 4294901760
        %v7027 = vsub.f32 %v6871, %v7026
        %7028 = vmatpush1.xpose.msra.mxu0 %v7027
        %7029 = vmatprep.subr.mxu0 0.0
        %7030 = vmatpush1.xpose.msra.mxu0 0.0
        %7031 = vmatprep.subr.mxu0 0.0
        %7032 = vmatpush1.xpose.msra.mxu0 0.0
        %7033 = vmatprep.subr.mxu0 0.0
        %7034 = vmatpush1.xpose.msra.mxu0 0.0
        %7035 = vmatprep.subr.mxu0 0.0
        %7036 = vmatpush1.xpose.msra.mxu0 0.0
        %7037 = vmatprep.subr.mxu0 0.0
        %7038 = vmatpush1.xpose.msra.mxu0 0.0
        %7039 = vmatprep.subr.mxu0 0.0
        %7040 = vmatpush1.xpose.msra.mxu0 0.0
        %7041 = vmatprep.subr.mxu0 0.0
        %7042 = vmatpush1.xpose.msra.mxu0 0.0
        %7043 = vmatprep.subr.mxu0 0.0
        %7044 = vmatpush1.xpose.msra.mxu0 0.0
        %7045 = vmatprep.subr.mxu0 0.0
        %7046 = vmatpush1.xpose.msra.mxu0 0.0
        %7047 = vmatprep.subr.mxu0 0.0
        %7048 = vmatpush1.xpose.msra.mxu0 0.0
        %7049 = vmatprep.subr.mxu0 0.0
        %7050 = vmatpush1.xpose.msra.mxu0 0.0
        %7051 = vmatprep.subr.mxu0 0.0
        %7052 = vmatpush1.xpose.msra.mxu0 0.0
        %7053 = vmatprep.subr.mxu0 0.0
        %7054 = vmatpush1.xpose.msra.mxu0 0.0
        %7055 = vmatprep.subr.mxu0 0.0
        %7056 = vmatpush1.xpose.msra.mxu0 0.0
        %7057 = vmatprep.subr.mxu0 0.0
        %7058 = vmatpush1.xpose.msra.mxu0 0.0
        %7059 = vmatprep.subr.mxu0 0.0
        %7060 = vmatpush1.xpose.msra.mxu0 0.0
        %7061 = vmatprep.subr.mxu0 0.0
        %7062 = vmatpush1.xpose.msra.mxu0 0.0
        %7063 = vmatprep.subr.mxu0 0.0
        %7064 = vmatpush1.xpose.msra.mxu0 0.0
        %7065 = vmatprep.subr.mxu0 0.0
        %7066 = vmatpush1.xpose.msra.mxu0 0.0
        %7067 = vmatprep.subr.mxu0 0.0
        %7068 = vmatpush1.xpose.msra.mxu0 0.0
        %7069 = vmatprep.subr.mxu0 0.0
        %7070 = vmatpush1.xpose.msra.mxu0 0.0
        %7071 = vmatprep.subr.mxu0 0.0
        %7072 = vmatpush1.xpose.msra.mxu0 0.0
        %7073 = vmatprep.subr.mxu0 0.0
        %7074 = vmatpush1.xpose.msra.mxu0 0.0
        %7075 = vmatprep.subr.mxu0 0.0
        %7076 = vmatpush1.xpose.msra.mxu0 0.0
        %7077 = vmatprep.subr.mxu0 0.0
        %7078 = vmatpush1.xpose.msra.mxu0 0.0
        %7079 = vmatprep.subr.mxu0 0.0
        %7080 = vmatpush1.xpose.msra.mxu0 0.0
        %7081 = vmatprep.subr.mxu0 0.0
        %7082 = vmatpush1.xpose.msra.mxu0 0.0
        %7083 = vmatprep.subr.mxu0 0.0
        %7084 = vmatpush1.xpose.msra.mxu0 0.0
        %7085 = vmatprep.subr.mxu0 0.0
        %7086 = vmatpush1.xpose.msra.mxu0 0.0
        %7087 = vmatprep.subr.mxu0 0.0
        %7088 = vmatpush1.xpose.msra.mxu0 0.0
        %7089 = vmatprep.subr.mxu0 0.0
        %7090 = vmatpush1.xpose.msra.mxu0 0.0
        %7091 = vmatprep.mubr.f32.mxu0 0.0
        %v7092 = vand.u32 %v6869, 4294901760
        %v7093 = vsub.f32 %v6869, %v7092
        %7094 = vmatmul.mubr.f32.gmra.mrb[0].mxu0 %v7093
        %v7095 = vpop.f32.mrb[0].mxu0
        %v7096 = vadd.f32 %v7022, %v7095
        %v7097 = vpop.f32.mrb[0].mxu0
        %7098 = vdwg.mxu0
        %7099 = vmatprep.subr.mxu0 0.0
        %v7100 = vand.u32 %v6871, 4294901760
        %7101 = vmatpush1.xpose.msra.mxu0 %v7100
        %7102 = vmatprep.subr.mxu0 0.0
        %7103 = vmatpush1.xpose.msra.mxu0 0.0
        %7104 = vmatprep.subr.mxu0 0.0
        %7105 = vmatpush1.xpose.msra.mxu0 0.0
        %7106 = vmatprep.subr.mxu0 0.0
        %7107 = vmatpush1.xpose.msra.mxu0 0.0
        %7108 = vmatprep.subr.mxu0 0.0
        %7109 = vmatpush1.xpose.msra.mxu0 0.0
        %7110 = vmatprep.subr.mxu0 0.0
        %7111 = vmatpush1.xpose.msra.mxu0 0.0
        %7112 = vmatprep.subr.mxu0 0.0
        %7113 = vmatpush1.xpose.msra.mxu0 0.0
        %7114 = vmatprep.subr.mxu0 0.0
        %7115 = vmatpush1.xpose.msra.mxu0 0.0
        %7116 = vmatprep.subr.mxu0 0.0
        %7117 = vmatpush1.xpose.msra.mxu0 0.0
        %7118 = vmatprep.subr.mxu0 0.0
        %7119 = vmatpush1.xpose.msra.mxu0 0.0
        %7120 = vmatprep.subr.mxu0 0.0
        %7121 = vmatpush1.xpose.msra.mxu0 0.0
        %7122 = vmatprep.subr.mxu0 0.0
        %7123 = vmatpush1.xpose.msra.mxu0 0.0
        %7124 = vmatprep.subr.mxu0 0.0
        %7125 = vmatpush1.xpose.msra.mxu0 0.0
        %7126 = vmatprep.subr.mxu0 0.0
        %7127 = vmatpush1.xpose.msra.mxu0 0.0
        %7128 = vmatprep.subr.mxu0 0.0
        %7129 = vmatpush1.xpose.msra.mxu0 0.0
        %7130 = vmatprep.subr.mxu0 0.0
        %7131 = vmatpush1.xpose.msra.mxu0 0.0
        %7132 = vmatprep.subr.mxu0 0.0
        %7133 = vmatpush1.xpose.msra.mxu0 0.0
        %7134 = vmatprep.subr.mxu0 0.0
        %7135 = vmatpush1.xpose.msra.mxu0 0.0
        %7136 = vmatprep.subr.mxu0 0.0
        %7137 = vmatpush1.xpose.msra.mxu0 0.0
        %7138 = vmatprep.subr.mxu0 0.0
        %7139 = vmatpush1.xpose.msra.mxu0 0.0
        %7140 = vmatprep.subr.mxu0 0.0
        %7141 = vmatpush1.xpose.msra.mxu0 0.0
        %7142 = vmatprep.subr.mxu0 0.0
        %7143 = vmatpush1.xpose.msra.mxu0 0.0
        %7144 = vmatprep.subr.mxu0 0.0
        %7145 = vmatpush1.xpose.msra.mxu0 0.0
        %7146 = vmatprep.subr.mxu0 0.0
        %7147 = vmatpush1.xpose.msra.mxu0 0.0
        %7148 = vmatprep.subr.mxu0 0.0
        %7149 = vmatpush1.xpose.msra.mxu0 0.0
        %7150 = vmatprep.subr.mxu0 0.0
        %7151 = vmatpush1.xpose.msra.mxu0 0.0
        %7152 = vmatprep.subr.mxu0 0.0
        %7153 = vmatpush1.xpose.msra.mxu0 0.0
        %7154 = vmatprep.subr.mxu0 0.0
        %7155 = vmatpush1.xpose.msra.mxu0 0.0
        %7156 = vmatprep.subr.mxu0 0.0
        %7157 = vmatpush1.xpose.msra.mxu0 0.0
        %7158 = vmatprep.subr.mxu0 0.0
        %7159 = vmatpush1.xpose.msra.mxu0 0.0
        %7160 = vmatprep.subr.mxu0 0.0
        %7161 = vmatpush1.xpose.msra.mxu0 0.0
        %7162 = vmatprep.subr.mxu0 0.0
        %7163 = vmatpush1.xpose.msra.mxu0 0.0
        %7164 = vmatprep.mubr.f32.mxu0 0.0
        %v7165 = vand.u32 %v6869, 4294901760
        %v7166 = vsub.f32 %v6869, %v7165
        %v7167 = vand.u32 %v7166, 4294901760
        %7168 = vmatmul.mubr.f32.gmra.mrb[0].mxu0 %v7167
        %v7169 = vpop.f32.mrb[0].mxu0
        %v7170 = vadd.f32 %v7096, %v7169
        %v7171 = vpop.f32.mrb[0].mxu0
        %7172 = vdwg.mxu0
        %7173 = vmatprep.subr.mxu0 0.0
        %v7174 = vand.u32 %v6871, 4294901760
        %v7175 = vsub.f32 %v6871, %v7174
        %v7176 = vand.u32 %v7175, 4294901760
        %7177 = vmatpush1.xpose.msra.mxu0 %v7176
        %7178 = vmatprep.subr.mxu0 0.0
        %7179 = vmatpush1.xpose.msra.mxu0 0.0
        %7180 = vmatprep.subr.mxu0 0.0
        %7181 = vmatpush1.xpose.msra.mxu0 0.0
        %7182 = vmatprep.subr.mxu0 0.0
        %7183 = vmatpush1.xpose.msra.mxu0 0.0
        %7184 = vmatprep.subr.mxu0 0.0
        %7185 = vmatpush1.xpose.msra.mxu0 0.0
        %7186 = vmatprep.subr.mxu0 0.0
        %7187 = vmatpush1.xpose.msra.mxu0 0.0
        %7188 = vmatprep.subr.mxu0 0.0
        %7189 = vmatpush1.xpose.msra.mxu0 0.0
        %7190 = vmatprep.subr.mxu0 0.0
        %7191 = vmatpush1.xpose.msra.mxu0 0.0
        %7192 = vmatprep.subr.mxu0 0.0
        %7193 = vmatpush1.xpose.msra.mxu0 0.0
        %7194 = vmatprep.subr.mxu0 0.0
        %7195 = vmatpush1.xpose.msra.mxu0 0.0
        %7196 = vmatprep.subr.mxu0 0.0
        %7197 = vmatpush1.xpose.msra.mxu0 0.0
        %7198 = vmatprep.subr.mxu0 0.0
        %7199 = vmatpush1.xpose.msra.mxu0 0.0
        %7200 = vmatprep.subr.mxu0 0.0
        %7201 = vmatpush1.xpose.msra.mxu0 0.0
        %7202 = vmatprep.subr.mxu0 0.0
        %7203 = vmatpush1.xpose.msra.mxu0 0.0
        %7204 = vmatprep.subr.mxu0 0.0
        %7205 = vmatpush1.xpose.msra.mxu0 0.0
        %7206 = vmatprep.subr.mxu0 0.0
        %7207 = vmatpush1.xpose.msra.mxu0 0.0
        %7208 = vmatprep.subr.mxu0 0.0
        %7209 = vmatpush1.xpose.msra.mxu0 0.0
        %7210 = vmatprep.subr.mxu0 0.0
        %7211 = vmatpush1.xpose.msra.mxu0 0.0
        %7212 = vmatprep.subr.mxu0 0.0
        %7213 = vmatpush1.xpose.msra.mxu0 0.0
        %7214 = vmatprep.subr.mxu0 0.0
        %7215 = vmatpush1.xpose.msra.mxu0 0.0
        %7216 = vmatprep.subr.mxu0 0.0
        %7217 = vmatpush1.xpose.msra.mxu0 0.0
        %7218 = vmatprep.subr.mxu0 0.0
        %7219 = vmatpush1.xpose.msra.mxu0 0.0
        %7220 = vmatprep.subr.mxu0 0.0
        %7221 = vmatpush1.xpose.msra.mxu0 0.0
        %7222 = vmatprep.subr.mxu0 0.0
        %7223 = vmatpush1.xpose.msra.mxu0 0.0
        %7224 = vmatprep.subr.mxu0 0.0
        %7225 = vmatpush1.xpose.msra.mxu0 0.0
        %7226 = vmatprep.subr.mxu0 0.0
        %7227 = vmatpush1.xpose.msra.mxu0 0.0
        %7228 = vmatprep.subr.mxu0 0.0
        %7229 = vmatpush1.xpose.msra.mxu0 0.0
        %7230 = vmatprep.subr.mxu0 0.0
        %7231 = vmatpush1.xpose.msra.mxu0 0.0
        %7232 = vmatprep.subr.mxu0 0.0
        %7233 = vmatpush1.xpose.msra.mxu0 0.0
        %7234 = vmatprep.subr.mxu0 0.0
        %7235 = vmatpush1.xpose.msra.mxu0 0.0
        %7236 = vmatprep.subr.mxu0 0.0
        %7237 = vmatpush1.xpose.msra.mxu0 0.0
        %7238 = vmatprep.subr.mxu0 0.0
        %7239 = vmatpush1.xpose.msra.mxu0 0.0
        %7240 = vmatprep.mubr.f32.mxu0 0.0
        %v7241 = vand.u32 %v6869, 4294901760
        %7242 = vmatmul.mubr.f32.gmra.mrb[0].mxu0 %v7241
        %v7243 = vpop.f32.mrb[0].mxu0
        %v7244 = vadd.f32 %v7170, %v7243
        %v7245 = vpop.f32.mrb[0].mxu0
        %7246 = vdwg.mxu0
        %7247 = vmatprep.subr.mxu0 0.0
        %v7248 = vand.u32 %v6871, 4294901760
        %7249 = vmatpush1.xpose.msra.mxu0 %v7248
        %7250 = vmatprep.subr.mxu0 0.0
        %7251 = vmatpush1.xpose.msra.mxu0 0.0
        %7252 = vmatprep.subr.mxu0 0.0
        %7253 = vmatpush1.xpose.msra.mxu0 0.0
        %7254 = vmatprep.subr.mxu0 0.0
        %7255 = vmatpush1.xpose.msra.mxu0 0.0
        %7256 = vmatprep.subr.mxu0 0.0
        %7257 = vmatpush1.xpose.msra.mxu0 0.0
        %7258 = vmatprep.subr.mxu0 0.0
        %7259 = vmatpush1.xpose.msra.mxu0 0.0
        %7260 = vmatprep.subr.mxu0 0.0
        %7261 = vmatpush1.xpose.msra.mxu0 0.0
        %7262 = vmatprep.subr.mxu0 0.0
        %7263 = vmatpush1.xpose.msra.mxu0 0.0
        %7264 = vmatprep.subr.mxu0 0.0
        %7265 = vmatpush1.xpose.msra.mxu0 0.0
        %7266 = vmatprep.subr.mxu0 0.0
        %7267 = vmatpush1.xpose.msra.mxu0 0.0
        %7268 = vmatprep.subr.mxu0 0.0
        %7269 = vmatpush1.xpose.msra.mxu0 0.0
        %7270 = vmatprep.subr.mxu0 0.0
        %7271 = vmatpush1.xpose.msra.mxu0 0.0
        %7272 = vmatprep.subr.mxu0 0.0
        %7273 = vmatpush1.xpose.msra.mxu0 0.0
        %7274 = vmatprep.subr.mxu0 0.0
        %7275 = vmatpush1.xpose.msra.mxu0 0.0
        %7276 = vmatprep.subr.mxu0 0.0
        %7277 = vmatpush1.xpose.msra.mxu0 0.0
        %7278 = vmatprep.subr.mxu0 0.0
        %7279 = vmatpush1.xpose.msra.mxu0 0.0
        %7280 = vmatprep.subr.mxu0 0.0
        %7281 = vmatpush1.xpose.msra.mxu0 0.0
        %7282 = vmatprep.subr.mxu0 0.0
        %7283 = vmatpush1.xpose.msra.mxu0 0.0
        %7284 = vmatprep.subr.mxu0 0.0
        %7285 = vmatpush1.xpose.msra.mxu0 0.0
        %7286 = vmatprep.subr.mxu0 0.0
        %7287 = vmatpush1.xpose.msra.mxu0 0.0
        %7288 = vmatprep.subr.mxu0 0.0
        %7289 = vmatpush1.xpose.msra.mxu0 0.0
        %7290 = vmatprep.subr.mxu0 0.0
        %7291 = vmatpush1.xpose.msra.mxu0 0.0
        %7292 = vmatprep.subr.mxu0 0.0
        %7293 = vmatpush1.xpose.msra.mxu0 0.0
        %7294 = vmatprep.subr.mxu0 0.0
        %7295 = vmatpush1.xpose.msra.mxu0 0.0
        %7296 = vmatprep.subr.mxu0 0.0
        %7297 = vmatpush1.xpose.msra.mxu0 0.0
        %7298 = vmatprep.subr.mxu0 0.0
        %7299 = vmatpush1.xpose.msra.mxu0 0.0
        %7300 = vmatprep.subr.mxu0 0.0
        %7301 = vmatpush1.xpose.msra.mxu0 0.0
        %7302 = vmatprep.subr.mxu0 0.0
        %7303 = vmatpush1.xpose.msra.mxu0 0.0
        %7304 = vmatprep.subr.mxu0 0.0
        %7305 = vmatpush1.xpose.msra.mxu0 0.0
        %7306 = vmatprep.subr.mxu0 0.0
        %7307 = vmatpush1.xpose.msra.mxu0 0.0
        %7308 = vmatprep.subr.mxu0 0.0
        %7309 = vmatpush1.xpose.msra.mxu0 0.0
        %7310 = vmatprep.subr.mxu0 0.0
        %7311 = vmatpush1.xpose.msra.mxu0 0.0
        %7312 = vmatprep.mubr.f32.mxu0 0.0
        %v7313 = vand.u32 %v6869, 4294901760
        %7314 = vmatmul.mubr.f32.gmra.mrb[0].mxu0 %v7313
        %v7315 = vpop.f32.mrb[0].mxu0
        %v7316 = vadd.f32 %v7244, %v7315
        %v7317 = vpop.f32.mrb[0].mxu0
        %7318 = vdwg.mxu0
        %7319 = vrot.lane.b32.xlu0 %v1324, 104
        %v7320 = vpop.permute.xlu0 %7319
        %7321 = vrot.lane.b32.xlu0 %v1324, 72
        %v7322 = vpop.permute.xlu0 %7321
        %v7323 = vsel %vm1335, %v7320, 0
        %v7325 = vsel %vm1335, %v7322, 0
        %7327 = vmatprep.subr.mxu0 0.0
        %v7328 = vand.u32 %v7325, 4294901760
        %7329 = vmatpush1.xpose.msra.mxu0 %v7328
        %7330 = vmatprep.subr.mxu0 0.0
        %7331 = vmatpush1.xpose.msra.mxu0 0.0
        %7332 = vmatprep.subr.mxu0 0.0
        %7333 = vmatpush1.xpose.msra.mxu0 0.0
        %7334 = vmatprep.subr.mxu0 0.0
        %7335 = vmatpush1.xpose.msra.mxu0 0.0
        %7336 = vmatprep.subr.mxu0 0.0
        %7337 = vmatpush1.xpose.msra.mxu0 0.0
        %7338 = vmatprep.subr.mxu0 0.0
        %7339 = vmatpush1.xpose.msra.mxu0 0.0
        %7340 = vmatprep.subr.mxu0 0.0
        %7341 = vmatpush1.xpose.msra.mxu0 0.0
        %7342 = vmatprep.subr.mxu0 0.0
        %7343 = vmatpush1.xpose.msra.mxu0 0.0
        %7344 = vmatprep.subr.mxu0 0.0
        %7345 = vmatpush1.xpose.msra.mxu0 0.0
        %7346 = vmatprep.subr.mxu0 0.0
        %7347 = vmatpush1.xpose.msra.mxu0 0.0
        %7348 = vmatprep.subr.mxu0 0.0
        %7349 = vmatpush1.xpose.msra.mxu0 0.0
        %7350 = vmatprep.subr.mxu0 0.0
        %7351 = vmatpush1.xpose.msra.mxu0 0.0
        %7352 = vmatprep.subr.mxu0 0.0
        %7353 = vmatpush1.xpose.msra.mxu0 0.0
        %7354 = vmatprep.subr.mxu0 0.0
        %7355 = vmatpush1.xpose.msra.mxu0 0.0
        %7356 = vmatprep.subr.mxu0 0.0
        %7357 = vmatpush1.xpose.msra.mxu0 0.0
        %7358 = vmatprep.subr.mxu0 0.0
        %7359 = vmatpush1.xpose.msra.mxu0 0.0
        %7360 = vmatprep.subr.mxu0 0.0
        %7361 = vmatpush1.xpose.msra.mxu0 0.0
        %7362 = vmatprep.subr.mxu0 0.0
        %7363 = vmatpush1.xpose.msra.mxu0 0.0
        %7364 = vmatprep.subr.mxu0 0.0
        %7365 = vmatpush1.xpose.msra.mxu0 0.0
        %7366 = vmatprep.subr.mxu0 0.0
        %7367 = vmatpush1.xpose.msra.mxu0 0.0
        %7368 = vmatprep.subr.mxu0 0.0
        %7369 = vmatpush1.xpose.msra.mxu0 0.0
        %7370 = vmatprep.subr.mxu0 0.0
        %7371 = vmatpush1.xpose.msra.mxu0 0.0
        %7372 = vmatprep.subr.mxu0 0.0
        %7373 = vmatpush1.xpose.msra.mxu0 0.0
        %7374 = vmatprep.subr.mxu0 0.0
        %7375 = vmatpush1.xpose.msra.mxu0 0.0
        %7376 = vmatprep.subr.mxu0 0.0
        %7377 = vmatpush1.xpose.msra.mxu0 0.0
        %7378 = vmatprep.subr.mxu0 0.0
        %7379 = vmatpush1.xpose.msra.mxu0 0.0
        %7380 = vmatprep.subr.mxu0 0.0
        %7381 = vmatpush1.xpose.msra.mxu0 0.0
        %7382 = vmatprep.subr.mxu0 0.0
        %7383 = vmatpush1.xpose.msra.mxu0 0.0
        %7384 = vmatprep.subr.mxu0 0.0
        %7385 = vmatpush1.xpose.msra.mxu0 0.0
        %7386 = vmatprep.subr.mxu0 0.0
        %7387 = vmatpush1.xpose.msra.mxu0 0.0
        %7388 = vmatprep.subr.mxu0 0.0
        %7389 = vmatpush1.xpose.msra.mxu0 0.0
        %7390 = vmatprep.subr.mxu0 0.0
        %7391 = vmatpush1.xpose.msra.mxu0 0.0
        %7392 = vmatprep.mubr.f32.mxu0 0.0
        %v7393 = vand.u32 %v7323, 4294901760
        %v7394 = vsub.f32 %v7323, %v7393
        %v7395 = vand.u32 %v7394, 4294901760
        %v7396 = vsub.f32 %v7394, %v7395
        %v7397 = vand.u32 %v7396, 4294901760
        %7398 = vmatmul.mubr.f32.gmra.mrb[0].mxu0 %v7397
        %v7399 = vpop.f32.mrb[0].mxu0
        %v7400 = vadd.f32 0.0, %v7399
        %v7401 = vpop.f32.mrb[0].mxu0
        %7402 = vdwg.mxu0
        %7403 = vmatprep.subr.mxu0 0.0
        %v7404 = vand.u32 %v7325, 4294901760
        %v7405 = vsub.f32 %v7325, %v7404
        %v7406 = vand.u32 %v7405, 4294901760
        %v7407 = vsub.f32 %v7405, %v7406
        %v7408 = vand.u32 %v7407, 4294901760
        %7409 = vmatpush1.xpose.msra.mxu0 %v7408
        %7410 = vmatprep.subr.mxu0 0.0
        %7411 = vmatpush1.xpose.msra.mxu0 0.0
        %7412 = vmatprep.subr.mxu0 0.0
        %7413 = vmatpush1.xpose.msra.mxu0 0.0
        %7414 = vmatprep.subr.mxu0 0.0
        %7415 = vmatpush1.xpose.msra.mxu0 0.0
        %7416 = vmatprep.subr.mxu0 0.0
        %7417 = vmatpush1.xpose.msra.mxu0 0.0
        %7418 = vmatprep.subr.mxu0 0.0
        %7419 = vmatpush1.xpose.msra.mxu0 0.0
        %7420 = vmatprep.subr.mxu0 0.0
        %7421 = vmatpush1.xpose.msra.mxu0 0.0
        %7422 = vmatprep.subr.mxu0 0.0
        %7423 = vmatpush1.xpose.msra.mxu0 0.0
        %7424 = vmatprep.subr.mxu0 0.0
        %7425 = vmatpush1.xpose.msra.mxu0 0.0
        %7426 = vmatprep.subr.mxu0 0.0
        %7427 = vmatpush1.xpose.msra.mxu0 0.0
        %7428 = vmatprep.subr.mxu0 0.0
        %7429 = vmatpush1.xpose.msra.mxu0 0.0
        %7430 = vmatprep.subr.mxu0 0.0
        %7431 = vmatpush1.xpose.msra.mxu0 0.0
        %7432 = vmatprep.subr.mxu0 0.0
        %7433 = vmatpush1.xpose.msra.mxu0 0.0
        %7434 = vmatprep.subr.mxu0 0.0
        %7435 = vmatpush1.xpose.msra.mxu0 0.0
        %7436 = vmatprep.subr.mxu0 0.0
        %7437 = vmatpush1.xpose.msra.mxu0 0.0
        %7438 = vmatprep.subr.mxu0 0.0
        %7439 = vmatpush1.xpose.msra.mxu0 0.0
        %7440 = vmatprep.subr.mxu0 0.0
        %7441 = vmatpush1.xpose.msra.mxu0 0.0
        %7442 = vmatprep.subr.mxu0 0.0
        %7443 = vmatpush1.xpose.msra.mxu0 0.0
        %7444 = vmatprep.subr.mxu0 0.0
        %7445 = vmatpush1.xpose.msra.mxu0 0.0
        %7446 = vmatprep.subr.mxu0 0.0
        %7447 = vmatpush1.xpose.msra.mxu0 0.0
        %7448 = vmatprep.subr.mxu0 0.0
        %7449 = vmatpush1.xpose.msra.mxu0 0.0
        %7450 = vmatprep.subr.mxu0 0.0
        %7451 = vmatpush1.xpose.msra.mxu0 0.0
        %7452 = vmatprep.subr.mxu0 0.0
        %7453 = vmatpush1.xpose.msra.mxu0 0.0
        %7454 = vmatprep.subr.mxu0 0.0
        %7455 = vmatpush1.xpose.msra.mxu0 0.0
        %7456 = vmatprep.subr.mxu0 0.0
        %7457 = vmatpush1.xpose.msra.mxu0 0.0
        %7458 = vmatprep.subr.mxu0 0.0
        %7459 = vmatpush1.xpose.msra.mxu0 0.0
        %7460 = vmatprep.subr.mxu0 0.0
        %7461 = vmatpush1.xpose.msra.mxu0 0.0
        %7462 = vmatprep.subr.mxu0 0.0
        %7463 = vmatpush1.xpose.msra.mxu0 0.0
        %7464 = vmatprep.subr.mxu0 0.0
        %7465 = vmatpush1.xpose.msra.mxu0 0.0
        %7466 = vmatprep.subr.mxu0 0.0
        %7467 = vmatpush1.xpose.msra.mxu0 0.0
        %7468 = vmatprep.subr.mxu0 0.0
        %7469 = vmatpush1.xpose.msra.mxu0 0.0
        %7470 = vmatprep.subr.mxu0 0.0
        %7471 = vmatpush1.xpose.msra.mxu0 0.0
        %7472 = vmatprep.mubr.f32.mxu0 0.0
        %v7473 = vand.u32 %v7323, 4294901760
        %7474 = vmatmul.mubr.f32.gmra.mrb[0].mxu0 %v7473
        %v7475 = vpop.f32.mrb[0].mxu0
        %v7476 = vadd.f32 %v7400, %v7475
        %v7477 = vpop.f32.mrb[0].mxu0
        %7478 = vdwg.mxu0
        %7479 = vmatprep.subr.mxu0 0.0
        %v7480 = vand.u32 %v7325, 4294901760
        %v7481 = vsub.f32 %v7325, %v7480
        %7482 = vmatpush1.xpose.msra.mxu0 %v7481
        %7483 = vmatprep.subr.mxu0 0.0
        %7484 = vmatpush1.xpose.msra.mxu0 0.0
        %7485 = vmatprep.subr.mxu0 0.0
        %7486 = vmatpush1.xpose.msra.mxu0 0.0
        %7487 = vmatprep.subr.mxu0 0.0
        %7488 = vmatpush1.xpose.msra.mxu0 0.0
        %7489 = vmatprep.subr.mxu0 0.0
        %7490 = vmatpush1.xpose.msra.mxu0 0.0
        %7491 = vmatprep.subr.mxu0 0.0
        %7492 = vmatpush1.xpose.msra.mxu0 0.0
        %7493 = vmatprep.subr.mxu0 0.0
        %7494 = vmatpush1.xpose.msra.mxu0 0.0
        %7495 = vmatprep.subr.mxu0 0.0
        %7496 = vmatpush1.xpose.msra.mxu0 0.0
        %7497 = vmatprep.subr.mxu0 0.0
        %7498 = vmatpush1.xpose.msra.mxu0 0.0
        %7499 = vmatprep.subr.mxu0 0.0
        %7500 = vmatpush1.xpose.msra.mxu0 0.0
        %7501 = vmatprep.subr.mxu0 0.0
        %7502 = vmatpush1.xpose.msra.mxu0 0.0
        %7503 = vmatprep.subr.mxu0 0.0
        %7504 = vmatpush1.xpose.msra.mxu0 0.0
        %7505 = vmatprep.subr.mxu0 0.0
        %7506 = vmatpush1.xpose.msra.mxu0 0.0
        %7507 = vmatprep.subr.mxu0 0.0
        %7508 = vmatpush1.xpose.msra.mxu0 0.0
        %7509 = vmatprep.subr.mxu0 0.0
        %7510 = vmatpush1.xpose.msra.mxu0 0.0
        %7511 = vmatprep.subr.mxu0 0.0
        %7512 = vmatpush1.xpose.msra.mxu0 0.0
        %7513 = vmatprep.subr.mxu0 0.0
        %7514 = vmatpush1.xpose.msra.mxu0 0.0
        %7515 = vmatprep.subr.mxu0 0.0
        %7516 = vmatpush1.xpose.msra.mxu0 0.0
        %7517 = vmatprep.subr.mxu0 0.0
        %7518 = vmatpush1.xpose.msra.mxu0 0.0
        %7519 = vmatprep.subr.mxu0 0.0
        %7520 = vmatpush1.xpose.msra.mxu0 0.0
        %7521 = vmatprep.subr.mxu0 0.0
        %7522 = vmatpush1.xpose.msra.mxu0 0.0
        %7523 = vmatprep.subr.mxu0 0.0
        %7524 = vmatpush1.xpose.msra.mxu0 0.0
        %7525 = vmatprep.subr.mxu0 0.0
        %7526 = vmatpush1.xpose.msra.mxu0 0.0
        %7527 = vmatprep.subr.mxu0 0.0
        %7528 = vmatpush1.xpose.msra.mxu0 0.0
        %7529 = vmatprep.subr.mxu0 0.0
        %7530 = vmatpush1.xpose.msra.mxu0 0.0
        %7531 = vmatprep.subr.mxu0 0.0
        %7532 = vmatpush1.xpose.msra.mxu0 0.0
        %7533 = vmatprep.subr.mxu0 0.0
        %7534 = vmatpush1.xpose.msra.mxu0 0.0
        %7535 = vmatprep.subr.mxu0 0.0
        %7536 = vmatpush1.xpose.msra.mxu0 0.0
        %7537 = vmatprep.subr.mxu0 0.0
        %7538 = vmatpush1.xpose.msra.mxu0 0.0
        %7539 = vmatprep.subr.mxu0 0.0
        %7540 = vmatpush1.xpose.msra.mxu0 0.0
        %7541 = vmatprep.subr.mxu0 0.0
        %7542 = vmatpush1.xpose.msra.mxu0 0.0
        %7543 = vmatprep.subr.mxu0 0.0
        %7544 = vmatpush1.xpose.msra.mxu0 0.0
        %7545 = vmatprep.mubr.f32.mxu0 0.0
        %v7546 = vand.u32 %v7323, 4294901760
        %v7547 = vsub.f32 %v7323, %v7546
        %7548 = vmatmul.mubr.f32.gmra.mrb[0].mxu0 %v7547
        %v7549 = vpop.f32.mrb[0].mxu0
        %v7550 = vadd.f32 %v7476, %v7549
        %v7551 = vpop.f32.mrb[0].mxu0
        %7552 = vdwg.mxu0
        %7553 = vmatprep.subr.mxu0 0.0
        %v7554 = vand.u32 %v7325, 4294901760
        %7555 = vmatpush1.xpose.msra.mxu0 %v7554
        %7556 = vmatprep.subr.mxu0 0.0
        %7557 = vmatpush1.xpose.msra.mxu0 0.0
        %7558 = vmatprep.subr.mxu0 0.0
        %7559 = vmatpush1.xpose.msra.mxu0 0.0
        %7560 = vmatprep.subr.mxu0 0.0
        %7561 = vmatpush1.xpose.msra.mxu0 0.0
        %7562 = vmatprep.subr.mxu0 0.0
        %7563 = vmatpush1.xpose.msra.mxu0 0.0
        %7564 = vmatprep.subr.mxu0 0.0
        %7565 = vmatpush1.xpose.msra.mxu0 0.0
        %7566 = vmatprep.subr.mxu0 0.0
        %7567 = vmatpush1.xpose.msra.mxu0 0.0
        %7568 = vmatprep.subr.mxu0 0.0
        %7569 = vmatpush1.xpose.msra.mxu0 0.0
        %7570 = vmatprep.subr.mxu0 0.0
        %7571 = vmatpush1.xpose.msra.mxu0 0.0
        %7572 = vmatprep.subr.mxu0 0.0
        %7573 = vmatpush1.xpose.msra.mxu0 0.0
        %7574 = vmatprep.subr.mxu0 0.0
        %7575 = vmatpush1.xpose.msra.mxu0 0.0
        %7576 = vmatprep.subr.mxu0 0.0
        %7577 = vmatpush1.xpose.msra.mxu0 0.0
        %7578 = vmatprep.subr.mxu0 0.0
        %7579 = vmatpush1.xpose.msra.mxu0 0.0
        %7580 = vmatprep.subr.mxu0 0.0
        %7581 = vmatpush1.xpose.msra.mxu0 0.0
        %7582 = vmatprep.subr.mxu0 0.0
        %7583 = vmatpush1.xpose.msra.mxu0 0.0
        %7584 = vmatprep.subr.mxu0 0.0
        %7585 = vmatpush1.xpose.msra.mxu0 0.0
        %7586 = vmatprep.subr.mxu0 0.0
        %7587 = vmatpush1.xpose.msra.mxu0 0.0
        %7588 = vmatprep.subr.mxu0 0.0
        %7589 = vmatpush1.xpose.msra.mxu0 0.0
        %7590 = vmatprep.subr.mxu0 0.0
        %7591 = vmatpush1.xpose.msra.mxu0 0.0
        %7592 = vmatprep.subr.mxu0 0.0
        %7593 = vmatpush1.xpose.msra.mxu0 0.0
        %7594 = vmatprep.subr.mxu0 0.0
        %7595 = vmatpush1.xpose.msra.mxu0 0.0
        %7596 = vmatprep.subr.mxu0 0.0
        %7597 = vmatpush1.xpose.msra.mxu0 0.0
        %7598 = vmatprep.subr.mxu0 0.0
        %7599 = vmatpush1.xpose.msra.mxu0 0.0
        %7600 = vmatprep.subr.mxu0 0.0
        %7601 = vmatpush1.xpose.msra.mxu0 0.0
        %7602 = vmatprep.subr.mxu0 0.0
        %7603 = vmatpush1.xpose.msra.mxu0 0.0
        %7604 = vmatprep.subr.mxu0 0.0
        %7605 = vmatpush1.xpose.msra.mxu0 0.0
        %7606 = vmatprep.subr.mxu0 0.0
        %7607 = vmatpush1.xpose.msra.mxu0 0.0
        %7608 = vmatprep.subr.mxu0 0.0
        %7609 = vmatpush1.xpose.msra.mxu0 0.0
        %7610 = vmatprep.subr.mxu0 0.0
        %7611 = vmatpush1.xpose.msra.mxu0 0.0
        %7612 = vmatprep.subr.mxu0 0.0
        %7613 = vmatpush1.xpose.msra.mxu0 0.0
        %7614 = vmatprep.subr.mxu0 0.0
        %7615 = vmatpush1.xpose.msra.mxu0 0.0
        %7616 = vmatprep.subr.mxu0 0.0
        %7617 = vmatpush1.xpose.msra.mxu0 0.0
        %7618 = vmatprep.mubr.f32.mxu0 0.0
        %v7619 = vand.u32 %v7323, 4294901760
        %v7620 = vsub.f32 %v7323, %v7619
        %v7621 = vand.u32 %v7620, 4294901760
        %7622 = vmatmul.mubr.f32.gmra.mrb[0].mxu0 %v7621
        %v7623 = vpop.f32.mrb[0].mxu0
        %v7624 = vadd.f32 %v7550, %v7623
        %v7625 = vpop.f32.mrb[0].mxu0
        %7626 = vdwg.mxu0
        %7627 = vmatprep.subr.mxu0 0.0
        %v7628 = vand.u32 %v7325, 4294901760
        %v7629 = vsub.f32 %v7325, %v7628
        %v7630 = vand.u32 %v7629, 4294901760
        %7631 = vmatpush1.xpose.msra.mxu0 %v7630
        %7632 = vmatprep.subr.mxu0 0.0
        %7633 = vmatpush1.xpose.msra.mxu0 0.0
        %7634 = vmatprep.subr.mxu0 0.0
        %7635 = vmatpush1.xpose.msra.mxu0 0.0
        %7636 = vmatprep.subr.mxu0 0.0
        %7637 = vmatpush1.xpose.msra.mxu0 0.0
        %7638 = vmatprep.subr.mxu0 0.0
        %7639 = vmatpush1.xpose.msra.mxu0 0.0
        %7640 = vmatprep.subr.mxu0 0.0
        %7641 = vmatpush1.xpose.msra.mxu0 0.0
        %7642 = vmatprep.subr.mxu0 0.0
        %7643 = vmatpush1.xpose.msra.mxu0 0.0
        %7644 = vmatprep.subr.mxu0 0.0
        %7645 = vmatpush1.xpose.msra.mxu0 0.0
        %7646 = vmatprep.subr.mxu0 0.0
        %7647 = vmatpush1.xpose.msra.mxu0 0.0
        %7648 = vmatprep.subr.mxu0 0.0
        %7649 = vmatpush1.xpose.msra.mxu0 0.0
        %7650 = vmatprep.subr.mxu0 0.0
        %7651 = vmatpush1.xpose.msra.mxu0 0.0
        %7652 = vmatprep.subr.mxu0 0.0
        %7653 = vmatpush1.xpose.msra.mxu0 0.0
        %7654 = vmatprep.subr.mxu0 0.0
        %7655 = vmatpush1.xpose.msra.mxu0 0.0
        %7656 = vmatprep.subr.mxu0 0.0
        %7657 = vmatpush1.xpose.msra.mxu0 0.0
        %7658 = vmatprep.subr.mxu0 0.0
        %7659 = vmatpush1.xpose.msra.mxu0 0.0
        %7660 = vmatprep.subr.mxu0 0.0
        %7661 = vmatpush1.xpose.msra.mxu0 0.0
        %7662 = vmatprep.subr.mxu0 0.0
        %7663 = vmatpush1.xpose.msra.mxu0 0.0
        %7664 = vmatprep.subr.mxu0 0.0
        %7665 = vmatpush1.xpose.msra.mxu0 0.0
        %7666 = vmatprep.subr.mxu0 0.0
        %7667 = vmatpush1.xpose.msra.mxu0 0.0
        %7668 = vmatprep.subr.mxu0 0.0
        %7669 = vmatpush1.xpose.msra.mxu0 0.0
        %7670 = vmatprep.subr.mxu0 0.0
        %7671 = vmatpush1.xpose.msra.mxu0 0.0
        %7672 = vmatprep.subr.mxu0 0.0
        %7673 = vmatpush1.xpose.msra.mxu0 0.0
        %7674 = vmatprep.subr.mxu0 0.0
        %7675 = vmatpush1.xpose.msra.mxu0 0.0
        %7676 = vmatprep.subr.mxu0 0.0
        %7677 = vmatpush1.xpose.msra.mxu0 0.0
        %7678 = vmatprep.subr.mxu0 0.0
        %7679 = vmatpush1.xpose.msra.mxu0 0.0
        %7680 = vmatprep.subr.mxu0 0.0
        %7681 = vmatpush1.xpose.msra.mxu0 0.0
        %7682 = vmatprep.subr.mxu0 0.0
        %7683 = vmatpush1.xpose.msra.mxu0 0.0
        %7684 = vmatprep.subr.mxu0 0.0
        %7685 = vmatpush1.xpose.msra.mxu0 0.0
        %7686 = vmatprep.subr.mxu0 0.0
        %7687 = vmatpush1.xpose.msra.mxu0 0.0
        %7688 = vmatprep.subr.mxu0 0.0
        %7689 = vmatpush1.xpose.msra.mxu0 0.0
        %7690 = vmatprep.subr.mxu0 0.0
        %7691 = vmatpush1.xpose.msra.mxu0 0.0
        %7692 = vmatprep.subr.mxu0 0.0
        %7693 = vmatpush1.xpose.msra.mxu0 0.0
        %7694 = vmatprep.mubr.f32.mxu0 0.0
        %v7695 = vand.u32 %v7323, 4294901760
        %7696 = vmatmul.mubr.f32.gmra.mrb[0].mxu0 %v7695
        %v7697 = vpop.f32.mrb[0].mxu0
        %v7698 = vadd.f32 %v7624, %v7697
        %v7699 = vpop.f32.mrb[0].mxu0
        %7700 = vdwg.mxu0
        %7701 = vmatprep.subr.mxu0 0.0
        %v7702 = vand.u32 %v7325, 4294901760
        %7703 = vmatpush1.xpose.msra.mxu0 %v7702
        %7704 = vmatprep.subr.mxu0 0.0
        %7705 = vmatpush1.xpose.msra.mxu0 0.0
        %7706 = vmatprep.subr.mxu0 0.0
        %7707 = vmatpush1.xpose.msra.mxu0 0.0
        %7708 = vmatprep.subr.mxu0 0.0
        %7709 = vmatpush1.xpose.msra.mxu0 0.0
        %7710 = vmatprep.subr.mxu0 0.0
        %7711 = vmatpush1.xpose.msra.mxu0 0.0
        %7712 = vmatprep.subr.mxu0 0.0
        %7713 = vmatpush1.xpose.msra.mxu0 0.0
        %7714 = vmatprep.subr.mxu0 0.0
        %7715 = vmatpush1.xpose.msra.mxu0 0.0
        %7716 = vmatprep.subr.mxu0 0.0
        %7717 = vmatpush1.xpose.msra.mxu0 0.0
        %7718 = vmatprep.subr.mxu0 0.0
        %7719 = vmatpush1.xpose.msra.mxu0 0.0
        %7720 = vmatprep.subr.mxu0 0.0
        %7721 = vmatpush1.xpose.msra.mxu0 0.0
        %7722 = vmatprep.subr.mxu0 0.0
        %7723 = vmatpush1.xpose.msra.mxu0 0.0
        %7724 = vmatprep.subr.mxu0 0.0
        %7725 = vmatpush1.xpose.msra.mxu0 0.0
        %7726 = vmatprep.subr.mxu0 0.0
        %7727 = vmatpush1.xpose.msra.mxu0 0.0
        %7728 = vmatprep.subr.mxu0 0.0
        %7729 = vmatpush1.xpose.msra.mxu0 0.0
        %7730 = vmatprep.subr.mxu0 0.0
        %7731 = vmatpush1.xpose.msra.mxu0 0.0
        %7732 = vmatprep.subr.mxu0 0.0
        %7733 = vmatpush1.xpose.msra.mxu0 0.0
        %7734 = vmatprep.subr.mxu0 0.0
        %7735 = vmatpush1.xpose.msra.mxu0 0.0
        %7736 = vmatprep.subr.mxu0 0.0
        %7737 = vmatpush1.xpose.msra.mxu0 0.0
        %7738 = vmatprep.subr.mxu0 0.0
        %7739 = vmatpush1.xpose.msra.mxu0 0.0
        %7740 = vmatprep.subr.mxu0 0.0
        %7741 = vmatpush1.xpose.msra.mxu0 0.0
        %7742 = vmatprep.subr.mxu0 0.0
        %7743 = vmatpush1.xpose.msra.mxu0 0.0
        %7744 = vmatprep.subr.mxu0 0.0
        %7745 = vmatpush1.xpose.msra.mxu0 0.0
        %7746 = vmatprep.subr.mxu0 0.0
        %7747 = vmatpush1.xpose.msra.mxu0 0.0
        %7748 = vmatprep.subr.mxu0 0.0
        %7749 = vmatpush1.xpose.msra.mxu0 0.0
        %7750 = vmatprep.subr.mxu0 0.0
        %7751 = vmatpush1.xpose.msra.mxu0 0.0
        %7752 = vmatprep.subr.mxu0 0.0
        %7753 = vmatpush1.xpose.msra.mxu0 0.0
        %7754 = vmatprep.subr.mxu0 0.0
        %7755 = vmatpush1.xpose.msra.mxu0 0.0
        %7756 = vmatprep.subr.mxu0 0.0
        %7757 = vmatpush1.xpose.msra.mxu0 0.0
        %7758 = vmatprep.subr.mxu0 0.0
        %7759 = vmatpush1.xpose.msra.mxu0 0.0
        %7760 = vmatprep.subr.mxu0 0.0
        %7761 = vmatpush1.xpose.msra.mxu0 0.0
        %7762 = vmatprep.subr.mxu0 0.0
        %7763 = vmatpush1.xpose.msra.mxu0 0.0
        %7764 = vmatprep.subr.mxu0 0.0
        %7765 = vmatpush1.xpose.msra.mxu0 0.0
        %7766 = vmatprep.mubr.f32.mxu0 0.0
        %v7767 = vand.u32 %v7323, 4294901760
        %7768 = vmatmul.mubr.f32.gmra.mrb[0].mxu0 %v7767
        %v7769 = vpop.f32.mrb[0].mxu0
        %v7770 = vadd.f32 %v7698, %v7769
        %v7771 = vpop.f32.mrb[0].mxu0
        %7772 = vdwg.mxu0
        %v7773 = vsel %vm2240, %v7316, -1e+30
        %v7774 = vsel %vm2240, %v7770, -1e+30
        %v7775 = vsel %vm1335, %v7773, -inf
        %7776 = vmax.xlane.f32.xlu0 %v7775
        %v7777 = vpop.xlane.xlu0 %7776
        %v7778 = vsel %vm1335, %v7774, -inf
        %7779 = vmax.xlane.f32.xlu0 %v7778
        %v7780 = vpop.xlane.xlu0 %7779
        %v7781 = vsub.f32 %v7773, %v7777
        %v7782 = vsub.f32 %v7774, %v7780
        %v7783 = vmul.f32 %v7781, 1.442695
        %v7784 = vpow.pop %v7783
        %v7785 = vmul.f32 %v7782, 1.442695
        %v7786 = vpow.pop %v7785
        %v7787 = vsel %vm1335, %v7784, 0.0
        %7788 = vadd.xlane.f32.xlu0 %v7787
        %v7789 = vpop.xlane.xlu0 %7788
        %v7790 = vsel %vm1335, %v7786, 0.0
        %7791 = vadd.xlane.f32.xlu0 %v7790
        %v7792 = vpop.xlane.xlu0 %7791
        %v7793 = vrcp.pop %v7789
        %v7794 = vrcp.pop %v7792
        %v7795 = vmul.f32 %v7784, %v7793
        %v7796 = vmul.f32 %v7786, %v7794
        %7797 = vrot.lane.b32.xlu0 %v1318, 40
        %v7798 = vpop.permute.xlu0 %7797
        %v7801 = vsel %vm1335, %v7795, 0
        %7803 = vmatprep.subr.mxu0 0.0
        %v7804 = vand.u32 %v7798, 4294901760
        %7805 = vmatpush1.msra.mxu0 %v7804
        %7806 = vmatprep.subr.mxu0 0.0
        %7807 = vmatpush1.msra.mxu0 0.0
        %7808 = vmatprep.subr.mxu0 0.0
        %7809 = vmatpush1.msra.mxu0 0.0
        %7810 = vmatprep.subr.mxu0 0.0
        %7811 = vmatpush1.msra.mxu0 0.0
        %7812 = vmatprep.subr.mxu0 0.0
        %7813 = vmatpush1.msra.mxu0 0.0
        %7814 = vmatprep.subr.mxu0 0.0
        %7815 = vmatpush1.msra.mxu0 0.0
        %7816 = vmatprep.subr.mxu0 0.0
        %7817 = vmatpush1.msra.mxu0 0.0
        %7818 = vmatprep.subr.mxu0 0.0
        %7819 = vmatpush1.msra.mxu0 0.0
        %7820 = vmatprep.subr.mxu0 0.0
        %7821 = vmatpush1.msra.mxu0 0.0
        %7822 = vmatprep.subr.mxu0 0.0
        %7823 = vmatpush1.msra.mxu0 0.0
        %7824 = vmatprep.subr.mxu0 0.0
        %7825 = vmatpush1.msra.mxu0 0.0
        %7826 = vmatprep.subr.mxu0 0.0
        %7827 = vmatpush1.msra.mxu0 0.0
        %7828 = vmatprep.subr.mxu0 0.0
        %7829 = vmatpush1.msra.mxu0 0.0
        %7830 = vmatprep.subr.mxu0 0.0
        %7831 = vmatpush1.msra.mxu0 0.0
        %7832 = vmatprep.subr.mxu0 0.0
        %7833 = vmatpush1.msra.mxu0 0.0
        %7834 = vmatprep.subr.mxu0 0.0
        %7835 = vmatpush1.msra.mxu0 0.0
        %7836 = vmatprep.subr.mxu0 0.0
        %7837 = vmatpush1.msra.mxu0 0.0
        %7838 = vmatprep.subr.mxu0 0.0
        %7839 = vmatpush1.msra.mxu0 0.0
        %7840 = vmatprep.subr.mxu0 0.0
        %7841 = vmatpush1.msra.mxu0 0.0
        %7842 = vmatprep.subr.mxu0 0.0
        %7843 = vmatpush1.msra.mxu0 0.0
        %7844 = vmatprep.subr.mxu0 0.0
        %7845 = vmatpush1.msra.mxu0 0.0
        %7846 = vmatprep.subr.mxu0 0.0
        %7847 = vmatpush1.msra.mxu0 0.0
        %7848 = vmatprep.subr.mxu0 0.0
        %7849 = vmatpush1.msra.mxu0 0.0
        %7850 = vmatprep.subr.mxu0 0.0
        %7851 = vmatpush1.msra.mxu0 0.0
        %7852 = vmatprep.subr.mxu0 0.0
        %7853 = vmatpush1.msra.mxu0 0.0
        %7854 = vmatprep.subr.mxu0 0.0
        %7855 = vmatpush1.msra.mxu0 0.0
        %7856 = vmatprep.subr.mxu0 0.0
        %7857 = vmatpush1.msra.mxu0 0.0
        %7858 = vmatprep.subr.mxu0 0.0
        %7859 = vmatpush1.msra.mxu0 0.0
        %7860 = vmatprep.subr.mxu0 0.0
        %7861 = vmatpush1.msra.mxu0 0.0
        %7862 = vmatprep.subr.mxu0 0.0
        %7863 = vmatpush1.msra.mxu0 0.0
        %7864 = vmatprep.subr.mxu0 0.0
        %7865 = vmatpush1.msra.mxu0 0.0
        %7866 = vmatprep.subr.mxu0 0.0
        %7867 = vmatpush1.msra.mxu0 0.0
        %7868 = vmatprep.mubr.f32.mxu0 0.0
        %v7869 = vand.u32 %v7801, 4294901760
        %v7870 = vsub.f32 %v7801, %v7869
        %v7871 = vand.u32 %v7870, 4294901760
        %v7872 = vsub.f32 %v7870, %v7871
        %v7873 = vand.u32 %v7872, 4294901760
        %7874 = vmatmul.mubr.f32.gmra.mrb[0].mxu0 %v7873
        %v7875 = vpop.f32.mrb[0].mxu0
        %v7876 = vadd.f32 0.0, %v7875
        %v7877 = vpop.f32.mrb[0].mxu0
        %7878 = vdwg.mxu0
        %7879 = vmatprep.subr.mxu0 0.0
        %v7880 = vand.u32 %v7798, 4294901760
        %v7881 = vsub.f32 %v7798, %v7880
        %v7882 = vand.u32 %v7881, 4294901760
        %v7883 = vsub.f32 %v7881, %v7882
        %v7884 = vand.u32 %v7883, 4294901760
        %7885 = vmatpush1.msra.mxu0 %v7884
        %7886 = vmatprep.subr.mxu0 0.0
        %7887 = vmatpush1.msra.mxu0 0.0
        %7888 = vmatprep.subr.mxu0 0.0
        %7889 = vmatpush1.msra.mxu0 0.0
        %7890 = vmatprep.subr.mxu0 0.0
        %7891 = vmatpush1.msra.mxu0 0.0
        %7892 = vmatprep.subr.mxu0 0.0
        %7893 = vmatpush1.msra.mxu0 0.0
        %7894 = vmatprep.subr.mxu0 0.0
        %7895 = vmatpush1.msra.mxu0 0.0
        %7896 = vmatprep.subr.mxu0 0.0
        %7897 = vmatpush1.msra.mxu0 0.0
        %7898 = vmatprep.subr.mxu0 0.0
        %7899 = vmatpush1.msra.mxu0 0.0
        %7900 = vmatprep.subr.mxu0 0.0
        %7901 = vmatpush1.msra.mxu0 0.0
        %7902 = vmatprep.subr.mxu0 0.0
        %7903 = vmatpush1.msra.mxu0 0.0
        %7904 = vmatprep.subr.mxu0 0.0
        %7905 = vmatpush1.msra.mxu0 0.0
        %7906 = vmatprep.subr.mxu0 0.0
        %7907 = vmatpush1.msra.mxu0 0.0
        %7908 = vmatprep.subr.mxu0 0.0
        %7909 = vmatpush1.msra.mxu0 0.0
        %7910 = vmatprep.subr.mxu0 0.0
        %7911 = vmatpush1.msra.mxu0 0.0
        %7912 = vmatprep.subr.mxu0 0.0
        %7913 = vmatpush1.msra.mxu0 0.0
        %7914 = vmatprep.subr.mxu0 0.0
        %7915 = vmatpush1.msra.mxu0 0.0
        %7916 = vmatprep.subr.mxu0 0.0
        %7917 = vmatpush1.msra.mxu0 0.0
        %7918 = vmatprep.subr.mxu0 0.0
        %7919 = vmatpush1.msra.mxu0 0.0
        %7920 = vmatprep.subr.mxu0 0.0
        %7921 = vmatpush1.msra.mxu0 0.0
        %7922 = vmatprep.subr.mxu0 0.0
        %7923 = vmatpush1.msra.mxu0 0.0
        %7924 = vmatprep.subr.mxu0 0.0
        %7925 = vmatpush1.msra.mxu0 0.0
        %7926 = vmatprep.subr.mxu0 0.0
        %7927 = vmatpush1.msra.mxu0 0.0
        %7928 = vmatprep.subr.mxu0 0.0
        %7929 = vmatpush1.msra.mxu0 0.0
        %7930 = vmatprep.subr.mxu0 0.0
        %7931 = vmatpush1.msra.mxu0 0.0
        %7932 = vmatprep.subr.mxu0 0.0
        %7933 = vmatpush1.msra.mxu0 0.0
        %7934 = vmatprep.subr.mxu0 0.0
        %7935 = vmatpush1.msra.mxu0 0.0
        %7936 = vmatprep.subr.mxu0 0.0
        %7937 = vmatpush1.msra.mxu0 0.0
        %7938 = vmatprep.subr.mxu0 0.0
        %7939 = vmatpush1.msra.mxu0 0.0
        %7940 = vmatprep.subr.mxu0 0.0
        %7941 = vmatpush1.msra.mxu0 0.0
        %7942 = vmatprep.subr.mxu0 0.0
        %7943 = vmatpush1.msra.mxu0 0.0
        %7944 = vmatprep.subr.mxu0 0.0
        %7945 = vmatpush1.msra.mxu0 0.0
        %7946 = vmatprep.subr.mxu0 0.0
        %7947 = vmatpush1.msra.mxu0 0.0
        %7948 = vmatprep.mubr.f32.mxu0 0.0
        %v7949 = vand.u32 %v7801, 4294901760
        %7950 = vmatmul.mubr.f32.gmra.mrb[0].mxu0 %v7949
        %v7951 = vpop.f32.mrb[0].mxu0
        %v7952 = vadd.f32 %v7876, %v7951
        %v7953 = vpop.f32.mrb[0].mxu0
        %7954 = vdwg.mxu0
        %7955 = vmatprep.subr.mxu0 0.0
        %v7956 = vand.u32 %v7798, 4294901760
        %v7957 = vsub.f32 %v7798, %v7956
        %7958 = vmatpush1.msra.mxu0 %v7957
        %7959 = vmatprep.subr.mxu0 0.0
        %7960 = vmatpush1.msra.mxu0 0.0
        %7961 = vmatprep.subr.mxu0 0.0
        %7962 = vmatpush1.msra.mxu0 0.0
        %7963 = vmatprep.subr.mxu0 0.0
        %7964 = vmatpush1.msra.mxu0 0.0
        %7965 = vmatprep.subr.mxu0 0.0
        %7966 = vmatpush1.msra.mxu0 0.0
        %7967 = vmatprep.subr.mxu0 0.0
        %7968 = vmatpush1.msra.mxu0 0.0
        %7969 = vmatprep.subr.mxu0 0.0
        %7970 = vmatpush1.msra.mxu0 0.0
        %7971 = vmatprep.subr.mxu0 0.0
        %7972 = vmatpush1.msra.mxu0 0.0
        %7973 = vmatprep.subr.mxu0 0.0
        %7974 = vmatpush1.msra.mxu0 0.0
        %7975 = vmatprep.subr.mxu0 0.0
        %7976 = vmatpush1.msra.mxu0 0.0
        %7977 = vmatprep.subr.mxu0 0.0
        %7978 = vmatpush1.msra.mxu0 0.0
        %7979 = vmatprep.subr.mxu0 0.0
        %7980 = vmatpush1.msra.mxu0 0.0
        %7981 = vmatprep.subr.mxu0 0.0
        %7982 = vmatpush1.msra.mxu0 0.0
        %7983 = vmatprep.subr.mxu0 0.0
        %7984 = vmatpush1.msra.mxu0 0.0
        %7985 = vmatprep.subr.mxu0 0.0
        %7986 = vmatpush1.msra.mxu0 0.0
        %7987 = vmatprep.subr.mxu0 0.0
        %7988 = vmatpush1.msra.mxu0 0.0
        %7989 = vmatprep.subr.mxu0 0.0
        %7990 = vmatpush1.msra.mxu0 0.0
        %7991 = vmatprep.subr.mxu0 0.0
        %7992 = vmatpush1.msra.mxu0 0.0
        %7993 = vmatprep.subr.mxu0 0.0
        %7994 = vmatpush1.msra.mxu0 0.0
        %7995 = vmatprep.subr.mxu0 0.0
        %7996 = vmatpush1.msra.mxu0 0.0
        %7997 = vmatprep.subr.mxu0 0.0
        %7998 = vmatpush1.msra.mxu0 0.0
        %7999 = vmatprep.subr.mxu0 0.0
        %8000 = vmatpush1.msra.mxu0 0.0
        %8001 = vmatprep.subr.mxu0 0.0
        %8002 = vmatpush1.msra.mxu0 0.0
        %8003 = vmatprep.subr.mxu0 0.0
        %8004 = vmatpush1.msra.mxu0 0.0
        %8005 = vmatprep.subr.mxu0 0.0
        %8006 = vmatpush1.msra.mxu0 0.0
        %8007 = vmatprep.subr.mxu0 0.0
        %8008 = vmatpush1.msra.mxu0 0.0
        %8009 = vmatprep.subr.mxu0 0.0
        %8010 = vmatpush1.msra.mxu0 0.0
        %8011 = vmatprep.subr.mxu0 0.0
        %8012 = vmatpush1.msra.mxu0 0.0
        %8013 = vmatprep.subr.mxu0 0.0
        %8014 = vmatpush1.msra.mxu0 0.0
        %8015 = vmatprep.subr.mxu0 0.0
        %8016 = vmatpush1.msra.mxu0 0.0
        %8017 = vmatprep.subr.mxu0 0.0
        %8018 = vmatpush1.msra.mxu0 0.0
        %8019 = vmatprep.subr.mxu0 0.0
        %8020 = vmatpush1.msra.mxu0 0.0
        %8021 = vmatprep.mubr.f32.mxu0 0.0
        %v8022 = vand.u32 %v7801, 4294901760
        %v8023 = vsub.f32 %v7801, %v8022
        %8024 = vmatmul.mubr.f32.gmra.mrb[0].mxu0 %v8023
        %v8025 = vpop.f32.mrb[0].mxu0
        %v8026 = vadd.f32 %v7952, %v8025
        %v8027 = vpop.f32.mrb[0].mxu0
        %8028 = vdwg.mxu0
        %8029 = vmatprep.subr.mxu0 0.0
        %v8030 = vand.u32 %v7798, 4294901760
        %8031 = vmatpush1.msra.mxu0 %v8030
        %8032 = vmatprep.subr.mxu0 0.0
        %8033 = vmatpush1.msra.mxu0 0.0
        %8034 = vmatprep.subr.mxu0 0.0
        %8035 = vmatpush1.msra.mxu0 0.0
        %8036 = vmatprep.subr.mxu0 0.0
        %8037 = vmatpush1.msra.mxu0 0.0
        %8038 = vmatprep.subr.mxu0 0.0
        %8039 = vmatpush1.msra.mxu0 0.0
        %8040 = vmatprep.subr.mxu0 0.0
        %8041 = vmatpush1.msra.mxu0 0.0
        %8042 = vmatprep.subr.mxu0 0.0
        %8043 = vmatpush1.msra.mxu0 0.0
        %8044 = vmatprep.subr.mxu0 0.0
        %8045 = vmatpush1.msra.mxu0 0.0
        %8046 = vmatprep.subr.mxu0 0.0
        %8047 = vmatpush1.msra.mxu0 0.0
        %8048 = vmatprep.subr.mxu0 0.0
        %8049 = vmatpush1.msra.mxu0 0.0
        %8050 = vmatprep.subr.mxu0 0.0
        %8051 = vmatpush1.msra.mxu0 0.0
        %8052 = vmatprep.subr.mxu0 0.0
        %8053 = vmatpush1.msra.mxu0 0.0
        %8054 = vmatprep.subr.mxu0 0.0
        %8055 = vmatpush1.msra.mxu0 0.0
        %8056 = vmatprep.subr.mxu0 0.0
        %8057 = vmatpush1.msra.mxu0 0.0
        %8058 = vmatprep.subr.mxu0 0.0
        %8059 = vmatpush1.msra.mxu0 0.0
        %8060 = vmatprep.subr.mxu0 0.0
        %8061 = vmatpush1.msra.mxu0 0.0
        %8062 = vmatprep.subr.mxu0 0.0
        %8063 = vmatpush1.msra.mxu0 0.0
        %8064 = vmatprep.subr.mxu0 0.0
        %8065 = vmatpush1.msra.mxu0 0.0
        %8066 = vmatprep.subr.mxu0 0.0
        %8067 = vmatpush1.msra.mxu0 0.0
        %8068 = vmatprep.subr.mxu0 0.0
        %8069 = vmatpush1.msra.mxu0 0.0
        %8070 = vmatprep.subr.mxu0 0.0
        %8071 = vmatpush1.msra.mxu0 0.0
        %8072 = vmatprep.subr.mxu0 0.0
        %8073 = vmatpush1.msra.mxu0 0.0
        %8074 = vmatprep.subr.mxu0 0.0
        %8075 = vmatpush1.msra.mxu0 0.0
        %8076 = vmatprep.subr.mxu0 0.0
        %8077 = vmatpush1.msra.mxu0 0.0
        %8078 = vmatprep.subr.mxu0 0.0
        %8079 = vmatpush1.msra.mxu0 0.0
        %8080 = vmatprep.subr.mxu0 0.0
        %8081 = vmatpush1.msra.mxu0 0.0
        %8082 = vmatprep.subr.mxu0 0.0
        %8083 = vmatpush1.msra.mxu0 0.0
        %8084 = vmatprep.subr.mxu0 0.0
        %8085 = vmatpush1.msra.mxu0 0.0
        %8086 = vmatprep.subr.mxu0 0.0
        %8087 = vmatpush1.msra.mxu0 0.0
        %8088 = vmatprep.subr.mxu0 0.0
        %8089 = vmatpush1.msra.mxu0 0.0
        %8090 = vmatprep.subr.mxu0 0.0
        %8091 = vmatpush1.msra.mxu0 0.0
        %8092 = vmatprep.subr.mxu0 0.0
        %8093 = vmatpush1.msra.mxu0 0.0
        %8094 = vmatprep.mubr.f32.mxu0 0.0
        %v8095 = vand.u32 %v7801, 4294901760
        %v8096 = vsub.f32 %v7801, %v8095
        %v8097 = vand.u32 %v8096, 4294901760
        %8098 = vmatmul.mubr.f32.gmra.mrb[0].mxu0 %v8097
        %v8099 = vpop.f32.mrb[0].mxu0
        %v8100 = vadd.f32 %v8026, %v8099
        %v8101 = vpop.f32.mrb[0].mxu0
        %8102 = vdwg.mxu0
        %8103 = vmatprep.subr.mxu0 0.0
        %v8104 = vand.u32 %v7798, 4294901760
        %v8105 = vsub.f32 %v7798, %v8104
        %v8106 = vand.u32 %v8105, 4294901760
        %8107 = vmatpush1.msra.mxu0 %v8106
        %8108 = vmatprep.subr.mxu0 0.0
        %8109 = vmatpush1.msra.mxu0 0.0
        %8110 = vmatprep.subr.mxu0 0.0
        %8111 = vmatpush1.msra.mxu0 0.0
        %8112 = vmatprep.subr.mxu0 0.0
        %8113 = vmatpush1.msra.mxu0 0.0
        %8114 = vmatprep.subr.mxu0 0.0
        %8115 = vmatpush1.msra.mxu0 0.0
        %8116 = vmatprep.subr.mxu0 0.0
        %8117 = vmatpush1.msra.mxu0 0.0
        %8118 = vmatprep.subr.mxu0 0.0
        %8119 = vmatpush1.msra.mxu0 0.0
        %8120 = vmatprep.subr.mxu0 0.0
        %8121 = vmatpush1.msra.mxu0 0.0
        %8122 = vmatprep.subr.mxu0 0.0
        %8123 = vmatpush1.msra.mxu0 0.0
        %8124 = vmatprep.subr.mxu0 0.0
        %8125 = vmatpush1.msra.mxu0 0.0
        %8126 = vmatprep.subr.mxu0 0.0
        %8127 = vmatpush1.msra.mxu0 0.0
        %8128 = vmatprep.subr.mxu0 0.0
        %8129 = vmatpush1.msra.mxu0 0.0
        %8130 = vmatprep.subr.mxu0 0.0
        %8131 = vmatpush1.msra.mxu0 0.0
        %8132 = vmatprep.subr.mxu0 0.0
        %8133 = vmatpush1.msra.mxu0 0.0
        %8134 = vmatprep.subr.mxu0 0.0
        %8135 = vmatpush1.msra.mxu0 0.0
        %8136 = vmatprep.subr.mxu0 0.0
        %8137 = vmatpush1.msra.mxu0 0.0
        %8138 = vmatprep.subr.mxu0 0.0
        %8139 = vmatpush1.msra.mxu0 0.0
        %8140 = vmatprep.subr.mxu0 0.0
        %8141 = vmatpush1.msra.mxu0 0.0
        %8142 = vmatprep.subr.mxu0 0.0
        %8143 = vmatpush1.msra.mxu0 0.0
        %8144 = vmatprep.subr.mxu0 0.0
        %8145 = vmatpush1.msra.mxu0 0.0
        %8146 = vmatprep.subr.mxu0 0.0
        %8147 = vmatpush1.msra.mxu0 0.0
        %8148 = vmatprep.subr.mxu0 0.0
        %8149 = vmatpush1.msra.mxu0 0.0
        %8150 = vmatprep.subr.mxu0 0.0
        %8151 = vmatpush1.msra.mxu0 0.0
        %8152 = vmatprep.subr.mxu0 0.0
        %8153 = vmatpush1.msra.mxu0 0.0
        %8154 = vmatprep.subr.mxu0 0.0
        %8155 = vmatpush1.msra.mxu0 0.0
        %8156 = vmatprep.subr.mxu0 0.0
        %8157 = vmatpush1.msra.mxu0 0.0
        %8158 = vmatprep.subr.mxu0 0.0
        %8159 = vmatpush1.msra.mxu0 0.0
        %8160 = vmatprep.subr.mxu0 0.0
        %8161 = vmatpush1.msra.mxu0 0.0
        %8162 = vmatprep.subr.mxu0 0.0
        %8163 = vmatpush1.msra.mxu0 0.0
        %8164 = vmatprep.subr.mxu0 0.0
        %8165 = vmatpush1.msra.mxu0 0.0
        %8166 = vmatprep.subr.mxu0 0.0
        %8167 = vmatpush1.msra.mxu0 0.0
        %8168 = vmatprep.subr.mxu0 0.0
        %8169 = vmatpush1.msra.mxu0 0.0
        %8170 = vmatprep.mubr.f32.mxu0 0.0
        %v8171 = vand.u32 %v7801, 4294901760
        %8172 = vmatmul.mubr.f32.gmra.mrb[0].mxu0 %v8171
        %v8173 = vpop.f32.mrb[0].mxu0
        %v8174 = vadd.f32 %v8100, %v8173
        %v8175 = vpop.f32.mrb[0].mxu0
        %8176 = vdwg.mxu0
        %8177 = vmatprep.subr.mxu0 0.0
        %v8178 = vand.u32 %v7798, 4294901760
        %8179 = vmatpush1.msra.mxu0 %v8178
        %8180 = vmatprep.subr.mxu0 0.0
        %8181 = vmatpush1.msra.mxu0 0.0
        %8182 = vmatprep.subr.mxu0 0.0
        %8183 = vmatpush1.msra.mxu0 0.0
        %8184 = vmatprep.subr.mxu0 0.0
        %8185 = vmatpush1.msra.mxu0 0.0
        %8186 = vmatprep.subr.mxu0 0.0
        %8187 = vmatpush1.msra.mxu0 0.0
        %8188 = vmatprep.subr.mxu0 0.0
        %8189 = vmatpush1.msra.mxu0 0.0
        %8190 = vmatprep.subr.mxu0 0.0
        %8191 = vmatpush1.msra.mxu0 0.0
        %8192 = vmatprep.subr.mxu0 0.0
        %8193 = vmatpush1.msra.mxu0 0.0
        %8194 = vmatprep.subr.mxu0 0.0
        %8195 = vmatpush1.msra.mxu0 0.0
        %8196 = vmatprep.subr.mxu0 0.0
        %8197 = vmatpush1.msra.mxu0 0.0
        %8198 = vmatprep.subr.mxu0 0.0
        %8199 = vmatpush1.msra.mxu0 0.0
        %8200 = vmatprep.subr.mxu0 0.0
        %8201 = vmatpush1.msra.mxu0 0.0
        %8202 = vmatprep.subr.mxu0 0.0
        %8203 = vmatpush1.msra.mxu0 0.0
        %8204 = vmatprep.subr.mxu0 0.0
        %8205 = vmatpush1.msra.mxu0 0.0
        %8206 = vmatprep.subr.mxu0 0.0
        %8207 = vmatpush1.msra.mxu0 0.0
        %8208 = vmatprep.subr.mxu0 0.0
        %8209 = vmatpush1.msra.mxu0 0.0
        %8210 = vmatprep.subr.mxu0 0.0
        %8211 = vmatpush1.msra.mxu0 0.0
        %8212 = vmatprep.subr.mxu0 0.0
        %8213 = vmatpush1.msra.mxu0 0.0
        %8214 = vmatprep.subr.mxu0 0.0
        %8215 = vmatpush1.msra.mxu0 0.0
        %8216 = vmatprep.subr.mxu0 0.0
        %8217 = vmatpush1.msra.mxu0 0.0
        %8218 = vmatprep.subr.mxu0 0.0
        %8219 = vmatpush1.msra.mxu0 0.0
        %8220 = vmatprep.subr.mxu0 0.0
        %8221 = vmatpush1.msra.mxu0 0.0
        %8222 = vmatprep.subr.mxu0 0.0
        %8223 = vmatpush1.msra.mxu0 0.0
        %8224 = vmatprep.subr.mxu0 0.0
        %8225 = vmatpush1.msra.mxu0 0.0
        %8226 = vmatprep.subr.mxu0 0.0
        %8227 = vmatpush1.msra.mxu0 0.0
        %8228 = vmatprep.subr.mxu0 0.0
        %8229 = vmatpush1.msra.mxu0 0.0
        %8230 = vmatprep.subr.mxu0 0.0
        %8231 = vmatpush1.msra.mxu0 0.0
        %8232 = vmatprep.subr.mxu0 0.0
        %8233 = vmatpush1.msra.mxu0 0.0
        %8234 = vmatprep.subr.mxu0 0.0
        %8235 = vmatpush1.msra.mxu0 0.0
        %8236 = vmatprep.subr.mxu0 0.0
        %8237 = vmatpush1.msra.mxu0 0.0
        %8238 = vmatprep.subr.mxu0 0.0
        %8239 = vmatpush1.msra.mxu0 0.0
        %8240 = vmatprep.subr.mxu0 0.0
        %8241 = vmatpush1.msra.mxu0 0.0
        %8242 = vmatprep.mubr.f32.mxu0 0.0
        %v8243 = vand.u32 %v7801, 4294901760
        %8244 = vmatmul.mubr.f32.gmra.mrb[0].mxu0 %v8243
        %v8245 = vpop.f32.mrb[0].mxu0
        %v8246 = vadd.f32 %v8174, %v8245
        %v8247 = vpop.f32.mrb[0].mxu0
        %8248 = vdwg.mxu0
        %8249 = vrot.lane.b32.xlu0 %v1324, 40
        %v8250 = vpop.permute.xlu0 %8249
        %v8253 = vsel %vm1335, %v7796, 0
        %8255 = vmatprep.subr.mxu0 0.0
        %v8256 = vand.u32 %v8250, 4294901760
        %8257 = vmatpush1.msra.mxu0 %v8256
        %8258 = vmatprep.subr.mxu0 0.0
        %8259 = vmatpush1.msra.mxu0 0.0
        %8260 = vmatprep.subr.mxu0 0.0
        %8261 = vmatpush1.msra.mxu0 0.0
        %8262 = vmatprep.subr.mxu0 0.0
        %8263 = vmatpush1.msra.mxu0 0.0
        %8264 = vmatprep.subr.mxu0 0.0
        %8265 = vmatpush1.msra.mxu0 0.0
        %8266 = vmatprep.subr.mxu0 0.0
        %8267 = vmatpush1.msra.mxu0 0.0
        %8268 = vmatprep.subr.mxu0 0.0
        %8269 = vmatpush1.msra.mxu0 0.0
        %8270 = vmatprep.subr.mxu0 0.0
        %8271 = vmatpush1.msra.mxu0 0.0
        %8272 = vmatprep.subr.mxu0 0.0
        %8273 = vmatpush1.msra.mxu0 0.0
        %8274 = vmatprep.subr.mxu0 0.0
        %8275 = vmatpush1.msra.mxu0 0.0
        %8276 = vmatprep.subr.mxu0 0.0
        %8277 = vmatpush1.msra.mxu0 0.0
        %8278 = vmatprep.subr.mxu0 0.0
        %8279 = vmatpush1.msra.mxu0 0.0
        %8280 = vmatprep.subr.mxu0 0.0
        %8281 = vmatpush1.msra.mxu0 0.0
        %8282 = vmatprep.subr.mxu0 0.0
        %8283 = vmatpush1.msra.mxu0 0.0
        %8284 = vmatprep.subr.mxu0 0.0
        %8285 = vmatpush1.msra.mxu0 0.0
        %8286 = vmatprep.subr.mxu0 0.0
        %8287 = vmatpush1.msra.mxu0 0.0
        %8288 = vmatprep.subr.mxu0 0.0
        %8289 = vmatpush1.msra.mxu0 0.0
        %8290 = vmatprep.subr.mxu0 0.0
        %8291 = vmatpush1.msra.mxu0 0.0
        %8292 = vmatprep.subr.mxu0 0.0
        %8293 = vmatpush1.msra.mxu0 0.0
        %8294 = vmatprep.subr.mxu0 0.0
        %8295 = vmatpush1.msra.mxu0 0.0
        %8296 = vmatprep.subr.mxu0 0.0
        %8297 = vmatpush1.msra.mxu0 0.0
        %8298 = vmatprep.subr.mxu0 0.0
        %8299 = vmatpush1.msra.mxu0 0.0
        %8300 = vmatprep.subr.mxu0 0.0
        %8301 = vmatpush1.msra.mxu0 0.0
        %8302 = vmatprep.subr.mxu0 0.0
        %8303 = vmatpush1.msra.mxu0 0.0
        %8304 = vmatprep.subr.mxu0 0.0
        %8305 = vmatpush1.msra.mxu0 0.0
        %8306 = vmatprep.subr.mxu0 0.0
        %8307 = vmatpush1.msra.mxu0 0.0
        %8308 = vmatprep.subr.mxu0 0.0
        %8309 = vmatpush1.msra.mxu0 0.0
        %8310 = vmatprep.subr.mxu0 0.0
        %8311 = vmatpush1.msra.mxu0 0.0
        %8312 = vmatprep.subr.mxu0 0.0
        %8313 = vmatpush1.msra.mxu0 0.0
        %8314 = vmatprep.subr.mxu0 0.0
        %8315 = vmatpush1.msra.mxu0 0.0
        %8316 = vmatprep.subr.mxu0 0.0
        %8317 = vmatpush1.msra.mxu0 0.0
        %8318 = vmatprep.subr.mxu0 0.0
        %8319 = vmatpush1.msra.mxu0 0.0
        %8320 = vmatprep.mubr.f32.mxu0 0.0
        %v8321 = vand.u32 %v8253, 4294901760
        %v8322 = vsub.f32 %v8253, %v8321
        %v8323 = vand.u32 %v8322, 4294901760
        %v8324 = vsub.f32 %v8322, %v8323
        %v8325 = vand.u32 %v8324, 4294901760
        %8326 = vmatmul.mubr.f32.gmra.mrb[0].mxu0 %v8325
        %v8327 = vpop.f32.mrb[0].mxu0
        %v8328 = vadd.f32 0.0, %v8327
        %v8329 = vpop.f32.mrb[0].mxu0
        %8330 = vdwg.mxu0
        %8331 = vmatprep.subr.mxu0 0.0
        %v8332 = vand.u32 %v8250, 4294901760
        %v8333 = vsub.f32 %v8250, %v8332
        %v8334 = vand.u32 %v8333, 4294901760
        %v8335 = vsub.f32 %v8333, %v8334
        %v8336 = vand.u32 %v8335, 4294901760
        %8337 = vmatpush1.msra.mxu0 %v8336
        %8338 = vmatprep.subr.mxu0 0.0
        %8339 = vmatpush1.msra.mxu0 0.0
        %8340 = vmatprep.subr.mxu0 0.0
        %8341 = vmatpush1.msra.mxu0 0.0
        %8342 = vmatprep.subr.mxu0 0.0
        %8343 = vmatpush1.msra.mxu0 0.0
        %8344 = vmatprep.subr.mxu0 0.0
        %8345 = vmatpush1.msra.mxu0 0.0
        %8346 = vmatprep.subr.mxu0 0.0
        %8347 = vmatpush1.msra.mxu0 0.0
        %8348 = vmatprep.subr.mxu0 0.0
        %8349 = vmatpush1.msra.mxu0 0.0
        %8350 = vmatprep.subr.mxu0 0.0
        %8351 = vmatpush1.msra.mxu0 0.0
        %8352 = vmatprep.subr.mxu0 0.0
        %8353 = vmatpush1.msra.mxu0 0.0
        %8354 = vmatprep.subr.mxu0 0.0
        %8355 = vmatpush1.msra.mxu0 0.0
        %8356 = vmatprep.subr.mxu0 0.0
        %8357 = vmatpush1.msra.mxu0 0.0
        %8358 = vmatprep.subr.mxu0 0.0
        %8359 = vmatpush1.msra.mxu0 0.0
        %8360 = vmatprep.subr.mxu0 0.0
        %8361 = vmatpush1.msra.mxu0 0.0
        %8362 = vmatprep.subr.mxu0 0.0
        %8363 = vmatpush1.msra.mxu0 0.0
        %8364 = vmatprep.subr.mxu0 0.0
        %8365 = vmatpush1.msra.mxu0 0.0
        %8366 = vmatprep.subr.mxu0 0.0
        %8367 = vmatpush1.msra.mxu0 0.0
        %8368 = vmatprep.subr.mxu0 0.0
        %8369 = vmatpush1.msra.mxu0 0.0
        %8370 = vmatprep.subr.mxu0 0.0
        %8371 = vmatpush1.msra.mxu0 0.0
        %8372 = vmatprep.subr.mxu0 0.0
        %8373 = vmatpush1.msra.mxu0 0.0
        %8374 = vmatprep.subr.mxu0 0.0
        %8375 = vmatpush1.msra.mxu0 0.0
        %8376 = vmatprep.subr.mxu0 0.0
        %8377 = vmatpush1.msra.mxu0 0.0
        %8378 = vmatprep.subr.mxu0 0.0
        %8379 = vmatpush1.msra.mxu0 0.0
        %8380 = vmatprep.subr.mxu0 0.0
        %8381 = vmatpush1.msra.mxu0 0.0
        %8382 = vmatprep.subr.mxu0 0.0
        %8383 = vmatpush1.msra.mxu0 0.0
        %8384 = vmatprep.subr.mxu0 0.0
        %8385 = vmatpush1.msra.mxu0 0.0
        %8386 = vmatprep.subr.mxu0 0.0
        %8387 = vmatpush1.msra.mxu0 0.0
        %8388 = vmatprep.subr.mxu0 0.0
        %8389 = vmatpush1.msra.mxu0 0.0
        %8390 = vmatprep.subr.mxu0 0.0
        %8391 = vmatpush1.msra.mxu0 0.0
        %8392 = vmatprep.subr.mxu0 0.0
        %8393 = vmatpush1.msra.mxu0 0.0
        %8394 = vmatprep.subr.mxu0 0.0
        %8395 = vmatpush1.msra.mxu0 0.0
        %8396 = vmatprep.subr.mxu0 0.0
        %8397 = vmatpush1.msra.mxu0 0.0
        %8398 = vmatprep.subr.mxu0 0.0
        %8399 = vmatpush1.msra.mxu0 0.0
        %8400 = vmatprep.mubr.f32.mxu0 0.0
        %v8401 = vand.u32 %v8253, 4294901760
        %8402 = vmatmul.mubr.f32.gmra.mrb[0].mxu0 %v8401
        %v8403 = vpop.f32.mrb[0].mxu0
        %v8404 = vadd.f32 %v8328, %v8403
        %v8405 = vpop.f32.mrb[0].mxu0
        %8406 = vdwg.mxu0
        %8407 = vmatprep.subr.mxu0 0.0
        %v8408 = vand.u32 %v8250, 4294901760
        %v8409 = vsub.f32 %v8250, %v8408
        %8410 = vmatpush1.msra.mxu0 %v8409
        %8411 = vmatprep.subr.mxu0 0.0
        %8412 = vmatpush1.msra.mxu0 0.0
        %8413 = vmatprep.subr.mxu0 0.0
        %8414 = vmatpush1.msra.mxu0 0.0
        %8415 = vmatprep.subr.mxu0 0.0
        %8416 = vmatpush1.msra.mxu0 0.0
        %8417 = vmatprep.subr.mxu0 0.0
        %8418 = vmatpush1.msra.mxu0 0.0
        %8419 = vmatprep.subr.mxu0 0.0
        %8420 = vmatpush1.msra.mxu0 0.0
        %8421 = vmatprep.subr.mxu0 0.0
        %8422 = vmatpush1.msra.mxu0 0.0
        %8423 = vmatprep.subr.mxu0 0.0
        %8424 = vmatpush1.msra.mxu0 0.0
        %8425 = vmatprep.subr.mxu0 0.0
        %8426 = vmatpush1.msra.mxu0 0.0
        %8427 = vmatprep.subr.mxu0 0.0
        %8428 = vmatpush1.msra.mxu0 0.0
        %8429 = vmatprep.subr.mxu0 0.0
        %8430 = vmatpush1.msra.mxu0 0.0
        %8431 = vmatprep.subr.mxu0 0.0
        %8432 = vmatpush1.msra.mxu0 0.0
        %8433 = vmatprep.subr.mxu0 0.0
        %8434 = vmatpush1.msra.mxu0 0.0
        %8435 = vmatprep.subr.mxu0 0.0
        %8436 = vmatpush1.msra.mxu0 0.0
        %8437 = vmatprep.subr.mxu0 0.0
        %8438 = vmatpush1.msra.mxu0 0.0
        %8439 = vmatprep.subr.mxu0 0.0
        %8440 = vmatpush1.msra.mxu0 0.0
        %8441 = vmatprep.subr.mxu0 0.0
        %8442 = vmatpush1.msra.mxu0 0.0
        %8443 = vmatprep.subr.mxu0 0.0
        %8444 = vmatpush1.msra.mxu0 0.0
        %8445 = vmatprep.subr.mxu0 0.0
        %8446 = vmatpush1.msra.mxu0 0.0
        %8447 = vmatprep.subr.mxu0 0.0
        %8448 = vmatpush1.msra.mxu0 0.0
        %8449 = vmatprep.subr.mxu0 0.0
        %8450 = vmatpush1.msra.mxu0 0.0
        %8451 = vmatprep.subr.mxu0 0.0
        %8452 = vmatpush1.msra.mxu0 0.0
        %8453 = vmatprep.subr.mxu0 0.0
        %8454 = vmatpush1.msra.mxu0 0.0
        %8455 = vmatprep.subr.mxu0 0.0
        %8456 = vmatpush1.msra.mxu0 0.0
        %8457 = vmatprep.subr.mxu0 0.0
        %8458 = vmatpush1.msra.mxu0 0.0
        %8459 = vmatprep.subr.mxu0 0.0
        %8460 = vmatpush1.msra.mxu0 0.0
        %8461 = vmatprep.subr.mxu0 0.0
        %8462 = vmatpush1.msra.mxu0 0.0
        %8463 = vmatprep.subr.mxu0 0.0
        %8464 = vmatpush1.msra.mxu0 0.0
        %8465 = vmatprep.subr.mxu0 0.0
        %8466 = vmatpush1.msra.mxu0 0.0
        %8467 = vmatprep.subr.mxu0 0.0
        %8468 = vmatpush1.msra.mxu0 0.0
        %8469 = vmatprep.subr.mxu0 0.0
        %8470 = vmatpush1.msra.mxu0 0.0
        %8471 = vmatprep.subr.mxu0 0.0
        %8472 = vmatpush1.msra.mxu0 0.0
        %8473 = vmatprep.mubr.f32.mxu0 0.0
        %v8474 = vand.u32 %v8253, 4294901760
        %v8475 = vsub.f32 %v8253, %v8474
        %8476 = vmatmul.mubr.f32.gmra.mrb[0].mxu0 %v8475
        %v8477 = vpop.f32.mrb[0].mxu0
        %v8478 = vadd.f32 %v8404, %v8477
        %v8479 = vpop.f32.mrb[0].mxu0
        %8480 = vdwg.mxu0
        %8481 = vmatprep.subr.mxu0 0.0
        %v8482 = vand.u32 %v8250, 4294901760
        %8483 = vmatpush1.msra.mxu0 %v8482
        %8484 = vmatprep.subr.mxu0 0.0
        %8485 = vmatpush1.msra.mxu0 0.0
        %8486 = vmatprep.subr.mxu0 0.0
        %8487 = vmatpush1.msra.mxu0 0.0
        %8488 = vmatprep.subr.mxu0 0.0
        %8489 = vmatpush1.msra.mxu0 0.0
        %8490 = vmatprep.subr.mxu0 0.0
        %8491 = vmatpush1.msra.mxu0 0.0
        %8492 = vmatprep.subr.mxu0 0.0
        %8493 = vmatpush1.msra.mxu0 0.0
        %8494 = vmatprep.subr.mxu0 0.0
        %8495 = vmatpush1.msra.mxu0 0.0
        %8496 = vmatprep.subr.mxu0 0.0
        %8497 = vmatpush1.msra.mxu0 0.0
        %8498 = vmatprep.subr.mxu0 0.0
        %8499 = vmatpush1.msra.mxu0 0.0
        %8500 = vmatprep.subr.mxu0 0.0
        %8501 = vmatpush1.msra.mxu0 0.0
        %8502 = vmatprep.subr.mxu0 0.0
        %8503 = vmatpush1.msra.mxu0 0.0
        %8504 = vmatprep.subr.mxu0 0.0
        %8505 = vmatpush1.msra.mxu0 0.0
        %8506 = vmatprep.subr.mxu0 0.0
        %8507 = vmatpush1.msra.mxu0 0.0
        %8508 = vmatprep.subr.mxu0 0.0
        %8509 = vmatpush1.msra.mxu0 0.0
        %8510 = vmatprep.subr.mxu0 0.0
        %8511 = vmatpush1.msra.mxu0 0.0
        %8512 = vmatprep.subr.mxu0 0.0
        %8513 = vmatpush1.msra.mxu0 0.0
        %8514 = vmatprep.subr.mxu0 0.0
        %8515 = vmatpush1.msra.mxu0 0.0
        %8516 = vmatprep.subr.mxu0 0.0
        %8517 = vmatpush1.msra.mxu0 0.0
        %8518 = vmatprep.subr.mxu0 0.0
        %8519 = vmatpush1.msra.mxu0 0.0
        %8520 = vmatprep.subr.mxu0 0.0
        %8521 = vmatpush1.msra.mxu0 0.0
        %8522 = vmatprep.subr.mxu0 0.0
        %8523 = vmatpush1.msra.mxu0 0.0
        %8524 = vmatprep.subr.mxu0 0.0
        %8525 = vmatpush1.msra.mxu0 0.0
        %8526 = vmatprep.subr.mxu0 0.0
        %8527 = vmatpush1.msra.mxu0 0.0
        %8528 = vmatprep.subr.mxu0 0.0
        %8529 = vmatpush1.msra.mxu0 0.0
        %8530 = vmatprep.subr.mxu0 0.0
        %8531 = vmatpush1.msra.mxu0 0.0
        %8532 = vmatprep.subr.mxu0 0.0
        %8533 = vmatpush1.msra.mxu0 0.0
        %8534 = vmatprep.subr.mxu0 0.0
        %8535 = vmatpush1.msra.mxu0 0.0
        %8536 = vmatprep.subr.mxu0 0.0
        %8537 = vmatpush1.msra.mxu0 0.0
        %8538 = vmatprep.subr.mxu0 0.0
        %8539 = vmatpush1.msra.mxu0 0.0
        %8540 = vmatprep.subr.mxu0 0.0
        %8541 = vmatpush1.msra.mxu0 0.0
        %8542 = vmatprep.subr.mxu0 0.0
        %8543 = vmatpush1.msra.mxu0 0.0
        %8544 = vmatprep.subr.mxu0 0.0
        %8545 = vmatpush1.msra.mxu0 0.0
        %8546 = vmatprep.mubr.f32.mxu0 0.0
        %v8547 = vand.u32 %v8253, 4294901760
        %v8548 = vsub.f32 %v8253, %v8547
        %v8549 = vand.u32 %v8548, 4294901760
        %8550 = vmatmul.mubr.f32.gmra.mrb[0].mxu0 %v8549
        %v8551 = vpop.f32.mrb[0].mxu0
        %v8552 = vadd.f32 %v8478, %v8551
        %v8553 = vpop.f32.mrb[0].mxu0
        %8554 = vdwg.mxu0
        %8555 = vmatprep.subr.mxu0 0.0
        %v8556 = vand.u32 %v8250, 4294901760
        %v8557 = vsub.f32 %v8250, %v8556
        %v8558 = vand.u32 %v8557, 4294901760
        %8559 = vmatpush1.msra.mxu0 %v8558
        %8560 = vmatprep.subr.mxu0 0.0
        %8561 = vmatpush1.msra.mxu0 0.0
        %8562 = vmatprep.subr.mxu0 0.0
        %8563 = vmatpush1.msra.mxu0 0.0
        %8564 = vmatprep.subr.mxu0 0.0
        %8565 = vmatpush1.msra.mxu0 0.0
        %8566 = vmatprep.subr.mxu0 0.0
        %8567 = vmatpush1.msra.mxu0 0.0
        %8568 = vmatprep.subr.mxu0 0.0
        %8569 = vmatpush1.msra.mxu0 0.0
        %8570 = vmatprep.subr.mxu0 0.0
        %8571 = vmatpush1.msra.mxu0 0.0
        %8572 = vmatprep.subr.mxu0 0.0
        %8573 = vmatpush1.msra.mxu0 0.0
        %8574 = vmatprep.subr.mxu0 0.0
        %8575 = vmatpush1.msra.mxu0 0.0
        %8576 = vmatprep.subr.mxu0 0.0
        %8577 = vmatpush1.msra.mxu0 0.0
        %8578 = vmatprep.subr.mxu0 0.0
        %8579 = vmatpush1.msra.mxu0 0.0
        %8580 = vmatprep.subr.mxu0 0.0
        %8581 = vmatpush1.msra.mxu0 0.0
        %8582 = vmatprep.subr.mxu0 0.0
        %8583 = vmatpush1.msra.mxu0 0.0
        %8584 = vmatprep.subr.mxu0 0.0
        %8585 = vmatpush1.msra.mxu0 0.0
        %8586 = vmatprep.subr.mxu0 0.0
        %8587 = vmatpush1.msra.mxu0 0.0
        %8588 = vmatprep.subr.mxu0 0.0
        %8589 = vmatpush1.msra.mxu0 0.0
        %8590 = vmatprep.subr.mxu0 0.0
        %8591 = vmatpush1.msra.mxu0 0.0
        %8592 = vmatprep.subr.mxu0 0.0
        %8593 = vmatpush1.msra.mxu0 0.0
        %8594 = vmatprep.subr.mxu0 0.0
        %8595 = vmatpush1.msra.mxu0 0.0
        %8596 = vmatprep.subr.mxu0 0.0
        %8597 = vmatpush1.msra.mxu0 0.0
        %8598 = vmatprep.subr.mxu0 0.0
        %8599 = vmatpush1.msra.mxu0 0.0
        %8600 = vmatprep.subr.mxu0 0.0
        %8601 = vmatpush1.msra.mxu0 0.0
        %8602 = vmatprep.subr.mxu0 0.0
        %8603 = vmatpush1.msra.mxu0 0.0
        %8604 = vmatprep.subr.mxu0 0.0
        %8605 = vmatpush1.msra.mxu0 0.0
        %8606 = vmatprep.subr.mxu0 0.0
        %8607 = vmatpush1.msra.mxu0 0.0
        %8608 = vmatprep.subr.mxu0 0.0
        %8609 = vmatpush1.msra.mxu0 0.0
        %8610 = vmatprep.subr.mxu0 0.0
        %8611 = vmatpush1.msra.mxu0 0.0
        %8612 = vmatprep.subr.mxu0 0.0
        %8613 = vmatpush1.msra.mxu0 0.0
        %8614 = vmatprep.subr.mxu0 0.0
        %8615 = vmatpush1.msra.mxu0 0.0
        %8616 = vmatprep.subr.mxu0 0.0
        %8617 = vmatpush1.msra.mxu0 0.0
        %8618 = vmatprep.subr.mxu0 0.0
        %8619 = vmatpush1.msra.mxu0 0.0
        %8620 = vmatprep.subr.mxu0 0.0
        %8621 = vmatpush1.msra.mxu0 0.0
        %8622 = vmatprep.mubr.f32.mxu0 0.0
        %v8623 = vand.u32 %v8253, 4294901760
        %8624 = vmatmul.mubr.f32.gmra.mrb[0].mxu0 %v8623
        %v8625 = vpop.f32.mrb[0].mxu0
        %v8626 = vadd.f32 %v8552, %v8625
        %v8627 = vpop.f32.mrb[0].mxu0
        %8628 = vdwg.mxu0
        %8629 = vmatprep.subr.mxu0 0.0
        %v8630 = vand.u32 %v8250, 4294901760
        %8631 = vmatpush1.msra.mxu0 %v8630
        %8632 = vmatprep.subr.mxu0 0.0
        %8633 = vmatpush1.msra.mxu0 0.0
        %8634 = vmatprep.subr.mxu0 0.0
        %8635 = vmatpush1.msra.mxu0 0.0
        %8636 = vmatprep.subr.mxu0 0.0
        %8637 = vmatpush1.msra.mxu0 0.0
        %8638 = vmatprep.subr.mxu0 0.0
        %8639 = vmatpush1.msra.mxu0 0.0
        %8640 = vmatprep.subr.mxu0 0.0
        %8641 = vmatpush1.msra.mxu0 0.0
        %8642 = vmatprep.subr.mxu0 0.0
        %8643 = vmatpush1.msra.mxu0 0.0
        %8644 = vmatprep.subr.mxu0 0.0
        %8645 = vmatpush1.msra.mxu0 0.0
        %8646 = vmatprep.subr.mxu0 0.0
        %8647 = vmatpush1.msra.mxu0 0.0
        %8648 = vmatprep.subr.mxu0 0.0
        %8649 = vmatpush1.msra.mxu0 0.0
        %8650 = vmatprep.subr.mxu0 0.0
        %8651 = vmatpush1.msra.mxu0 0.0
        %8652 = vmatprep.subr.mxu0 0.0
        %8653 = vmatpush1.msra.mxu0 0.0
        %8654 = vmatprep.subr.mxu0 0.0
        %8655 = vmatpush1.msra.mxu0 0.0
        %8656 = vmatprep.subr.mxu0 0.0
        %8657 = vmatpush1.msra.mxu0 0.0
        %8658 = vmatprep.subr.mxu0 0.0
        %8659 = vmatpush1.msra.mxu0 0.0
        %8660 = vmatprep.subr.mxu0 0.0
        %8661 = vmatpush1.msra.mxu0 0.0
        %8662 = vmatprep.subr.mxu0 0.0
        %8663 = vmatpush1.msra.mxu0 0.0
        %8664 = vmatprep.subr.mxu0 0.0
        %8665 = vmatpush1.msra.mxu0 0.0
        %8666 = vmatprep.subr.mxu0 0.0
        %8667 = vmatpush1.msra.mxu0 0.0
        %8668 = vmatprep.subr.mxu0 0.0
        %8669 = vmatpush1.msra.mxu0 0.0
        %8670 = vmatprep.subr.mxu0 0.0
        %8671 = vmatpush1.msra.mxu0 0.0
        %8672 = vmatprep.subr.mxu0 0.0
        %8673 = vmatpush1.msra.mxu0 0.0
        %8674 = vmatprep.subr.mxu0 0.0
        %8675 = vmatpush1.msra.mxu0 0.0
        %8676 = vmatprep.subr.mxu0 0.0
        %8677 = vmatpush1.msra.mxu0 0.0
        %8678 = vmatprep.subr.mxu0 0.0
        %8679 = vmatpush1.msra.mxu0 0.0
        %8680 = vmatprep.subr.mxu0 0.0
        %8681 = vmatpush1.msra.mxu0 0.0
        %8682 = vmatprep.subr.mxu0 0.0
        %8683 = vmatpush1.msra.mxu0 0.0
        %8684 = vmatprep.subr.mxu0 0.0
        %8685 = vmatpush1.msra.mxu0 0.0
        %8686 = vmatprep.subr.mxu0 0.0
        %8687 = vmatpush1.msra.mxu0 0.0
        %8688 = vmatprep.subr.mxu0 0.0
        %8689 = vmatpush1.msra.mxu0 0.0
        %8690 = vmatprep.subr.mxu0 0.0
        %8691 = vmatpush1.msra.mxu0 0.0
        %8692 = vmatprep.subr.mxu0 0.0
        %8693 = vmatpush1.msra.mxu0 0.0
        %8694 = vmatprep.mubr.f32.mxu0 0.0
        %v8695 = vand.u32 %v8253, 4294901760
        %8696 = vmatmul.mubr.f32.gmra.mrb[0].mxu0 %v8695
        %v8697 = vpop.f32.mrb[0].mxu0
        %v8698 = vadd.f32 %v8626, %v8697
        %v8699 = vpop.f32.mrb[0].mxu0
        %8700 = vdwg.mxu0
        %8703 = vrot.lane.b32.xlu0 %v8246, 24
        %v8704 = vpop.permute.xlu0 %8703
        %8705 = vrot.lane.b32.xlu0 %v8698, 24
        %v8706 = vpop.permute.xlu0 %8705
        %vm8709 = vcmask 261312
        %8710 = vst.msk [vmem:[#allocation3] sm:$0xff] %vm8709, %v8704
        %8711 = vst.msk [vmem:[#allocation3 + $0x8] sm:$0xff] %vm8709, %v8706
        %v8712 = vld [vmem:[#allocation3] sm:$0xff]
        %v8713 = vld [vmem:[#allocation3 + $0x8] sm:$0xff]
        %v8714 = vld [vmem:[%s693] sm:$0xff]
        %v8715 = vld [vmem:[%s693 + $0x8] sm:$0xff]
        %v8716 = vld [vmem:[%s693 + $0x10] sm:$0xff]
        %v8717 = vld [vmem:[%s693 + $0x18] sm:$0xff]
        %v8719 = vsel %vm738, %v8712, 0
        %v8722 = vsel %vm738, %v8713, 0
        %8724 = vmatprep.subr.mxu0 0.0
        %v8725 = vand.u32 %v8714, 4294901760
        %8726 = vmatpush1.msra.mxu0 %v8725
        %8727 = vmatprep.subr.mxu0 0.0
        %v8728 = vand.u32 %v8715, 4294901760
        %8729 = vmatpush1.msra.mxu0 %v8728
        %8730 = vmatprep.subr.mxu0 0.0
        %v8731 = vand.u32 %v8716, 4294901760
        %8732 = vmatpush1.msra.mxu0 %v8731
        %8733 = vmatprep.subr.mxu0 0.0
        %v8734 = vand.u32 %v8717, 4294901760
        %8735 = vmatpush1.msra.mxu0 %v8734
        %8736 = vmatprep.subr.mxu0 0.0
        %8737 = vmatpush1.msra.mxu0 0.0
        %8738 = vmatprep.subr.mxu0 0.0
        %8739 = vmatpush1.msra.mxu0 0.0
        %8740 = vmatprep.subr.mxu0 0.0
        %8741 = vmatpush1.msra.mxu0 0.0
        %8742 = vmatprep.subr.mxu0 0.0
        %8743 = vmatpush1.msra.mxu0 0.0
        %8744 = vmatprep.subr.mxu0 0.0
        %8745 = vmatpush1.msra.mxu0 0.0
        %8746 = vmatprep.subr.mxu0 0.0
        %8747 = vmatpush1.msra.mxu0 0.0
        %8748 = vmatprep.subr.mxu0 0.0
        %8749 = vmatpush1.msra.mxu0 0.0
        %8750 = vmatprep.subr.mxu0 0.0
        %8751 = vmatpush1.msra.mxu0 0.0
        %8752 = vmatprep.subr.mxu0 0.0
        %8753 = vmatpush1.msra.mxu0 0.0
        %8754 = vmatprep.subr.mxu0 0.0
        %8755 = vmatpush1.msra.mxu0 0.0
        %8756 = vmatprep.subr.mxu0 0.0
        %8757 = vmatpush1.msra.mxu0 0.0
        %8758 = vmatprep.subr.mxu0 0.0
        %8759 = vmatpush1.msra.mxu0 0.0
        %8760 = vmatprep.subr.mxu0 0.0
        %8761 = vmatpush1.msra.mxu0 0.0
        %8762 = vmatprep.subr.mxu0 0.0
        %8763 = vmatpush1.msra.mxu0 0.0
        %8764 = vmatprep.subr.mxu0 0.0
        %8765 = vmatpush1.msra.mxu0 0.0
        %8766 = vmatprep.subr.mxu0 0.0
        %8767 = vmatpush1.msra.mxu0 0.0
        %8768 = vmatprep.subr.mxu0 0.0
        %8769 = vmatpush1.msra.mxu0 0.0
        %8770 = vmatprep.subr.mxu0 0.0
        %8771 = vmatpush1.msra.mxu0 0.0
        %8772 = vmatprep.subr.mxu0 0.0
        %8773 = vmatpush1.msra.mxu0 0.0
        %8774 = vmatprep.subr.mxu0 0.0
        %8775 = vmatpush1.msra.mxu0 0.0
        %8776 = vmatprep.subr.mxu0 0.0
        %8777 = vmatpush1.msra.mxu0 0.0
        %8778 = vmatprep.subr.mxu0 0.0
        %8779 = vmatpush1.msra.mxu0 0.0
        %8780 = vmatprep.subr.mxu0 0.0
        %8781 = vmatpush1.msra.mxu0 0.0
        %8782 = vmatprep.subr.mxu0 0.0
        %8783 = vmatpush1.msra.mxu0 0.0
        %8784 = vmatprep.subr.mxu0 0.0
        %8785 = vmatpush1.msra.mxu0 0.0
        %8786 = vmatprep.subr.mxu0 0.0
        %8787 = vmatpush1.msra.mxu0 0.0
        %8788 = vmatprep.subr.mxu0 0.0
        %8789 = vmatpush1.msra.mxu0 0.0
        %8790 = vmatprep.subr.mxu0 0.0
        %8791 = vmatpush1.msra.mxu0 0.0
        %8792 = vmatprep.mubr.f32.mxu0 0.0
        %v8793 = vand.u32 %v8719, 4294901760
        %v8794 = vsub.f32 %v8719, %v8793
        %v8795 = vand.u32 %v8794, 4294901760
        %v8796 = vsub.f32 %v8794, %v8795
        %v8797 = vand.u32 %v8796, 4294901760
        %8798 = vmatmul.mubr.f32.gmra.mrb[0].mxu0 %v8797
        %v8799 = vpop.f32.mrb[0].mxu0
        %v8800 = vadd.f32 0.0, %v8799
        %v8801 = vpop.f32.mrb[0].mxu0
        %8802 = vmatprep.mubr.f32.mxu0 0.0
        %v8803 = vand.u32 %v8722, 4294901760
        %v8804 = vsub.f32 %v8722, %v8803
        %v8805 = vand.u32 %v8804, 4294901760
        %v8806 = vsub.f32 %v8804, %v8805
        %v8807 = vand.u32 %v8806, 4294901760
        %8808 = vmatmul.mubr.f32.gmra.mrb[0].mxu0 %v8807
        %v8809 = vpop.f32.mrb[0].mxu0
        %v8810 = vadd.f32 0.0, %v8809
        %v8811 = vpop.f32.mrb[0].mxu0
        %8812 = vdwg.mxu0
        %8813 = vmatprep.subr.mxu0 0.0
        %v8814 = vand.u32 %v8714, 4294901760
        %v8815 = vsub.f32 %v8714, %v8814
        %v8816 = vand.u32 %v8815, 4294901760
        %v8817 = vsub.f32 %v8815, %v8816
        %v8818 = vand.u32 %v8817, 4294901760
        %8819 = vmatpush1.msra.mxu0 %v8818
        %8820 = vmatprep.subr.mxu0 0.0
        %v8821 = vand.u32 %v8715, 4294901760
        %v8822 = vsub.f32 %v8715, %v8821
        %v8823 = vand.u32 %v8822, 4294901760
        %v8824 = vsub.f32 %v8822, %v8823
        %v8825 = vand.u32 %v8824, 4294901760
        %8826 = vmatpush1.msra.mxu0 %v8825
        %8827 = vmatprep.subr.mxu0 0.0
        %v8828 = vand.u32 %v8716, 4294901760
        %v8829 = vsub.f32 %v8716, %v8828
        %v8830 = vand.u32 %v8829, 4294901760
        %v8831 = vsub.f32 %v8829, %v8830
        %v8832 = vand.u32 %v8831, 4294901760
        %8833 = vmatpush1.msra.mxu0 %v8832
        %8834 = vmatprep.subr.mxu0 0.0
        %v8835 = vand.u32 %v8717, 4294901760
        %v8836 = vsub.f32 %v8717, %v8835
        %v8837 = vand.u32 %v8836, 4294901760
        %v8838 = vsub.f32 %v8836, %v8837
        %v8839 = vand.u32 %v8838, 4294901760
        %8840 = vmatpush1.msra.mxu0 %v8839
        %8841 = vmatprep.subr.mxu0 0.0
        %8842 = vmatpush1.msra.mxu0 0.0
        %8843 = vmatprep.subr.mxu0 0.0
        %8844 = vmatpush1.msra.mxu0 0.0
        %8845 = vmatprep.subr.mxu0 0.0
        %8846 = vmatpush1.msra.mxu0 0.0
        %8847 = vmatprep.subr.mxu0 0.0
        %8848 = vmatpush1.msra.mxu0 0.0
        %8849 = vmatprep.subr.mxu0 0.0
        %8850 = vmatpush1.msra.mxu0 0.0
        %8851 = vmatprep.subr.mxu0 0.0
        %8852 = vmatpush1.msra.mxu0 0.0
        %8853 = vmatprep.subr.mxu0 0.0
        %8854 = vmatpush1.msra.mxu0 0.0
        %8855 = vmatprep.subr.mxu0 0.0
        %8856 = vmatpush1.msra.mxu0 0.0
        %8857 = vmatprep.subr.mxu0 0.0
        %8858 = vmatpush1.msra.mxu0 0.0
        %8859 = vmatprep.subr.mxu0 0.0
        %8860 = vmatpush1.msra.mxu0 0.0
        %8861 = vmatprep.subr.mxu0 0.0
        %8862 = vmatpush1.msra.mxu0 0.0
        %8863 = vmatprep.subr.mxu0 0.0
        %8864 = vmatpush1.msra.mxu0 0.0
        %8865 = vmatprep.subr.mxu0 0.0
        %8866 = vmatpush1.msra.mxu0 0.0
        %8867 = vmatprep.subr.mxu0 0.0
        %8868 = vmatpush1.msra.mxu0 0.0
        %8869 = vmatprep.subr.mxu0 0.0
        %8870 = vmatpush1.msra.mxu0 0.0
        %8871 = vmatprep.subr.mxu0 0.0
        %8872 = vmatpush1.msra.mxu0 0.0
        %8873 = vmatprep.subr.mxu0 0.0
        %8874 = vmatpush1.msra.mxu0 0.0
        %8875 = vmatprep.subr.mxu0 0.0
        %8876 = vmatpush1.msra.mxu0 0.0
        %8877 = vmatprep.subr.mxu0 0.0
        %8878 = vmatpush1.msra.mxu0 0.0
        %8879 = vmatprep.subr.mxu0 0.0
        %8880 = vmatpush1.msra.mxu0 0.0
        %8881 = vmatprep.subr.mxu0 0.0
        %8882 = vmatpush1.msra.mxu0 0.0
        %8883 = vmatprep.subr.mxu0 0.0
        %8884 = vmatpush1.msra.mxu0 0.0
        %8885 = vmatprep.subr.mxu0 0.0
        %8886 = vmatpush1.msra.mxu0 0.0
        %8887 = vmatprep.subr.mxu0 0.0
        %8888 = vmatpush1.msra.mxu0 0.0
        %8889 = vmatprep.subr.mxu0 0.0
        %8890 = vmatpush1.msra.mxu0 0.0
        %8891 = vmatprep.subr.mxu0 0.0
        %8892 = vmatpush1.msra.mxu0 0.0
        %8893 = vmatprep.subr.mxu0 0.0
        %8894 = vmatpush1.msra.mxu0 0.0
        %8895 = vmatprep.subr.mxu0 0.0
        %8896 = vmatpush1.msra.mxu0 0.0
        %8897 = vmatprep.mubr.f32.mxu0 0.0
        %v8898 = vand.u32 %v8719, 4294901760
        %8899 = vmatmul.mubr.f32.gmra.mrb[0].mxu0 %v8898
        %v8900 = vpop.f32.mrb[0].mxu0
        %v8901 = vadd.f32 %v8800, %v8900
        %v8902 = vpop.f32.mrb[0].mxu0
        %8903 = vmatprep.mubr.f32.mxu0 0.0
        %v8904 = vand.u32 %v8722, 4294901760
        %8905 = vmatmul.mubr.f32.gmra.mrb[0].mxu0 %v8904
        %v8906 = vpop.f32.mrb[0].mxu0
        %v8907 = vadd.f32 %v8810, %v8906
        %v8908 = vpop.f32.mrb[0].mxu0
        %8909 = vdwg.mxu0
        %8910 = vmatprep.subr.mxu0 0.0
        %v8911 = vand.u32 %v8714, 4294901760
        %v8912 = vsub.f32 %v8714, %v8911
        %8913 = vmatpush1.msra.mxu0 %v8912
        %8914 = vmatprep.subr.mxu0 0.0
        %v8915 = vand.u32 %v8715, 4294901760
        %v8916 = vsub.f32 %v8715, %v8915
        %8917 = vmatpush1.msra.mxu0 %v8916
        %8918 = vmatprep.subr.mxu0 0.0
        %v8919 = vand.u32 %v8716, 4294901760
        %v8920 = vsub.f32 %v8716, %v8919
        %8921 = vmatpush1.msra.mxu0 %v8920
        %8922 = vmatprep.subr.mxu0 0.0
        %v8923 = vand.u32 %v8717, 4294901760
        %v8924 = vsub.f32 %v8717, %v8923
        %8925 = vmatpush1.msra.mxu0 %v8924
        %8926 = vmatprep.subr.mxu0 0.0
        %8927 = vmatpush1.msra.mxu0 0.0
        %8928 = vmatprep.subr.mxu0 0.0
        %8929 = vmatpush1.msra.mxu0 0.0
        %8930 = vmatprep.subr.mxu0 0.0
        %8931 = vmatpush1.msra.mxu0 0.0
        %8932 = vmatprep.subr.mxu0 0.0
        %8933 = vmatpush1.msra.mxu0 0.0
        %8934 = vmatprep.subr.mxu0 0.0
        %8935 = vmatpush1.msra.mxu0 0.0
        %8936 = vmatprep.subr.mxu0 0.0
        %8937 = vmatpush1.msra.mxu0 0.0
        %8938 = vmatprep.subr.mxu0 0.0
        %8939 = vmatpush1.msra.mxu0 0.0
        %8940 = vmatprep.subr.mxu0 0.0
        %8941 = vmatpush1.msra.mxu0 0.0
        %8942 = vmatprep.subr.mxu0 0.0
        %8943 = vmatpush1.msra.mxu0 0.0
        %8944 = vmatprep.subr.mxu0 0.0
        %8945 = vmatpush1.msra.mxu0 0.0
        %8946 = vmatprep.subr.mxu0 0.0
        %8947 = vmatpush1.msra.mxu0 0.0
        %8948 = vmatprep.subr.mxu0 0.0
        %8949 = vmatpush1.msra.mxu0 0.0
        %8950 = vmatprep.subr.mxu0 0.0
        %8951 = vmatpush1.msra.mxu0 0.0
        %8952 = vmatprep.subr.mxu0 0.0
        %8953 = vmatpush1.msra.mxu0 0.0
        %8954 = vmatprep.subr.mxu0 0.0
        %8955 = vmatpush1.msra.mxu0 0.0
        %8956 = vmatprep.subr.mxu0 0.0
        %8957 = vmatpush1.msra.mxu0 0.0
        %8958 = vmatprep.subr.mxu0 0.0
        %8959 = vmatpush1.msra.mxu0 0.0
        %8960 = vmatprep.subr.mxu0 0.0
        %8961 = vmatpush1.msra.mxu0 0.0
        %8962 = vmatprep.subr.mxu0 0.0
        %8963 = vmatpush1.msra.mxu0 0.0
        %8964 = vmatprep.subr.mxu0 0.0
        %8965 = vmatpush1.msra.mxu0 0.0
        %8966 = vmatprep.subr.mxu0 0.0
        %8967 = vmatpush1.msra.mxu0 0.0
        %8968 = vmatprep.subr.mxu0 0.0
        %8969 = vmatpush1.msra.mxu0 0.0
        %8970 = vmatprep.subr.mxu0 0.0
        %8971 = vmatpush1.msra.mxu0 0.0
        %8972 = vmatprep.subr.mxu0 0.0
        %8973 = vmatpush1.msra.mxu0 0.0
        %8974 = vmatprep.subr.mxu0 0.0
        %8975 = vmatpush1.msra.mxu0 0.0
        %8976 = vmatprep.subr.mxu0 0.0
        %8977 = vmatpush1.msra.mxu0 0.0
        %8978 = vmatprep.subr.mxu0 0.0
        %8979 = vmatpush1.msra.mxu0 0.0
        %8980 = vmatprep.subr.mxu0 0.0
        %8981 = vmatpush1.msra.mxu0 0.0
        %8982 = vmatprep.mubr.f32.mxu0 0.0
        %v8983 = vand.u32 %v8719, 4294901760
        %v8984 = vsub.f32 %v8719, %v8983
        %8985 = vmatmul.mubr.f32.gmra.mrb[0].mxu0 %v8984
        %v8986 = vpop.f32.mrb[0].mxu0
        %v8987 = vadd.f32 %v8901, %v8986
        %v8988 = vpop.f32.mrb[0].mxu0
        %8989 = vmatprep.mubr.f32.mxu0 0.0
        %v8990 = vand.u32 %v8722, 4294901760
        %v8991 = vsub.f32 %v8722, %v8990
        %8992 = vmatmul.mubr.f32.gmra.mrb[0].mxu0 %v8991
        %v8993 = vpop.f32.mrb[0].mxu0
        %v8994 = vadd.f32 %v8907, %v8993
        %v8995 = vpop.f32.mrb[0].mxu0
        %8996 = vdwg.mxu0
        %8997 = vmatprep.subr.mxu0 0.0
        %v8998 = vand.u32 %v8714, 4294901760
        %8999 = vmatpush1.msra.mxu0 %v8998
        %9000 = vmatprep.subr.mxu0 0.0
        %v9001 = vand.u32 %v8715, 4294901760
        %9002 = vmatpush1.msra.mxu0 %v9001
        %9003 = vmatprep.subr.mxu0 0.0
        %v9004 = vand.u32 %v8716, 4294901760
        %9005 = vmatpush1.msra.mxu0 %v9004
        %9006 = vmatprep.subr.mxu0 0.0
        %v9007 = vand.u32 %v8717, 4294901760
        %9008 = vmatpush1.msra.mxu0 %v9007
        %9009 = vmatprep.subr.mxu0 0.0
        %9010 = vmatpush1.msra.mxu0 0.0
        %9011 = vmatprep.subr.mxu0 0.0
        %9012 = vmatpush1.msra.mxu0 0.0
        %9013 = vmatprep.subr.mxu0 0.0
        %9014 = vmatpush1.msra.mxu0 0.0
        %9015 = vmatprep.subr.mxu0 0.0
        %9016 = vmatpush1.msra.mxu0 0.0
        %9017 = vmatprep.subr.mxu0 0.0
        %9018 = vmatpush1.msra.mxu0 0.0
        %9019 = vmatprep.subr.mxu0 0.0
        %9020 = vmatpush1.msra.mxu0 0.0
        %9021 = vmatprep.subr.mxu0 0.0
        %9022 = vmatpush1.msra.mxu0 0.0
        %9023 = vmatprep.subr.mxu0 0.0
        %9024 = vmatpush1.msra.mxu0 0.0
        %9025 = vmatprep.subr.mxu0 0.0
        %9026 = vmatpush1.msra.mxu0 0.0
        %9027 = vmatprep.subr.mxu0 0.0
        %9028 = vmatpush1.msra.mxu0 0.0
        %9029 = vmatprep.subr.mxu0 0.0
        %9030 = vmatpush1.msra.mxu0 0.0
        %9031 = vmatprep.subr.mxu0 0.0
        %9032 = vmatpush1.msra.mxu0 0.0
        %9033 = vmatprep.subr.mxu0 0.0
        %9034 = vmatpush1.msra.mxu0 0.0
        %9035 = vmatprep.subr.mxu0 0.0
        %9036 = vmatpush1.msra.mxu0 0.0
        %9037 = vmatprep.subr.mxu0 0.0
        %9038 = vmatpush1.msra.mxu0 0.0
        %9039 = vmatprep.subr.mxu0 0.0
        %9040 = vmatpush1.msra.mxu0 0.0
        %9041 = vmatprep.subr.mxu0 0.0
        %9042 = vmatpush1.msra.mxu0 0.0
        %9043 = vmatprep.subr.mxu0 0.0
        %9044 = vmatpush1.msra.mxu0 0.0
        %9045 = vmatprep.subr.mxu0 0.0
        %9046 = vmatpush1.msra.mxu0 0.0
        %9047 = vmatprep.subr.mxu0 0.0
        %9048 = vmatpush1.msra.mxu0 0.0
        %9049 = vmatprep.subr.mxu0 0.0
        %9050 = vmatpush1.msra.mxu0 0.0
        %9051 = vmatprep.subr.mxu0 0.0
        %9052 = vmatpush1.msra.mxu0 0.0
        %9053 = vmatprep.subr.mxu0 0.0
        %9054 = vmatpush1.msra.mxu0 0.0
        %9055 = vmatprep.subr.mxu0 0.0
        %9056 = vmatpush1.msra.mxu0 0.0
        %9057 = vmatprep.subr.mxu0 0.0
        %9058 = vmatpush1.msra.mxu0 0.0
        %9059 = vmatprep.subr.mxu0 0.0
        %9060 = vmatpush1.msra.mxu0 0.0
        %9061 = vmatprep.subr.mxu0 0.0
        %9062 = vmatpush1.msra.mxu0 0.0
        %9063 = vmatprep.subr.mxu0 0.0
        %9064 = vmatpush1.msra.mxu0 0.0
        %9065 = vmatprep.mubr.f32.mxu0 0.0
        %v9066 = vand.u32 %v8719, 4294901760
        %v9067 = vsub.f32 %v8719, %v9066
        %v9068 = vand.u32 %v9067, 4294901760
        %9069 = vmatmul.mubr.f32.gmra.mrb[0].mxu0 %v9068
        %v9070 = vpop.f32.mrb[0].mxu0
        %v9071 = vadd.f32 %v8987, %v9070
        %v9072 = vpop.f32.mrb[0].mxu0
        %9073 = vmatprep.mubr.f32.mxu0 0.0
        %v9074 = vand.u32 %v8722, 4294901760
        %v9075 = vsub.f32 %v8722, %v9074
        %v9076 = vand.u32 %v9075, 4294901760
        %9077 = vmatmul.mubr.f32.gmra.mrb[0].mxu0 %v9076
        %v9078 = vpop.f32.mrb[0].mxu0
        %v9079 = vadd.f32 %v8994, %v9078
        %v9080 = vpop.f32.mrb[0].mxu0
        %9081 = vdwg.mxu0
        %9082 = vmatprep.subr.mxu0 0.0
        %v9083 = vand.u32 %v8714, 4294901760
        %v9084 = vsub.f32 %v8714, %v9083
        %v9085 = vand.u32 %v9084, 4294901760
        %9086 = vmatpush1.msra.mxu0 %v9085
        %9087 = vmatprep.subr.mxu0 0.0
        %v9088 = vand.u32 %v8715, 4294901760
        %v9089 = vsub.f32 %v8715, %v9088
        %v9090 = vand.u32 %v9089, 4294901760
        %9091 = vmatpush1.msra.mxu0 %v9090
        %9092 = vmatprep.subr.mxu0 0.0
        %v9093 = vand.u32 %v8716, 4294901760
        %v9094 = vsub.f32 %v8716, %v9093
        %v9095 = vand.u32 %v9094, 4294901760
        %9096 = vmatpush1.msra.mxu0 %v9095
        %9097 = vmatprep.subr.mxu0 0.0
        %v9098 = vand.u32 %v8717, 4294901760
        %v9099 = vsub.f32 %v8717, %v9098
        %v9100 = vand.u32 %v9099, 4294901760
        %9101 = vmatpush1.msra.mxu0 %v9100
        %9102 = vmatprep.subr.mxu0 0.0
        %9103 = vmatpush1.msra.mxu0 0.0
        %9104 = vmatprep.subr.mxu0 0.0
        %9105 = vmatpush1.msra.mxu0 0.0
        %9106 = vmatprep.subr.mxu0 0.0
        %9107 = vmatpush1.msra.mxu0 0.0
        %9108 = vmatprep.subr.mxu0 0.0
        %9109 = vmatpush1.msra.mxu0 0.0
        %9110 = vmatprep.subr.mxu0 0.0
        %9111 = vmatpush1.msra.mxu0 0.0
        %9112 = vmatprep.subr.mxu0 0.0
        %9113 = vmatpush1.msra.mxu0 0.0
        %9114 = vmatprep.subr.mxu0 0.0
        %9115 = vmatpush1.msra.mxu0 0.0
        %9116 = vmatprep.subr.mxu0 0.0
        %9117 = vmatpush1.msra.mxu0 0.0
        %9118 = vmatprep.subr.mxu0 0.0
        %9119 = vmatpush1.msra.mxu0 0.0
        %9120 = vmatprep.subr.mxu0 0.0
        %9121 = vmatpush1.msra.mxu0 0.0
        %9122 = vmatprep.subr.mxu0 0.0
        %9123 = vmatpush1.msra.mxu0 0.0
        %9124 = vmatprep.subr.mxu0 0.0
        %9125 = vmatpush1.msra.mxu0 0.0
        %9126 = vmatprep.subr.mxu0 0.0
        %9127 = vmatpush1.msra.mxu0 0.0
        %9128 = vmatprep.subr.mxu0 0.0
        %9129 = vmatpush1.msra.mxu0 0.0
        %9130 = vmatprep.subr.mxu0 0.0
        %9131 = vmatpush1.msra.mxu0 0.0
        %9132 = vmatprep.subr.mxu0 0.0
        %9133 = vmatpush1.msra.mxu0 0.0
        %9134 = vmatprep.subr.mxu0 0.0
        %9135 = vmatpush1.msra.mxu0 0.0
        %9136 = vmatprep.subr.mxu0 0.0
        %9137 = vmatpush1.msra.mxu0 0.0
        %9138 = vmatprep.subr.mxu0 0.0
        %9139 = vmatpush1.msra.mxu0 0.0
        %9140 = vmatprep.subr.mxu0 0.0
        %9141 = vmatpush1.msra.mxu0 0.0
        %9142 = vmatprep.subr.mxu0 0.0
        %9143 = vmatpush1.msra.mxu0 0.0
        %9144 = vmatprep.subr.mxu0 0.0
        %9145 = vmatpush1.msra.mxu0 0.0
        %9146 = vmatprep.subr.mxu0 0.0
        %9147 = vmatpush1.msra.mxu0 0.0
        %9148 = vmatprep.subr.mxu0 0.0
        %9149 = vmatpush1.msra.mxu0 0.0
        %9150 = vmatprep.subr.mxu0 0.0
        %9151 = vmatpush1.msra.mxu0 0.0
        %9152 = vmatprep.subr.mxu0 0.0
        %9153 = vmatpush1.msra.mxu0 0.0
        %9154 = vmatprep.subr.mxu0 0.0
        %9155 = vmatpush1.msra.mxu0 0.0
        %9156 = vmatprep.subr.mxu0 0.0
        %9157 = vmatpush1.msra.mxu0 0.0
        %9158 = vmatprep.mubr.f32.mxu0 0.0
        %v9159 = vand.u32 %v8719, 4294901760
        %9160 = vmatmul.mubr.f32.gmra.mrb[0].mxu0 %v9159
        %v9161 = vpop.f32.mrb[0].mxu0
        %v9162 = vadd.f32 %v9071, %v9161
        %v9163 = vpop.f32.mrb[0].mxu0
        %9164 = vmatprep.mubr.f32.mxu0 0.0
        %v9165 = vand.u32 %v8722, 4294901760
        %9166 = vmatmul.mubr.f32.gmra.mrb[0].mxu0 %v9165
        %v9167 = vpop.f32.mrb[0].mxu0
        %v9168 = vadd.f32 %v9079, %v9167
        %v9169 = vpop.f32.mrb[0].mxu0
        %9170 = vdwg.mxu0
        %9171 = vmatprep.subr.mxu0 0.0
        %v9172 = vand.u32 %v8714, 4294901760
        %9173 = vmatpush1.msra.mxu0 %v9172
        %9174 = vmatprep.subr.mxu0 0.0
        %v9175 = vand.u32 %v8715, 4294901760
        %9176 = vmatpush1.msra.mxu0 %v9175
        %9177 = vmatprep.subr.mxu0 0.0
        %v9178 = vand.u32 %v8716, 4294901760
        %9179 = vmatpush1.msra.mxu0 %v9178
        %9180 = vmatprep.subr.mxu0 0.0
        %v9181 = vand.u32 %v8717, 4294901760
        %9182 = vmatpush1.msra.mxu0 %v9181
        %9183 = vmatprep.subr.mxu0 0.0
        %9184 = vmatpush1.msra.mxu0 0.0
        %9185 = vmatprep.subr.mxu0 0.0
        %9186 = vmatpush1.msra.mxu0 0.0
        %9187 = vmatprep.subr.mxu0 0.0
        %9188 = vmatpush1.msra.mxu0 0.0
        %9189 = vmatprep.subr.mxu0 0.0
        %9190 = vmatpush1.msra.mxu0 0.0
        %9191 = vmatprep.subr.mxu0 0.0
        %9192 = vmatpush1.msra.mxu0 0.0
        %9193 = vmatprep.subr.mxu0 0.0
        %9194 = vmatpush1.msra.mxu0 0.0
        %9195 = vmatprep.subr.mxu0 0.0
        %9196 = vmatpush1.msra.mxu0 0.0
        %9197 = vmatprep.subr.mxu0 0.0
        %9198 = vmatpush1.msra.mxu0 0.0
        %9199 = vmatprep.subr.mxu0 0.0
        %9200 = vmatpush1.msra.mxu0 0.0
        %9201 = vmatprep.subr.mxu0 0.0
        %9202 = vmatpush1.msra.mxu0 0.0
        %9203 = vmatprep.subr.mxu0 0.0
        %9204 = vmatpush1.msra.mxu0 0.0
        %9205 = vmatprep.subr.mxu0 0.0
        %9206 = vmatpush1.msra.mxu0 0.0
        %9207 = vmatprep.subr.mxu0 0.0
        %9208 = vmatpush1.msra.mxu0 0.0
        %9209 = vmatprep.subr.mxu0 0.0
        %9210 = vmatpush1.msra.mxu0 0.0
        %9211 = vmatprep.subr.mxu0 0.0
        %9212 = vmatpush1.msra.mxu0 0.0
        %9213 = vmatprep.subr.mxu0 0.0
        %9214 = vmatpush1.msra.mxu0 0.0
        %9215 = vmatprep.subr.mxu0 0.0
        %9216 = vmatpush1.msra.mxu0 0.0
        %9217 = vmatprep.subr.mxu0 0.0
        %9218 = vmatpush1.msra.mxu0 0.0
        %9219 = vmatprep.subr.mxu0 0.0
        %9220 = vmatpush1.msra.mxu0 0.0
        %9221 = vmatprep.subr.mxu0 0.0
        %9222 = vmatpush1.msra.mxu0 0.0
        %9223 = vmatprep.subr.mxu0 0.0
        %9224 = vmatpush1.msra.mxu0 0.0
        %9225 = vmatprep.subr.mxu0 0.0
        %9226 = vmatpush1.msra.mxu0 0.0
        %9227 = vmatprep.subr.mxu0 0.0
        %9228 = vmatpush1.msra.mxu0 0.0
        %9229 = vmatprep.subr.mxu0 0.0
        %9230 = vmatpush1.msra.mxu0 0.0
        %9231 = vmatprep.subr.mxu0 0.0
        %9232 = vmatpush1.msra.mxu0 0.0
        %9233 = vmatprep.subr.mxu0 0.0
        %9234 = vmatpush1.msra.mxu0 0.0
        %9235 = vmatprep.subr.mxu0 0.0
        %9236 = vmatpush1.msra.mxu0 0.0
        %9237 = vmatprep.subr.mxu0 0.0
        %9238 = vmatpush1.msra.mxu0 0.0
        %9239 = vmatprep.mubr.f32.mxu0 0.0
        %v9240 = vand.u32 %v8719, 4294901760
        %9241 = vmatmul.mubr.f32.gmra.mrb[0].mxu0 %v9240
        %v9242 = vpop.f32.mrb[0].mxu0
        %v9243 = vadd.f32 %v9162, %v9242
        %v9244 = vpop.f32.mrb[0].mxu0
        %9245 = vmatprep.mubr.f32.mxu0 0.0
        %v9246 = vand.u32 %v8722, 4294901760
        %9247 = vmatmul.mubr.f32.gmra.mrb[0].mxu0 %v9246
        %v9248 = vpop.f32.mrb[0].mxu0
        %v9249 = vadd.f32 %v9168, %v9248
        %v9250 = vpop.f32.mrb[0].mxu0
        %9251 = vdwg.mxu0
        %v9252 = vadd.f32 %v734, %v9243
        %v9253 = vadd.f32 %v735, %v9249
        %v9254 = vld [vmem:[%s696] sm:$0x1]
        %v9256 = vlaneseq
        %v9257 = vshrl.u32 %v9256, 7
        %v9258 = vsub.s32 0, %v9257
        %v9259 = vrot.slane %v9254, %v9258
        %v9261 = vadd.f32 %v9252, %v9259
        %v9262 = vadd.f32 %v9253, %v9259
        %v9263 = vld [vmem:[%s699] sm:$0x1]
        %v9264 = vld [vmem:[%s702] sm:$0x1]
        %v9265 = vsel %vm738, %v9261, 0.0
        %9266 = vadd.xlane.f32.xlu0 %v9265
        %v9267 = vpop.xlane.xlu0 %9266
        %v9268 = vsel %vm738, %v9262, 0.0
        %9269 = vadd.xlane.f32.xlu0 %v9268
        %v9270 = vpop.xlane.xlu0 %9269
        %v9271 = vmul.f32 %v9267, %v745
        %v9272 = vmul.f32 %v9270, %v745
        %v9273 = vsub.f32 %v9261, %v9271
        %v9274 = vsub.f32 %v9262, %v9272
        %v9275 = vmul.f32 %v9273, %v9273
        %v9276 = vmul.f32 %v9274, %v9274
        %v9277 = vsel %vm738, %v9275, 0.0
        %9278 = vadd.xlane.f32.xlu0 %v9277
        %v9279 = vpop.xlane.xlu0 %9278
        %v9280 = vsel %vm738, %v9276, 0.0
        %9281 = vadd.xlane.f32.xlu0 %v9280
        %v9282 = vpop.xlane.xlu0 %9281
        %v9283 = vmul.f32 %v9279, %v745
        %v9284 = vmul.f32 %v9282, %v745
        %v9285 = vadd.f32 %v9283, 1e-05
        %v9286 = vadd.f32 %v9284, 1e-05
        %v9287 = vrsqrt.pop %v9285
        %v9288 = vrsqrt.pop %v9286
        %v9289 = vmul.f32 %v9273, %v9287
        %v9290 = vmul.f32 %v9274, %v9288
        %v9292 = vlaneseq
        %v9293 = vshrl.u32 %v9292, 7
        %v9294 = vsub.s32 0, %v9293
        %v9295 = vrot.slane %v9263, %v9294
        %v9297 = vmul.f32 %v9289, %v9295
        %v9298 = vmul.f32 %v9290, %v9295
        %v9300 = vlaneseq
        %v9301 = vshrl.u32 %v9300, 7
        %v9302 = vsub.s32 0, %v9301
        %v9303 = vrot.slane %v9264, %v9302
        %v9305 = vadd.f32 %v9297, %v9303
        %v9306 = vadd.f32 %v9298, %v9303
        %v9307 = vld [vmem:[%s707] sm:$0xff]
        %v9308 = vld [vmem:[%s707 + $0x8] sm:$0xff]
        %v9309 = vld [vmem:[%s707 + $0x10] sm:$0xff]
        %v9310 = vld [vmem:[%s707 + $0x18] sm:$0xff]
        %v9311 = vld [vmem:[%s710] sm:$0x1]
        %v9313 = vlaneseq
        %v9314 = vshrl.u32 %v9313, 7
        %v9315 = vsub.s32 0, %v9314
        %v9316 = vrot.slane %v9311, %v9315
        %v9319 = vsel %vm738, %v9305, 0
        %v9322 = vsel %vm738, %v9306, 0
        %9324 = vmatprep.subr.mxu0 0.0
        %v9325 = vand.u32 %v9307, 4294901760
        %9326 = vmatpush1.msra.mxu0 %v9325
        %9327 = vmatprep.subr.mxu0 0.0
        %v9328 = vand.u32 %v9308, 4294901760
        %9329 = vmatpush1.msra.mxu0 %v9328
        %9330 = vmatprep.subr.mxu0 0.0
        %v9331 = vand.u32 %v9309, 4294901760
        %9332 = vmatpush1.msra.mxu0 %v9331
        %9333 = vmatprep.subr.mxu0 0.0
        %v9334 = vand.u32 %v9310, 4294901760
        %9335 = vmatpush1.msra.mxu0 %v9334
        %9336 = vmatprep.subr.mxu0 0.0
        %9337 = vmatpush1.msra.mxu0 0.0
        %9338 = vmatprep.subr.mxu0 0.0
        %9339 = vmatpush1.msra.mxu0 0.0
        %9340 = vmatprep.subr.mxu0 0.0
        %9341 = vmatpush1.msra.mxu0 0.0
        %9342 = vmatprep.subr.mxu0 0.0
        %9343 = vmatpush1.msra.mxu0 0.0
        %9344 = vmatprep.subr.mxu0 0.0
        %9345 = vmatpush1.msra.mxu0 0.0
        %9346 = vmatprep.subr.mxu0 0.0
        %9347 = vmatpush1.msra.mxu0 0.0
        %9348 = vmatprep.subr.mxu0 0.0
        %9349 = vmatpush1.msra.mxu0 0.0
        %9350 = vmatprep.subr.mxu0 0.0
        %9351 = vmatpush1.msra.mxu0 0.0
        %9352 = vmatprep.subr.mxu0 0.0
        %9353 = vmatpush1.msra.mxu0 0.0
        %9354 = vmatprep.subr.mxu0 0.0
        %9355 = vmatpush1.msra.mxu0 0.0
        %9356 = vmatprep.subr.mxu0 0.0
        %9357 = vmatpush1.msra.mxu0 0.0
        %9358 = vmatprep.subr.mxu0 0.0
        %9359 = vmatpush1.msra.mxu0 0.0
        %9360 = vmatprep.subr.mxu0 0.0
        %9361 = vmatpush1.msra.mxu0 0.0
        %9362 = vmatprep.subr.mxu0 0.0
        %9363 = vmatpush1.msra.mxu0 0.0
        %9364 = vmatprep.subr.mxu0 0.0
        %9365 = vmatpush1.msra.mxu0 0.0
        %9366 = vmatprep.subr.mxu0 0.0
        %9367 = vmatpush1.msra.mxu0 0.0
        %9368 = vmatprep.subr.mxu0 0.0
        %9369 = vmatpush1.msra.mxu0 0.0
        %9370 = vmatprep.subr.mxu0 0.0
        %9371 = vmatpush1.msra.mxu0 0.0
        %9372 = vmatprep.subr.mxu0 0.0
        %9373 = vmatpush1.msra.mxu0 0.0
        %9374 = vmatprep.subr.mxu0 0.0
        %9375 = vmatpush1.msra.mxu0 0.0
        %9376 = vmatprep.subr.mxu0 0.0
        %9377 = vmatpush1.msra.mxu0 0.0
        %9378 = vmatprep.subr.mxu0 0.0
        %9379 = vmatpush1.msra.mxu0 0.0
        %9380 = vmatprep.subr.mxu0 0.0
        %9381 = vmatpush1.msra.mxu0 0.0
        %9382 = vmatprep.subr.mxu0 0.0
        %9383 = vmatpush1.msra.mxu0 0.0
        %9384 = vmatprep.subr.mxu0 0.0
        %9385 = vmatpush1.msra.mxu0 0.0
        %9386 = vmatprep.subr.mxu0 0.0
        %9387 = vmatpush1.msra.mxu0 0.0
        %9388 = vmatprep.subr.mxu0 0.0
        %9389 = vmatpush1.msra.mxu0 0.0
        %9390 = vmatprep.subr.mxu0 0.0
        %9391 = vmatpush1.msra.mxu0 0.0
        %9392 = vmatprep.mubr.f32.mxu0 0.0
        %v9393 = vand.u32 %v9319, 4294901760
        %v9394 = vsub.f32 %v9319, %v9393
        %v9395 = vand.u32 %v9394, 4294901760
        %v9396 = vsub.f32 %v9394, %v9395
        %v9397 = vand.u32 %v9396, 4294901760
        %9398 = vmatmul.mubr.f32.gmra.mrb[0].mxu0 %v9397
        %v9399 = vpop.f32.mrb[0].mxu0
        %v9400 = vadd.f32 %v9316, %v9399
        %v9401 = vpop.f32.mrb[0].mxu0
        %9402 = vmatprep.mubr.f32.mxu0 0.0
        %v9403 = vand.u32 %v9322, 4294901760
        %v9404 = vsub.f32 %v9322, %v9403
        %v9405 = vand.u32 %v9404, 4294901760
        %v9406 = vsub.f32 %v9404, %v9405
        %v9407 = vand.u32 %v9406, 4294901760
        %9408 = vmatmul.mubr.f32.gmra.mrb[0].mxu0 %v9407
        %v9409 = vpop.f32.mrb[0].mxu0
        %v9410 = vadd.f32 %v9316, %v9409
        %v9411 = vpop.f32.mrb[0].mxu0
        %9412 = vdwg.mxu0
        %9413 = vmatprep.subr.mxu0 0.0
        %v9414 = vand.u32 %v9307, 4294901760
        %v9415 = vsub.f32 %v9307, %v9414
        %v9416 = vand.u32 %v9415, 4294901760
        %v9417 = vsub.f32 %v9415, %v9416
        %v9418 = vand.u32 %v9417, 4294901760
        %9419 = vmatpush1.msra.mxu0 %v9418
        %9420 = vmatprep.subr.mxu0 0.0
        %v9421 = vand.u32 %v9308, 4294901760
        %v9422 = vsub.f32 %v9308, %v9421
        %v9423 = vand.u32 %v9422, 4294901760
        %v9424 = vsub.f32 %v9422, %v9423
        %v9425 = vand.u32 %v9424, 4294901760
        %9426 = vmatpush1.msra.mxu0 %v9425
        %9427 = vmatprep.subr.mxu0 0.0
        %v9428 = vand.u32 %v9309, 4294901760
        %v9429 = vsub.f32 %v9309, %v9428
        %v9430 = vand.u32 %v9429, 4294901760
        %v9431 = vsub.f32 %v9429, %v9430
        %v9432 = vand.u32 %v9431, 4294901760
        %9433 = vmatpush1.msra.mxu0 %v9432
        %9434 = vmatprep.subr.mxu0 0.0
        %v9435 = vand.u32 %v9310, 4294901760
        %v9436 = vsub.f32 %v9310, %v9435
        %v9437 = vand.u32 %v9436, 4294901760
        %v9438 = vsub.f32 %v9436, %v9437
        %v9439 = vand.u32 %v9438, 4294901760
        %9440 = vmatpush1.msra.mxu0 %v9439
        %9441 = vmatprep.subr.mxu0 0.0
        %9442 = vmatpush1.msra.mxu0 0.0
        %9443 = vmatprep.subr.mxu0 0.0
        %9444 = vmatpush1.msra.mxu0 0.0
        %9445 = vmatprep.subr.mxu0 0.0
        %9446 = vmatpush1.msra.mxu0 0.0
        %9447 = vmatprep.subr.mxu0 0.0
        %9448 = vmatpush1.msra.mxu0 0.0
        %9449 = vmatprep.subr.mxu0 0.0
        %9450 = vmatpush1.msra.mxu0 0.0
        %9451 = vmatprep.subr.mxu0 0.0
        %9452 = vmatpush1.msra.mxu0 0.0
        %9453 = vmatprep.subr.mxu0 0.0
        %9454 = vmatpush1.msra.mxu0 0.0
        %9455 = vmatprep.subr.mxu0 0.0
        %9456 = vmatpush1.msra.mxu0 0.0
        %9457 = vmatprep.subr.mxu0 0.0
        %9458 = vmatpush1.msra.mxu0 0.0
        %9459 = vmatprep.subr.mxu0 0.0
        %9460 = vmatpush1.msra.mxu0 0.0
        %9461 = vmatprep.subr.mxu0 0.0
        %9462 = vmatpush1.msra.mxu0 0.0
        %9463 = vmatprep.subr.mxu0 0.0
        %9464 = vmatpush1.msra.mxu0 0.0
        %9465 = vmatprep.subr.mxu0 0.0
        %9466 = vmatpush1.msra.mxu0 0.0
        %9467 = vmatprep.subr.mxu0 0.0
        %9468 = vmatpush1.msra.mxu0 0.0
        %9469 = vmatprep.subr.mxu0 0.0
        %9470 = vmatpush1.msra.mxu0 0.0
        %9471 = vmatprep.subr.mxu0 0.0
        %9472 = vmatpush1.msra.mxu0 0.0
        %9473 = vmatprep.subr.mxu0 0.0
        %9474 = vmatpush1.msra.mxu0 0.0
        %9475 = vmatprep.subr.mxu0 0.0
        %9476 = vmatpush1.msra.mxu0 0.0
        %9477 = vmatprep.subr.mxu0 0.0
        %9478 = vmatpush1.msra.mxu0 0.0
        %9479 = vmatprep.subr.mxu0 0.0
        %9480 = vmatpush1.msra.mxu0 0.0
        %9481 = vmatprep.subr.mxu0 0.0
        %9482 = vmatpush1.msra.mxu0 0.0
        %9483 = vmatprep.subr.mxu0 0.0
        %9484 = vmatpush1.msra.mxu0 0.0
        %9485 = vmatprep.subr.mxu0 0.0
        %9486 = vmatpush1.msra.mxu0 0.0
        %9487 = vmatprep.subr.mxu0 0.0
        %9488 = vmatpush1.msra.mxu0 0.0
        %9489 = vmatprep.subr.mxu0 0.0
        %9490 = vmatpush1.msra.mxu0 0.0
        %9491 = vmatprep.subr.mxu0 0.0
        %9492 = vmatpush1.msra.mxu0 0.0
        %9493 = vmatprep.subr.mxu0 0.0
        %9494 = vmatpush1.msra.mxu0 0.0
        %9495 = vmatprep.subr.mxu0 0.0
        %9496 = vmatpush1.msra.mxu0 0.0
        %9497 = vmatprep.mubr.f32.mxu0 0.0
        %v9498 = vand.u32 %v9319, 4294901760
        %9499 = vmatmul.mubr.f32.gmra.mrb[0].mxu0 %v9498
        %v9500 = vpop.f32.mrb[0].mxu0
        %v9501 = vadd.f32 %v9400, %v9500
        %v9502 = vpop.f32.mrb[0].mxu0
        %9503 = vmatprep.mubr.f32.mxu0 0.0
        %v9504 = vand.u32 %v9322, 4294901760
        %9505 = vmatmul.mubr.f32.gmra.mrb[0].mxu0 %v9504
        %v9506 = vpop.f32.mrb[0].mxu0
        %v9507 = vadd.f32 %v9410, %v9506
        %v9508 = vpop.f32.mrb[0].mxu0
        %9509 = vdwg.mxu0
        %9510 = vmatprep.subr.mxu0 0.0
        %v9511 = vand.u32 %v9307, 4294901760
        %v9512 = vsub.f32 %v9307, %v9511
        %9513 = vmatpush1.msra.mxu0 %v9512
        %9514 = vmatprep.subr.mxu0 0.0
        %v9515 = vand.u32 %v9308, 4294901760
        %v9516 = vsub.f32 %v9308, %v9515
        %9517 = vmatpush1.msra.mxu0 %v9516
        %9518 = vmatprep.subr.mxu0 0.0
        %v9519 = vand.u32 %v9309, 4294901760
        %v9520 = vsub.f32 %v9309, %v9519
        %9521 = vmatpush1.msra.mxu0 %v9520
        %9522 = vmatprep.subr.mxu0 0.0
        %v9523 = vand.u32 %v9310, 4294901760
        %v9524 = vsub.f32 %v9310, %v9523
        %9525 = vmatpush1.msra.mxu0 %v9524
        %9526 = vmatprep.subr.mxu0 0.0
        %9527 = vmatpush1.msra.mxu0 0.0
        %9528 = vmatprep.subr.mxu0 0.0
        %9529 = vmatpush1.msra.mxu0 0.0
        %9530 = vmatprep.subr.mxu0 0.0
        %9531 = vmatpush1.msra.mxu0 0.0
        %9532 = vmatprep.subr.mxu0 0.0
        %9533 = vmatpush1.msra.mxu0 0.0
        %9534 = vmatprep.subr.mxu0 0.0
        %9535 = vmatpush1.msra.mxu0 0.0
        %9536 = vmatprep.subr.mxu0 0.0
        %9537 = vmatpush1.msra.mxu0 0.0
        %9538 = vmatprep.subr.mxu0 0.0
        %9539 = vmatpush1.msra.mxu0 0.0
        %9540 = vmatprep.subr.mxu0 0.0
        %9541 = vmatpush1.msra.mxu0 0.0
        %9542 = vmatprep.subr.mxu0 0.0
        %9543 = vmatpush1.msra.mxu0 0.0
        %9544 = vmatprep.subr.mxu0 0.0
        %9545 = vmatpush1.msra.mxu0 0.0
        %9546 = vmatprep.subr.mxu0 0.0
        %9547 = vmatpush1.msra.mxu0 0.0
        %9548 = vmatprep.subr.mxu0 0.0
        %9549 = vmatpush1.msra.mxu0 0.0
        %9550 = vmatprep.subr.mxu0 0.0
        %9551 = vmatpush1.msra.mxu0 0.0
        %9552 = vmatprep.subr.mxu0 0.0
        %9553 = vmatpush1.msra.mxu0 0.0
        %9554 = vmatprep.subr.mxu0 0.0
        %9555 = vmatpush1.msra.mxu0 0.0
        %9556 = vmatprep.subr.mxu0 0.0
        %9557 = vmatpush1.msra.mxu0 0.0
        %9558 = vmatprep.subr.mxu0 0.0
        %9559 = vmatpush1.msra.mxu0 0.0
        %9560 = vmatprep.subr.mxu0 0.0
        %9561 = vmatpush1.msra.mxu0 0.0
        %9562 = vmatprep.subr.mxu0 0.0
        %9563 = vmatpush1.msra.mxu0 0.0
        %9564 = vmatprep.subr.mxu0 0.0
        %9565 = vmatpush1.msra.mxu0 0.0
        %9566 = vmatprep.subr.mxu0 0.0
        %9567 = vmatpush1.msra.mxu0 0.0
        %9568 = vmatprep.subr.mxu0 0.0
        %9569 = vmatpush1.msra.mxu0 0.0
        %9570 = vmatprep.subr.mxu0 0.0
        %9571 = vmatpush1.msra.mxu0 0.0
        %9572 = vmatprep.subr.mxu0 0.0
        %9573 = vmatpush1.msra.mxu0 0.0
        %9574 = vmatprep.subr.mxu0 0.0
        %9575 = vmatpush1.msra.mxu0 0.0
        %9576 = vmatprep.subr.mxu0 0.0
        %9577 = vmatpush1.msra.mxu0 0.0
        %9578 = vmatprep.subr.mxu0 0.0
        %9579 = vmatpush1.msra.mxu0 0.0
        %9580 = vmatprep.subr.mxu0 0.0
        %9581 = vmatpush1.msra.mxu0 0.0
        %9582 = vmatprep.mubr.f32.mxu0 0.0
        %v9583 = vand.u32 %v9319, 4294901760
        %v9584 = vsub.f32 %v9319, %v9583
        %9585 = vmatmul.mubr.f32.gmra.mrb[0].mxu0 %v9584
        %v9586 = vpop.f32.mrb[0].mxu0
        %v9587 = vadd.f32 %v9501, %v9586
        %v9588 = vpop.f32.mrb[0].mxu0
        %9589 = vmatprep.mubr.f32.mxu0 0.0
        %v9590 = vand.u32 %v9322, 4294901760
        %v9591 = vsub.f32 %v9322, %v9590
        %9592 = vmatmul.mubr.f32.gmra.mrb[0].mxu0 %v9591
        %v9593 = vpop.f32.mrb[0].mxu0
        %v9594 = vadd.f32 %v9507, %v9593
        %v9595 = vpop.f32.mrb[0].mxu0
        %9596 = vdwg.mxu0
        %9597 = vmatprep.subr.mxu0 0.0
        %v9598 = vand.u32 %v9307, 4294901760
        %9599 = vmatpush1.msra.mxu0 %v9598
        %9600 = vmatprep.subr.mxu0 0.0
        %v9601 = vand.u32 %v9308, 4294901760
        %9602 = vmatpush1.msra.mxu0 %v9601
        %9603 = vmatprep.subr.mxu0 0.0
        %v9604 = vand.u32 %v9309, 4294901760
        %9605 = vmatpush1.msra.mxu0 %v9604
        %9606 = vmatprep.subr.mxu0 0.0
        %v9607 = vand.u32 %v9310, 4294901760
        %9608 = vmatpush1.msra.mxu0 %v9607
        %9609 = vmatprep.subr.mxu0 0.0
        %9610 = vmatpush1.msra.mxu0 0.0
        %9611 = vmatprep.subr.mxu0 0.0
        %9612 = vmatpush1.msra.mxu0 0.0
        %9613 = vmatprep.subr.mxu0 0.0
        %9614 = vmatpush1.msra.mxu0 0.0
        %9615 = vmatprep.subr.mxu0 0.0
        %9616 = vmatpush1.msra.mxu0 0.0
        %9617 = vmatprep.subr.mxu0 0.0
        %9618 = vmatpush1.msra.mxu0 0.0
        %9619 = vmatprep.subr.mxu0 0.0
        %9620 = vmatpush1.msra.mxu0 0.0
        %9621 = vmatprep.subr.mxu0 0.0
        %9622 = vmatpush1.msra.mxu0 0.0
        %9623 = vmatprep.subr.mxu0 0.0
        %9624 = vmatpush1.msra.mxu0 0.0
        %9625 = vmatprep.subr.mxu0 0.0
        %9626 = vmatpush1.msra.mxu0 0.0
        %9627 = vmatprep.subr.mxu0 0.0
        %9628 = vmatpush1.msra.mxu0 0.0
        %9629 = vmatprep.subr.mxu0 0.0
        %9630 = vmatpush1.msra.mxu0 0.0
        %9631 = vmatprep.subr.mxu0 0.0
        %9632 = vmatpush1.msra.mxu0 0.0
        %9633 = vmatprep.subr.mxu0 0.0
        %9634 = vmatpush1.msra.mxu0 0.0
        %9635 = vmatprep.subr.mxu0 0.0
        %9636 = vmatpush1.msra.mxu0 0.0
        %9637 = vmatprep.subr.mxu0 0.0
        %9638 = vmatpush1.msra.mxu0 0.0
        %9639 = vmatprep.subr.mxu0 0.0
        %9640 = vmatpush1.msra.mxu0 0.0
        %9641 = vmatprep.subr.mxu0 0.0
        %9642 = vmatpush1.msra.mxu0 0.0
        %9643 = vmatprep.subr.mxu0 0.0
        %9644 = vmatpush1.msra.mxu0 0.0
        %9645 = vmatprep.subr.mxu0 0.0
        %9646 = vmatpush1.msra.mxu0 0.0
        %9647 = vmatprep.subr.mxu0 0.0
        %9648 = vmatpush1.msra.mxu0 0.0
        %9649 = vmatprep.subr.mxu0 0.0
        %9650 = vmatpush1.msra.mxu0 0.0
        %9651 = vmatprep.subr.mxu0 0.0
        %9652 = vmatpush1.msra.mxu0 0.0
        %9653 = vmatprep.subr.mxu0 0.0
        %9654 = vmatpush1.msra.mxu0 0.0
        %9655 = vmatprep.subr.mxu0 0.0
        %9656 = vmatpush1.msra.mxu0 0.0
        %9657 = vmatprep.subr.mxu0 0.0
        %9658 = vmatpush1.msra.mxu0 0.0
        %9659 = vmatprep.subr.mxu0 0.0
        %9660 = vmatpush1.msra.mxu0 0.0
        %9661 = vmatprep.subr.mxu0 0.0
        %9662 = vmatpush1.msra.mxu0 0.0
        %9663 = vmatprep.subr.mxu0 0.0
        %9664 = vmatpush1.msra.mxu0 0.0
        %9665 = vmatprep.mubr.f32.mxu0 0.0
        %v9666 = vand.u32 %v9319, 4294901760
        %v9667 = vsub.f32 %v9319, %v9666
        %v9668 = vand.u32 %v9667, 4294901760
        %9669 = vmatmul.mubr.f32.gmra.mrb[0].mxu0 %v9668
        %v9670 = vpop.f32.mrb[0].mxu0
        %v9671 = vadd.f32 %v9587, %v9670
        %v9672 = vpop.f32.mrb[0].mxu0
        %9673 = vmatprep.mubr.f32.mxu0 0.0
        %v9674 = vand.u32 %v9322, 4294901760
        %v9675 = vsub.f32 %v9322, %v9674
        %v9676 = vand.u32 %v9675, 4294901760
        %9677 = vmatmul.mubr.f32.gmra.mrb[0].mxu0 %v9676
        %v9678 = vpop.f32.mrb[0].mxu0
        %v9679 = vadd.f32 %v9594, %v9678
        %v9680 = vpop.f32.mrb[0].mxu0
        %9681 = vdwg.mxu0
        %9682 = vmatprep.subr.mxu0 0.0
        %v9683 = vand.u32 %v9307, 4294901760
        %v9684 = vsub.f32 %v9307, %v9683
        %v9685 = vand.u32 %v9684, 4294901760
        %9686 = vmatpush1.msra.mxu0 %v9685
        %9687 = vmatprep.subr.mxu0 0.0
        %v9688 = vand.u32 %v9308, 4294901760
        %v9689 = vsub.f32 %v9308, %v9688
        %v9690 = vand.u32 %v9689, 4294901760
        %9691 = vmatpush1.msra.mxu0 %v9690
        %9692 = vmatprep.subr.mxu0 0.0
        %v9693 = vand.u32 %v9309, 4294901760
        %v9694 = vsub.f32 %v9309, %v9693
        %v9695 = vand.u32 %v9694, 4294901760
        %9696 = vmatpush1.msra.mxu0 %v9695
        %9697 = vmatprep.subr.mxu0 0.0
        %v9698 = vand.u32 %v9310, 4294901760
        %v9699 = vsub.f32 %v9310, %v9698
        %v9700 = vand.u32 %v9699, 4294901760
        %9701 = vmatpush1.msra.mxu0 %v9700
        %9702 = vmatprep.subr.mxu0 0.0
        %9703 = vmatpush1.msra.mxu0 0.0
        %9704 = vmatprep.subr.mxu0 0.0
        %9705 = vmatpush1.msra.mxu0 0.0
        %9706 = vmatprep.subr.mxu0 0.0
        %9707 = vmatpush1.msra.mxu0 0.0
        %9708 = vmatprep.subr.mxu0 0.0
        %9709 = vmatpush1.msra.mxu0 0.0
        %9710 = vmatprep.subr.mxu0 0.0
        %9711 = vmatpush1.msra.mxu0 0.0
        %9712 = vmatprep.subr.mxu0 0.0
        %9713 = vmatpush1.msra.mxu0 0.0
        %9714 = vmatprep.subr.mxu0 0.0
        %9715 = vmatpush1.msra.mxu0 0.0
        %9716 = vmatprep.subr.mxu0 0.0
        %9717 = vmatpush1.msra.mxu0 0.0
        %9718 = vmatprep.subr.mxu0 0.0
        %9719 = vmatpush1.msra.mxu0 0.0
        %9720 = vmatprep.subr.mxu0 0.0
        %9721 = vmatpush1.msra.mxu0 0.0
        %9722 = vmatprep.subr.mxu0 0.0
        %9723 = vmatpush1.msra.mxu0 0.0
        %9724 = vmatprep.subr.mxu0 0.0
        %9725 = vmatpush1.msra.mxu0 0.0
        %9726 = vmatprep.subr.mxu0 0.0
        %9727 = vmatpush1.msra.mxu0 0.0
        %9728 = vmatprep.subr.mxu0 0.0
        %9729 = vmatpush1.msra.mxu0 0.0
        %9730 = vmatprep.subr.mxu0 0.0
        %9731 = vmatpush1.msra.mxu0 0.0
        %9732 = vmatprep.subr.mxu0 0.0
        %9733 = vmatpush1.msra.mxu0 0.0
        %9734 = vmatprep.subr.mxu0 0.0
        %9735 = vmatpush1.msra.mxu0 0.0
        %9736 = vmatprep.subr.mxu0 0.0
        %9737 = vmatpush1.msra.mxu0 0.0
        %9738 = vmatprep.subr.mxu0 0.0
        %9739 = vmatpush1.msra.mxu0 0.0
        %9740 = vmatprep.subr.mxu0 0.0
        %9741 = vmatpush1.msra.mxu0 0.0
        %9742 = vmatprep.subr.mxu0 0.0
        %9743 = vmatpush1.msra.mxu0 0.0
        %9744 = vmatprep.subr.mxu0 0.0
        %9745 = vmatpush1.msra.mxu0 0.0
        %9746 = vmatprep.subr.mxu0 0.0
        %9747 = vmatpush1.msra.mxu0 0.0
        %9748 = vmatprep.subr.mxu0 0.0
        %9749 = vmatpush1.msra.mxu0 0.0
        %9750 = vmatprep.subr.mxu0 0.0
        %9751 = vmatpush1.msra.mxu0 0.0
        %9752 = vmatprep.subr.mxu0 0.0
        %9753 = vmatpush1.msra.mxu0 0.0
        %9754 = vmatprep.subr.mxu0 0.0
        %9755 = vmatpush1.msra.mxu0 0.0
        %9756 = vmatprep.subr.mxu0 0.0
        %9757 = vmatpush1.msra.mxu0 0.0
        %9758 = vmatprep.mubr.f32.mxu0 0.0
        %v9759 = vand.u32 %v9319, 4294901760
        %9760 = vmatmul.mubr.f32.gmra.mrb[0].mxu0 %v9759
        %v9761 = vpop.f32.mrb[0].mxu0
        %v9762 = vadd.f32 %v9671, %v9761
        %v9763 = vpop.f32.mrb[0].mxu0
        %9764 = vmatprep.mubr.f32.mxu0 0.0
        %v9765 = vand.u32 %v9322, 4294901760
        %9766 = vmatmul.mubr.f32.gmra.mrb[0].mxu0 %v9765
        %v9767 = vpop.f32.mrb[0].mxu0
        %v9768 = vadd.f32 %v9679, %v9767
        %v9769 = vpop.f32.mrb[0].mxu0
        %9770 = vdwg.mxu0
        %9771 = vmatprep.subr.mxu0 0.0
        %v9772 = vand.u32 %v9307, 4294901760
        %9773 = vmatpush1.msra.mxu0 %v9772
        %9774 = vmatprep.subr.mxu0 0.0
        %v9775 = vand.u32 %v9308, 4294901760
        %9776 = vmatpush1.msra.mxu0 %v9775
        %9777 = vmatprep.subr.mxu0 0.0
        %v9778 = vand.u32 %v9309, 4294901760
        %9779 = vmatpush1.msra.mxu0 %v9778
        %9780 = vmatprep.subr.mxu0 0.0
        %v9781 = vand.u32 %v9310, 4294901760
        %9782 = vmatpush1.msra.mxu0 %v9781
        %9783 = vmatprep.subr.mxu0 0.0
        %9784 = vmatpush1.msra.mxu0 0.0
        %9785 = vmatprep.subr.mxu0 0.0
        %9786 = vmatpush1.msra.mxu0 0.0
        %9787 = vmatprep.subr.mxu0 0.0
        %9788 = vmatpush1.msra.mxu0 0.0
        %9789 = vmatprep.subr.mxu0 0.0
        %9790 = vmatpush1.msra.mxu0 0.0
        %9791 = vmatprep.subr.mxu0 0.0
        %9792 = vmatpush1.msra.mxu0 0.0
        %9793 = vmatprep.subr.mxu0 0.0
        %9794 = vmatpush1.msra.mxu0 0.0
        %9795 = vmatprep.subr.mxu0 0.0
        %9796 = vmatpush1.msra.mxu0 0.0
        %9797 = vmatprep.subr.mxu0 0.0
        %9798 = vmatpush1.msra.mxu0 0.0
        %9799 = vmatprep.subr.mxu0 0.0
        %9800 = vmatpush1.msra.mxu0 0.0
        %9801 = vmatprep.subr.mxu0 0.0
        %9802 = vmatpush1.msra.mxu0 0.0
        %9803 = vmatprep.subr.mxu0 0.0
        %9804 = vmatpush1.msra.mxu0 0.0
        %9805 = vmatprep.subr.mxu0 0.0
        %9806 = vmatpush1.msra.mxu0 0.0
        %9807 = vmatprep.subr.mxu0 0.0
        %9808 = vmatpush1.msra.mxu0 0.0
        %9809 = vmatprep.subr.mxu0 0.0
        %9810 = vmatpush1.msra.mxu0 0.0
        %9811 = vmatprep.subr.mxu0 0.0
        %9812 = vmatpush1.msra.mxu0 0.0
        %9813 = vmatprep.subr.mxu0 0.0
        %9814 = vmatpush1.msra.mxu0 0.0
        %9815 = vmatprep.subr.mxu0 0.0
        %9816 = vmatpush1.msra.mxu0 0.0
        %9817 = vmatprep.subr.mxu0 0.0
        %9818 = vmatpush1.msra.mxu0 0.0
        %9819 = vmatprep.subr.mxu0 0.0
        %9820 = vmatpush1.msra.mxu0 0.0
        %9821 = vmatprep.subr.mxu0 0.0
        %9822 = vmatpush1.msra.mxu0 0.0
        %9823 = vmatprep.subr.mxu0 0.0
        %9824 = vmatpush1.msra.mxu0 0.0
        %9825 = vmatprep.subr.mxu0 0.0
        %9826 = vmatpush1.msra.mxu0 0.0
        %9827 = vmatprep.subr.mxu0 0.0
        %9828 = vmatpush1.msra.mxu0 0.0
        %9829 = vmatprep.subr.mxu0 0.0
        %9830 = vmatpush1.msra.mxu0 0.0
        %9831 = vmatprep.subr.mxu0 0.0
        %9832 = vmatpush1.msra.mxu0 0.0
        %9833 = vmatprep.subr.mxu0 0.0
        %9834 = vmatpush1.msra.mxu0 0.0
        %9835 = vmatprep.subr.mxu0 0.0
        %9836 = vmatpush1.msra.mxu0 0.0
        %9837 = vmatprep.subr.mxu0 0.0
        %9838 = vmatpush1.msra.mxu0 0.0
        %9839 = vmatprep.mubr.f32.mxu0 0.0
        %v9840 = vand.u32 %v9319, 4294901760
        %9841 = vmatmul.mubr.f32.gmra.mrb[0].mxu0 %v9840
        %v9842 = vpop.f32.mrb[0].mxu0
        %v9843 = vadd.f32 %v9762, %v9842
        %v9844 = vpop.f32.mrb[0].mxu0
        %9845 = vmatprep.mubr.f32.mxu0 0.0
        %v9846 = vand.u32 %v9322, 4294901760
        %9847 = vmatmul.mubr.f32.gmra.mrb[0].mxu0 %v9846
        %v9848 = vpop.f32.mrb[0].mxu0
        %v9849 = vadd.f32 %v9768, %v9848
        %v9850 = vpop.f32.mrb[0].mxu0
        %9851 = vdwg.mxu0
        %v9852 = vmul.f32 %v9843, 0.5
        %v9853 = vmul.f32 %v9849, 0.5
        %v9854 = vmul.f32 %v9843, 0.044715
        %v9855 = vmul.f32 %v9849, 0.044715
        %v9856 = vmul.f32 %v9854, %v9843
        %v9857 = vmul.f32 %v9855, %v9849
        %v9858 = vmul.f32 %v9856, %v9843
        %v9859 = vmul.f32 %v9857, %v9849
        %v9860 = vadd.f32 %v9843, %v9858
        %v9861 = vadd.f32 %v9849, %v9859
        %v9862 = vmul.f32 %v9860, 0.7978846
        %v9863 = vmul.f32 %v9861, 0.7978846
        %v9864 = vtanh.pop %v9862
        %v9865 = vtanh.pop %v9863
        %v9866 = vadd.f32 %v9864, 1.0
        %v9867 = vadd.f32 %v9865, 1.0
        %v9868 = vmul.f32 %v9852, %v9866
        %v9869 = vmul.f32 %v9853, %v9867
        %v9870 = vld [vmem:[%s715] sm:$0xff]
        %v9871 = vld [vmem:[%s715 + $0x8] sm:$0xff]
        %v9872 = vld [vmem:[%s715 + $0x10] sm:$0xff]
        %v9873 = vld [vmem:[%s715 + $0x18] sm:$0xff]
        %v9874 = vld [vmem:[%s715 + $0x20] sm:$0xff]
        %v9875 = vld [vmem:[%s715 + $0x28] sm:$0xff]
        %v9876 = vld [vmem:[%s715 + $0x30] sm:$0xff]
        %v9877 = vld [vmem:[%s715 + $0x38] sm:$0xff]
        %vm9878 = vcmask 523264
        %v9880 = vsel %vm9878, %v9868, 0
        %v9883 = vsel %vm9878, %v9869, 0
        %9885 = vmatprep.subr.mxu0 0.0
        %v9886 = vand.u32 %v9870, 4294901760
        %9887 = vmatpush1.msra.mxu0 %v9886
        %9888 = vmatprep.subr.mxu0 0.0
        %v9889 = vand.u32 %v9871, 4294901760
        %9890 = vmatpush1.msra.mxu0 %v9889
        %9891 = vmatprep.subr.mxu0 0.0
        %v9892 = vand.u32 %v9872, 4294901760
        %9893 = vmatpush1.msra.mxu0 %v9892
        %9894 = vmatprep.subr.mxu0 0.0
        %v9895 = vand.u32 %v9873, 4294901760
        %9896 = vmatpush1.msra.mxu0 %v9895
        %9897 = vmatprep.subr.mxu0 0.0
        %v9898 = vand.u32 %v9874, 4294901760
        %9899 = vmatpush1.msra.mxu0 %v9898
        %9900 = vmatprep.subr.mxu0 0.0
        %v9901 = vand.u32 %v9875, 4294901760
        %9902 = vmatpush1.msra.mxu0 %v9901
        %9903 = vmatprep.subr.mxu0 0.0
        %v9904 = vand.u32 %v9876, 4294901760
        %9905 = vmatpush1.msra.mxu0 %v9904
        %9906 = vmatprep.subr.mxu0 0.0
        %v9907 = vand.u32 %v9877, 4294901760
        %9908 = vmatpush1.msra.mxu0 %v9907
        %9909 = vmatprep.subr.mxu0 0.0
        %9910 = vmatpush1.msra.mxu0 0.0
        %9911 = vmatprep.subr.mxu0 0.0
        %9912 = vmatpush1.msra.mxu0 0.0
        %9913 = vmatprep.subr.mxu0 0.0
        %9914 = vmatpush1.msra.mxu0 0.0
        %9915 = vmatprep.subr.mxu0 0.0
        %9916 = vmatpush1.msra.mxu0 0.0
        %9917 = vmatprep.subr.mxu0 0.0
        %9918 = vmatpush1.msra.mxu0 0.0
        %9919 = vmatprep.subr.mxu0 0.0
        %9920 = vmatpush1.msra.mxu0 0.0
        %9921 = vmatprep.subr.mxu0 0.0
        %9922 = vmatpush1.msra.mxu0 0.0
        %9923 = vmatprep.subr.mxu0 0.0
        %9924 = vmatpush1.msra.mxu0 0.0
        %9925 = vmatprep.subr.mxu0 0.0
        %9926 = vmatpush1.msra.mxu0 0.0
        %9927 = vmatprep.subr.mxu0 0.0
        %9928 = vmatpush1.msra.mxu0 0.0
        %9929 = vmatprep.subr.mxu0 0.0
        %9930 = vmatpush1.msra.mxu0 0.0
        %9931 = vmatprep.subr.mxu0 0.0
        %9932 = vmatpush1.msra.mxu0 0.0
        %9933 = vmatprep.subr.mxu0 0.0
        %9934 = vmatpush1.msra.mxu0 0.0
        %9935 = vmatprep.subr.mxu0 0.0
        %9936 = vmatpush1.msra.mxu0 0.0
        %9937 = vmatprep.subr.mxu0 0.0
        %9938 = vmatpush1.msra.mxu0 0.0
        %9939 = vmatprep.subr.mxu0 0.0
        %9940 = vmatpush1.msra.mxu0 0.0
        %9941 = vmatprep.subr.mxu0 0.0
        %9942 = vmatpush1.msra.mxu0 0.0
        %9943 = vmatprep.subr.mxu0 0.0
        %9944 = vmatpush1.msra.mxu0 0.0
        %9945 = vmatprep.subr.mxu0 0.0
        %9946 = vmatpush1.msra.mxu0 0.0
        %9947 = vmatprep.subr.mxu0 0.0
        %9948 = vmatpush1.msra.mxu0 0.0
        %9949 = vmatprep.subr.mxu0 0.0
        %9950 = vmatpush1.msra.mxu0 0.0
        %9951 = vmatprep.subr.mxu0 0.0
        %9952 = vmatpush1.msra.mxu0 0.0
        %9953 = vmatprep.subr.mxu0 0.0
        %9954 = vmatpush1.msra.mxu0 0.0
        %9955 = vmatprep.subr.mxu0 0.0
        %9956 = vmatpush1.msra.mxu0 0.0
        %9957 = vmatprep.mubr.f32.mxu0 0.0
        %v9958 = vand.u32 %v9880, 4294901760
        %v9959 = vsub.f32 %v9880, %v9958
        %v9960 = vand.u32 %v9959, 4294901760
        %v9961 = vsub.f32 %v9959, %v9960
        %v9962 = vand.u32 %v9961, 4294901760
        %9963 = vmatmul.mubr.f32.gmra.mrb[0].mxu0 %v9962
        %v9964 = vpop.f32.mrb[0].mxu0
        %v9965 = vadd.f32 0.0, %v9964
        %v9966 = vpop.f32.mrb[0].mxu0
        %9967 = vmatprep.mubr.f32.mxu0 0.0
        %v9968 = vand.u32 %v9883, 4294901760
        %v9969 = vsub.f32 %v9883, %v9968
        %v9970 = vand.u32 %v9969, 4294901760
        %v9971 = vsub.f32 %v9969, %v9970
        %v9972 = vand.u32 %v9971, 4294901760
        %9973 = vmatmul.mubr.f32.gmra.mrb[0].mxu0 %v9972
        %v9974 = vpop.f32.mrb[0].mxu0
        %v9975 = vadd.f32 0.0, %v9974
        %v9976 = vpop.f32.mrb[0].mxu0
        %9977 = vdwg.mxu0
        %9978 = vmatprep.subr.mxu0 0.0
        %v9979 = vand.u32 %v9870, 4294901760
        %v9980 = vsub.f32 %v9870, %v9979
        %v9981 = vand.u32 %v9980, 4294901760
        %v9982 = vsub.f32 %v9980, %v9981
        %v9983 = vand.u32 %v9982, 4294901760
        %9984 = vmatpush1.msra.mxu0 %v9983
        %9985 = vmatprep.subr.mxu0 0.0
        %v9986 = vand.u32 %v9871, 4294901760
        %v9987 = vsub.f32 %v9871, %v9986
        %v9988 = vand.u32 %v9987, 4294901760
        %v9989 = vsub.f32 %v9987, %v9988
        %v9990 = vand.u32 %v9989, 4294901760
        %9991 = vmatpush1.msra.mxu0 %v9990
        %9992 = vmatprep.subr.mxu0 0.0
        %v9993 = vand.u32 %v9872, 4294901760
        %v9994 = vsub.f32 %v9872, %v9993
        %v9995 = vand.u32 %v9994, 4294901760
        %v9996 = vsub.f32 %v9994, %v9995
        %v9997 = vand.u32 %v9996, 4294901760
        %9998 = vmatpush1.msra.mxu0 %v9997
        %9999 = vmatprep.subr.mxu0 0.0
        %v10000 = vand.u32 %v9873, 4294901760
        %v10001 = vsub.f32 %v9873, %v10000
        %v10002 = vand.u32 %v10001, 4294901760
        %v10003 = vsub.f32 %v10001, %v10002
        %v10004 = vand.u32 %v10003, 4294901760
        %10005 = vmatpush1.msra.mxu0 %v10004
        %10006 = vmatprep.subr.mxu0 0.0
        %v10007 = vand.u32 %v9874, 4294901760
        %v10008 = vsub.f32 %v9874, %v10007
        %v10009 = vand.u32 %v10008, 4294901760
        %v10010 = vsub.f32 %v10008, %v10009
        %v10011 = vand.u32 %v10010, 4294901760
        %10012 = vmatpush1.msra.mxu0 %v10011
        %10013 = vmatprep.subr.mxu0 0.0
        %v10014 = vand.u32 %v9875, 4294901760
        %v10015 = vsub.f32 %v9875, %v10014
        %v10016 = vand.u32 %v10015, 4294901760
        %v10017 = vsub.f32 %v10015, %v10016
        %v10018 = vand.u32 %v10017, 4294901760
        %10019 = vmatpush1.msra.mxu0 %v10018
        %10020 = vmatprep.subr.mxu0 0.0
        %v10021 = vand.u32 %v9876, 4294901760
        %v10022 = vsub.f32 %v9876, %v10021
        %v10023 = vand.u32 %v10022, 4294901760
        %v10024 = vsub.f32 %v10022, %v10023
        %v10025 = vand.u32 %v10024, 4294901760
        %10026 = vmatpush1.msra.mxu0 %v10025
        %10027 = vmatprep.subr.mxu0 0.0
        %v10028 = vand.u32 %v9877, 4294901760
        %v10029 = vsub.f32 %v9877, %v10028
        %v10030 = vand.u32 %v10029, 4294901760
        %v10031 = vsub.f32 %v10029, %v10030
        %v10032 = vand.u32 %v10031, 4294901760
        %10033 = vmatpush1.msra.mxu0 %v10032
        %10034 = vmatprep.subr.mxu0 0.0
        %10035 = vmatpush1.msra.mxu0 0.0
        %10036 = vmatprep.subr.mxu0 0.0
        %10037 = vmatpush1.msra.mxu0 0.0
        %10038 = vmatprep.subr.mxu0 0.0
        %10039 = vmatpush1.msra.mxu0 0.0
        %10040 = vmatprep.subr.mxu0 0.0
        %10041 = vmatpush1.msra.mxu0 0.0
        %10042 = vmatprep.subr.mxu0 0.0
        %10043 = vmatpush1.msra.mxu0 0.0
        %10044 = vmatprep.subr.mxu0 0.0
        %10045 = vmatpush1.msra.mxu0 0.0
        %10046 = vmatprep.subr.mxu0 0.0
        %10047 = vmatpush1.msra.mxu0 0.0
        %10048 = vmatprep.subr.mxu0 0.0
        %10049 = vmatpush1.msra.mxu0 0.0
        %10050 = vmatprep.subr.mxu0 0.0
        %10051 = vmatpush1.msra.mxu0 0.0
        %10052 = vmatprep.subr.mxu0 0.0
        %10053 = vmatpush1.msra.mxu0 0.0
        %10054 = vmatprep.subr.mxu0 0.0
        %10055 = vmatpush1.msra.mxu0 0.0
        %10056 = vmatprep.subr.mxu0 0.0
        %10057 = vmatpush1.msra.mxu0 0.0
        %10058 = vmatprep.subr.mxu0 0.0
        %10059 = vmatpush1.msra.mxu0 0.0
        %10060 = vmatprep.subr.mxu0 0.0
        %10061 = vmatpush1.msra.mxu0 0.0
        %10062 = vmatprep.subr.mxu0 0.0
        %10063 = vmatpush1.msra.mxu0 0.0
        %10064 = vmatprep.subr.mxu0 0.0
        %10065 = vmatpush1.msra.mxu0 0.0
        %10066 = vmatprep.subr.mxu0 0.0
        %10067 = vmatpush1.msra.mxu0 0.0
        %10068 = vmatprep.subr.mxu0 0.0
        %10069 = vmatpush1.msra.mxu0 0.0
        %10070 = vmatprep.subr.mxu0 0.0
        %10071 = vmatpush1.msra.mxu0 0.0
        %10072 = vmatprep.subr.mxu0 0.0
        %10073 = vmatpush1.msra.mxu0 0.0
        %10074 = vmatprep.subr.mxu0 0.0
        %10075 = vmatpush1.msra.mxu0 0.0
        %10076 = vmatprep.subr.mxu0 0.0
        %10077 = vmatpush1.msra.mxu0 0.0
        %10078 = vmatprep.subr.mxu0 0.0
        %10079 = vmatpush1.msra.mxu0 0.0
        %10080 = vmatprep.subr.mxu0 0.0
        %10081 = vmatpush1.msra.mxu0 0.0
        %10082 = vmatprep.mubr.f32.mxu0 0.0
        %v10083 = vand.u32 %v9880, 4294901760
        %10084 = vmatmul.mubr.f32.gmra.mrb[0].mxu0 %v10083
        %v10085 = vpop.f32.mrb[0].mxu0
        %v10086 = vadd.f32 %v9965, %v10085
        %v10087 = vpop.f32.mrb[0].mxu0
        %10088 = vmatprep.mubr.f32.mxu0 0.0
        %v10089 = vand.u32 %v9883, 4294901760
        %10090 = vmatmul.mubr.f32.gmra.mrb[0].mxu0 %v10089
        %v10091 = vpop.f32.mrb[0].mxu0
        %v10092 = vadd.f32 %v9975, %v10091
        %v10093 = vpop.f32.mrb[0].mxu0
        %10094 = vdwg.mxu0
        %10095 = vmatprep.subr.mxu0 0.0
        %v10096 = vand.u32 %v9870, 4294901760
        %v10097 = vsub.f32 %v9870, %v10096
        %10098 = vmatpush1.msra.mxu0 %v10097
        %10099 = vmatprep.subr.mxu0 0.0
        %v10100 = vand.u32 %v9871, 4294901760
        %v10101 = vsub.f32 %v9871, %v10100
        %10102 = vmatpush1.msra.mxu0 %v10101
        %10103 = vmatprep.subr.mxu0 0.0
        %v10104 = vand.u32 %v9872, 4294901760
        %v10105 = vsub.f32 %v9872, %v10104
        %10106 = vmatpush1.msra.mxu0 %v10105
        %10107 = vmatprep.subr.mxu0 0.0
        %v10108 = vand.u32 %v9873, 4294901760
        %v10109 = vsub.f32 %v9873, %v10108
        %10110 = vmatpush1.msra.mxu0 %v10109
        %10111 = vmatprep.subr.mxu0 0.0
        %v10112 = vand.u32 %v9874, 4294901760
        %v10113 = vsub.f32 %v9874, %v10112
        %10114 = vmatpush1.msra.mxu0 %v10113
        %10115 = vmatprep.subr.mxu0 0.0
        %v10116 = vand.u32 %v9875, 4294901760
        %v10117 = vsub.f32 %v9875, %v10116
        %10118 = vmatpush1.msra.mxu0 %v10117
        %10119 = vmatprep.subr.mxu0 0.0
        %v10120 = vand.u32 %v9876, 4294901760
        %v10121 = vsub.f32 %v9876, %v10120
        %10122 = vmatpush1.msra.mxu0 %v10121
        %10123 = vmatprep.subr.mxu0 0.0
        %v10124 = vand.u32 %v9877, 4294901760
        %v10125 = vsub.f32 %v9877, %v10124
        %10126 = vmatpush1.msra.mxu0 %v10125
        %10127 = vmatprep.subr.mxu0 0.0
        %10128 = vmatpush1.msra.mxu0 0.0
        %10129 = vmatprep.subr.mxu0 0.0
        %10130 = vmatpush1.msra.mxu0 0.0
        %10131 = vmatprep.subr.mxu0 0.0
        %10132 = vmatpush1.msra.mxu0 0.0
        %10133 = vmatprep.subr.mxu0 0.0
        %10134 = vmatpush1.msra.mxu0 0.0
        %10135 = vmatprep.subr.mxu0 0.0
        %10136 = vmatpush1.msra.mxu0 0.0
        %10137 = vmatprep.subr.mxu0 0.0
        %10138 = vmatpush1.msra.mxu0 0.0
        %10139 = vmatprep.subr.mxu0 0.0
        %10140 = vmatpush1.msra.mxu0 0.0
        %10141 = vmatprep.subr.mxu0 0.0
        %10142 = vmatpush1.msra.mxu0 0.0
        %10143 = vmatprep.subr.mxu0 0.0
        %10144 = vmatpush1.msra.mxu0 0.0
        %10145 = vmatprep.subr.mxu0 0.0
        %10146 = vmatpush1.msra.mxu0 0.0
        %10147 = vmatprep.subr.mxu0 0.0
        %10148 = vmatpush1.msra.mxu0 0.0
        %10149 = vmatprep.subr.mxu0 0.0
        %10150 = vmatpush1.msra.mxu0 0.0
        %10151 = vmatprep.subr.mxu0 0.0
        %10152 = vmatpush1.msra.mxu0 0.0
        %10153 = vmatprep.subr.mxu0 0.0
        %10154 = vmatpush1.msra.mxu0 0.0
        %10155 = vmatprep.subr.mxu0 0.0
        %10156 = vmatpush1.msra.mxu0 0.0
        %10157 = vmatprep.subr.mxu0 0.0
        %10158 = vmatpush1.msra.mxu0 0.0
        %10159 = vmatprep.subr.mxu0 0.0
        %10160 = vmatpush1.msra.mxu0 0.0
        %10161 = vmatprep.subr.mxu0 0.0
        %10162 = vmatpush1.msra.mxu0 0.0
        %10163 = vmatprep.subr.mxu0 0.0
        %10164 = vmatpush1.msra.mxu0 0.0
        %10165 = vmatprep.subr.mxu0 0.0
        %10166 = vmatpush1.msra.mxu0 0.0
        %10167 = vmatprep.subr.mxu0 0.0
        %10168 = vmatpush1.msra.mxu0 0.0
        %10169 = vmatprep.subr.mxu0 0.0
        %10170 = vmatpush1.msra.mxu0 0.0
        %10171 = vmatprep.subr.mxu0 0.0
        %10172 = vmatpush1.msra.mxu0 0.0
        %10173 = vmatprep.subr.mxu0 0.0
        %10174 = vmatpush1.msra.mxu0 0.0
        %10175 = vmatprep.mubr.f32.mxu0 0.0
        %v10176 = vand.u32 %v9880, 4294901760
        %v10177 = vsub.f32 %v9880, %v10176
        %10178 = vmatmul.mubr.f32.gmra.mrb[0].mxu0 %v10177
        %v10179 = vpop.f32.mrb[0].mxu0
        %v10180 = vadd.f32 %v10086, %v10179
        %v10181 = vpop.f32.mrb[0].mxu0
        %10182 = vmatprep.mubr.f32.mxu0 0.0
        %v10183 = vand.u32 %v9883, 4294901760
        %v10184 = vsub.f32 %v9883, %v10183
        %10185 = vmatmul.mubr.f32.gmra.mrb[0].mxu0 %v10184
        %v10186 = vpop.f32.mrb[0].mxu0
        %v10187 = vadd.f32 %v10092, %v10186
        %v10188 = vpop.f32.mrb[0].mxu0
        %10189 = vdwg.mxu0
        %10190 = vmatprep.subr.mxu0 0.0
        %v10191 = vand.u32 %v9870, 4294901760
        %10192 = vmatpush1.msra.mxu0 %v10191
        %10193 = vmatprep.subr.mxu0 0.0
        %v10194 = vand.u32 %v9871, 4294901760
        %10195 = vmatpush1.msra.mxu0 %v10194
        %10196 = vmatprep.subr.mxu0 0.0
        %v10197 = vand.u32 %v9872, 4294901760
        %10198 = vmatpush1.msra.mxu0 %v10197
        %10199 = vmatprep.subr.mxu0 0.0
        %v10200 = vand.u32 %v9873, 4294901760
        %10201 = vmatpush1.msra.mxu0 %v10200
        %10202 = vmatprep.subr.mxu0 0.0
        %v10203 = vand.u32 %v9874, 4294901760
        %10204 = vmatpush1.msra.mxu0 %v10203
        %10205 = vmatprep.subr.mxu0 0.0
        %v10206 = vand.u32 %v9875, 4294901760
        %10207 = vmatpush1.msra.mxu0 %v10206
        %10208 = vmatprep.subr.mxu0 0.0
        %v10209 = vand.u32 %v9876, 4294901760
        %10210 = vmatpush1.msra.mxu0 %v10209
        %10211 = vmatprep.subr.mxu0 0.0
        %v10212 = vand.u32 %v9877, 4294901760
        %10213 = vmatpush1.msra.mxu0 %v10212
        %10214 = vmatprep.subr.mxu0 0.0
        %10215 = vmatpush1.msra.mxu0 0.0
        %10216 = vmatprep.subr.mxu0 0.0
        %10217 = vmatpush1.msra.mxu0 0.0
        %10218 = vmatprep.subr.mxu0 0.0
        %10219 = vmatpush1.msra.mxu0 0.0
        %10220 = vmatprep.subr.mxu0 0.0
        %10221 = vmatpush1.msra.mxu0 0.0
        %10222 = vmatprep.subr.mxu0 0.0
        %10223 = vmatpush1.msra.mxu0 0.0
        %10224 = vmatprep.subr.mxu0 0.0
        %10225 = vmatpush1.msra.mxu0 0.0
        %10226 = vmatprep.subr.mxu0 0.0
        %10227 = vmatpush1.msra.mxu0 0.0
        %10228 = vmatprep.subr.mxu0 0.0
        %10229 = vmatpush1.msra.mxu0 0.0
        %10230 = vmatprep.subr.mxu0 0.0
        %10231 = vmatpush1.msra.mxu0 0.0
        %10232 = vmatprep.subr.mxu0 0.0
        %10233 = vmatpush1.msra.mxu0 0.0
        %10234 = vmatprep.subr.mxu0 0.0
        %10235 = vmatpush1.msra.mxu0 0.0
        %10236 = vmatprep.subr.mxu0 0.0
        %10237 = vmatpush1.msra.mxu0 0.0
        %10238 = vmatprep.subr.mxu0 0.0
        %10239 = vmatpush1.msra.mxu0 0.0
        %10240 = vmatprep.subr.mxu0 0.0
        %10241 = vmatpush1.msra.mxu0 0.0
        %10242 = vmatprep.subr.mxu0 0.0
        %10243 = vmatpush1.msra.mxu0 0.0
        %10244 = vmatprep.subr.mxu0 0.0
        %10245 = vmatpush1.msra.mxu0 0.0
        %10246 = vmatprep.subr.mxu0 0.0
        %10247 = vmatpush1.msra.mxu0 0.0
        %10248 = vmatprep.subr.mxu0 0.0
        %10249 = vmatpush1.msra.mxu0 0.0
        %10250 = vmatprep.subr.mxu0 0.0
        %10251 = vmatpush1.msra.mxu0 0.0
        %10252 = vmatprep.subr.mxu0 0.0
        %10253 = vmatpush1.msra.mxu0 0.0
        %10254 = vmatprep.subr.mxu0 0.0
        %10255 = vmatpush1.msra.mxu0 0.0
        %10256 = vmatprep.subr.mxu0 0.0
        %10257 = vmatpush1.msra.mxu0 0.0
        %10258 = vmatprep.subr.mxu0 0.0
        %10259 = vmatpush1.msra.mxu0 0.0
        %10260 = vmatprep.subr.mxu0 0.0
        %10261 = vmatpush1.msra.mxu0 0.0
        %10262 = vmatprep.mubr.f32.mxu0 0.0
        %v10263 = vand.u32 %v9880, 4294901760
        %v10264 = vsub.f32 %v9880, %v10263
        %v10265 = vand.u32 %v10264, 4294901760
        %10266 = vmatmul.mubr.f32.gmra.mrb[0].mxu0 %v10265
        %v10267 = vpop.f32.mrb[0].mxu0
        %v10268 = vadd.f32 %v10180, %v10267
        %v10269 = vpop.f32.mrb[0].mxu0
        %10270 = vmatprep.mubr.f32.mxu0 0.0
        %v10271 = vand.u32 %v9883, 4294901760
        %v10272 = vsub.f32 %v9883, %v10271
        %v10273 = vand.u32 %v10272, 4294901760
        %10274 = vmatmul.mubr.f32.gmra.mrb[0].mxu0 %v10273
        %v10275 = vpop.f32.mrb[0].mxu0
        %v10276 = vadd.f32 %v10187, %v10275
        %v10277 = vpop.f32.mrb[0].mxu0
        %10278 = vdwg.mxu0
        %10279 = vmatprep.subr.mxu0 0.0
        %v10280 = vand.u32 %v9870, 4294901760
        %v10281 = vsub.f32 %v9870, %v10280
        %v10282 = vand.u32 %v10281, 4294901760
        %10283 = vmatpush1.msra.mxu0 %v10282
        %10284 = vmatprep.subr.mxu0 0.0
        %v10285 = vand.u32 %v9871, 4294901760
        %v10286 = vsub.f32 %v9871, %v10285
        %v10287 = vand.u32 %v10286, 4294901760
        %10288 = vmatpush1.msra.mxu0 %v10287
        %10289 = vmatprep.subr.mxu0 0.0
        %v10290 = vand.u32 %v9872, 4294901760
        %v10291 = vsub.f32 %v9872, %v10290
        %v10292 = vand.u32 %v10291, 4294901760
        %10293 = vmatpush1.msra.mxu0 %v10292
        %10294 = vmatprep.subr.mxu0 0.0
        %v10295 = vand.u32 %v9873, 4294901760
        %v10296 = vsub.f32 %v9873, %v10295
        %v10297 = vand.u32 %v10296, 4294901760
        %10298 = vmatpush1.msra.mxu0 %v10297
        %10299 = vmatprep.subr.mxu0 0.0
        %v10300 = vand.u32 %v9874, 4294901760
        %v10301 = vsub.f32 %v9874, %v10300
        %v10302 = vand.u32 %v10301, 4294901760
        %10303 = vmatpush1.msra.mxu0 %v10302
        %10304 = vmatprep.subr.mxu0 0.0
        %v10305 = vand.u32 %v9875, 4294901760
        %v10306 = vsub.f32 %v9875, %v10305
        %v10307 = vand.u32 %v10306, 4294901760
        %10308 = vmatpush1.msra.mxu0 %v10307
        %10309 = vmatprep.subr.mxu0 0.0
        %v10310 = vand.u32 %v9876, 4294901760
        %v10311 = vsub.f32 %v9876, %v10310
        %v10312 = vand.u32 %v10311, 4294901760
        %10313 = vmatpush1.msra.mxu0 %v10312
        %10314 = vmatprep.subr.mxu0 0.0
        %v10315 = vand.u32 %v9877, 4294901760
        %v10316 = vsub.f32 %v9877, %v10315
        %v10317 = vand.u32 %v10316, 4294901760
        %10318 = vmatpush1.msra.mxu0 %v10317
        %10319 = vmatprep.subr.mxu0 0.0
        %10320 = vmatpush1.msra.mxu0 0.0
        %10321 = vmatprep.subr.mxu0 0.0
        %10322 = vmatpush1.msra.mxu0 0.0
        %10323 = vmatprep.subr.mxu0 0.0
        %10324 = vmatpush1.msra.mxu0 0.0
        %10325 = vmatprep.subr.mxu0 0.0
        %10326 = vmatpush1.msra.mxu0 0.0
        %10327 = vmatprep.subr.mxu0 0.0
        %10328 = vmatpush1.msra.mxu0 0.0
        %10329 = vmatprep.subr.mxu0 0.0
        %10330 = vmatpush1.msra.mxu0 0.0
        %10331 = vmatprep.subr.mxu0 0.0
        %10332 = vmatpush1.msra.mxu0 0.0
        %10333 = vmatprep.subr.mxu0 0.0
        %10334 = vmatpush1.msra.mxu0 0.0
        %10335 = vmatprep.subr.mxu0 0.0
        %10336 = vmatpush1.msra.mxu0 0.0
        %10337 = vmatprep.subr.mxu0 0.0
        %10338 = vmatpush1.msra.mxu0 0.0
        %10339 = vmatprep.subr.mxu0 0.0
        %10340 = vmatpush1.msra.mxu0 0.0
        %10341 = vmatprep.subr.mxu0 0.0
        %10342 = vmatpush1.msra.mxu0 0.0
        %10343 = vmatprep.subr.mxu0 0.0
        %10344 = vmatpush1.msra.mxu0 0.0
        %10345 = vmatprep.subr.mxu0 0.0
        %10346 = vmatpush1.msra.mxu0 0.0
        %10347 = vmatprep.subr.mxu0 0.0
        %10348 = vmatpush1.msra.mxu0 0.0
        %10349 = vmatprep.subr.mxu0 0.0
        %10350 = vmatpush1.msra.mxu0 0.0
        %10351 = vmatprep.subr.mxu0 0.0
        %10352 = vmatpush1.msra.mxu0 0.0
        %10353 = vmatprep.subr.mxu0 0.0
        %10354 = vmatpush1.msra.mxu0 0.0
        %10355 = vmatprep.subr.mxu0 0.0
        %10356 = vmatpush1.msra.mxu0 0.0
        %10357 = vmatprep.subr.mxu0 0.0
        %10358 = vmatpush1.msra.mxu0 0.0
        %10359 = vmatprep.subr.mxu0 0.0
        %10360 = vmatpush1.msra.mxu0 0.0
        %10361 = vmatprep.subr.mxu0 0.0
        %10362 = vmatpush1.msra.mxu0 0.0
        %10363 = vmatprep.subr.mxu0 0.0
        %10364 = vmatpush1.msra.mxu0 0.0
        %10365 = vmatprep.subr.mxu0 0.0
        %10366 = vmatpush1.msra.mxu0 0.0
        %10367 = vmatprep.mubr.f32.mxu0 0.0
        %v10368 = vand.u32 %v9880, 4294901760
        %10369 = vmatmul.mubr.f32.gmra.mrb[0].mxu0 %v10368
        %v10370 = vpop.f32.mrb[0].mxu0
        %v10371 = vadd.f32 %v10268, %v10370
        %v10372 = vpop.f32.mrb[0].mxu0
        %10373 = vmatprep.mubr.f32.mxu0 0.0
        %v10374 = vand.u32 %v9883, 4294901760
        %10375 = vmatmul.mubr.f32.gmra.mrb[0].mxu0 %v10374
        %v10376 = vpop.f32.mrb[0].mxu0
        %v10377 = vadd.f32 %v10276, %v10376
        %v10378 = vpop.f32.mrb[0].mxu0
        %10379 = vdwg.mxu0
        %10380 = vmatprep.subr.mxu0 0.0
        %v10381 = vand.u32 %v9870, 4294901760
        %10382 = vmatpush1.msra.mxu0 %v10381
        %10383 = vmatprep.subr.mxu0 0.0
        %v10384 = vand.u32 %v9871, 4294901760
        %10385 = vmatpush1.msra.mxu0 %v10384
        %10386 = vmatprep.subr.mxu0 0.0
        %v10387 = vand.u32 %v9872, 4294901760
        %10388 = vmatpush1.msra.mxu0 %v10387
        %10389 = vmatprep.subr.mxu0 0.0
        %v10390 = vand.u32 %v9873, 4294901760
        %10391 = vmatpush1.msra.mxu0 %v10390
        %10392 = vmatprep.subr.mxu0 0.0
        %v10393 = vand.u32 %v9874, 4294901760
        %10394 = vmatpush1.msra.mxu0 %v10393
        %10395 = vmatprep.subr.mxu0 0.0
        %v10396 = vand.u32 %v9875, 4294901760
        %10397 = vmatpush1.msra.mxu0 %v10396
        %10398 = vmatprep.subr.mxu0 0.0
        %v10399 = vand.u32 %v9876, 4294901760
        %10400 = vmatpush1.msra.mxu0 %v10399
        %10401 = vmatprep.subr.mxu0 0.0
        %v10402 = vand.u32 %v9877, 4294901760
        %10403 = vmatpush1.msra.mxu0 %v10402
        %10404 = vmatprep.subr.mxu0 0.0
        %10405 = vmatpush1.msra.mxu0 0.0
        %10406 = vmatprep.subr.mxu0 0.0
        %10407 = vmatpush1.msra.mxu0 0.0
        %10408 = vmatprep.subr.mxu0 0.0
        %10409 = vmatpush1.msra.mxu0 0.0
        %10410 = vmatprep.subr.mxu0 0.0
        %10411 = vmatpush1.msra.mxu0 0.0
        %10412 = vmatprep.subr.mxu0 0.0
        %10413 = vmatpush1.msra.mxu0 0.0
        %10414 = vmatprep.subr.mxu0 0.0
        %10415 = vmatpush1.msra.mxu0 0.0
        %10416 = vmatprep.subr.mxu0 0.0
        %10417 = vmatpush1.msra.mxu0 0.0
        %10418 = vmatprep.subr.mxu0 0.0
        %10419 = vmatpush1.msra.mxu0 0.0
        %10420 = vmatprep.subr.mxu0 0.0
        %10421 = vmatpush1.msra.mxu0 0.0
        %10422 = vmatprep.subr.mxu0 0.0
        %10423 = vmatpush1.msra.mxu0 0.0
        %10424 = vmatprep.subr.mxu0 0.0
        %10425 = vmatpush1.msra.mxu0 0.0
        %10426 = vmatprep.subr.mxu0 0.0
        %10427 = vmatpush1.msra.mxu0 0.0
        %10428 = vmatprep.subr.mxu0 0.0
        %10429 = vmatpush1.msra.mxu0 0.0
        %10430 = vmatprep.subr.mxu0 0.0
        %10431 = vmatpush1.msra.mxu0 0.0
        %10432 = vmatprep.subr.mxu0 0.0
        %10433 = vmatpush1.msra.mxu0 0.0
        %10434 = vmatprep.subr.mxu0 0.0
        %10435 = vmatpush1.msra.mxu0 0.0
        %10436 = vmatprep.subr.mxu0 0.0
        %10437 = vmatpush1.msra.mxu0 0.0
        %10438 = vmatprep.subr.mxu0 0.0
        %10439 = vmatpush1.msra.mxu0 0.0
        %10440 = vmatprep.subr.mxu0 0.0
        %10441 = vmatpush1.msra.mxu0 0.0
        %10442 = vmatprep.subr.mxu0 0.0
        %10443 = vmatpush1.msra.mxu0 0.0
        %10444 = vmatprep.subr.mxu0 0.0
        %10445 = vmatpush1.msra.mxu0 0.0
        %10446 = vmatprep.subr.mxu0 0.0
        %10447 = vmatpush1.msra.mxu0 0.0
        %10448 = vmatprep.subr.mxu0 0.0
        %10449 = vmatpush1.msra.mxu0 0.0
        %10450 = vmatprep.subr.mxu0 0.0
        %10451 = vmatpush1.msra.mxu0 0.0
        %10452 = vmatprep.mubr.f32.mxu0 0.0
        %v10453 = vand.u32 %v9880, 4294901760
        %10454 = vmatmul.mubr.f32.gmra.mrb[0].mxu0 %v10453
        %v10455 = vpop.f32.mrb[0].mxu0
        %v10456 = vadd.f32 %v10371, %v10455
        %v10457 = vpop.f32.mrb[0].mxu0
        %10458 = vmatprep.mubr.f32.mxu0 0.0
        %v10459 = vand.u32 %v9883, 4294901760
        %10460 = vmatmul.mubr.f32.gmra.mrb[0].mxu0 %v10459
        %v10461 = vpop.f32.mrb[0].mxu0
        %v10462 = vadd.f32 %v10377, %v10461
        %v10463 = vpop.f32.mrb[0].mxu0
        %10464 = vdwg.mxu0
        %v10465 = vadd.f32 %v9261, %v10456
        %v10466 = vadd.f32 %v9262, %v10462
        %v10467 = vld [vmem:[%s718] sm:$0x1]
        %v10469 = vlaneseq
        %v10470 = vshrl.u32 %v10469, 7
        %v10471 = vsub.s32 0, %v10470
        %v10472 = vrot.slane %v10467, %v10471
        %v10474 = vadd.f32 %v10465, %v10472
        %v10475 = vadd.f32 %v10466, %v10472
        %10476 = vst.msk [vmem:[#allocation2] sm:$0xff] %vm738, %v10474
        %10477 = vst.msk [vmem:[#allocation2 + $0x8] sm:$0xff] %vm738, %v10475
        %p10478 = scmp.eq.s32.totalorder %s33, 1
        // Predicated region
        $region89: #{decoder_forward.1} parent=83 // pred_check
          %p10479 = pneg %p10478
        $region90: #{decoder_forward.1} parent=83 // pred_check_branch
          %10481 = sbr.rel (%p10479) target = $region92
        $region91: #{decoder_forward.1} parent=83 // pred_region
          %v10482 = vld [vmem:[%s14] sm:$0x1]
          %v10483 = vld [vmem:[%s15] sm:$0x1]
          %v10484 = vsel %vm738, %v10474, 0.0
          %10485 = vadd.xlane.f32.xlu0 %v10484
          %v10486 = vpop.xlane.xlu0 %10485
          %v10487 = vsel %vm738, %v10475, 0.0
          %10488 = vadd.xlane.f32.xlu0 %v10487
          %v10489 = vpop.xlane.xlu0 %10488
          %v10490 = vmul.f32 %v10486, %v745
          %v10491 = vmul.f32 %v10489, %v745
          %v10492 = vsub.f32 %v10474, %v10490
          %v10493 = vsub.f32 %v10475, %v10491
          %v10494 = vmul.f32 %v10492, %v10492
          %v10495 = vmul.f32 %v10493, %v10493
          %v10496 = vsel %vm738, %v10494, 0.0
          %10497 = vadd.xlane.f32.xlu0 %v10496
          %v10498 = vpop.xlane.xlu0 %10497
          %v10499 = vsel %vm738, %v10495, 0.0
          %10500 = vadd.xlane.f32.xlu0 %v10499
          %v10501 = vpop.xlane.xlu0 %10500
          %v10502 = vmul.f32 %v10498, %v745
          %v10503 = vmul.f32 %v10501, %v745
          %v10504 = vadd.f32 %v10502, 1e-05
          %v10505 = vadd.f32 %v10503, 1e-05
          %v10506 = vrsqrt.pop %v10504
          %v10507 = vrsqrt.pop %v10505
          %v10508 = vmul.f32 %v10492, %v10506
          %v10509 = vmul.f32 %v10493, %v10507
          %v10511 = vlaneseq
          %v10512 = vshrl.u32 %v10511, 7
          %v10513 = vsub.s32 0, %v10512
          %v10514 = vrot.slane %v10482, %v10513
          %v10516 = vmul.f32 %v10508, %v10514
          %v10517 = vmul.f32 %v10509, %v10514
          %v10519 = vlaneseq
          %v10520 = vshrl.u32 %v10519, 7
          %v10521 = vsub.s32 0, %v10520
          %v10522 = vrot.slane %v10483, %v10521
          %v10524 = vadd.f32 %v10516, %v10522
          %v10525 = vadd.f32 %v10517, %v10522
          %10526 = vst.msk [vmem:[#allocation4] sm:$0xff] %vm738, %v10524
          %10527 = vst.msk [vmem:[#allocation4 + $0x8] sm:$0xff] %vm738, %v10525
        $region92: #{decoder_forward.1} parent=83 // pred_fallthru
          _
        // Predicated region
        $region93: #{decoder_forward.1} parent=83 // pred_check
          %p10528 = pneg %p459
        $region94: #{decoder_forward.1} parent=83 // pred_check_branch
          %10530 = sbr.rel (%p10528) target = $region96
        $region95: #{decoder_forward.1} parent=83 // pred_region
          %s10531 = smul.u32 2, %s32
          %s10533 = ssub.s32 256, 256
          %10534 = vsyncadd [#allocation5], %s10533
          %s10535 = smul.addr %s10531, 128
          %s10536 = scalar_lea.hbm %s16, %s10535
          %s10537 = sshll.u32 [#allocation4], 4
          %s10538 = int_to_ptr.vmem [resolvable:$true] %s10537
          %10543 = dma.vmem_to_hbm [thread:$0]  %s10538, 256, %s10536, [#allocation5], 128, 128, 8
        $region96: #{decoder_forward.1} parent=83 // pred_fallthru
          _
        // Predicated region
        $region97: #{decoder_forward.1} parent=83 // pred_check
          %p10544 = pneg %p459
        $region98: #{decoder_forward.1} parent=83 // pred_check_branch
          %10546 = sbr.rel (%p10544) target = $region100
        $region99: #{decoder_forward.1} parent=83 // pred_region
          %10547 = dma.done [#allocation5], 256
        $region100: #{decoder_forward.1} parent=83 // pred_fallthru
          _
      $region84: #{decoder_forward.1} parent=5 // pred_fallthru
        _
      %p10548 = scmp.le.s32.totalorder 2, %s23
      // Predicated region
      $region101: #{decoder_forward.1} parent=5 // pred_check
        %p10549 = pneg %p10548
      $region102: #{decoder_forward.1} parent=5 // pred_check_branch
        %10551 = sbr.rel (%p10549) target = $region104
      $region103: #{decoder_forward.1} parent=5 // pred_region
        %s10552 = ssub.s32 %s23, 2
      $region104: #{decoder_forward.1} parent=5 // pred_fallthru
        _
    $region6: #{decoder_forward.1} parent=1 // loop_footer
      %s27 = sadd.s32 1, %s23
    $region7: #{decoder_forward.1} parent=1 // loop_footer_branch
      %22 = sbr.rel target = $region3
    $region8: #{decoder_forward.1} parent=1 // loop_exit
      _
    %10553 = vsyncpa [#allocation5], 1
    %s10554 = scalar_lea.sflag [#allocation5], 1
    %10555 = vsyncpa %s10554, 1

</llo_original>
